<compile_context>
chip_gen: v7x
topology: tpu7x:2x2x1
jax: 0.10.0
libtpu: 0.0.40
codegen_flags: <defaults>
</compile_context>

<pallas_src>
import functools

import jax
import jax.numpy as jnp
from jax.experimental import pallas as pl
from jax.experimental.pallas import tpu as pltpu


# ----------------------------------------------------------------------------
# Fused encoder kernel (one grid step = one batch element)
# ----------------------------------------------------------------------------
def _make_encoder_kernel(H, W):
    H2, W2 = H // 2, W // 2
    H4, W4 = H2 // 2, W2 // 2

    def stage_padded(pad_ref, val_hwc):
        # Zero halo + interior write.  The buffer is re-zeroed on every use:
        # scratch is per-core on v7x (the grid axis is "parallel"), so a
        # program_id==0 one-shot init would be unsafe there.  The bulk zero of
        # these small buffers is a handful of vector stores, cheaper and
        # simpler than masked border-only writes.
        h, w, _ = val_hwc.shape
        pad_ref[...] = jnp.zeros_like(pad_ref)
        pad_ref[1:h + 1, 1:w + 1, :] = val_hwc

    def conv3x3_relu(pad_ref, patch_ref, w_ref, b_ref, h, w, cin):
        # Build the (h*w, 9*cin) im2col patch matrix in VMEM, then ONE matmul
        # on the MXU with f32 accumulation.
        for dy in range(3):
            for dx in range(3):
                tap = dy * 3 + dx
                patch_ref[0:h * w, tap * cin:(tap + 1) * cin] = (
                    pad_ref[dy:dy + h, dx:dx + w, :].reshape(h * w, cin))
        acc = jnp.dot(patch_ref[0:h * w, 0:9 * cin], w_ref[...],
                      preferred_element_type=jnp.float32)
        return jnp.maximum(acc + b_ref[...], 0.0)            # (h*w, cout)

    def maxpool2x2(x_flat, h, w, c):
        t = x_flat.reshape(h // 2, 2, w // 2, 2, c)
        t = jnp.max(t, axis=3)
        t = jnp.max(t, axis=1)
        return t                                             # (h//2, w//2, c)

    def kernel(xcol_ref,
               w1a_ref, b1a_ref, w1b_ref, b1b_ref,
               w2a_ref, b2a_ref, w2b_ref, b2b_ref,
               w3a_ref, b3a_ref, w3b_ref, b3b_ref,
               f1_ref, f2_ref, g_ref,
               pad1b, pad2a, pad2b, pad3a, pad3b, patch_ref):
        # ---- block 1 ------------------------------------------------------
        # conv1a: im2col done (and K padded to 128) in the wrapper.
        a = jnp.dot(xcol_ref[0], w1a_ref[...],
                    preferred_element_type=jnp.float32)
        a = jnp.maximum(a + b1a_ref[...], 0.0)               # (H*W, 32)

        stage_padded(pad1b, a.reshape(H, W, 32))
        f1 = conv3x3_relu(pad1b, patch_ref, w1b_ref, b1b_ref, H, W, 32)
        # Store feature 1 immediately so its output DMA overlaps block 2/3.
        f1_ref[...] = f1.reshape(1, H, W, 32).astype(f1_ref.dtype)

        p1 = maxpool2x2(f1, H, W, 32)                        # (H2, W2, 32)

        # ---- block 2 ------------------------------------------------------
        stage_padded(pad2a, p1)
        a = conv3x3_relu(pad2a, patch_ref, w2a_ref, b2a_ref, H2, W2, 32)
        stage_padded(pad2b, a.reshape(H2, W2, 64))
        f2 = conv3x3_relu(pad2b, patch_ref, w2b_ref, b2b_ref, H2, W2, 64)
        f2_ref[...] = f2.reshape(1, H2, W2, 64).astype(f2_ref.dtype)

        p2 = maxpool2x2(f2, H2, W2, 64)                      # (H4, W4, 64)

        # ---- block 3 ------------------------------------------------------
        stage_padded(pad3a, p2)
        a = conv3x3_relu(pad3a, patch_ref, w3a_ref, b3a_ref, H4, W4, 64)
        stage_padded(pad3b, a.reshape(H4, W4, 128))
        g = conv3x3_relu(pad3b, patch_ref, w3b_ref, b3b_ref, H4, W4, 128)
        g_ref[...] = g.reshape(1, H4, W4, 128).astype(g_ref.dtype)

    return kernel


# ----------------------------------------------------------------------------
# Wrapper glue: weight packing, first-layer im2col, BlockSpecs, grid over batch
# ----------------------------------------------------------------------------
def _conv_mat(w_hwio):
    # (3,3,Cin,Cout) -> (9*Cin, Cout); row order (dy, dx, cin) matches the
    # im2col column order built inside the kernel.
    _, _, cin, cout = w_hwio.shape
    return w_hwio.reshape(9 * cin, cout)


def _im2col_3x3(x_nhwc):
    # (N,H,W,C) -> (N, H*W, 9*C); column order (dy, dx, c) matching _conv_mat.
    N, H, W, C = x_nhwc.shape
    xp = jnp.pad(x_nhwc, ((0, 0), (1, 1), (1, 1), (0, 0)))
    cols = [xp[:, dy:dy + H, dx:dx + W, :]
            for dy in range(3) for dx in range(3)]
    return jnp.concatenate(cols, axis=-1).reshape(N, H * W, 9 * C)


def encoding_forward(g_nchw, params):
    """Mirrors encoding.forward. Input/outputs are NCHW like PyTorch."""
    g_start = g_nchw
    x = jnp.transpose(g_nchw, (0, 2, 3, 1)).astype(jnp.float32)  # NCHW->NHWC
    N, H, W, Cin = x.shape
    assert H % 4 == 0 and W % 4 == 0, "two 2x2 maxpools need H, W % 4 == 0"
    # TODO(synk): odd spatial sizes (PyTorch MaxPool2d floors) not handled.
    # TODO(synk): for large images, tile H in ~128-row blocks with a 2-row halo
    #             instead of whole-image VMEM residency (v7x 64 MiB VMEM).

    H2, W2, H4, W4 = H // 2, W // 2, H // 4, W // 4

    # First layer: im2col + zero-pad K up to a multiple of 128 (lane-dense).
    xcol = _im2col_3x3(x)                                     # (N, H*W, 9*Cin)
    K1 = 9 * Cin
    K1p = ((K1 + 127) // 128) * 128
    xcol = jnp.pad(xcol, ((0, 0), (0, 0), (0, K1p - K1)))

    w1a = jnp.pad(_conv_mat(params["b1a"][0]), ((0, K1p - K1), (0, 0)))
    b1a = params["b1a"][1].reshape(1, -1)
    w1b = _conv_mat(params["b1b"][0]); b1b = params["b1b"][1].reshape(1, -1)
    w2a = _conv_mat(params["b2a"][0]); b2a = params["b2a"][1].reshape(1, -1)
    w2b = _conv_mat(params["b2b"][0]); b2b = params["b2b"][1].reshape(1, -1)
    w3a = _conv_mat(params["b3a"][0]); b3a = params["b3a"][1].reshape(1, -1)
    w3b = _conv_mat(params["b3b"][0]); b3b = params["b3b"][1].reshape(1, -1)

    ops = [xcol, w1a, b1a, w1b, b1b, w2a, b2a, w2b, b2b, w3a, b3a, w3b, b3b]

    def whole(arr):
        # Full-array block; constant index_map => fetched once, not per step.
        shape = arr.shape
        return pl.BlockSpec(shape, lambda n, _r=len(shape): (0,) * _r)

    in_specs = [pl.BlockSpec((1, H * W, K1p), lambda n: (n, 0, 0))]
    in_specs += [whole(a) for a in ops[1:]]

    out_shapes = (
        jax.ShapeDtypeStruct((N, H, W, 32), jnp.float32),
        jax.ShapeDtypeStruct((N, H2, W2, 64), jnp.float32),
        jax.ShapeDtypeStruct((N, H4, W4, 128), jnp.float32),
    )
    out_specs = (
        pl.BlockSpec((1, H, W, 32), lambda n: (n, 0, 0, 0)),
        pl.BlockSpec((1, H2, W2, 64), lambda n: (n, 0, 0, 0)),
        pl.BlockSpec((1, H4, W4, 128), lambda n: (n, 0, 0, 0)),
    )

    scratch_shapes = [
        pltpu.VMEM((H + 2, W + 2, 32), jnp.float32),      # halo for conv1b
        pltpu.VMEM((H2 + 2, W2 + 2, 32), jnp.float32),    # halo for conv2a
        pltpu.VMEM((H2 + 2, W2 + 2, 64), jnp.float32),    # halo for conv2b
        pltpu.VMEM((H4 + 2, W4 + 2, 64), jnp.float32),    # halo for conv3a
        pltpu.VMEM((H4 + 2, W4 + 2, 128), jnp.float32),   # halo for conv3b
        pltpu.VMEM((H * W, 9 * 128), jnp.float32),        # shared im2col buffer
    ]

    f1, f2, g = pl.pallas_call(
        _make_encoder_kernel(H, W),
        out_shape=out_shapes,
        grid=(N,),
        in_specs=in_specs,
        out_specs=out_specs,
        scratch_shapes=scratch_shapes,
        compiler_params=pltpu.CompilerParams(
            dimension_semantics=("parallel",)),
    )(*ops)

    to_nchw = lambda t: jnp.transpose(t, (0, 3, 1, 2))
    return to_nchw(g), [to_nchw(f1), to_nchw(f2)], g_start


# ----------------------------------------------------------------------------
# Deterministic parameter init (shapes follow the nn.Module __init__)
# ----------------------------------------------------------------------------
def init_params(key, in_channels):
    def conv_param(k, cin, cout):
        kw, kb = jax.random.split(k)
        bound = 1.0 / jnp.sqrt(cin * 9.0)
        w = jax.random.uniform(kw, (3, 3, cin, cout), jnp.float32,
                               -bound, bound)                # HWIO
        b = jax.random.uniform(kb, (cout,), jnp.float32, -bound, bound)
        return (w, b)

    ks = jax.random.split(key, 6)
    return {
        "b1a": conv_param(ks[0], in_channels, 32),
        "b1b": conv_param(ks[1], 32, 32),
        "b2a": conv_param(ks[2], 32, 64),
        "b2b": conv_param(ks[3], 64, 64),
        "b3a": conv_param(ks[4], 64, 128),
        "b3b": conv_param(ks[5], 128, 128),
    }


# ----------------------------------------------------------------------------
# Pure-JAX reference (for correctness check)
# ----------------------------------------------------------------------------
def conv3x3_relu_ref(x_nhwc, w_hwio, b):
    y = jax.lax.conv_general_dilated(
        x_nhwc, w_hwio, window_strides=(1, 1), padding="SAME",
        dimension_numbers=("NHWC", "HWIO", "NHWC"))
    return jnp.maximum(y + b.reshape(1, 1, 1, -1), 0.0)


def maxpool2x2_ref(x_nhwc):
    N, H, W, C = x_nhwc.shape
    x = x_nhwc.reshape(N, H // 2, 2, W // 2, 2, C)
    return jnp.max(x, axis=(2, 4))


def encoding_forward_ref(g_nchw, params):
    x = jnp.transpose(g_nchw, (0, 2, 3, 1))
    f1 = conv3x3_relu_ref(conv3x3_relu_ref(x, *params["b1a"]), *params["b1b"])
    x = maxpool2x2_ref(f1)
    f2 = conv3x3_relu_ref(conv3x3_relu_ref(x, *params["b2a"]), *params["b2b"])
    x = maxpool2x2_ref(f2)
    g = conv3x3_relu_ref(conv3x3_relu_ref(x, *params["b3a"]), *params["b3b"])
    to_nchw = lambda t: jnp.transpose(t, (0, 3, 1, 2))
    return to_nchw(g), [to_nchw(f1), to_nchw(f2)], g_nchw


# ----------------------------------------------------------------------------
if __name__ == "__main__":
    key = jax.random.PRNGKey(0)
    k_x, k_p = jax.random.split(key)

    batch, in_channels, spatial = 2, 4, 16
    g_in = jax.random.normal(k_x, (batch, in_channels, spatial, spatial),
                             dtype=jnp.float32)
    params = init_params(k_p, in_channels)

    fwd = jax.jit(functools.partial(encoding_forward, params=params))
    g_out, feats, g_start = fwd(g_in)
    jax.block_until_ready((g_out, feats, g_start))

    # sanity check against pure-JAX reference
    g_ref, feats_ref, g_start_ref = encoding_forward_ref(g_in, params)
    assert g_out.shape == (batch, 128, spatial // 4, spatial // 4)
    assert feats[0].shape == (batch, 32, spatial, spatial)
    assert feats[1].shape == (batch, 64, spatial // 2, spatial // 2)
    assert jnp.allclose(g_start, g_start_ref)
    assert jnp.allclose(feats[0], feats_ref[0], atol=1e-3, rtol=1e-3)
    assert jnp.allclose(feats[1], feats_ref[1], atol=1e-3, rtol=1e-3)
    assert jnp.allclose(g_out, g_ref, atol=1e-3, rtol=1e-3)

    print("KERNEL_OK")
</pallas_src>

<mosaic_0001>
module attributes {stable_mosaic.version = 11 : i64} {
  func.func @kernel(%arg0: i32, %arg1: memref<1x256x128xf32, #tpu.memory_space<vmem>>, %arg2: memref<128x32xf32, #tpu.memory_space<vmem>>, %arg3: memref<1x32xf32, #tpu.memory_space<vmem>>, %arg4: memref<288x32xf32, #tpu.memory_space<vmem>>, %arg5: memref<1x32xf32, #tpu.memory_space<vmem>>, %arg6: memref<288x64xf32, #tpu.memory_space<vmem>>, %arg7: memref<1x64xf32, #tpu.memory_space<vmem>>, %arg8: memref<576x64xf32, #tpu.memory_space<vmem>>, %arg9: memref<1x64xf32, #tpu.memory_space<vmem>>, %arg10: memref<576x128xf32, #tpu.memory_space<vmem>>, %arg11: memref<1x128xf32, #tpu.memory_space<vmem>>, %arg12: memref<1152x128xf32, #tpu.memory_space<vmem>>, %arg13: memref<1x128xf32, #tpu.memory_space<vmem>>, %arg14: memref<1x16x16x32xf32, #tpu.memory_space<vmem>>, %arg15: memref<1x8x8x64xf32, #tpu.memory_space<vmem>>, %arg16: memref<1x4x4x128xf32, #tpu.memory_space<vmem>>, %arg17: memref<18x18x32xf32, #tpu.memory_space<vmem>>, %arg18: memref<10x10x32xf32, #tpu.memory_space<vmem>>, %arg19: memref<10x10x64xf32, #tpu.memory_space<vmem>>, %arg20: memref<6x6x64xf32, #tpu.memory_space<vmem>>, %arg21: memref<6x6x128xf32, #tpu.memory_space<vmem>>, %arg22: memref<256x1152xf32, #tpu.memory_space<vmem>>) attributes {dimension_semantics = [#tpu.dimension_semantics<parallel>], iteration_bounds = array<i64: 2>, scalar_prefetch = 0 : i64, scratch_operands = 6 : i64, tpu.core_type = #tpu.core_type<tc>, window_params = [{transform_indices = @transform_0, window_bounds = array<i64: 1, 256, 128>}, {pipeline_mode = #tpu.pipeline_mode<synchronous>, transform_indices = @transform_1, window_bounds = array<i64: 128, 32>}, {pipeline_mode = #tpu.pipeline_mode<synchronous>, transform_indices = @transform_2, window_bounds = array<i64: 1, 32>}, {pipeline_mode = #tpu.pipeline_mode<synchronous>, transform_indices = @transform_3, window_bounds = array<i64: 288, 32>}, {pipeline_mode = #tpu.pipeline_mode<synchronous>, transform_indices = @transform_4, window_bounds = array<i64: 1, 32>}, {pipeline_mode = #tpu.pipeline_mode<synchronous>, transform_indices = @transform_5, window_bounds = array<i64: 288, 64>}, {pipeline_mode = #tpu.pipeline_mode<synchronous>, transform_indices = @transform_6, window_bounds = array<i64: 1, 64>}, {pipeline_mode = #tpu.pipeline_mode<synchronous>, transform_indices = @transform_7, window_bounds = array<i64: 576, 64>}, {pipeline_mode = #tpu.pipeline_mode<synchronous>, transform_indices = @transform_8, window_bounds = array<i64: 1, 64>}, {pipeline_mode = #tpu.pipeline_mode<synchronous>, transform_indices = @transform_9, window_bounds = array<i64: 576, 128>}, {pipeline_mode = #tpu.pipeline_mode<synchronous>, transform_indices = @transform_10, window_bounds = array<i64: 1, 128>}, {pipeline_mode = #tpu.pipeline_mode<synchronous>, transform_indices = @transform_11, window_bounds = array<i64: 1152, 128>}, {pipeline_mode = #tpu.pipeline_mode<synchronous>, transform_indices = @transform_12, window_bounds = array<i64: 1, 128>}, {transform_indices = @transform_13, window_bounds = array<i64: 1, 16, 16, 32>}, {transform_indices = @transform_14, window_bounds = array<i64: 1, 8, 8, 64>}, {transform_indices = @transform_15, window_bounds = array<i64: 1, 4, 4, 128>}]} {
    %c0 = arith.constant 0 : index
    %c0_0 = arith.constant 0 : index
    %c0_1 = arith.constant 0 : index
    %0 = vector.load %arg1[%c0, %c0_0, %c0_1] : memref<1x256x128xf32, #tpu.memory_space<vmem>>, vector<1x256x128xf32>
    %1 = vector.shape_cast %0 : vector<1x256x128xf32> to vector<256x128xf32>
    %c0_2 = arith.constant 0 : index
    %c0_3 = arith.constant 0 : index
    %2 = vector.load %arg2[%c0_2, %c0_3] : memref<128x32xf32, #tpu.memory_space<vmem>>, vector<128x32xf32>
    %cst = arith.constant dense<0.000000e+00> : vector<256x32xf32>
    %3 = tpu.matmul %1, %2, %cst {dimension_numbers = #tpu.dot_dimension_numbers<[1], [0], [0], [1], [0, 0, 1, 1], [], []>} : vector<256x128xf32>, vector<128x32xf32>, vector<256x32xf32> -> vector<256x32xf32>
    %c0_4 = arith.constant 0 : index
    %c0_5 = arith.constant 0 : index
    %4 = vector.load %arg3[%c0_4, %c0_5] : memref<1x32xf32, #tpu.memory_space<vmem>>, vector<1x32xf32>
    %5 = vector.broadcast %4 : vector<1x32xf32> to vector<256x32xf32>
    %6 = arith.addf %3, %5 : vector<256x32xf32>
    %cst_6 = arith.constant 0.000000e+00 : f32
    %7 = vector.broadcast %cst_6 : f32 to vector<256x32xf32>
    %8 = arith.maximumf %6, %7 : vector<256x32xf32>
    %9 = vector.shape_cast %8 : vector<256x32xf32> to vector<16x16x32xf32>
    %cst_7 = arith.constant 0.000000e+00 : f32
    %10 = vector.broadcast %cst_7 : f32 to vector<18x18x32xf32>
    %c0_8 = arith.constant 0 : index
    %c0_9 = arith.constant 0 : index
    %c0_10 = arith.constant 0 : index
    %11 = vector.load %arg17[%c0_8, %c0_9, %c0_10] : memref<18x18x32xf32, #tpu.memory_space<vmem>>, vector<18x18x32xf32>
    tpu.vector_store %arg17[%c0_8, %c0_9, %c0_10], %10 {strides = array<i32>} : memref<18x18x32xf32, #tpu.memory_space<vmem>>, vector<18x18x32xf32>,
    %c1 = arith.constant 1 : index
    %c1_11 = arith.constant 1 : index
    %c0_12 = arith.constant 0 : index
    %12 = vector.load %arg17[%c1, %c1_11, %c0_12] : memref<18x18x32xf32, #tpu.memory_space<vmem>>, vector<16x16x32xf32>
    tpu.vector_store %arg17[%c1, %c1_11, %c0_12], %9 {strides = array<i32>} : memref<18x18x32xf32, #tpu.memory_space<vmem>>, vector<16x16x32xf32>,
    %c0_13 = arith.constant 0 : index
    %c0_14 = arith.constant 0 : index
    %c0_15 = arith.constant 0 : index
    %13 = vector.load %arg17[%c0_13, %c0_14, %c0_15] : memref<18x18x32xf32, #tpu.memory_space<vmem>>, vector<16x16x32xf32>
    %14 = vector.shape_cast %13 : vector<16x16x32xf32> to vector<256x32xf32>
    %c0_16 = arith.constant 0 : index
    %c0_17 = arith.constant 0 : index
    %15 = vector.load %arg22[%c0_16, %c0_17] : memref<256x1152xf32, #tpu.memory_space<vmem>>, vector<256x32xf32>
    tpu.vector_store %arg22[%c0_16, %c0_17], %14 {strides = array<i32>} : memref<256x1152xf32, #tpu.memory_space<vmem>>, vector<256x32xf32>,
    %c0_18 = arith.constant 0 : index
    %c1_19 = arith.constant 1 : index
    %c0_20 = arith.constant 0 : index
    %16 = vector.load %arg17[%c0_18, %c1_19, %c0_20] : memref<18x18x32xf32, #tpu.memory_space<vmem>>, vector<16x16x32xf32>
    %17 = vector.shape_cast %16 : vector<16x16x32xf32> to vector<256x32xf32>
    %c0_21 = arith.constant 0 : index
    %c32 = arith.constant 32 : index
    %18 = vector.load %arg22[%c0_21, %c32] : memref<256x1152xf32, #tpu.memory_space<vmem>>, vector<256x32xf32>
    tpu.vector_store %arg22[%c0_21, %c32], %17 {strides = array<i32>} : memref<256x1152xf32, #tpu.memory_space<vmem>>, vector<256x32xf32>,
    %c0_22 = arith.constant 0 : index
    %c2 = arith.constant 2 : index
    %c0_23 = arith.constant 0 : index
    %19 = vector.load %arg17[%c0_22, %c2, %c0_23] : memref<18x18x32xf32, #tpu.memory_space<vmem>>, vector<16x16x32xf32>
    %20 = vector.shape_cast %19 : vector<16x16x32xf32> to vector<256x32xf32>
    %c0_24 = arith.constant 0 : index
    %c64 = arith.constant 64 : index
    %21 = vector.load %arg22[%c0_24, %c64] : memref<256x1152xf32, #tpu.memory_space<vmem>>, vector<256x32xf32>
    tpu.vector_store %arg22[%c0_24, %c64], %20 {strides = array<i32>} : memref<256x1152xf32, #tpu.memory_space<vmem>>, vector<256x32xf32>,
    %c1_25 = arith.constant 1 : index
    %c0_26 = arith.constant 0 : index
    %c0_27 = arith.constant 0 : index
    %22 = vector.load %arg17[%c1_25, %c0_26, %c0_27] : memref<18x18x32xf32, #tpu.memory_space<vmem>>, vector<16x16x32xf32>
    %23 = vector.shape_cast %22 : vector<16x16x32xf32> to vector<256x32xf32>
    %c0_28 = arith.constant 0 : index
    %c96 = arith.constant 96 : index
    %24 = vector.load %arg22[%c0_28, %c96] : memref<256x1152xf32, #tpu.memory_space<vmem>>, vector<256x32xf32>
    tpu.vector_store %arg22[%c0_28, %c96], %23 {strides = array<i32>} : memref<256x1152xf32, #tpu.memory_space<vmem>>, vector<256x32xf32>,
    %c1_29 = arith.constant 1 : index
    %c1_30 = arith.constant 1 : index
    %c0_31 = arith.constant 0 : index
    %25 = vector.load %arg17[%c1_29, %c1_30, %c0_31] : memref<18x18x32xf32, #tpu.memory_space<vmem>>, vector<16x16x32xf32>
    %26 = vector.shape_cast %25 : vector<16x16x32xf32> to vector<256x32xf32>
    %c0_32 = arith.constant 0 : index
    %c128 = arith.constant 128 : index
    %27 = vector.load %arg22[%c0_32, %c128] : memref<256x1152xf32, #tpu.memory_space<vmem>>, vector<256x32xf32>
    tpu.vector_store %arg22[%c0_32, %c128], %26 {strides = array<i32>} : memref<256x1152xf32, #tpu.memory_space<vmem>>, vector<256x32xf32>,
    %c1_33 = arith.constant 1 : index
    %c2_34 = arith.constant 2 : index
    %c0_35 = arith.constant 0 : index
    %28 = vector.load %arg17[%c1_33, %c2_34, %c0_35] : memref<18x18x32xf32, #tpu.memory_space<vmem>>, vector<16x16x32xf32>
    %29 = vector.shape_cast %28 : vector<16x16x32xf32> to vector<256x32xf32>
    %c0_36 = arith.constant 0 : index
    %c160 = arith.constant 160 : index
    %30 = vector.load %arg22[%c0_36, %c160] : memref<256x1152xf32, #tpu.memory_space<vmem>>, vector<256x32xf32>
    tpu.vector_store %arg22[%c0_36, %c160], %29 {strides = array<i32>} : memref<256x1152xf32, #tpu.memory_space<vmem>>, vector<256x32xf32>,
    %c2_37 = arith.constant 2 : index
    %c0_38 = arith.constant 0 : index
    %c0_39 = arith.constant 0 : index
    %31 = vector.load %arg17[%c2_37, %c0_38, %c0_39] : memref<18x18x32xf32, #tpu.memory_space<vmem>>, vector<16x16x32xf32>
    %32 = vector.shape_cast %31 : vector<16x16x32xf32> to vector<256x32xf32>
    %c0_40 = arith.constant 0 : index
    %c192 = arith.constant 192 : index
    %33 = vector.load %arg22[%c0_40, %c192] : memref<256x1152xf32, #tpu.memory_space<vmem>>, vector<256x32xf32>
    tpu.vector_store %arg22[%c0_40, %c192], %32 {strides = array<i32>} : memref<256x1152xf32, #tpu.memory_space<vmem>>, vector<256x32xf32>,
    %c2_41 = arith.constant 2 : index
    %c1_42 = arith.constant 1 : index
    %c0_43 = arith.constant 0 : index
    %34 = vector.load %arg17[%c2_41, %c1_42, %c0_43] : memref<18x18x32xf32, #tpu.memory_space<vmem>>, vector<16x16x32xf32>
    %35 = vector.shape_cast %34 : vector<16x16x32xf32> to vector<256x32xf32>
    %c0_44 = arith.constant 0 : index
    %c224 = arith.constant 224 : index
    %36 = vector.load %arg22[%c0_44, %c224] : memref<256x1152xf32, #tpu.memory_space<vmem>>, vector<256x32xf32>
    tpu.vector_store %arg22[%c0_44, %c224], %35 {strides = array<i32>} : memref<256x1152xf32, #tpu.memory_space<vmem>>, vector<256x32xf32>,
    %c2_45 = arith.constant 2 : index
    %c2_46 = arith.constant 2 : index
    %c0_47 = arith.constant 0 : index
    %37 = vector.load %arg17[%c2_45, %c2_46, %c0_47] : memref<18x18x32xf32, #tpu.memory_space<vmem>>, vector<16x16x32xf32>
    %38 = vector.shape_cast %37 : vector<16x16x32xf32> to vector<256x32xf32>
    %c0_48 = arith.constant 0 : index
    %c256 = arith.constant 256 : index
    %39 = vector.load %arg22[%c0_48, %c256] : memref<256x1152xf32, #tpu.memory_space<vmem>>, vector<256x32xf32>
    tpu.vector_store %arg22[%c0_48, %c256], %38 {strides = array<i32>} : memref<256x1152xf32, #tpu.memory_space<vmem>>, vector<256x32xf32>,
    %c0_49 = arith.constant 0 : index
    %c0_50 = arith.constant 0 : index
    %40 = vector.load %arg22[%c0_49, %c0_50] : memref<256x1152xf32, #tpu.memory_space<vmem>>, vector<256x288xf32>
    %c0_51 = arith.constant 0 : index
    %c0_52 = arith.constant 0 : index
    %41 = vector.load %arg4[%c0_51, %c0_52] : memref<288x32xf32, #tpu.memory_space<vmem>>, vector<288x32xf32>
    %cst_53 = arith.constant dense<0.000000e+00> : vector<256x32xf32>
    %42 = tpu.matmul %40, %41, %cst_53 {dimension_numbers = #tpu.dot_dimension_numbers<[1], [0], [0], [1], [0, 0, 1, 1], [], []>} : vector<256x288xf32>, vector<288x32xf32>, vector<256x32xf32> -> vector<256x32xf32>
    %c0_54 = arith.constant 0 : index
    %c0_55 = arith.constant 0 : index
    %43 = vector.load %arg5[%c0_54, %c0_55] : memref<1x32xf32, #tpu.memory_space<vmem>>, vector<1x32xf32>
    %44 = vector.broadcast %43 : vector<1x32xf32> to vector<256x32xf32>
    %45 = arith.addf %42, %44 : vector<256x32xf32>
    %cst_56 = arith.constant 0.000000e+00 : f32
    %46 = vector.broadcast %cst_56 : f32 to vector<256x32xf32>
    %47 = arith.maximumf %45, %46 : vector<256x32xf32>
    %48 = vector.shape_cast %47 : vector<256x32xf32> to vector<1x16x16x32xf32>
    %c0_57 = arith.constant 0 : index
    %c0_58 = arith.constant 0 : index
    %c0_59 = arith.constant 0 : index
    %c0_60 = arith.constant 0 : index
    %49 = vector.load %arg14[%c0_57, %c0_58, %c0_59, %c0_60] : memref<1x16x16x32xf32, #tpu.memory_space<vmem>>, vector<1x16x16x32xf32>
    tpu.vector_store %arg14[%c0_57, %c0_58, %c0_59, %c0_60], %48 {strides = array<i32>} : memref<1x16x16x32xf32, #tpu.memory_space<vmem>>, vector<1x16x16x32xf32>,
    %50 = vector.shape_cast %47 : vector<256x32xf32> to vector<8x2x8x2x32xf32>
    %cst_61 = arith.constant dense<0xFF800000> : vector<8x2x8x32xf32>
    %51 = vector.multi_reduction <maximumf>, %50, %cst_61 [3] : vector<8x2x8x2x32xf32> to vector<8x2x8x32xf32>
    %cst_62 = arith.constant dense<0xFF800000> : vector<8x8x32xf32>
    %52 = vector.multi_reduction <maximumf>, %51, %cst_62 [1] : vector<8x2x8x32xf32> to vector<8x8x32xf32>
    %cst_63 = arith.constant 0.000000e+00 : f32
    %53 = vector.broadcast %cst_63 : f32 to vector<10x10x32xf32>
    %c0_64 = arith.constant 0 : index
    %c0_65 = arith.constant 0 : index
    %c0_66 = arith.constant 0 : index
    %54 = vector.load %arg18[%c0_64, %c0_65, %c0_66] : memref<10x10x32xf32, #tpu.memory_space<vmem>>, vector<10x10x32xf32>
    tpu.vector_store %arg18[%c0_64, %c0_65, %c0_66], %53 {strides = array<i32>} : memref<10x10x32xf32, #tpu.memory_space<vmem>>, vector<10x10x32xf32>,
    %c1_67 = arith.constant 1 : index
    %c1_68 = arith.constant 1 : index
    %c0_69 = arith.constant 0 : index
    %55 = vector.load %arg18[%c1_67, %c1_68, %c0_69] : memref<10x10x32xf32, #tpu.memory_space<vmem>>, vector<8x8x32xf32>
    tpu.vector_store %arg18[%c1_67, %c1_68, %c0_69], %52 {strides = array<i32>} : memref<10x10x32xf32, #tpu.memory_space<vmem>>, vector<8x8x32xf32>,
    %c0_70 = arith.constant 0 : index
    %c0_71 = arith.constant 0 : index
    %c0_72 = arith.constant 0 : index
    %56 = vector.load %arg18[%c0_70, %c0_71, %c0_72] : memref<10x10x32xf32, #tpu.memory_space<vmem>>, vector<8x8x32xf32>
    %57 = vector.shape_cast %56 : vector<8x8x32xf32> to vector<64x32xf32>
    %c0_73 = arith.constant 0 : index
    %c0_74 = arith.constant 0 : index
    %58 = vector.load %arg22[%c0_73, %c0_74] : memref<256x1152xf32, #tpu.memory_space<vmem>>, vector<64x32xf32>
    tpu.vector_store %arg22[%c0_73, %c0_74], %57 {strides = array<i32>} : memref<256x1152xf32, #tpu.memory_space<vmem>>, vector<64x32xf32>,
    %c0_75 = arith.constant 0 : index
    %c1_76 = arith.constant 1 : index
    %c0_77 = arith.constant 0 : index
    %59 = vector.load %arg18[%c0_75, %c1_76, %c0_77] : memref<10x10x32xf32, #tpu.memory_space<vmem>>, vector<8x8x32xf32>
    %60 = vector.shape_cast %59 : vector<8x8x32xf32> to vector<64x32xf32>
    %c0_78 = arith.constant 0 : index
    %c32_79 = arith.constant 32 : index
    %61 = vector.load %arg22[%c0_78, %c32_79] : memref<256x1152xf32, #tpu.memory_space<vmem>>, vector<64x32xf32>
    tpu.vector_store %arg22[%c0_78, %c32_79], %60 {strides = array<i32>} : memref<256x1152xf32, #tpu.memory_space<vmem>>, vector<64x32xf32>,
    %c0_80 = arith.constant 0 : index
    %c2_81 = arith.constant 2 : index
    %c0_82 = arith.constant 0 : index
    %62 = vector.load %arg18[%c0_80, %c2_81, %c0_82] : memref<10x10x32xf32, #tpu.memory_space<vmem>>, vector<8x8x32xf32>
    %63 = vector.shape_cast %62 : vector<8x8x32xf32> to vector<64x32xf32>
    %c0_83 = arith.constant 0 : index
    %c64_84 = arith.constant 64 : index
    %64 = vector.load %arg22[%c0_83, %c64_84] : memref<256x1152xf32, #tpu.memory_space<vmem>>, vector<64x32xf32>
    tpu.vector_store %arg22[%c0_83, %c64_84], %63 {strides = array<i32>} : memref<256x1152xf32, #tpu.memory_space<vmem>>, vector<64x32xf32>,
    %c1_85 = arith.constant 1 : index
    %c0_86 = arith.constant 0 : index
    %c0_87 = arith.constant 0 : index
    %65 = vector.load %arg18[%c1_85, %c0_86, %c0_87] : memref<10x10x32xf32, #tpu.memory_space<vmem>>, vector<8x8x32xf32>
    %66 = vector.shape_cast %65 : vector<8x8x32xf32> to vector<64x32xf32>
    %c0_88 = arith.constant 0 : index
    %c96_89 = arith.constant 96 : index
    %67 = vector.load %arg22[%c0_88, %c96_89] : memref<256x1152xf32, #tpu.memory_space<vmem>>, vector<64x32xf32>
    tpu.vector_store %arg22[%c0_88, %c96_89], %66 {strides = array<i32>} : memref<256x1152xf32, #tpu.memory_space<vmem>>, vector<64x32xf32>,
    %c1_90 = arith.constant 1 : index
    %c1_91 = arith.constant 1 : index
    %c0_92 = arith.constant 0 : index
    %68 = vector.load %arg18[%c1_90, %c1_91, %c0_92] : memref<10x10x32xf32, #tpu.memory_space<vmem>>, vector<8x8x32xf32>
    %69 = vector.shape_cast %68 : vector<8x8x32xf32> to vector<64x32xf32>
    %c0_93 = arith.constant 0 : index
    %c128_94 = arith.constant 128 : index
    %70 = vector.load %arg22[%c0_93, %c128_94] : memref<256x1152xf32, #tpu.memory_space<vmem>>, vector<64x32xf32>
    tpu.vector_store %arg22[%c0_93, %c128_94], %69 {strides = array<i32>} : memref<256x1152xf32, #tpu.memory_space<vmem>>, vector<64x32xf32>,
    %c1_95 = arith.constant 1 : index
    %c2_96 = arith.constant 2 : index
    %c0_97 = arith.constant 0 : index
    %71 = vector.load %arg18[%c1_95, %c2_96, %c0_97] : memref<10x10x32xf32, #tpu.memory_space<vmem>>, vector<8x8x32xf32>
    %72 = vector.shape_cast %71 : vector<8x8x32xf32> to vector<64x32xf32>
    %c0_98 = arith.constant 0 : index
    %c160_99 = arith.constant 160 : index
    %73 = vector.load %arg22[%c0_98, %c160_99] : memref<256x1152xf32, #tpu.memory_space<vmem>>, vector<64x32xf32>
    tpu.vector_store %arg22[%c0_98, %c160_99], %72 {strides = array<i32>} : memref<256x1152xf32, #tpu.memory_space<vmem>>, vector<64x32xf32>,
    %c2_100 = arith.constant 2 : index
    %c0_101 = arith.constant 0 : index
    %c0_102 = arith.constant 0 : index
    %74 = vector.load %arg18[%c2_100, %c0_101, %c0_102] : memref<10x10x32xf32, #tpu.memory_space<vmem>>, vector<8x8x32xf32>
    %75 = vector.shape_cast %74 : vector<8x8x32xf32> to vector<64x32xf32>
    %c0_103 = arith.constant 0 : index
    %c192_104 = arith.constant 192 : index
    %76 = vector.load %arg22[%c0_103, %c192_104] : memref<256x1152xf32, #tpu.memory_space<vmem>>, vector<64x32xf32>
    tpu.vector_store %arg22[%c0_103, %c192_104], %75 {strides = array<i32>} : memref<256x1152xf32, #tpu.memory_space<vmem>>, vector<64x32xf32>,
    %c2_105 = arith.constant 2 : index
    %c1_106 = arith.constant 1 : index
    %c0_107 = arith.constant 0 : index
    %77 = vector.load %arg18[%c2_105, %c1_106, %c0_107] : memref<10x10x32xf32, #tpu.memory_space<vmem>>, vector<8x8x32xf32>
    %78 = vector.shape_cast %77 : vector<8x8x32xf32> to vector<64x32xf32>
    %c0_108 = arith.constant 0 : index
    %c224_109 = arith.constant 224 : index
    %79 = vector.load %arg22[%c0_108, %c224_109] : memref<256x1152xf32, #tpu.memory_space<vmem>>, vector<64x32xf32>
    tpu.vector_store %arg22[%c0_108, %c224_109], %78 {strides = array<i32>} : memref<256x1152xf32, #tpu.memory_space<vmem>>, vector<64x32xf32>,
    %c2_110 = arith.constant 2 : index
    %c2_111 = arith.constant 2 : index
    %c0_112 = arith.constant 0 : index
    %80 = vector.load %arg18[%c2_110, %c2_111, %c0_112] : memref<10x10x32xf32, #tpu.memory_space<vmem>>, vector<8x8x32xf32>
    %81 = vector.shape_cast %80 : vector<8x8x32xf32> to vector<64x32xf32>
    %c0_113 = arith.constant 0 : index
    %c256_114 = arith.constant 256 : index
    %82 = vector.load %arg22[%c0_113, %c256_114] : memref<256x1152xf32, #tpu.memory_space<vmem>>, vector<64x32xf32>
    tpu.vector_store %arg22[%c0_113, %c256_114], %81 {strides = array<i32>} : memref<256x1152xf32, #tpu.memory_space<vmem>>, vector<64x32xf32>,
    %c0_115 = arith.constant 0 : index
    %c0_116 = arith.constant 0 : index
    %83 = vector.load %arg22[%c0_115, %c0_116] : memref<256x1152xf32, #tpu.memory_space<vmem>>, vector<64x288xf32>
    %c0_117 = arith.constant 0 : index
    %c0_118 = arith.constant 0 : index
    %84 = vector.load %arg6[%c0_117, %c0_118] : memref<288x64xf32, #tpu.memory_space<vmem>>, vector<288x64xf32>
    %cst_119 = arith.constant dense<0.000000e+00> : vector<64x64xf32>
    %85 = tpu.matmul %83, %84, %cst_119 {dimension_numbers = #tpu.dot_dimension_numbers<[1], [0], [0], [1], [0, 0, 1, 1], [], []>} : vector<64x288xf32>, vector<288x64xf32>, vector<64x64xf32> -> vector<64x64xf32>
    %c0_120 = arith.constant 0 : index
    %c0_121 = arith.constant 0 : index
    %86 = vector.load %arg7[%c0_120, %c0_121] : memref<1x64xf32, #tpu.memory_space<vmem>>, vector<1x64xf32>
    %87 = vector.broadcast %86 : vector<1x64xf32> to vector<64x64xf32>
    %88 = arith.addf %85, %87 : vector<64x64xf32>
    %cst_122 = arith.constant 0.000000e+00 : f32
    %89 = vector.broadcast %cst_122 : f32 to vector<64x64xf32>
    %90 = arith.maximumf %88, %89 : vector<64x64xf32>
    %91 = vector.shape_cast %90 : vector<64x64xf32> to vector<8x8x64xf32>
    %cst_123 = arith.constant 0.000000e+00 : f32
    %92 = vector.broadcast %cst_123 : f32 to vector<10x10x64xf32>
    %c0_124 = arith.constant 0 : index
    %c0_125 = arith.constant 0 : index
    %c0_126 = arith.constant 0 : index
    %93 = vector.load %arg19[%c0_124, %c0_125, %c0_126] : memref<10x10x64xf32, #tpu.memory_space<vmem>>, vector<10x10x64xf32>
    tpu.vector_store %arg19[%c0_124, %c0_125, %c0_126], %92 {strides = array<i32>} : memref<10x10x64xf32, #tpu.memory_space<vmem>>, vector<10x10x64xf32>,
    %c1_127 = arith.constant 1 : index
    %c1_128 = arith.constant 1 : index
    %c0_129 = arith.constant 0 : index
    %94 = vector.load %arg19[%c1_127, %c1_128, %c0_129] : memref<10x10x64xf32, #tpu.memory_space<vmem>>, vector<8x8x64xf32>
    tpu.vector_store %arg19[%c1_127, %c1_128, %c0_129], %91 {strides = array<i32>} : memref<10x10x64xf32, #tpu.memory_space<vmem>>, vector<8x8x64xf32>,
    %c0_130 = arith.constant 0 : index
    %c0_131 = arith.constant 0 : index
    %c0_132 = arith.constant 0 : index
    %95 = vector.load %arg19[%c0_130, %c0_131, %c0_132] : memref<10x10x64xf32, #tpu.memory_space<vmem>>, vector<8x8x64xf32>
    %96 = vector.shape_cast %95 : vector<8x8x64xf32> to vector<64x64xf32>
    %c0_133 = arith.constant 0 : index
    %c0_134 = arith.constant 0 : index
    %97 = vector.load %arg22[%c0_133, %c0_134] : memref<256x1152xf32, #tpu.memory_space<vmem>>, vector<64x64xf32>
    tpu.vector_store %arg22[%c0_133, %c0_134], %96 {strides = array<i32>} : memref<256x1152xf32, #tpu.memory_space<vmem>>, vector<64x64xf32>,
    %c0_135 = arith.constant 0 : index
    %c1_136 = arith.constant 1 : index
    %c0_137 = arith.constant 0 : index
    %98 = vector.load %arg19[%c0_135, %c1_136, %c0_137] : memref<10x10x64xf32, #tpu.memory_space<vmem>>, vector<8x8x64xf32>
    %99 = vector.shape_cast %98 : vector<8x8x64xf32> to vector<64x64xf32>
    %c0_138 = arith.constant 0 : index
    %c64_139 = arith.constant 64 : index
    %100 = vector.load %arg22[%c0_138, %c64_139] : memref<256x1152xf32, #tpu.memory_space<vmem>>, vector<64x64xf32>
    tpu.vector_store %arg22[%c0_138, %c64_139], %99 {strides = array<i32>} : memref<256x1152xf32, #tpu.memory_space<vmem>>, vector<64x64xf32>,
    %c0_140 = arith.constant 0 : index
    %c2_141 = arith.constant 2 : index
    %c0_142 = arith.constant 0 : index
    %101 = vector.load %arg19[%c0_140, %c2_141, %c0_142] : memref<10x10x64xf32, #tpu.memory_space<vmem>>, vector<8x8x64xf32>
    %102 = vector.shape_cast %101 : vector<8x8x64xf32> to vector<64x64xf32>
    %c0_143 = arith.constant 0 : index
    %c128_144 = arith.constant 128 : index
    %103 = vector.load %arg22[%c0_143, %c128_144] : memref<256x1152xf32, #tpu.memory_space<vmem>>, vector<64x64xf32>
    tpu.vector_store %arg22[%c0_143, %c128_144], %102 {strides = array<i32>} : memref<256x1152xf32, #tpu.memory_space<vmem>>, vector<64x64xf32>,
    %c1_145 = arith.constant 1 : index
    %c0_146 = arith.constant 0 : index
    %c0_147 = arith.constant 0 : index
    %104 = vector.load %arg19[%c1_145, %c0_146, %c0_147] : memref<10x10x64xf32, #tpu.memory_space<vmem>>, vector<8x8x64xf32>
    %105 = vector.shape_cast %104 : vector<8x8x64xf32> to vector<64x64xf32>
    %c0_148 = arith.constant 0 : index
    %c192_149 = arith.constant 192 : index
    %106 = vector.load %arg22[%c0_148, %c192_149] : memref<256x1152xf32, #tpu.memory_space<vmem>>, vector<64x64xf32>
    tpu.vector_store %arg22[%c0_148, %c192_149], %105 {strides = array<i32>} : memref<256x1152xf32, #tpu.memory_space<vmem>>, vector<64x64xf32>,
    %c1_150 = arith.constant 1 : index
    %c1_151 = arith.constant 1 : index
    %c0_152 = arith.constant 0 : index
    %107 = vector.load %arg19[%c1_150, %c1_151, %c0_152] : memref<10x10x64xf32, #tpu.memory_space<vmem>>, vector<8x8x64xf32>
    %108 = vector.shape_cast %107 : vector<8x8x64xf32> to vector<64x64xf32>
    %c0_153 = arith.constant 0 : index
    %c256_154 = arith.constant 256 : index
    %109 = vector.load %arg22[%c0_153, %c256_154] : memref<256x1152xf32, #tpu.memory_space<vmem>>, vector<64x64xf32>
    tpu.vector_store %arg22[%c0_153, %c256_154], %108 {strides = array<i32>} : memref<256x1152xf32, #tpu.memory_space<vmem>>, vector<64x64xf32>,
    %c1_155 = arith.constant 1 : index
    %c2_156 = arith.constant 2 : index
    %c0_157 = arith.constant 0 : index
    %110 = vector.load %arg19[%c1_155, %c2_156, %c0_157] : memref<10x10x64xf32, #tpu.memory_space<vmem>>, vector<8x8x64xf32>
    %111 = vector.shape_cast %110 : vector<8x8x64xf32> to vector<64x64xf32>
    %c0_158 = arith.constant 0 : index
    %c320 = arith.constant 320 : index
    %112 = vector.load %arg22[%c0_158, %c320] : memref<256x1152xf32, #tpu.memory_space<vmem>>, vector<64x64xf32>
    tpu.vector_store %arg22[%c0_158, %c320], %111 {strides = array<i32>} : memref<256x1152xf32, #tpu.memory_space<vmem>>, vector<64x64xf32>,
    %c2_159 = arith.constant 2 : index
    %c0_160 = arith.constant 0 : index
    %c0_161 = arith.constant 0 : index
    %113 = vector.load %arg19[%c2_159, %c0_160, %c0_161] : memref<10x10x64xf32, #tpu.memory_space<vmem>>, vector<8x8x64xf32>
    %114 = vector.shape_cast %113 : vector<8x8x64xf32> to vector<64x64xf32>
    %c0_162 = arith.constant 0 : index
    %c384 = arith.constant 384 : index
    %115 = vector.load %arg22[%c0_162, %c384] : memref<256x1152xf32, #tpu.memory_space<vmem>>, vector<64x64xf32>
    tpu.vector_store %arg22[%c0_162, %c384], %114 {strides = array<i32>} : memref<256x1152xf32, #tpu.memory_space<vmem>>, vector<64x64xf32>,
    %c2_163 = arith.constant 2 : index
    %c1_164 = arith.constant 1 : index
    %c0_165 = arith.constant 0 : index
    %116 = vector.load %arg19[%c2_163, %c1_164, %c0_165] : memref<10x10x64xf32, #tpu.memory_space<vmem>>, vector<8x8x64xf32>
    %117 = vector.shape_cast %116 : vector<8x8x64xf32> to vector<64x64xf32>
    %c0_166 = arith.constant 0 : index
    %c448 = arith.constant 448 : index
    %118 = vector.load %arg22[%c0_166, %c448] : memref<256x1152xf32, #tpu.memory_space<vmem>>, vector<64x64xf32>
    tpu.vector_store %arg22[%c0_166, %c448], %117 {strides = array<i32>} : memref<256x1152xf32, #tpu.memory_space<vmem>>, vector<64x64xf32>,
    %c2_167 = arith.constant 2 : index
    %c2_168 = arith.constant 2 : index
    %c0_169 = arith.constant 0 : index
    %119 = vector.load %arg19[%c2_167, %c2_168, %c0_169] : memref<10x10x64xf32, #tpu.memory_space<vmem>>, vector<8x8x64xf32>
    %120 = vector.shape_cast %119 : vector<8x8x64xf32> to vector<64x64xf32>
    %c0_170 = arith.constant 0 : index
    %c512 = arith.constant 512 : index
    %121 = vector.load %arg22[%c0_170, %c512] : memref<256x1152xf32, #tpu.memory_space<vmem>>, vector<64x64xf32>
    tpu.vector_store %arg22[%c0_170, %c512], %120 {strides = array<i32>} : memref<256x1152xf32, #tpu.memory_space<vmem>>, vector<64x64xf32>,
    %c0_171 = arith.constant 0 : index
    %c0_172 = arith.constant 0 : index
    %122 = vector.load %arg22[%c0_171, %c0_172] : memref<256x1152xf32, #tpu.memory_space<vmem>>, vector<64x576xf32>
    %c0_173 = arith.constant 0 : index
    %c0_174 = arith.constant 0 : index
    %123 = vector.load %arg8[%c0_173, %c0_174] : memref<576x64xf32, #tpu.memory_space<vmem>>, vector<576x64xf32>
    %cst_175 = arith.constant dense<0.000000e+00> : vector<64x64xf32>
    %124 = tpu.matmul %122, %123, %cst_175 {dimension_numbers = #tpu.dot_dimension_numbers<[1], [0], [0], [1], [0, 0, 1, 1], [], []>} : vector<64x576xf32>, vector<576x64xf32>, vector<64x64xf32> -> vector<64x64xf32>
    %c0_176 = arith.constant 0 : index
    %c0_177 = arith.constant 0 : index
    %125 = vector.load %arg9[%c0_176, %c0_177] : memref<1x64xf32, #tpu.memory_space<vmem>>, vector<1x64xf32>
    %126 = vector.broadcast %125 : vector<1x64xf32> to vector<64x64xf32>
    %127 = arith.addf %124, %126 : vector<64x64xf32>
    %cst_178 = arith.constant 0.000000e+00 : f32
    %128 = vector.broadcast %cst_178 : f32 to vector<64x64xf32>
    %129 = arith.maximumf %127, %128 : vector<64x64xf32>
    %130 = vector.shape_cast %129 : vector<64x64xf32> to vector<1x8x8x64xf32>
    %c0_179 = arith.constant 0 : index
    %c0_180 = arith.constant 0 : index
    %c0_181 = arith.constant 0 : index
    %c0_182 = arith.constant 0 : index
    %131 = vector.load %arg15[%c0_179, %c0_180, %c0_181, %c0_182] : memref<1x8x8x64xf32, #tpu.memory_space<vmem>>, vector<1x8x8x64xf32>
    tpu.vector_store %arg15[%c0_179, %c0_180, %c0_181, %c0_182], %130 {strides = array<i32>} : memref<1x8x8x64xf32, #tpu.memory_space<vmem>>, vector<1x8x8x64xf32>,
    %132 = vector.shape_cast %129 : vector<64x64xf32> to vector<4x2x4x2x64xf32>
    %cst_183 = arith.constant dense<0xFF800000> : vector<4x2x4x64xf32>
    %133 = vector.multi_reduction <maximumf>, %132, %cst_183 [3] : vector<4x2x4x2x64xf32> to vector<4x2x4x64xf32>
    %cst_184 = arith.constant dense<0xFF800000> : vector<4x4x64xf32>
    %134 = vector.multi_reduction <maximumf>, %133, %cst_184 [1] : vector<4x2x4x64xf32> to vector<4x4x64xf32>
    %cst_185 = arith.constant 0.000000e+00 : f32
    %135 = vector.broadcast %cst_185 : f32 to vector<6x6x64xf32>
    %c0_186 = arith.constant 0 : index
    %c0_187 = arith.constant 0 : index
    %c0_188 = arith.constant 0 : index
    %136 = vector.load %arg20[%c0_186, %c0_187, %c0_188] : memref<6x6x64xf32, #tpu.memory_space<vmem>>, vector<6x6x64xf32>
    tpu.vector_store %arg20[%c0_186, %c0_187, %c0_188], %135 {strides = array<i32>} : memref<6x6x64xf32, #tpu.memory_space<vmem>>, vector<6x6x64xf32>,
    %c1_189 = arith.constant 1 : index
    %c1_190 = arith.constant 1 : index
    %c0_191 = arith.constant 0 : index
    %137 = vector.load %arg20[%c1_189, %c1_190, %c0_191] : memref<6x6x64xf32, #tpu.memory_space<vmem>>, vector<4x4x64xf32>
    tpu.vector_store %arg20[%c1_189, %c1_190, %c0_191], %134 {strides = array<i32>} : memref<6x6x64xf32, #tpu.memory_space<vmem>>, vector<4x4x64xf32>,
    %c0_192 = arith.constant 0 : index
    %c0_193 = arith.constant 0 : index
    %c0_194 = arith.constant 0 : index
    %138 = vector.load %arg20[%c0_192, %c0_193, %c0_194] : memref<6x6x64xf32, #tpu.memory_space<vmem>>, vector<4x4x64xf32>
    %139 = vector.shape_cast %138 : vector<4x4x64xf32> to vector<16x64xf32>
    %c0_195 = arith.constant 0 : index
    %c0_196 = arith.constant 0 : index
    %140 = vector.load %arg22[%c0_195, %c0_196] : memref<256x1152xf32, #tpu.memory_space<vmem>>, vector<16x64xf32>
    tpu.vector_store %arg22[%c0_195, %c0_196], %139 {strides = array<i32>} : memref<256x1152xf32, #tpu.memory_space<vmem>>, vector<16x64xf32>,
    %c0_197 = arith.constant 0 : index
    %c1_198 = arith.constant 1 : index
    %c0_199 = arith.constant 0 : index
    %141 = vector.load %arg20[%c0_197, %c1_198, %c0_199] : memref<6x6x64xf32, #tpu.memory_space<vmem>>, vector<4x4x64xf32>
    %142 = vector.shape_cast %141 : vector<4x4x64xf32> to vector<16x64xf32>
    %c0_200 = arith.constant 0 : index
    %c64_201 = arith.constant 64 : index
    %143 = vector.load %arg22[%c0_200, %c64_201] : memref<256x1152xf32, #tpu.memory_space<vmem>>, vector<16x64xf32>
    tpu.vector_store %arg22[%c0_200, %c64_201], %142 {strides = array<i32>} : memref<256x1152xf32, #tpu.memory_space<vmem>>, vector<16x64xf32>,
    %c0_202 = arith.constant 0 : index
    %c2_203 = arith.constant 2 : index
    %c0_204 = arith.constant 0 : index
    %144 = vector.load %arg20[%c0_202, %c2_203, %c0_204] : memref<6x6x64xf32, #tpu.memory_space<vmem>>, vector<4x4x64xf32>
    %145 = vector.shape_cast %144 : vector<4x4x64xf32> to vector<16x64xf32>
    %c0_205 = arith.constant 0 : index
    %c128_206 = arith.constant 128 : index
    %146 = vector.load %arg22[%c0_205, %c128_206] : memref<256x1152xf32, #tpu.memory_space<vmem>>, vector<16x64xf32>
    tpu.vector_store %arg22[%c0_205, %c128_206], %145 {strides = array<i32>} : memref<256x1152xf32, #tpu.memory_space<vmem>>, vector<16x64xf32>,
    %c1_207 = arith.constant 1 : index
    %c0_208 = arith.constant 0 : index
    %c0_209 = arith.constant 0 : index
    %147 = vector.load %arg20[%c1_207, %c0_208, %c0_209] : memref<6x6x64xf32, #tpu.memory_space<vmem>>, vector<4x4x64xf32>
    %148 = vector.shape_cast %147 : vector<4x4x64xf32> to vector<16x64xf32>
    %c0_210 = arith.constant 0 : index
    %c192_211 = arith.constant 192 : index
    %149 = vector.load %arg22[%c0_210, %c192_211] : memref<256x1152xf32, #tpu.memory_space<vmem>>, vector<16x64xf32>
    tpu.vector_store %arg22[%c0_210, %c192_211], %148 {strides = array<i32>} : memref<256x1152xf32, #tpu.memory_space<vmem>>, vector<16x64xf32>,
    %c1_212 = arith.constant 1 : index
    %c1_213 = arith.constant 1 : index
    %c0_214 = arith.constant 0 : index
    %150 = vector.load %arg20[%c1_212, %c1_213, %c0_214] : memref<6x6x64xf32, #tpu.memory_space<vmem>>, vector<4x4x64xf32>
    %151 = vector.shape_cast %150 : vector<4x4x64xf32> to vector<16x64xf32>
    %c0_215 = arith.constant 0 : index
    %c256_216 = arith.constant 256 : index
    %152 = vector.load %arg22[%c0_215, %c256_216] : memref<256x1152xf32, #tpu.memory_space<vmem>>, vector<16x64xf32>
    tpu.vector_store %arg22[%c0_215, %c256_216], %151 {strides = array<i32>} : memref<256x1152xf32, #tpu.memory_space<vmem>>, vector<16x64xf32>,
    %c1_217 = arith.constant 1 : index
    %c2_218 = arith.constant 2 : index
    %c0_219 = arith.constant 0 : index
    %153 = vector.load %arg20[%c1_217, %c2_218, %c0_219] : memref<6x6x64xf32, #tpu.memory_space<vmem>>, vector<4x4x64xf32>
    %154 = vector.shape_cast %153 : vector<4x4x64xf32> to vector<16x64xf32>
    %c0_220 = arith.constant 0 : index
    %c320_221 = arith.constant 320 : index
    %155 = vector.load %arg22[%c0_220, %c320_221] : memref<256x1152xf32, #tpu.memory_space<vmem>>, vector<16x64xf32>
    tpu.vector_store %arg22[%c0_220, %c320_221], %154 {strides = array<i32>} : memref<256x1152xf32, #tpu.memory_space<vmem>>, vector<16x64xf32>,
    %c2_222 = arith.constant 2 : index
    %c0_223 = arith.constant 0 : index
    %c0_224 = arith.constant 0 : index
    %156 = vector.load %arg20[%c2_222, %c0_223, %c0_224] : memref<6x6x64xf32, #tpu.memory_space<vmem>>, vector<4x4x64xf32>
    %157 = vector.shape_cast %156 : vector<4x4x64xf32> to vector<16x64xf32>
    %c0_225 = arith.constant 0 : index
    %c384_226 = arith.constant 384 : index
    %158 = vector.load %arg22[%c0_225, %c384_226] : memref<256x1152xf32, #tpu.memory_space<vmem>>, vector<16x64xf32>
    tpu.vector_store %arg22[%c0_225, %c384_226], %157 {strides = array<i32>} : memref<256x1152xf32, #tpu.memory_space<vmem>>, vector<16x64xf32>,
    %c2_227 = arith.constant 2 : index
    %c1_228 = arith.constant 1 : index
    %c0_229 = arith.constant 0 : index
    %159 = vector.load %arg20[%c2_227, %c1_228, %c0_229] : memref<6x6x64xf32, #tpu.memory_space<vmem>>, vector<4x4x64xf32>
    %160 = vector.shape_cast %159 : vector<4x4x64xf32> to vector<16x64xf32>
    %c0_230 = arith.constant 0 : index
    %c448_231 = arith.constant 448 : index
    %161 = vector.load %arg22[%c0_230, %c448_231] : memref<256x1152xf32, #tpu.memory_space<vmem>>, vector<16x64xf32>
    tpu.vector_store %arg22[%c0_230, %c448_231], %160 {strides = array<i32>} : memref<256x1152xf32, #tpu.memory_space<vmem>>, vector<16x64xf32>,
    %c2_232 = arith.constant 2 : index
    %c2_233 = arith.constant 2 : index
    %c0_234 = arith.constant 0 : index
    %162 = vector.load %arg20[%c2_232, %c2_233, %c0_234] : memref<6x6x64xf32, #tpu.memory_space<vmem>>, vector<4x4x64xf32>
    %163 = vector.shape_cast %162 : vector<4x4x64xf32> to vector<16x64xf32>
    %c0_235 = arith.constant 0 : index
    %c512_236 = arith.constant 512 : index
    %164 = vector.load %arg22[%c0_235, %c512_236] : memref<256x1152xf32, #tpu.memory_space<vmem>>, vector<16x64xf32>
    tpu.vector_store %arg22[%c0_235, %c512_236], %163 {strides = array<i32>} : memref<256x1152xf32, #tpu.memory_space<vmem>>, vector<16x64xf32>,
    %c0_237 = arith.constant 0 : index
    %c0_238 = arith.constant 0 : index
    %165 = vector.load %arg22[%c0_237, %c0_238] : memref<256x1152xf32, #tpu.memory_space<vmem>>, vector<16x576xf32>
    %c0_239 = arith.constant 0 : index
    %c0_240 = arith.constant 0 : index
    %166 = vector.load %arg10[%c0_239, %c0_240] : memref<576x128xf32, #tpu.memory_space<vmem>>, vector<576x128xf32>
    %cst_241 = arith.constant dense<0.000000e+00> : vector<16x128xf32>
    %167 = tpu.matmul %165, %166, %cst_241 {dimension_numbers = #tpu.dot_dimension_numbers<[1], [0], [0], [1], [0, 0, 1, 1], [], []>} : vector<16x576xf32>, vector<576x128xf32>, vector<16x128xf32> -> vector<16x128xf32>
    %c0_242 = arith.constant 0 : index
    %c0_243 = arith.constant 0 : index
    %168 = vector.load %arg11[%c0_242, %c0_243] : memref<1x128xf32, #tpu.memory_space<vmem>>, vector<1x128xf32>
    %169 = vector.broadcast %168 : vector<1x128xf32> to vector<16x128xf32>
    %170 = arith.addf %167, %169 : vector<16x128xf32>
    %cst_244 = arith.constant 0.000000e+00 : f32
    %171 = vector.broadcast %cst_244 : f32 to vector<16x128xf32>
    %172 = arith.maximumf %170, %171 : vector<16x128xf32>
    %173 = vector.shape_cast %172 : vector<16x128xf32> to vector<4x4x128xf32>
    %cst_245 = arith.constant 0.000000e+00 : f32
    %174 = vector.broadcast %cst_245 : f32 to vector<6x6x128xf32>
    %c0_246 = arith.constant 0 : index
    %c0_247 = arith.constant 0 : index
    %c0_248 = arith.constant 0 : index
    %175 = vector.load %arg21[%c0_246, %c0_247, %c0_248] : memref<6x6x128xf32, #tpu.memory_space<vmem>>, vector<6x6x128xf32>
    tpu.vector_store %arg21[%c0_246, %c0_247, %c0_248], %174 {strides = array<i32>} : memref<6x6x128xf32, #tpu.memory_space<vmem>>, vector<6x6x128xf32>,
    %c1_249 = arith.constant 1 : index
    %c1_250 = arith.constant 1 : index
    %c0_251 = arith.constant 0 : index
    %176 = vector.load %arg21[%c1_249, %c1_250, %c0_251] : memref<6x6x128xf32, #tpu.memory_space<vmem>>, vector<4x4x128xf32>
    tpu.vector_store %arg21[%c1_249, %c1_250, %c0_251], %173 {strides = array<i32>} : memref<6x6x128xf32, #tpu.memory_space<vmem>>, vector<4x4x128xf32>,
    %c0_252 = arith.constant 0 : index
    %c0_253 = arith.constant 0 : index
    %c0_254 = arith.constant 0 : index
    %177 = vector.load %arg21[%c0_252, %c0_253, %c0_254] : memref<6x6x128xf32, #tpu.memory_space<vmem>>, vector<4x4x128xf32>
    %178 = vector.shape_cast %177 : vector<4x4x128xf32> to vector<16x128xf32>
    %c0_255 = arith.constant 0 : index
    %c0_256 = arith.constant 0 : index
    %179 = vector.load %arg22[%c0_255, %c0_256] : memref<256x1152xf32, #tpu.memory_space<vmem>>, vector<16x128xf32>
    tpu.vector_store %arg22[%c0_255, %c0_256], %178 {strides = array<i32>} : memref<256x1152xf32, #tpu.memory_space<vmem>>, vector<16x128xf32>,
    %c0_257 = arith.constant 0 : index
    %c1_258 = arith.constant 1 : index
    %c0_259 = arith.constant 0 : index
    %180 = vector.load %arg21[%c0_257, %c1_258, %c0_259] : memref<6x6x128xf32, #tpu.memory_space<vmem>>, vector<4x4x128xf32>
    %181 = vector.shape_cast %180 : vector<4x4x128xf32> to vector<16x128xf32>
    %c0_260 = arith.constant 0 : index
    %c128_261 = arith.constant 128 : index
    %182 = vector.load %arg22[%c0_260, %c128_261] : memref<256x1152xf32, #tpu.memory_space<vmem>>, vector<16x128xf32>
    tpu.vector_store %arg22[%c0_260, %c128_261], %181 {strides = array<i32>} : memref<256x1152xf32, #tpu.memory_space<vmem>>, vector<16x128xf32>,
    %c0_262 = arith.constant 0 : index
    %c2_263 = arith.constant 2 : index
    %c0_264 = arith.constant 0 : index
    %183 = vector.load %arg21[%c0_262, %c2_263, %c0_264] : memref<6x6x128xf32, #tpu.memory_space<vmem>>, vector<4x4x128xf32>
    %184 = vector.shape_cast %183 : vector<4x4x128xf32> to vector<16x128xf32>
    %c0_265 = arith.constant 0 : index
    %c256_266 = arith.constant 256 : index
    %185 = vector.load %arg22[%c0_265, %c256_266] : memref<256x1152xf32, #tpu.memory_space<vmem>>, vector<16x128xf32>
    tpu.vector_store %arg22[%c0_265, %c256_266], %184 {strides = array<i32>} : memref<256x1152xf32, #tpu.memory_space<vmem>>, vector<16x128xf32>,
    %c1_267 = arith.constant 1 : index
    %c0_268 = arith.constant 0 : index
    %c0_269 = arith.constant 0 : index
    %186 = vector.load %arg21[%c1_267, %c0_268, %c0_269] : memref<6x6x128xf32, #tpu.memory_space<vmem>>, vector<4x4x128xf32>
    %187 = vector.shape_cast %186 : vector<4x4x128xf32> to vector<16x128xf32>
    %c0_270 = arith.constant 0 : index
    %c384_271 = arith.constant 384 : index
    %188 = vector.load %arg22[%c0_270, %c384_271] : memref<256x1152xf32, #tpu.memory_space<vmem>>, vector<16x128xf32>
    tpu.vector_store %arg22[%c0_270, %c384_271], %187 {strides = array<i32>} : memref<256x1152xf32, #tpu.memory_space<vmem>>, vector<16x128xf32>,
    %c1_272 = arith.constant 1 : index
    %c1_273 = arith.constant 1 : index
    %c0_274 = arith.constant 0 : index
    %189 = vector.load %arg21[%c1_272, %c1_273, %c0_274] : memref<6x6x128xf32, #tpu.memory_space<vmem>>, vector<4x4x128xf32>
    %190 = vector.shape_cast %189 : vector<4x4x128xf32> to vector<16x128xf32>
    %c0_275 = arith.constant 0 : index
    %c512_276 = arith.constant 512 : index
    %191 = vector.load %arg22[%c0_275, %c512_276] : memref<256x1152xf32, #tpu.memory_space<vmem>>, vector<16x128xf32>
    tpu.vector_store %arg22[%c0_275, %c512_276], %190 {strides = array<i32>} : memref<256x1152xf32, #tpu.memory_space<vmem>>, vector<16x128xf32>,
    %c1_277 = arith.constant 1 : index
    %c2_278 = arith.constant 2 : index
    %c0_279 = arith.constant 0 : index
    %192 = vector.load %arg21[%c1_277, %c2_278, %c0_279] : memref<6x6x128xf32, #tpu.memory_space<vmem>>, vector<4x4x128xf32>
    %193 = vector.shape_cast %192 : vector<4x4x128xf32> to vector<16x128xf32>
    %c0_280 = arith.constant 0 : index
    %c640 = arith.constant 640 : index
    %194 = vector.load %arg22[%c0_280, %c640] : memref<256x1152xf32, #tpu.memory_space<vmem>>, vector<16x128xf32>
    tpu.vector_store %arg22[%c0_280, %c640], %193 {strides = array<i32>} : memref<256x1152xf32, #tpu.memory_space<vmem>>, vector<16x128xf32>,
    %c2_281 = arith.constant 2 : index
    %c0_282 = arith.constant 0 : index
    %c0_283 = arith.constant 0 : index
    %195 = vector.load %arg21[%c2_281, %c0_282, %c0_283] : memref<6x6x128xf32, #tpu.memory_space<vmem>>, vector<4x4x128xf32>
    %196 = vector.shape_cast %195 : vector<4x4x128xf32> to vector<16x128xf32>
    %c0_284 = arith.constant 0 : index
    %c768 = arith.constant 768 : index
    %197 = vector.load %arg22[%c0_284, %c768] : memref<256x1152xf32, #tpu.memory_space<vmem>>, vector<16x128xf32>
    tpu.vector_store %arg22[%c0_284, %c768], %196 {strides = array<i32>} : memref<256x1152xf32, #tpu.memory_space<vmem>>, vector<16x128xf32>,
    %c2_285 = arith.constant 2 : index
    %c1_286 = arith.constant 1 : index
    %c0_287 = arith.constant 0 : index
    %198 = vector.load %arg21[%c2_285, %c1_286, %c0_287] : memref<6x6x128xf32, #tpu.memory_space<vmem>>, vector<4x4x128xf32>
    %199 = vector.shape_cast %198 : vector<4x4x128xf32> to vector<16x128xf32>
    %c0_288 = arith.constant 0 : index
    %c896 = arith.constant 896 : index
    %200 = vector.load %arg22[%c0_288, %c896] : memref<256x1152xf32, #tpu.memory_space<vmem>>, vector<16x128xf32>
    tpu.vector_store %arg22[%c0_288, %c896], %199 {strides = array<i32>} : memref<256x1152xf32, #tpu.memory_space<vmem>>, vector<16x128xf32>,
    %c2_289 = arith.constant 2 : index
    %c2_290 = arith.constant 2 : index
    %c0_291 = arith.constant 0 : index
    %201 = vector.load %arg21[%c2_289, %c2_290, %c0_291] : memref<6x6x128xf32, #tpu.memory_space<vmem>>, vector<4x4x128xf32>
    %202 = vector.shape_cast %201 : vector<4x4x128xf32> to vector<16x128xf32>
    %c0_292 = arith.constant 0 : index
    %c1024 = arith.constant 1024 : index
    %203 = vector.load %arg22[%c0_292, %c1024] : memref<256x1152xf32, #tpu.memory_space<vmem>>, vector<16x128xf32>
    tpu.vector_store %arg22[%c0_292, %c1024], %202 {strides = array<i32>} : memref<256x1152xf32, #tpu.memory_space<vmem>>, vector<16x128xf32>,
    %c0_293 = arith.constant 0 : index
    %c0_294 = arith.constant 0 : index
    %204 = vector.load %arg22[%c0_293, %c0_294] : memref<256x1152xf32, #tpu.memory_space<vmem>>, vector<16x1152xf32>
    %c0_295 = arith.constant 0 : index
    %c0_296 = arith.constant 0 : index
    %205 = vector.load %arg12[%c0_295, %c0_296] : memref<1152x128xf32, #tpu.memory_space<vmem>>, vector<1152x128xf32>
    %cst_297 = arith.constant dense<0.000000e+00> : vector<16x128xf32>
    %206 = tpu.matmul %204, %205, %cst_297 {dimension_numbers = #tpu.dot_dimension_numbers<[1], [0], [0], [1], [0, 0, 1, 1], [], []>} : vector<16x1152xf32>, vector<1152x128xf32>, vector<16x128xf32> -> vector<16x128xf32>
    %c0_298 = arith.constant 0 : index
    %c0_299 = arith.constant 0 : index
    %207 = vector.load %arg13[%c0_298, %c0_299] : memref<1x128xf32, #tpu.memory_space<vmem>>, vector<1x128xf32>
    %208 = vector.broadcast %207 : vector<1x128xf32> to vector<16x128xf32>
    %209 = arith.addf %206, %208 : vector<16x128xf32>
    %cst_300 = arith.constant 0.000000e+00 : f32
    %210 = vector.broadcast %cst_300 : f32 to vector<16x128xf32>
    %211 = arith.maximumf %209, %210 : vector<16x128xf32>
    %212 = vector.shape_cast %211 : vector<16x128xf32> to vector<1x4x4x128xf32>
    %c0_301 = arith.constant 0 : index
    %c0_302 = arith.constant 0 : index
    %c0_303 = arith.constant 0 : index
    %c0_304 = arith.constant 0 : index
    %213 = vector.load %arg16[%c0_301, %c0_302, %c0_303, %c0_304] : memref<1x4x4x128xf32, #tpu.memory_space<vmem>>, vector<1x4x4x128xf32>
    tpu.vector_store %arg16[%c0_301, %c0_302, %c0_303, %c0_304], %212 {strides = array<i32>} : memref<1x4x4x128xf32, #tpu.memory_space<vmem>>, vector<1x4x4x128xf32>,
    return
  }
  func.func @transform_0(%arg0: i32) -> (i32, i32, i32) {
    %c0_i32 = arith.constant 0 : i32
    %c0_i32_0 = arith.constant 0 : i32
    %c0_i32_1 = arith.constant 0 : i32
    return %arg0, %c0_i32, %c0_i32_0 : i32, i32, i32
  }
  func.func @transform_1(%arg0: i32) -> (i32, i32) {
    %c0_i32 = arith.constant 0 : i32
    %c0_i32_0 = arith.constant 0 : i32
    %c0_i32_1 = arith.constant 0 : i32
    return %c0_i32, %c0_i32_0 : i32, i32
  }
  func.func @transform_2(%arg0: i32) -> (i32, i32) {
    %c0_i32 = arith.constant 0 : i32
    %c0_i32_0 = arith.constant 0 : i32
    %c0_i32_1 = arith.constant 0 : i32
    return %c0_i32, %c0_i32_0 : i32, i32
  }
  func.func @transform_3(%arg0: i32) -> (i32, i32) {
    %c0_i32 = arith.constant 0 : i32
    %c0_i32_0 = arith.constant 0 : i32
    %c0_i32_1 = arith.constant 0 : i32
    return %c0_i32, %c0_i32_0 : i32, i32
  }
  func.func @transform_4(%arg0: i32) -> (i32, i32) {
    %c0_i32 = arith.constant 0 : i32
    %c0_i32_0 = arith.constant 0 : i32
    %c0_i32_1 = arith.constant 0 : i32
    return %c0_i32, %c0_i32_0 : i32, i32
  }
  func.func @transform_5(%arg0: i32) -> (i32, i32) {
    %c0_i32 = arith.constant 0 : i32
    %c0_i32_0 = arith.constant 0 : i32
    %c0_i32_1 = arith.constant 0 : i32
    return %c0_i32, %c0_i32_0 : i32, i32
  }
  func.func @transform_6(%arg0: i32) -> (i32, i32) {
    %c0_i32 = arith.constant 0 : i32
    %c0_i32_0 = arith.constant 0 : i32
    %c0_i32_1 = arith.constant 0 : i32
    return %c0_i32, %c0_i32_0 : i32, i32
  }
  func.func @transform_7(%arg0: i32) -> (i32, i32) {
    %c0_i32 = arith.constant 0 : i32
    %c0_i32_0 = arith.constant 0 : i32
    %c0_i32_1 = arith.constant 0 : i32
    return %c0_i32, %c0_i32_0 : i32, i32
  }
  func.func @transform_8(%arg0: i32) -> (i32, i32) {
    %c0_i32 = arith.constant 0 : i32
    %c0_i32_0 = arith.constant 0 : i32
    %c0_i32_1 = arith.constant 0 : i32
    return %c0_i32, %c0_i32_0 : i32, i32
  }
  func.func @transform_9(%arg0: i32) -> (i32, i32) {
    %c0_i32 = arith.constant 0 : i32
    %c0_i32_0 = arith.constant 0 : i32
    %c0_i32_1 = arith.constant 0 : i32
    return %c0_i32, %c0_i32_0 : i32, i32
  }
  func.func @transform_10(%arg0: i32) -> (i32, i32) {
    %c0_i32 = arith.constant 0 : i32
    %c0_i32_0 = arith.constant 0 : i32
    %c0_i32_1 = arith.constant 0 : i32
    return %c0_i32, %c0_i32_0 : i32, i32
  }
  func.func @transform_11(%arg0: i32) -> (i32, i32) {
    %c0_i32 = arith.constant 0 : i32
    %c0_i32_0 = arith.constant 0 : i32
    %c0_i32_1 = arith.constant 0 : i32
    return %c0_i32, %c0_i32_0 : i32, i32
  }
  func.func @transform_12(%arg0: i32) -> (i32, i32) {
    %c0_i32 = arith.constant 0 : i32
    %c0_i32_0 = arith.constant 0 : i32
    %c0_i32_1 = arith.constant 0 : i32
    return %c0_i32, %c0_i32_0 : i32, i32
  }
  func.func @transform_13(%arg0: i32) -> (i32, i32, i32, i32) {
    %c0_i32 = arith.constant 0 : i32
    %c0_i32_0 = arith.constant 0 : i32
    %c0_i32_1 = arith.constant 0 : i32
    %c0_i32_2 = arith.constant 0 : i32
    return %arg0, %c0_i32, %c0_i32_0, %c0_i32_1 : i32, i32, i32, i32
  }
  func.func @transform_14(%arg0: i32) -> (i32, i32, i32, i32) {
    %c0_i32 = arith.constant 0 : i32
    %c0_i32_0 = arith.constant 0 : i32
    %c0_i32_1 = arith.constant 0 : i32
    %c0_i32_2 = arith.constant 0 : i32
    return %arg0, %c0_i32, %c0_i32_0, %c0_i32_1 : i32, i32, i32, i32
  }
  func.func @transform_15(%arg0: i32) -> (i32, i32, i32, i32) {
    %c0_i32 = arith.constant 0 : i32
    %c0_i32_0 = arith.constant 0 : i32
    %c0_i32_1 = arith.constant 0 : i32
    %c0_i32_2 = arith.constant 0 : i32
    return %arg0, %c0_i32, %c0_i32_0, %c0_i32_1 : i32, i32, i32, i32
  }
}

</mosaic_0001>

<llo_original>
// kernel: encoding_forward.1
$region0: #{encoding_forward.1}
  #allocation0 [shape = 'u32[]', space=smem, size = 0x4, offset = 0x4, fixed_abs, tag = 'smem constant byte address 0x4 - core index']
  #allocation1 [shape = 'u32[144,128]{1,0:T(1,128)}', space=vmem, size = 0x12000, scoped, tag = 'internal scratch']
  #allocation2 [shape = 'f32[18,18,32]{2,1,0:T(8,128)}', space=vmem, size = 0x36000, scoped, tag = 'scratch operand']
  #allocation3 [shape = 'f32[10,10,32]{2,1,0:T(8,128)}', space=vmem, size = 0x14000, scoped, tag = 'scratch operand']
  #allocation4 [shape = 'f32[10,10,64]{2,1,0:T(8,128)}', space=vmem, size = 0x14000, scoped, tag = 'scratch operand']
  #allocation5 [shape = 'f32[6,6,64]{2,1,0:T(8,128)}', space=vmem, size = 0x6000, scoped, tag = 'scratch operand']
  #allocation6 [shape = 'f32[6,6,128]{2,1,0:T(8,128)}', space=vmem, size = 0x6000, scoped, tag = 'scratch operand']
  #allocation7 [shape = 'f32[256,1152]{1,0:T(8,128)}', space=vmem, size = 0x120000, scoped, tag = 'scratch operand']
  %s0 = inlined_call_operand.vmem [shape: f32[2,256,128], index: 0, kind: input, shape index: {}]
  %s1 = inlined_call_operand.vmem [shape: f32[128,32], index: 1, kind: input, shape index: {}]
  %s2 = inlined_call_operand.vmem [shape: f32[1,32], index: 2, kind: input, shape index: {}]
  %s3 = inlined_call_operand.vmem [shape: f32[288,32], index: 3, kind: input, shape index: {}]
  %s4 = inlined_call_operand.vmem [shape: f32[1,32], index: 4, kind: input, shape index: {}]
  %s5 = inlined_call_operand.vmem [shape: f32[288,64], index: 5, kind: input, shape index: {}]
  %s6 = inlined_call_operand.vmem [shape: f32[1,64], index: 6, kind: input, shape index: {}]
  %s7 = inlined_call_operand.vmem [shape: f32[576,64], index: 7, kind: input, shape index: {}]
  %s8 = inlined_call_operand.vmem [shape: f32[1,64], index: 8, kind: input, shape index: {}]
  %s9 = inlined_call_operand.vmem [shape: f32[576,128], index: 9, kind: input, shape index: {}]
  %s10 = inlined_call_operand.vmem [shape: f32[1,128], index: 10, kind: input, shape index: {}]
  %s11 = inlined_call_operand.vmem [shape: f32[1152,128], index: 11, kind: input, shape index: {}]
  %s12 = inlined_call_operand.vmem [shape: f32[1,128], index: 12, kind: input, shape index: {}]
  %s13 = inlined_call_operand.hbm [shape: f32[2,16,16,32], index: 13, kind: output, shape index: {0}]
  %s14 = inlined_call_operand.hbm [shape: f32[2,8,8,64], index: 14, kind: output, shape index: {1}]
  %s15 = inlined_call_operand.hbm [shape: f32[2,4,4,128], index: 15, kind: output, shape index: {2}]
  %16 = xla_tuple %s13, %s14, %s15
  %s17 = sld [smem:[#allocation0]]
  $region101: #{encoding_forward.1} parent=0
    _
  %s19 = ssub.s32 1, %s17
  %s20 = scalar_select 0, %s19, %s17
  $region1: #{encoding_forward.1} parent=0
    #allocation8 [shape = 'u8[262144]{0}', space=vmem, size = 0x40000, scoped, tag = 'output window, operand 0']
    #allocation9 [shape = 's32[2]{0}', space=sflag, size = 0x8, scoped, tag = 'scoped memory for encoding_forward.1']
    #allocation10 [shape = 'u8[65536]{0}', space=vmem, size = 0x10000, scoped, tag = 'output window, operand 1']
    #allocation11 [shape = 's32[2]{0}', space=sflag, size = 0x8, scoped, tag = 'scoped memory for encoding_forward.1']
    #allocation12 [shape = 'u8[16384]{0}', space=vmem, size = 0x4000, scoped, tag = 'output window, operand 2']
    %21 = vsyncpa [#allocation9], 0
    %s22 = scalar_lea.sflag [#allocation9], 1
    %23 = vsyncpa %s22, 0
    %24 = vsyncpa [#allocation11], 0
    %s25 = scalar_lea.sflag [#allocation11], 1
    %26 = vsyncpa %s25, 0
    loop: start=0, step=1, limit=4
    $region2: #{encoding_forward.1} parent=1 // loop_pre_header
      _
    $region3: #{encoding_forward.1} parent=1 // loop_header
      %s28 = sphi 0, %s32
      %p29 = scmp.ge.s32.totalorder %s28, 4
      %s38 = sphi 0, %s40
      %s41 = sphi 0, %s38
      %s42 = sphi 0, %s41
      %s58 = sphi 0, %s42
      %s62 = sphi 0, %s62
      %s64 = sphi 0, %s62
      %s65 = sphi 0, %s64
      %s79 = sphi 0, %s65
      %s83 = sphi 0, %s83
      %s85 = sphi 0, %s83
      %s86 = sphi 0, %s85
      %s100 = sphi 0, %s86
      %s104 = sphi 0, %s104
      %s106 = sphi 0, %s104
      %s107 = sphi 0, %s106
      %s121 = sphi 0, %s107
      %s125 = sphi 0, %s125
      %s127 = sphi 0, %s125
      %s128 = sphi 0, %s127
      %s142 = sphi 0, %s128
      %s146 = sphi 0, %s146
      %s148 = sphi 0, %s146
      %s149 = sphi 0, %s148
      %s163 = sphi 0, %s149
      %s167 = sphi 0, %s167
      %s169 = sphi 0, %s167
      %s170 = sphi 0, %s169
      %s184 = sphi 0, %s170
      %s188 = sphi 0, %s188
      %s190 = sphi 0, %s188
      %s191 = sphi 0, %s190
      %s205 = sphi 0, %s191
      %s209 = sphi 0, %s209
      %s211 = sphi 0, %s209
      %s212 = sphi 0, %s211
      %s226 = sphi 0, %s212
      %s230 = sphi 0, %s230
      %s232 = sphi 0, %s230
      %s233 = sphi 0, %s232
      %s247 = sphi 0, %s233
      %s251 = sphi 0, %s251
      %s253 = sphi 0, %s251
      %s254 = sphi 0, %s253
      %s268 = sphi 0, %s254
      %s272 = sphi 0, %s272
      %s274 = sphi 0, %s272
      %s275 = sphi 0, %s274
      %s289 = sphi 0, %s275
      %s293 = sphi 0, %s293
      %s295 = sphi 0, %s293
      %s296 = sphi 0, %s295
      %s310 = sphi 0, %s296
      %s316 = sphi 0, %s318
      %s319 = sphi 0, %s316
      %s320 = sphi 0, %s319
      %s336 = sphi 0, %s320
      %s342 = sphi 0, %s344
      %s345 = sphi 0, %s342
      %s346 = sphi 0, %s345
      %s362 = sphi 0, %s346
      %s368 = sphi 0, %s370
      %s371 = sphi 0, %s368
      %s372 = sphi 0, %s371
      %s388 = sphi 0, %s372
    $region4: #{encoding_forward.1} parent=1 // loop_header_branch
      %31 = sbr.rel (%p29) target = $region8
    $region5: #{encoding_forward.1} parent=1 // loop_body
      %s33 = ssub.s32 %s28, 1
      %s34 = ssub.s32 %s28, 2
      %s35 = sadd.s32 %s28, 1
      %s36 = ssub.s32 %s28, %s35
      %p37 = scmp.eq.s32.totalorder %s36, 0
      %s39 = sadd.s32 %s38, 1
      %s40 = scalar_select %p37, %s38, %s39
      %p43 = pneg %p37
      %p44 = scmp.eq.s32.totalorder %s28, 1
      %p45 = por %p43, %p44
      %p46 = scmp.ne.s32.totalorder %s38, %s41
      %p47 = scmp.eq.s32.totalorder %s28, 0
      %p48 = por %p46, %p47
      %p49 = scmp.ne.s32.totalorder %s38, %s41
      %p50 = scmp.eq.s32.totalorder %s33, 1
      %p51 = por %p49, %p50
      %p52 = scmp.ne.s32.totalorder %s41, %s42
      %p53 = scmp.eq.s32.totalorder %s33, 0
      %p54 = por %p52, %p53
      %p55 = scmp.ne.s32.totalorder %s41, %s42
      %p56 = scmp.eq.s32.totalorder %s34, 1
      %p57 = por %p55, %p56
      %p59 = scmp.ne.s32.totalorder %s42, %s58
      %p60 = scmp.eq.s32.totalorder %s34, 0
      %p61 = por %p59, %p60
      %s63 = sadd.s32 %s62, 1
      %p66 = scmp.eq.s32.totalorder %s28, 1
      %p67 = scmp.ne.s32.totalorder %s62, %s64
      %p68 = scmp.eq.s32.totalorder %s28, 0
      %p69 = por %p67, %p68
      %p70 = scmp.ne.s32.totalorder %s62, %s64
      %p71 = scmp.eq.s32.totalorder %s33, 1
      %p72 = por %p70, %p71
      %p73 = scmp.ne.s32.totalorder %s64, %s65
      %p74 = scmp.eq.s32.totalorder %s33, 0
      %p75 = por %p73, %p74
      %p76 = scmp.ne.s32.totalorder %s64, %s65
      %p77 = scmp.eq.s32.totalorder %s34, 1
      %p78 = por %p76, %p77
      %p80 = scmp.ne.s32.totalorder %s65, %s79
      %p81 = scmp.eq.s32.totalorder %s34, 0
      %p82 = por %p80, %p81
      %s84 = sadd.s32 %s83, 1
      %p87 = scmp.eq.s32.totalorder %s28, 1
      %p88 = scmp.ne.s32.totalorder %s83, %s85
      %p89 = scmp.eq.s32.totalorder %s28, 0
      %p90 = por %p88, %p89
      %p91 = scmp.ne.s32.totalorder %s83, %s85
      %p92 = scmp.eq.s32.totalorder %s33, 1
      %p93 = por %p91, %p92
      %p94 = scmp.ne.s32.totalorder %s85, %s86
      %p95 = scmp.eq.s32.totalorder %s33, 0
      %p96 = por %p94, %p95
      %p97 = scmp.ne.s32.totalorder %s85, %s86
      %p98 = scmp.eq.s32.totalorder %s34, 1
      %p99 = por %p97, %p98
      %p101 = scmp.ne.s32.totalorder %s86, %s100
      %p102 = scmp.eq.s32.totalorder %s34, 0
      %p103 = por %p101, %p102
      %s105 = sadd.s32 %s104, 1
      %p108 = scmp.eq.s32.totalorder %s28, 1
      %p109 = scmp.ne.s32.totalorder %s104, %s106
      %p110 = scmp.eq.s32.totalorder %s28, 0
      %p111 = por %p109, %p110
      %p112 = scmp.ne.s32.totalorder %s104, %s106
      %p113 = scmp.eq.s32.totalorder %s33, 1
      %p114 = por %p112, %p113
      %p115 = scmp.ne.s32.totalorder %s106, %s107
      %p116 = scmp.eq.s32.totalorder %s33, 0
      %p117 = por %p115, %p116
      %p118 = scmp.ne.s32.totalorder %s106, %s107
      %p119 = scmp.eq.s32.totalorder %s34, 1
      %p120 = por %p118, %p119
      %p122 = scmp.ne.s32.totalorder %s107, %s121
      %p123 = scmp.eq.s32.totalorder %s34, 0
      %p124 = por %p122, %p123
      %s126 = sadd.s32 %s125, 1
      %p129 = scmp.eq.s32.totalorder %s28, 1
      %p130 = scmp.ne.s32.totalorder %s125, %s127
      %p131 = scmp.eq.s32.totalorder %s28, 0
      %p132 = por %p130, %p131
      %p133 = scmp.ne.s32.totalorder %s125, %s127
      %p134 = scmp.eq.s32.totalorder %s33, 1
      %p135 = por %p133, %p134
      %p136 = scmp.ne.s32.totalorder %s127, %s128
      %p137 = scmp.eq.s32.totalorder %s33, 0
      %p138 = por %p136, %p137
      %p139 = scmp.ne.s32.totalorder %s127, %s128
      %p140 = scmp.eq.s32.totalorder %s34, 1
      %p141 = por %p139, %p140
      %p143 = scmp.ne.s32.totalorder %s128, %s142
      %p144 = scmp.eq.s32.totalorder %s34, 0
      %p145 = por %p143, %p144
      %s147 = sadd.s32 %s146, 1
      %p150 = scmp.eq.s32.totalorder %s28, 1
      %p151 = scmp.ne.s32.totalorder %s146, %s148
      %p152 = scmp.eq.s32.totalorder %s28, 0
      %p153 = por %p151, %p152
      %p154 = scmp.ne.s32.totalorder %s146, %s148
      %p155 = scmp.eq.s32.totalorder %s33, 1
      %p156 = por %p154, %p155
      %p157 = scmp.ne.s32.totalorder %s148, %s149
      %p158 = scmp.eq.s32.totalorder %s33, 0
      %p159 = por %p157, %p158
      %p160 = scmp.ne.s32.totalorder %s148, %s149
      %p161 = scmp.eq.s32.totalorder %s34, 1
      %p162 = por %p160, %p161
      %p164 = scmp.ne.s32.totalorder %s149, %s163
      %p165 = scmp.eq.s32.totalorder %s34, 0
      %p166 = por %p164, %p165
      %s168 = sadd.s32 %s167, 1
      %p171 = scmp.eq.s32.totalorder %s28, 1
      %p172 = scmp.ne.s32.totalorder %s167, %s169
      %p173 = scmp.eq.s32.totalorder %s28, 0
      %p174 = por %p172, %p173
      %p175 = scmp.ne.s32.totalorder %s167, %s169
      %p176 = scmp.eq.s32.totalorder %s33, 1
      %p177 = por %p175, %p176
      %p178 = scmp.ne.s32.totalorder %s169, %s170
      %p179 = scmp.eq.s32.totalorder %s33, 0
      %p180 = por %p178, %p179
      %p181 = scmp.ne.s32.totalorder %s169, %s170
      %p182 = scmp.eq.s32.totalorder %s34, 1
      %p183 = por %p181, %p182
      %p185 = scmp.ne.s32.totalorder %s170, %s184
      %p186 = scmp.eq.s32.totalorder %s34, 0
      %p187 = por %p185, %p186
      %s189 = sadd.s32 %s188, 1
      %p192 = scmp.eq.s32.totalorder %s28, 1
      %p193 = scmp.ne.s32.totalorder %s188, %s190
      %p194 = scmp.eq.s32.totalorder %s28, 0
      %p195 = por %p193, %p194
      %p196 = scmp.ne.s32.totalorder %s188, %s190
      %p197 = scmp.eq.s32.totalorder %s33, 1
      %p198 = por %p196, %p197
      %p199 = scmp.ne.s32.totalorder %s190, %s191
      %p200 = scmp.eq.s32.totalorder %s33, 0
      %p201 = por %p199, %p200
      %p202 = scmp.ne.s32.totalorder %s190, %s191
      %p203 = scmp.eq.s32.totalorder %s34, 1
      %p204 = por %p202, %p203
      %p206 = scmp.ne.s32.totalorder %s191, %s205
      %p207 = scmp.eq.s32.totalorder %s34, 0
      %p208 = por %p206, %p207
      %s210 = sadd.s32 %s209, 1
      %p213 = scmp.eq.s32.totalorder %s28, 1
      %p214 = scmp.ne.s32.totalorder %s209, %s211
      %p215 = scmp.eq.s32.totalorder %s28, 0
      %p216 = por %p214, %p215
      %p217 = scmp.ne.s32.totalorder %s209, %s211
      %p218 = scmp.eq.s32.totalorder %s33, 1
      %p219 = por %p217, %p218
      %p220 = scmp.ne.s32.totalorder %s211, %s212
      %p221 = scmp.eq.s32.totalorder %s33, 0
      %p222 = por %p220, %p221
      %p223 = scmp.ne.s32.totalorder %s211, %s212
      %p224 = scmp.eq.s32.totalorder %s34, 1
      %p225 = por %p223, %p224
      %p227 = scmp.ne.s32.totalorder %s212, %s226
      %p228 = scmp.eq.s32.totalorder %s34, 0
      %p229 = por %p227, %p228
      %s231 = sadd.s32 %s230, 1
      %p234 = scmp.eq.s32.totalorder %s28, 1
      %p235 = scmp.ne.s32.totalorder %s230, %s232
      %p236 = scmp.eq.s32.totalorder %s28, 0
      %p237 = por %p235, %p236
      %p238 = scmp.ne.s32.totalorder %s230, %s232
      %p239 = scmp.eq.s32.totalorder %s33, 1
      %p240 = por %p238, %p239
      %p241 = scmp.ne.s32.totalorder %s232, %s233
      %p242 = scmp.eq.s32.totalorder %s33, 0
      %p243 = por %p241, %p242
      %p244 = scmp.ne.s32.totalorder %s232, %s233
      %p245 = scmp.eq.s32.totalorder %s34, 1
      %p246 = por %p244, %p245
      %p248 = scmp.ne.s32.totalorder %s233, %s247
      %p249 = scmp.eq.s32.totalorder %s34, 0
      %p250 = por %p248, %p249
      %s252 = sadd.s32 %s251, 1
      %p255 = scmp.eq.s32.totalorder %s28, 1
      %p256 = scmp.ne.s32.totalorder %s251, %s253
      %p257 = scmp.eq.s32.totalorder %s28, 0
      %p258 = por %p256, %p257
      %p259 = scmp.ne.s32.totalorder %s251, %s253
      %p260 = scmp.eq.s32.totalorder %s33, 1
      %p261 = por %p259, %p260
      %p262 = scmp.ne.s32.totalorder %s253, %s254
      %p263 = scmp.eq.s32.totalorder %s33, 0
      %p264 = por %p262, %p263
      %p265 = scmp.ne.s32.totalorder %s253, %s254
      %p266 = scmp.eq.s32.totalorder %s34, 1
      %p267 = por %p265, %p266
      %p269 = scmp.ne.s32.totalorder %s254, %s268
      %p270 = scmp.eq.s32.totalorder %s34, 0
      %p271 = por %p269, %p270
      %s273 = sadd.s32 %s272, 1
      %p276 = scmp.eq.s32.totalorder %s28, 1
      %p277 = scmp.ne.s32.totalorder %s272, %s274
      %p278 = scmp.eq.s32.totalorder %s28, 0
      %p279 = por %p277, %p278
      %p280 = scmp.ne.s32.totalorder %s272, %s274
      %p281 = scmp.eq.s32.totalorder %s33, 1
      %p282 = por %p280, %p281
      %p283 = scmp.ne.s32.totalorder %s274, %s275
      %p284 = scmp.eq.s32.totalorder %s33, 0
      %p285 = por %p283, %p284
      %p286 = scmp.ne.s32.totalorder %s274, %s275
      %p287 = scmp.eq.s32.totalorder %s34, 1
      %p288 = por %p286, %p287
      %p290 = scmp.ne.s32.totalorder %s275, %s289
      %p291 = scmp.eq.s32.totalorder %s34, 0
      %p292 = por %p290, %p291
      %s294 = sadd.s32 %s293, 1
      %p297 = scmp.eq.s32.totalorder %s28, 1
      %p298 = scmp.ne.s32.totalorder %s293, %s295
      %p299 = scmp.eq.s32.totalorder %s28, 0
      %p300 = por %p298, %p299
      %p301 = scmp.ne.s32.totalorder %s293, %s295
      %p302 = scmp.eq.s32.totalorder %s33, 1
      %p303 = por %p301, %p302
      %p304 = scmp.ne.s32.totalorder %s295, %s296
      %p305 = scmp.eq.s32.totalorder %s33, 0
      %p306 = por %p304, %p305
      %p307 = scmp.ne.s32.totalorder %s295, %s296
      %p308 = scmp.eq.s32.totalorder %s34, 1
      %p309 = por %p307, %p308
      %p311 = scmp.ne.s32.totalorder %s296, %s310
      %p312 = scmp.eq.s32.totalorder %s34, 0
      %p313 = por %p311, %p312
      %s314 = ssub.s32 %s28, %s35
      %p315 = scmp.eq.s32.totalorder %s314, 0
      %s317 = sadd.s32 %s316, 1
      %s318 = scalar_select %p315, %s316, %s317
      %p321 = pneg %p315
      %p322 = scmp.eq.s32.totalorder %s28, 1
      %p323 = por %p321, %p322
      %p324 = scmp.ne.s32.totalorder %s316, %s319
      %p325 = scmp.eq.s32.totalorder %s28, 0
      %p326 = por %p324, %p325
      %p327 = scmp.ne.s32.totalorder %s316, %s319
      %p328 = scmp.eq.s32.totalorder %s33, 1
      %p329 = por %p327, %p328
      %p330 = scmp.ne.s32.totalorder %s319, %s320
      %p331 = scmp.eq.s32.totalorder %s33, 0
      %p332 = por %p330, %p331
      %p333 = scmp.ne.s32.totalorder %s319, %s320
      %p334 = scmp.eq.s32.totalorder %s34, 1
      %p335 = por %p333, %p334
      %p337 = scmp.ne.s32.totalorder %s320, %s336
      %p338 = scmp.eq.s32.totalorder %s34, 0
      %p339 = por %p337, %p338
      %s340 = ssub.s32 %s28, %s35
      %p341 = scmp.eq.s32.totalorder %s340, 0
      %s343 = sadd.s32 %s342, 1
      %s344 = scalar_select %p341, %s342, %s343
      %p347 = pneg %p341
      %p348 = scmp.eq.s32.totalorder %s28, 1
      %p349 = por %p347, %p348
      %p350 = scmp.ne.s32.totalorder %s342, %s345
      %p351 = scmp.eq.s32.totalorder %s28, 0
      %p352 = por %p350, %p351
      %p353 = scmp.ne.s32.totalorder %s342, %s345
      %p354 = scmp.eq.s32.totalorder %s33, 1
      %p355 = por %p353, %p354
      %p356 = scmp.ne.s32.totalorder %s345, %s346
      %p357 = scmp.eq.s32.totalorder %s33, 0
      %p358 = por %p356, %p357
      %p359 = scmp.ne.s32.totalorder %s345, %s346
      %p360 = scmp.eq.s32.totalorder %s34, 1
      %p361 = por %p359, %p360
      %p363 = scmp.ne.s32.totalorder %s346, %s362
      %p364 = scmp.eq.s32.totalorder %s34, 0
      %p365 = por %p363, %p364
      %s366 = ssub.s32 %s28, %s35
      %p367 = scmp.eq.s32.totalorder %s366, 0
      %s369 = sadd.s32 %s368, 1
      %s370 = scalar_select %p367, %s368, %s369
      %p373 = pneg %p367
      %p374 = scmp.eq.s32.totalorder %s28, 1
      %p375 = por %p373, %p374
      %p376 = scmp.ne.s32.totalorder %s368, %s371
      %p377 = scmp.eq.s32.totalorder %s28, 0
      %p378 = por %p376, %p377
      %p379 = scmp.ne.s32.totalorder %s368, %s371
      %p380 = scmp.eq.s32.totalorder %s33, 1
      %p381 = por %p379, %p380
      %p382 = scmp.ne.s32.totalorder %s371, %s372
      %p383 = scmp.eq.s32.totalorder %s33, 0
      %p384 = por %p382, %p383
      %p385 = scmp.ne.s32.totalorder %s371, %s372
      %p386 = scmp.eq.s32.totalorder %s34, 1
      %p387 = por %p385, %p386
      %p389 = scmp.ne.s32.totalorder %s372, %s388
      %p390 = scmp.eq.s32.totalorder %s34, 0
      %p391 = por %p389, %p390
      %p392 = scmp.le.s32.totalorder 1, %s28
      %p393 = scmp.lt.s32.totalorder %s28, 3
      %p394 = pnand %p392, %p393
      %p395 = pneg %p394
      // Predicated region
      $region9: #{encoding_forward.1} parent=5 // pred_check
        _
      $region10: #{encoding_forward.1} parent=5 // pred_check_branch
        %397 = sbr.rel (%p394) target = $region12
      $region11: #{encoding_forward.1} parent=5 // pred_region
        %s398 = ssub.s32 %s28, 1
        // Predicated region
        $region13: #{encoding_forward.1} parent=11 // pred_check
          %p399 = pneg %p75
        $region14: #{encoding_forward.1} parent=11 // pred_check_branch
          %401 = sbr.rel (%p399) target = $region16
        $region15: #{encoding_forward.1} parent=11 // pred_region
          _
        $region16: #{encoding_forward.1} parent=11 // pred_fallthru
          _
        // Predicated region
        $region17: #{encoding_forward.1} parent=11 // pred_check
          %p402 = pneg %p96
        $region18: #{encoding_forward.1} parent=11 // pred_check_branch
          %404 = sbr.rel (%p402) target = $region20
        $region19: #{encoding_forward.1} parent=11 // pred_region
          _
        $region20: #{encoding_forward.1} parent=11 // pred_fallthru
          _
        // Predicated region
        $region21: #{encoding_forward.1} parent=11 // pred_check
          %p405 = pneg %p117
        $region22: #{encoding_forward.1} parent=11 // pred_check_branch
          %407 = sbr.rel (%p405) target = $region24
        $region23: #{encoding_forward.1} parent=11 // pred_region
          _
        $region24: #{encoding_forward.1} parent=11 // pred_fallthru
          _
        // Predicated region
        $region25: #{encoding_forward.1} parent=11 // pred_check
          %p408 = pneg %p138
        $region26: #{encoding_forward.1} parent=11 // pred_check_branch
          %410 = sbr.rel (%p408) target = $region28
        $region27: #{encoding_forward.1} parent=11 // pred_region
          _
        $region28: #{encoding_forward.1} parent=11 // pred_fallthru
          _
        // Predicated region
        $region29: #{encoding_forward.1} parent=11 // pred_check
          %p411 = pneg %p159
        $region30: #{encoding_forward.1} parent=11 // pred_check_branch
          %413 = sbr.rel (%p411) target = $region32
        $region31: #{encoding_forward.1} parent=11 // pred_region
          _
        $region32: #{encoding_forward.1} parent=11 // pred_fallthru
          _
        // Predicated region
        $region33: #{encoding_forward.1} parent=11 // pred_check
          %p414 = pneg %p180
        $region34: #{encoding_forward.1} parent=11 // pred_check_branch
          %416 = sbr.rel (%p414) target = $region36
        $region35: #{encoding_forward.1} parent=11 // pred_region
          _
        $region36: #{encoding_forward.1} parent=11 // pred_fallthru
          _
        // Predicated region
        $region37: #{encoding_forward.1} parent=11 // pred_check
          %p417 = pneg %p201
        $region38: #{encoding_forward.1} parent=11 // pred_check_branch
          %419 = sbr.rel (%p417) target = $region40
        $region39: #{encoding_forward.1} parent=11 // pred_region
          _
        $region40: #{encoding_forward.1} parent=11 // pred_fallthru
          _
        // Predicated region
        $region41: #{encoding_forward.1} parent=11 // pred_check
          %p420 = pneg %p222
        $region42: #{encoding_forward.1} parent=11 // pred_check_branch
          %422 = sbr.rel (%p420) target = $region44
        $region43: #{encoding_forward.1} parent=11 // pred_region
          _
        $region44: #{encoding_forward.1} parent=11 // pred_fallthru
          _
        // Predicated region
        $region45: #{encoding_forward.1} parent=11 // pred_check
          %p423 = pneg %p243
        $region46: #{encoding_forward.1} parent=11 // pred_check_branch
          %425 = sbr.rel (%p423) target = $region48
        $region47: #{encoding_forward.1} parent=11 // pred_region
          _
        $region48: #{encoding_forward.1} parent=11 // pred_fallthru
          _
        // Predicated region
        $region49: #{encoding_forward.1} parent=11 // pred_check
          %p426 = pneg %p264
        $region50: #{encoding_forward.1} parent=11 // pred_check_branch
          %428 = sbr.rel (%p426) target = $region52
        $region51: #{encoding_forward.1} parent=11 // pred_region
          _
        $region52: #{encoding_forward.1} parent=11 // pred_fallthru
          _
        // Predicated region
        $region53: #{encoding_forward.1} parent=11 // pred_check
          %p429 = pneg %p285
        $region54: #{encoding_forward.1} parent=11 // pred_check_branch
          %431 = sbr.rel (%p429) target = $region56
        $region55: #{encoding_forward.1} parent=11 // pred_region
          _
        $region56: #{encoding_forward.1} parent=11 // pred_fallthru
          _
        // Predicated region
        $region57: #{encoding_forward.1} parent=11 // pred_check
          %p432 = pneg %p306
        $region58: #{encoding_forward.1} parent=11 // pred_check_branch
          %434 = sbr.rel (%p432) target = $region60
        $region59: #{encoding_forward.1} parent=11 // pred_region
          _
        $region60: #{encoding_forward.1} parent=11 // pred_fallthru
          _
      $region12: #{encoding_forward.1} parent=5 // pred_fallthru
        _
      %p435 = scmp.lt.s32.totalorder %s28, 2
      // Predicated region
      $region61: #{encoding_forward.1} parent=5 // pred_check
        %p436 = pneg %p435
      $region62: #{encoding_forward.1} parent=5 // pred_check_branch
        %438 = sbr.rel (%p436) target = $region64
      $region63: #{encoding_forward.1} parent=5 // pred_region
        // Predicated region
        $region65: #{encoding_forward.1} parent=63 // pred_check
          %p439 = pneg %p48
        $region66: #{encoding_forward.1} parent=63 // pred_check_branch
          %441 = sbr.rel (%p439) target = $region68
        $region67: #{encoding_forward.1} parent=63 // pred_region
          %p442 = scmp.lt.s32.totalorder %s28, 1
          %s443 = scalar_select %p442, %s28, 1
          %s444 = smul.addr %s443, 32
          %s445 = smul.addr %s444, 8
          %s446 = scalar_lea.vmem %s0, %s445
        $region68: #{encoding_forward.1} parent=63 // pred_fallthru
          _
      $region64: #{encoding_forward.1} parent=5 // pred_fallthru
        _
      %p447 = scmp.le.s32.totalorder 1, %s28
      %p448 = scmp.lt.s32.totalorder %s28, 3
      %p449 = pnand %p447, %p448
      %p450 = pneg %p449
      // Predicated region
      $region69: #{encoding_forward.1} parent=5 // pred_check
        _
      $region70: #{encoding_forward.1} parent=5 // pred_check_branch
        %452 = sbr.rel (%p449) target = $region72
      $region71: #{encoding_forward.1} parent=5 // pred_region
        %s453 = ssub.s32 %s28, 1
        %p454 = scmp.lt.s32.totalorder %s33, 1
        %s455 = scalar_select %p454, %s33, 1
        %s456 = smul.addr %s455, 32
        %s457 = smul.addr %s456, 8
        %s458 = scalar_lea.vmem %s0, %s457
        %p459 = pneg %p54
        %p460 = pneg %p51
        %p461 = pneg %p75
        %p462 = pneg %p72
        %p463 = pneg %p96
        %p464 = pneg %p93
        %p465 = pneg %p117
        %p466 = pneg %p114
        %p467 = pneg %p138
        %p468 = pneg %p135
        %p469 = pneg %p159
        %p470 = pneg %p156
        %p471 = pneg %p180
        %p472 = pneg %p177
        %p473 = pneg %p201
        %p474 = pneg %p198
        %p475 = pneg %p222
        %p476 = pneg %p219
        %p477 = pneg %p243
        %p478 = pneg %p240
        %p479 = pneg %p264
        %p480 = pneg %p261
        %p481 = pneg %p285
        %p482 = pneg %p282
        %p483 = pneg %p306
        %p484 = pneg %p303
        %p485 = pneg %p332
        %p486 = pneg %p329
        %s487 = sand.u32 %s319, 1
        %s488 = scalar_lea.sflag [#allocation9], %s487
        %s489 = sand.u32 %s319, 1
        %s490 = smul.addr %s489, 256
        %s491 = scalar_lea.vmem [#allocation8], %s490
        %p492 = pneg %p358
        %p493 = pneg %p355
        %s494 = sand.u32 %s33, 1
        %s495 = scalar_lea.sflag [#allocation11], %s494
        %s496 = sand.u32 %s345, 1
        %s497 = smul.addr %s496, 64
        %s498 = scalar_lea.vmem [#allocation10], %s497
        %p499 = pneg %p384
        %p500 = pneg %p381
        %s501 = sand.u32 %s33, 1
        %s502 = scalar_lea.sflag [#allocation11], %s501
        %s503 = sand.u32 %s371, 1
        %s504 = smul.addr %s503, 16
        %s505 = scalar_lea.vmem [#allocation12], %s504
        %p506 = scmp.lt.s32.totalorder %s33, 1
        %s507 = scalar_select %p506, %s33, 1
        %s508 = smul.addr %s507, 32
        %s509 = smul.addr %s508, 8
        %s510 = scalar_lea.vmem %s0, %s509
        %v511 = vld [vmem:[%s510] sm:$0xff]
        %v512 = vld [vmem:[%s510 + $0x8] sm:$0xff]
        %v513 = vld [vmem:[%s510 + $0x10] sm:$0xff]
        %v514 = vld [vmem:[%s510 + $0x18] sm:$0xff]
        %v515 = vld [vmem:[%s510 + $0x20] sm:$0xff]
        %v516 = vld [vmem:[%s510 + $0x28] sm:$0xff]
        %v517 = vld [vmem:[%s510 + $0x30] sm:$0xff]
        %v518 = vld [vmem:[%s510 + $0x38] sm:$0xff]
        %v519 = vld [vmem:[%s510 + $0x40] sm:$0xff]
        %v520 = vld [vmem:[%s510 + $0x48] sm:$0xff]
        %v521 = vld [vmem:[%s510 + $0x50] sm:$0xff]
        %v522 = vld [vmem:[%s510 + $0x58] sm:$0xff]
        %v523 = vld [vmem:[%s510 + $0x60] sm:$0xff]
        %v524 = vld [vmem:[%s510 + $0x68] sm:$0xff]
        %v525 = vld [vmem:[%s510 + $0x70] sm:$0xff]
        %v526 = vld [vmem:[%s510 + $0x78] sm:$0xff]
        %v527 = vld [vmem:[%s510 + $0x80] sm:$0xff]
        %v528 = vld [vmem:[%s510 + $0x88] sm:$0xff]
        %v529 = vld [vmem:[%s510 + $0x90] sm:$0xff]
        %v530 = vld [vmem:[%s510 + $0x98] sm:$0xff]
        %v531 = vld [vmem:[%s510 + $0xa0] sm:$0xff]
        %v532 = vld [vmem:[%s510 + $0xa8] sm:$0xff]
        %v533 = vld [vmem:[%s510 + $0xb0] sm:$0xff]
        %v534 = vld [vmem:[%s510 + $0xb8] sm:$0xff]
        %v535 = vld [vmem:[%s510 + $0xc0] sm:$0xff]
        %v536 = vld [vmem:[%s510 + $0xc8] sm:$0xff]
        %v537 = vld [vmem:[%s510 + $0xd0] sm:$0xff]
        %v538 = vld [vmem:[%s510 + $0xd8] sm:$0xff]
        %v539 = vld [vmem:[%s510 + $0xe0] sm:$0xff]
        %v540 = vld [vmem:[%s510 + $0xe8] sm:$0xff]
        %v541 = vld [vmem:[%s510 + $0xf0] sm:$0xff]
        %v542 = vld [vmem:[%s510 + $0xf8] sm:$0xff]
        %v543 = vld [vmem:[%s1] sm:$0xff]
        %v544 = vld [vmem:[%s1 + $0x8] sm:$0xff]
        %v545 = vld [vmem:[%s1 + $0x10] sm:$0xff]
        %v546 = vld [vmem:[%s1 + $0x18] sm:$0xff]
        %v547 = vld [vmem:[%s1 + $0x20] sm:$0xff]
        %v548 = vld [vmem:[%s1 + $0x28] sm:$0xff]
        %v549 = vld [vmem:[%s1 + $0x30] sm:$0xff]
        %v550 = vld [vmem:[%s1 + $0x38] sm:$0xff]
        %v551 = vld [vmem:[%s1 + $0x40] sm:$0xff]
        %v552 = vld [vmem:[%s1 + $0x48] sm:$0xff]
        %v553 = vld [vmem:[%s1 + $0x50] sm:$0xff]
        %v554 = vld [vmem:[%s1 + $0x58] sm:$0xff]
        %v555 = vld [vmem:[%s1 + $0x60] sm:$0xff]
        %v556 = vld [vmem:[%s1 + $0x68] sm:$0xff]
        %v557 = vld [vmem:[%s1 + $0x70] sm:$0xff]
        %v558 = vld [vmem:[%s1 + $0x78] sm:$0xff]
        %v559 = vld [vmem:[%s2] sm:$0x1]
        %v561 = vlaneseq
        %v562 = vshrl.u32 %v561, 7
        %v563 = vsub.s32 0, %v562
        %v564 = vrot.slane %v559, %v563
        %566 = vmatprep.subr.mxu0 0.0
        %567 = vmatpush1.msra.mxu0 %v543
        %568 = vmatprep.subr.mxu0 0.0
        %569 = vmatpush1.msra.mxu0 %v544
        %570 = vmatprep.subr.mxu0 0.0
        %571 = vmatpush1.msra.mxu0 %v545
        %572 = vmatprep.subr.mxu0 0.0
        %573 = vmatpush1.msra.mxu0 %v546
        %574 = vmatprep.subr.mxu0 0.0
        %575 = vmatpush1.msra.mxu0 %v547
        %576 = vmatprep.subr.mxu0 0.0
        %577 = vmatpush1.msra.mxu0 %v548
        %578 = vmatprep.subr.mxu0 0.0
        %579 = vmatpush1.msra.mxu0 %v549
        %580 = vmatprep.subr.mxu0 0.0
        %581 = vmatpush1.msra.mxu0 %v550
        %582 = vmatprep.subr.mxu0 0.0
        %583 = vmatpush1.msra.mxu0 %v551
        %584 = vmatprep.subr.mxu0 0.0
        %585 = vmatpush1.msra.mxu0 %v552
        %586 = vmatprep.subr.mxu0 0.0
        %587 = vmatpush1.msra.mxu0 %v553
        %588 = vmatprep.subr.mxu0 0.0
        %589 = vmatpush1.msra.mxu0 %v554
        %590 = vmatprep.subr.mxu0 0.0
        %591 = vmatpush1.msra.mxu0 %v555
        %592 = vmatprep.subr.mxu0 0.0
        %593 = vmatpush1.msra.mxu0 %v556
        %594 = vmatprep.subr.mxu0 0.0
        %595 = vmatpush1.msra.mxu0 %v557
        %596 = vmatprep.subr.mxu0 0.0
        %597 = vmatpush1.msra.mxu0 %v558
        %598 = vmatprep.subr.mxu0 0.0
        %599 = vmatpush1.msra.mxu0 0.0
        %600 = vmatprep.subr.mxu0 0.0
        %601 = vmatpush1.msra.mxu0 0.0
        %602 = vmatprep.subr.mxu0 0.0
        %603 = vmatpush1.msra.mxu0 0.0
        %604 = vmatprep.subr.mxu0 0.0
        %605 = vmatpush1.msra.mxu0 0.0
        %606 = vmatprep.subr.mxu0 0.0
        %607 = vmatpush1.msra.mxu0 0.0
        %608 = vmatprep.subr.mxu0 0.0
        %609 = vmatpush1.msra.mxu0 0.0
        %610 = vmatprep.subr.mxu0 0.0
        %611 = vmatpush1.msra.mxu0 0.0
        %612 = vmatprep.subr.mxu0 0.0
        %613 = vmatpush1.msra.mxu0 0.0
        %614 = vmatprep.subr.mxu0 0.0
        %615 = vmatpush1.msra.mxu0 0.0
        %616 = vmatprep.subr.mxu0 0.0
        %617 = vmatpush1.msra.mxu0 0.0
        %618 = vmatprep.subr.mxu0 0.0
        %619 = vmatpush1.msra.mxu0 0.0
        %620 = vmatprep.subr.mxu0 0.0
        %621 = vmatpush1.msra.mxu0 0.0
        %622 = vmatprep.subr.mxu0 0.0
        %623 = vmatpush1.msra.mxu0 0.0
        %624 = vmatprep.subr.mxu0 0.0
        %625 = vmatpush1.msra.mxu0 0.0
        %626 = vmatprep.subr.mxu0 0.0
        %627 = vmatpush1.msra.mxu0 0.0
        %628 = vmatprep.subr.mxu0 0.0
        %629 = vmatpush1.msra.mxu0 0.0
        %630 = vmatprep.mubr.f32.mxu0 0.0
        %631 = vmatmul.mubr.f32.gmra.mrb[0].mxu0 %v511
        %v632 = vpop.f32.mrb[0].mxu0
        %v633 = vadd.f32 %v564, %v632
        %v634 = vpop.f32.mrb[0].mxu0
        %635 = vmatprep.mubr.f32.mxu0 0.0
        %636 = vmatmul.mubr.f32.gmra.mrb[0].mxu0 %v512
        %v637 = vpop.f32.mrb[0].mxu0
        %v638 = vadd.f32 %v564, %v637
        %v639 = vpop.f32.mrb[0].mxu0
        %640 = vmatprep.mubr.f32.mxu0 0.0
        %641 = vmatmul.mubr.f32.gmra.mrb[0].mxu0 %v513
        %v642 = vpop.f32.mrb[0].mxu0
        %v643 = vadd.f32 %v564, %v642
        %v644 = vpop.f32.mrb[0].mxu0
        %645 = vmatprep.mubr.f32.mxu0 0.0
        %646 = vmatmul.mubr.f32.gmra.mrb[0].mxu0 %v514
        %v647 = vpop.f32.mrb[0].mxu0
        %v648 = vadd.f32 %v564, %v647
        %v649 = vpop.f32.mrb[0].mxu0
        %650 = vmatprep.mubr.f32.mxu0 0.0
        %651 = vmatmul.mubr.f32.gmra.mrb[0].mxu0 %v515
        %v652 = vpop.f32.mrb[0].mxu0
        %v653 = vadd.f32 %v564, %v652
        %v654 = vpop.f32.mrb[0].mxu0
        %655 = vmatprep.mubr.f32.mxu0 0.0
        %656 = vmatmul.mubr.f32.gmra.mrb[0].mxu0 %v516
        %v657 = vpop.f32.mrb[0].mxu0
        %v658 = vadd.f32 %v564, %v657
        %v659 = vpop.f32.mrb[0].mxu0
        %660 = vmatprep.mubr.f32.mxu0 0.0
        %661 = vmatmul.mubr.f32.gmra.mrb[0].mxu0 %v517
        %v662 = vpop.f32.mrb[0].mxu0
        %v663 = vadd.f32 %v564, %v662
        %v664 = vpop.f32.mrb[0].mxu0
        %665 = vmatprep.mubr.f32.mxu0 0.0
        %666 = vmatmul.mubr.f32.gmra.mrb[0].mxu0 %v518
        %v667 = vpop.f32.mrb[0].mxu0
        %v668 = vadd.f32 %v564, %v667
        %v669 = vpop.f32.mrb[0].mxu0
        %670 = vmatprep.mubr.f32.mxu0 0.0
        %671 = vmatmul.mubr.f32.gmra.mrb[0].mxu0 %v519
        %v672 = vpop.f32.mrb[0].mxu0
        %v673 = vadd.f32 %v564, %v672
        %v674 = vpop.f32.mrb[0].mxu0
        %675 = vmatprep.mubr.f32.mxu0 0.0
        %676 = vmatmul.mubr.f32.gmra.mrb[0].mxu0 %v520
        %v677 = vpop.f32.mrb[0].mxu0
        %v678 = vadd.f32 %v564, %v677
        %v679 = vpop.f32.mrb[0].mxu0
        %680 = vmatprep.mubr.f32.mxu0 0.0
        %681 = vmatmul.mubr.f32.gmra.mrb[0].mxu0 %v521
        %v682 = vpop.f32.mrb[0].mxu0
        %v683 = vadd.f32 %v564, %v682
        %v684 = vpop.f32.mrb[0].mxu0
        %685 = vmatprep.mubr.f32.mxu0 0.0
        %686 = vmatmul.mubr.f32.gmra.mrb[0].mxu0 %v522
        %v687 = vpop.f32.mrb[0].mxu0
        %v688 = vadd.f32 %v564, %v687
        %v689 = vpop.f32.mrb[0].mxu0
        %690 = vmatprep.mubr.f32.mxu0 0.0
        %691 = vmatmul.mubr.f32.gmra.mrb[0].mxu0 %v523
        %v692 = vpop.f32.mrb[0].mxu0
        %v693 = vadd.f32 %v564, %v692
        %v694 = vpop.f32.mrb[0].mxu0
        %695 = vmatprep.mubr.f32.mxu0 0.0
        %696 = vmatmul.mubr.f32.gmra.mrb[0].mxu0 %v524
        %v697 = vpop.f32.mrb[0].mxu0
        %v698 = vadd.f32 %v564, %v697
        %v699 = vpop.f32.mrb[0].mxu0
        %700 = vmatprep.mubr.f32.mxu0 0.0
        %701 = vmatmul.mubr.f32.gmra.mrb[0].mxu0 %v525
        %v702 = vpop.f32.mrb[0].mxu0
        %v703 = vadd.f32 %v564, %v702
        %v704 = vpop.f32.mrb[0].mxu0
        %705 = vmatprep.mubr.f32.mxu0 0.0
        %706 = vmatmul.mubr.f32.gmra.mrb[0].mxu0 %v526
        %v707 = vpop.f32.mrb[0].mxu0
        %v708 = vadd.f32 %v564, %v707
        %v709 = vpop.f32.mrb[0].mxu0
        %710 = vmatprep.mubr.f32.mxu0 0.0
        %711 = vmatmul.mubr.f32.gmra.mrb[0].mxu0 %v527
        %v712 = vpop.f32.mrb[0].mxu0
        %v713 = vadd.f32 %v564, %v712
        %v714 = vpop.f32.mrb[0].mxu0
        %715 = vmatprep.mubr.f32.mxu0 0.0
        %716 = vmatmul.mubr.f32.gmra.mrb[0].mxu0 %v528
        %v717 = vpop.f32.mrb[0].mxu0
        %v718 = vadd.f32 %v564, %v717
        %v719 = vpop.f32.mrb[0].mxu0
        %720 = vmatprep.mubr.f32.mxu0 0.0
        %721 = vmatmul.mubr.f32.gmra.mrb[0].mxu0 %v529
        %v722 = vpop.f32.mrb[0].mxu0
        %v723 = vadd.f32 %v564, %v722
        %v724 = vpop.f32.mrb[0].mxu0
        %725 = vmatprep.mubr.f32.mxu0 0.0
        %726 = vmatmul.mubr.f32.gmra.mrb[0].mxu0 %v530
        %v727 = vpop.f32.mrb[0].mxu0
        %v728 = vadd.f32 %v564, %v727
        %v729 = vpop.f32.mrb[0].mxu0
        %730 = vmatprep.mubr.f32.mxu0 0.0
        %731 = vmatmul.mubr.f32.gmra.mrb[0].mxu0 %v531
        %v732 = vpop.f32.mrb[0].mxu0
        %v733 = vadd.f32 %v564, %v732
        %v734 = vpop.f32.mrb[0].mxu0
        %735 = vmatprep.mubr.f32.mxu0 0.0
        %736 = vmatmul.mubr.f32.gmra.mrb[0].mxu0 %v532
        %v737 = vpop.f32.mrb[0].mxu0
        %v738 = vadd.f32 %v564, %v737
        %v739 = vpop.f32.mrb[0].mxu0
        %740 = vmatprep.mubr.f32.mxu0 0.0
        %741 = vmatmul.mubr.f32.gmra.mrb[0].mxu0 %v533
        %v742 = vpop.f32.mrb[0].mxu0
        %v743 = vadd.f32 %v564, %v742
        %v744 = vpop.f32.mrb[0].mxu0
        %745 = vmatprep.mubr.f32.mxu0 0.0
        %746 = vmatmul.mubr.f32.gmra.mrb[0].mxu0 %v534
        %v747 = vpop.f32.mrb[0].mxu0
        %v748 = vadd.f32 %v564, %v747
        %v749 = vpop.f32.mrb[0].mxu0
        %750 = vmatprep.mubr.f32.mxu0 0.0
        %751 = vmatmul.mubr.f32.gmra.mrb[0].mxu0 %v535
        %v752 = vpop.f32.mrb[0].mxu0
        %v753 = vadd.f32 %v564, %v752
        %v754 = vpop.f32.mrb[0].mxu0
        %755 = vmatprep.mubr.f32.mxu0 0.0
        %756 = vmatmul.mubr.f32.gmra.mrb[0].mxu0 %v536
        %v757 = vpop.f32.mrb[0].mxu0
        %v758 = vadd.f32 %v564, %v757
        %v759 = vpop.f32.mrb[0].mxu0
        %760 = vmatprep.mubr.f32.mxu0 0.0
        %761 = vmatmul.mubr.f32.gmra.mrb[0].mxu0 %v537
        %v762 = vpop.f32.mrb[0].mxu0
        %v763 = vadd.f32 %v564, %v762
        %v764 = vpop.f32.mrb[0].mxu0
        %765 = vmatprep.mubr.f32.mxu0 0.0
        %766 = vmatmul.mubr.f32.gmra.mrb[0].mxu0 %v538
        %v767 = vpop.f32.mrb[0].mxu0
        %v768 = vadd.f32 %v564, %v767
        %v769 = vpop.f32.mrb[0].mxu0
        %770 = vmatprep.mubr.f32.mxu0 0.0
        %771 = vmatmul.mubr.f32.gmra.mrb[0].mxu0 %v539
        %v772 = vpop.f32.mrb[0].mxu0
        %v773 = vadd.f32 %v564, %v772
        %v774 = vpop.f32.mrb[0].mxu0
        %775 = vmatprep.mubr.f32.mxu0 0.0
        %776 = vmatmul.mubr.f32.gmra.mrb[0].mxu0 %v540
        %v777 = vpop.f32.mrb[0].mxu0
        %v778 = vadd.f32 %v564, %v777
        %v779 = vpop.f32.mrb[0].mxu0
        %780 = vmatprep.mubr.f32.mxu0 0.0
        %781 = vmatmul.mubr.f32.gmra.mrb[0].mxu0 %v541
        %v782 = vpop.f32.mrb[0].mxu0
        %v783 = vadd.f32 %v564, %v782
        %v784 = vpop.f32.mrb[0].mxu0
        %785 = vmatprep.mubr.f32.mxu0 0.0
        %786 = vmatmul.mubr.f32.gmra.mrb[0].mxu0 %v542
        %v787 = vpop.f32.mrb[0].mxu0
        %v788 = vadd.f32 %v564, %v787
        %v789 = vpop.f32.mrb[0].mxu0
        %790 = vdwg.mxu0
        %v791 = vmax.f32 %v633, 0.0
        %v792 = vmax.f32 %v638, 0.0
        %v793 = vmax.f32 %v643, 0.0
        %v794 = vmax.f32 %v648, 0.0
        %v795 = vmax.f32 %v653, 0.0
        %v796 = vmax.f32 %v658, 0.0
        %v797 = vmax.f32 %v663, 0.0
        %v798 = vmax.f32 %v668, 0.0
        %v799 = vmax.f32 %v673, 0.0
        %v800 = vmax.f32 %v678, 0.0
        %v801 = vmax.f32 %v683, 0.0
        %v802 = vmax.f32 %v688, 0.0
        %v803 = vmax.f32 %v693, 0.0
        %v804 = vmax.f32 %v698, 0.0
        %v805 = vmax.f32 %v703, 0.0
        %v806 = vmax.f32 %v708, 0.0
        %v807 = vmax.f32 %v713, 0.0
        %v808 = vmax.f32 %v718, 0.0
        %v809 = vmax.f32 %v723, 0.0
        %v810 = vmax.f32 %v728, 0.0
        %v811 = vmax.f32 %v733, 0.0
        %v812 = vmax.f32 %v738, 0.0
        %v813 = vmax.f32 %v743, 0.0
        %v814 = vmax.f32 %v748, 0.0
        %v815 = vmax.f32 %v753, 0.0
        %v816 = vmax.f32 %v758, 0.0
        %v817 = vmax.f32 %v763, 0.0
        %v818 = vmax.f32 %v768, 0.0
        %v819 = vmax.f32 %v773, 0.0
        %v820 = vmax.f32 %v778, 0.0
        %v821 = vmax.f32 %v783, 0.0
        %v822 = vmax.f32 %v788, 0.0
        %vm823 = vcmask 261120
        %824 = vst.msk [vmem:[#allocation2] sm:$0xff] %vm823, 0.0
        %825 = vst.msk [vmem:[#allocation2 + $0x8] sm:$0xff] %vm823, 0.0
        %vm826 = vcmask 254976
        %827 = vst.msk [vmem:[#allocation2 + $0x10] sm:$0x3] %vm826, 0.0
        %828 = vst.msk [vmem:[#allocation2 + $0x18] sm:$0xff] %vm823, 0.0
        %829 = vst.msk [vmem:[#allocation2 + $0x20] sm:$0xff] %vm823, 0.0
        %830 = vst.msk [vmem:[#allocation2 + $0x28] sm:$0x3] %vm826, 0.0
        %831 = vst.msk [vmem:[#allocation2 + $0x30] sm:$0xff] %vm823, 0.0
        %832 = vst.msk [vmem:[#allocation2 + $0x38] sm:$0xff] %vm823, 0.0
        %833 = vst.msk [vmem:[#allocation2 + $0x40] sm:$0x3] %vm826, 0.0
        %834 = vst.msk [vmem:[#allocation2 + $0x48] sm:$0xff] %vm823, 0.0
        %835 = vst.msk [vmem:[#allocation2 + $0x50] sm:$0xff] %vm823, 0.0
        %836 = vst.msk [vmem:[#allocation2 + $0x58] sm:$0x3] %vm826, 0.0
        %837 = vst.msk [vmem:[#allocation2 + $0x60] sm:$0xff] %vm823, 0.0
        %838 = vst.msk [vmem:[#allocation2 + $0x68] sm:$0xff] %vm823, 0.0
        %839 = vst.msk [vmem:[#allocation2 + $0x70] sm:$0x3] %vm826, 0.0
        %840 = vst.msk [vmem:[#allocation2 + $0x78] sm:$0xff] %vm823, 0.0
        %841 = vst.msk [vmem:[#allocation2 + $0x80] sm:$0xff] %vm823, 0.0
        %842 = vst.msk [vmem:[#allocation2 + $0x88] sm:$0x3] %vm826, 0.0
        %843 = vst.msk [vmem:[#allocation2 + $0x90] sm:$0xff] %vm823, 0.0
        %844 = vst.msk [vmem:[#allocation2 + $0x98] sm:$0xff] %vm823, 0.0
        %845 = vst.msk [vmem:[#allocation2 + $0xa0] sm:$0x3] %vm826, 0.0
        %846 = vst.msk [vmem:[#allocation2 + $0xa8] sm:$0xff] %vm823, 0.0
        %847 = vst.msk [vmem:[#allocation2 + $0xb0] sm:$0xff] %vm823, 0.0
        %848 = vst.msk [vmem:[#allocation2 + $0xb8] sm:$0x3] %vm826, 0.0
        %849 = vst.msk [vmem:[#allocation2 + $0xc0] sm:$0xff] %vm823, 0.0
        %850 = vst.msk [vmem:[#allocation2 + $0xc8] sm:$0xff] %vm823, 0.0
        %851 = vst.msk [vmem:[#allocation2 + $0xd0] sm:$0x3] %vm826, 0.0
        %852 = vst.msk [vmem:[#allocation2 + $0xd8] sm:$0xff] %vm823, 0.0
        %853 = vst.msk [vmem:[#allocation2 + $0xe0] sm:$0xff] %vm823, 0.0
        %854 = vst.msk [vmem:[#allocation2 + $0xe8] sm:$0x3] %vm826, 0.0
        %855 = vst.msk [vmem:[#allocation2 + $0xf0] sm:$0xff] %vm823, 0.0
        %856 = vst.msk [vmem:[#allocation2 + $0xf8] sm:$0xff] %vm823, 0.0
        %857 = vst.msk [vmem:[#allocation2 + $0x100] sm:$0x3] %vm826, 0.0
        %858 = vst.msk [vmem:[#allocation2 + $0x108] sm:$0xff] %vm823, 0.0
        %859 = vst.msk [vmem:[#allocation2 + $0x110] sm:$0xff] %vm823, 0.0
        %860 = vst.msk [vmem:[#allocation2 + $0x118] sm:$0x3] %vm826, 0.0
        %861 = vst.msk [vmem:[#allocation2 + $0x120] sm:$0xff] %vm823, 0.0
        %862 = vst.msk [vmem:[#allocation2 + $0x128] sm:$0xff] %vm823, 0.0
        %863 = vst.msk [vmem:[#allocation2 + $0x130] sm:$0x3] %vm826, 0.0
        %864 = vst.msk [vmem:[#allocation2 + $0x138] sm:$0xff] %vm823, 0.0
        %865 = vst.msk [vmem:[#allocation2 + $0x140] sm:$0xff] %vm823, 0.0
        %866 = vst.msk [vmem:[#allocation2 + $0x148] sm:$0x3] %vm826, 0.0
        %867 = vst.msk [vmem:[#allocation2 + $0x150] sm:$0xff] %vm823, 0.0
        %868 = vst.msk [vmem:[#allocation2 + $0x158] sm:$0xff] %vm823, 0.0
        %869 = vst.msk [vmem:[#allocation2 + $0x160] sm:$0x3] %vm826, 0.0
        %870 = vst.msk [vmem:[#allocation2 + $0x168] sm:$0xff] %vm823, 0.0
        %871 = vst.msk [vmem:[#allocation2 + $0x170] sm:$0xff] %vm823, 0.0
        %872 = vst.msk [vmem:[#allocation2 + $0x178] sm:$0x3] %vm826, 0.0
        %873 = vst.msk [vmem:[#allocation2 + $0x180] sm:$0xff] %vm823, 0.0
        %874 = vst.msk [vmem:[#allocation2 + $0x188] sm:$0xff] %vm823, 0.0
        %875 = vst.msk [vmem:[#allocation2 + $0x190] sm:$0x3] %vm826, 0.0
        %876 = vst.msk [vmem:[#allocation2 + $0x198] sm:$0xff] %vm823, 0.0
        %877 = vst.msk [vmem:[#allocation2 + $0x1a0] sm:$0xff] %vm823, 0.0
        %878 = vst.msk [vmem:[#allocation2 + $0x1a8] sm:$0x3] %vm826, 0.0
        %s879 = scalar_lea.vmem [#allocation2], 24
        %880 = vst.msk [vmem:[%s879 + $0x1] sm:$0xff] %vm823, %v791
        %881 = vst.msk [vmem:[%s879 + $0x9] sm:$0xff] %vm823, %v792
        %882 = vst.msk [vmem:[%s879 + $0x19] sm:$0xff] %vm823, %v793
        %883 = vst.msk [vmem:[%s879 + $0x21] sm:$0xff] %vm823, %v794
        %884 = vst.msk [vmem:[%s879 + $0x31] sm:$0xff] %vm823, %v795
        %885 = vst.msk [vmem:[%s879 + $0x39] sm:$0xff] %vm823, %v796
        %886 = vst.msk [vmem:[%s879 + $0x49] sm:$0xff] %vm823, %v797
        %887 = vst.msk [vmem:[%s879 + $0x51] sm:$0xff] %vm823, %v798
        %888 = vst.msk [vmem:[%s879 + $0x61] sm:$0xff] %vm823, %v799
        %889 = vst.msk [vmem:[%s879 + $0x69] sm:$0xff] %vm823, %v800
        %890 = vst.msk [vmem:[%s879 + $0x79] sm:$0xff] %vm823, %v801
        %891 = vst.msk [vmem:[%s879 + $0x81] sm:$0xff] %vm823, %v802
        %892 = vst.msk [vmem:[%s879 + $0x91] sm:$0xff] %vm823, %v803
        %893 = vst.msk [vmem:[%s879 + $0x99] sm:$0xff] %vm823, %v804
        %894 = vst.msk [vmem:[%s879 + $0xa9] sm:$0xff] %vm823, %v805
        %895 = vst.msk [vmem:[%s879 + $0xb1] sm:$0xff] %vm823, %v806
        %896 = vst.msk [vmem:[%s879 + $0xc1] sm:$0xff] %vm823, %v807
        %897 = vst.msk [vmem:[%s879 + $0xc9] sm:$0xff] %vm823, %v808
        %898 = vst.msk [vmem:[%s879 + $0xd9] sm:$0xff] %vm823, %v809
        %899 = vst.msk [vmem:[%s879 + $0xe1] sm:$0xff] %vm823, %v810
        %900 = vst.msk [vmem:[%s879 + $0xf1] sm:$0xff] %vm823, %v811
        %901 = vst.msk [vmem:[%s879 + $0xf9] sm:$0xff] %vm823, %v812
        %902 = vst.msk [vmem:[%s879 + $0x109] sm:$0xff] %vm823, %v813
        %903 = vst.msk [vmem:[%s879 + $0x111] sm:$0xff] %vm823, %v814
        %904 = vst.msk [vmem:[%s879 + $0x121] sm:$0xff] %vm823, %v815
        %905 = vst.msk [vmem:[%s879 + $0x129] sm:$0xff] %vm823, %v816
        %906 = vst.msk [vmem:[%s879 + $0x139] sm:$0xff] %vm823, %v817
        %907 = vst.msk [vmem:[%s879 + $0x141] sm:$0xff] %vm823, %v818
        %908 = vst.msk [vmem:[%s879 + $0x151] sm:$0xff] %vm823, %v819
        %909 = vst.msk [vmem:[%s879 + $0x159] sm:$0xff] %vm823, %v820
        %910 = vst.msk [vmem:[%s879 + $0x169] sm:$0xff] %vm823, %v821
        %911 = vst.msk [vmem:[%s879 + $0x171] sm:$0xff] %vm823, %v822
        %v912 = vld [vmem:[#allocation2] sm:$0xff]
        %v913 = vld [vmem:[#allocation2 + $0x8] sm:$0xff]
        %v914 = vld [vmem:[#allocation2 + $0x18] sm:$0xff]
        %v915 = vld [vmem:[#allocation2 + $0x20] sm:$0xff]
        %v916 = vld [vmem:[#allocation2 + $0x30] sm:$0xff]
        %v917 = vld [vmem:[#allocation2 + $0x38] sm:$0xff]
        %v918 = vld [vmem:[#allocation2 + $0x48] sm:$0xff]
        %v919 = vld [vmem:[#allocation2 + $0x50] sm:$0xff]
        %v920 = vld [vmem:[#allocation2 + $0x60] sm:$0xff]
        %v921 = vld [vmem:[#allocation2 + $0x68] sm:$0xff]
        %v922 = vld [vmem:[#allocation2 + $0x78] sm:$0xff]
        %v923 = vld [vmem:[#allocation2 + $0x80] sm:$0xff]
        %v924 = vld [vmem:[#allocation2 + $0x90] sm:$0xff]
        %v925 = vld [vmem:[#allocation2 + $0x98] sm:$0xff]
        %v926 = vld [vmem:[#allocation2 + $0xa8] sm:$0xff]
        %v927 = vld [vmem:[#allocation2 + $0xb0] sm:$0xff]
        %v928 = vld [vmem:[#allocation2 + $0xc0] sm:$0xff]
        %v929 = vld [vmem:[#allocation2 + $0xc8] sm:$0xff]
        %v930 = vld [vmem:[#allocation2 + $0xd8] sm:$0xff]
        %v931 = vld [vmem:[#allocation2 + $0xe0] sm:$0xff]
        %v932 = vld [vmem:[#allocation2 + $0xf0] sm:$0xff]
        %v933 = vld [vmem:[#allocation2 + $0xf8] sm:$0xff]
        %v934 = vld [vmem:[#allocation2 + $0x108] sm:$0xff]
        %v935 = vld [vmem:[#allocation2 + $0x110] sm:$0xff]
        %v936 = vld [vmem:[#allocation2 + $0x120] sm:$0xff]
        %v937 = vld [vmem:[#allocation2 + $0x128] sm:$0xff]
        %v938 = vld [vmem:[#allocation2 + $0x138] sm:$0xff]
        %v939 = vld [vmem:[#allocation2 + $0x140] sm:$0xff]
        %v940 = vld [vmem:[#allocation2 + $0x150] sm:$0xff]
        %v941 = vld [vmem:[#allocation2 + $0x158] sm:$0xff]
        %v942 = vld [vmem:[#allocation2 + $0x168] sm:$0xff]
        %v943 = vld [vmem:[#allocation2 + $0x170] sm:$0xff]
        %944 = vst.msk [vmem:[#allocation7] sm:$0xff] %vm823, %v912
        %945 = vst.msk [vmem:[#allocation7 + $0x48] sm:$0xff] %vm823, %v913
        %946 = vst.msk [vmem:[#allocation7 + $0x90] sm:$0xff] %vm823, %v914
        %947 = vst.msk [vmem:[#allocation7 + $0xd8] sm:$0xff] %vm823, %v915
        %948 = vst.msk [vmem:[#allocation7 + $0x120] sm:$0xff] %vm823, %v916
        %949 = vst.msk [vmem:[#allocation7 + $0x168] sm:$0xff] %vm823, %v917
        %950 = vst.msk [vmem:[#allocation7 + $0x1b0] sm:$0xff] %vm823, %v918
        %951 = vst.msk [vmem:[#allocation7 + $0x1f8] sm:$0xff] %vm823, %v919
        %952 = vst.msk [vmem:[#allocation7 + $0x240] sm:$0xff] %vm823, %v920
        %953 = vst.msk [vmem:[#allocation7 + $0x288] sm:$0xff] %vm823, %v921
        %954 = vst.msk [vmem:[#allocation7 + $0x2d0] sm:$0xff] %vm823, %v922
        %955 = vst.msk [vmem:[#allocation7 + $0x318] sm:$0xff] %vm823, %v923
        %956 = vst.msk [vmem:[#allocation7 + $0x360] sm:$0xff] %vm823, %v924
        %957 = vst.msk [vmem:[#allocation7 + $0x3a8] sm:$0xff] %vm823, %v925
        %958 = vst.msk [vmem:[#allocation7 + $0x3f0] sm:$0xff] %vm823, %v926
        %959 = vst.msk [vmem:[#allocation7 + $0x438] sm:$0xff] %vm823, %v927
        %960 = vst.msk [vmem:[#allocation7 + $0x480] sm:$0xff] %vm823, %v928
        %961 = vst.msk [vmem:[#allocation7 + $0x4c8] sm:$0xff] %vm823, %v929
        %962 = vst.msk [vmem:[#allocation7 + $0x510] sm:$0xff] %vm823, %v930
        %963 = vst.msk [vmem:[#allocation7 + $0x558] sm:$0xff] %vm823, %v931
        %964 = vst.msk [vmem:[#allocation7 + $0x5a0] sm:$0xff] %vm823, %v932
        %965 = vst.msk [vmem:[#allocation7 + $0x5e8] sm:$0xff] %vm823, %v933
        %966 = vst.msk [vmem:[#allocation7 + $0x630] sm:$0xff] %vm823, %v934
        %967 = vst.msk [vmem:[#allocation7 + $0x678] sm:$0xff] %vm823, %v935
        %968 = vst.msk [vmem:[#allocation7 + $0x6c0] sm:$0xff] %vm823, %v936
        %969 = vst.msk [vmem:[#allocation7 + $0x708] sm:$0xff] %vm823, %v937
        %970 = vst.msk [vmem:[#allocation7 + $0x750] sm:$0xff] %vm823, %v938
        %971 = vst.msk [vmem:[#allocation7 + $0x798] sm:$0xff] %vm823, %v939
        %972 = vst.msk [vmem:[#allocation7 + $0x7e0] sm:$0xff] %vm823, %v940
        %973 = vst.msk [vmem:[#allocation7 + $0x828] sm:$0xff] %vm823, %v941
        %974 = vst.msk [vmem:[#allocation7 + $0x870] sm:$0xff] %vm823, %v942
        %975 = vst.msk [vmem:[#allocation7 + $0x8b8] sm:$0xff] %vm823, %v943
        %v976 = vld [vmem:[#allocation2 + $0x1] sm:$0xff]
        %v977 = vld [vmem:[#allocation2 + $0x9] sm:$0xff]
        %v978 = vld [vmem:[#allocation2 + $0x19] sm:$0xff]
        %v979 = vld [vmem:[#allocation2 + $0x21] sm:$0xff]
        %v980 = vld [vmem:[#allocation2 + $0x31] sm:$0xff]
        %v981 = vld [vmem:[#allocation2 + $0x39] sm:$0xff]
        %v982 = vld [vmem:[#allocation2 + $0x49] sm:$0xff]
        %v983 = vld [vmem:[#allocation2 + $0x51] sm:$0xff]
        %v984 = vld [vmem:[#allocation2 + $0x61] sm:$0xff]
        %v985 = vld [vmem:[#allocation2 + $0x69] sm:$0xff]
        %v986 = vld [vmem:[#allocation2 + $0x79] sm:$0xff]
        %v987 = vld [vmem:[#allocation2 + $0x81] sm:$0xff]
        %v988 = vld [vmem:[#allocation2 + $0x91] sm:$0xff]
        %v989 = vld [vmem:[#allocation2 + $0x99] sm:$0xff]
        %v990 = vld [vmem:[#allocation2 + $0xa9] sm:$0xff]
        %v991 = vld [vmem:[#allocation2 + $0xb1] sm:$0xff]
        %v992 = vld [vmem:[#allocation2 + $0xc1] sm:$0xff]
        %v993 = vld [vmem:[#allocation2 + $0xc9] sm:$0xff]
        %v994 = vld [vmem:[#allocation2 + $0xd9] sm:$0xff]
        %v995 = vld [vmem:[#allocation2 + $0xe1] sm:$0xff]
        %v996 = vld [vmem:[#allocation2 + $0xf1] sm:$0xff]
        %v997 = vld [vmem:[#allocation2 + $0xf9] sm:$0xff]
        %v998 = vld [vmem:[#allocation2 + $0x109] sm:$0xff]
        %v999 = vld [vmem:[#allocation2 + $0x111] sm:$0xff]
        %v1000 = vld [vmem:[#allocation2 + $0x121] sm:$0xff]
        %v1001 = vld [vmem:[#allocation2 + $0x129] sm:$0xff]
        %v1002 = vld [vmem:[#allocation2 + $0x139] sm:$0xff]
        %v1003 = vld [vmem:[#allocation2 + $0x141] sm:$0xff]
        %v1004 = vld [vmem:[#allocation2 + $0x151] sm:$0xff]
        %v1005 = vld [vmem:[#allocation2 + $0x159] sm:$0xff]
        %v1006 = vld [vmem:[#allocation2 + $0x169] sm:$0xff]
        %v1007 = vld [vmem:[#allocation2 + $0x171] sm:$0xff]
        %1040 = vrot.lane.b32.xlu0 %v976, 32
        %v1041 = vpop.permute.xlu0 %1040
        %1042 = vrot.lane.b32.xlu0 %v977, 32
        %v1043 = vpop.permute.xlu0 %1042
        %1044 = vrot.lane.b32.xlu0 %v978, 32
        %v1045 = vpop.permute.xlu0 %1044
        %1046 = vrot.lane.b32.xlu0 %v979, 32
        %v1047 = vpop.permute.xlu0 %1046
        %1048 = vrot.lane.b32.xlu0 %v980, 32
        %v1049 = vpop.permute.xlu0 %1048
        %1050 = vrot.lane.b32.xlu0 %v981, 32
        %v1051 = vpop.permute.xlu0 %1050
        %1052 = vrot.lane.b32.xlu0 %v982, 32
        %v1053 = vpop.permute.xlu0 %1052
        %1054 = vrot.lane.b32.xlu0 %v983, 32
        %v1055 = vpop.permute.xlu0 %1054
        %1056 = vrot.lane.b32.xlu0 %v984, 32
        %v1057 = vpop.permute.xlu0 %1056
        %1058 = vrot.lane.b32.xlu0 %v985, 32
        %v1059 = vpop.permute.xlu0 %1058
        %1060 = vrot.lane.b32.xlu0 %v986, 32
        %v1061 = vpop.permute.xlu0 %1060
        %1062 = vrot.lane.b32.xlu0 %v987, 32
        %v1063 = vpop.permute.xlu0 %1062
        %1064 = vrot.lane.b32.xlu0 %v988, 32
        %v1065 = vpop.permute.xlu0 %1064
        %1066 = vrot.lane.b32.xlu0 %v989, 32
        %v1067 = vpop.permute.xlu0 %1066
        %1068 = vrot.lane.b32.xlu0 %v990, 32
        %v1069 = vpop.permute.xlu0 %1068
        %1070 = vrot.lane.b32.xlu0 %v991, 32
        %v1071 = vpop.permute.xlu0 %1070
        %1072 = vrot.lane.b32.xlu0 %v992, 32
        %v1073 = vpop.permute.xlu0 %1072
        %1074 = vrot.lane.b32.xlu0 %v993, 32
        %v1075 = vpop.permute.xlu0 %1074
        %1076 = vrot.lane.b32.xlu0 %v994, 32
        %v1077 = vpop.permute.xlu0 %1076
        %1078 = vrot.lane.b32.xlu0 %v995, 32
        %v1079 = vpop.permute.xlu0 %1078
        %1080 = vrot.lane.b32.xlu0 %v996, 32
        %v1081 = vpop.permute.xlu0 %1080
        %1082 = vrot.lane.b32.xlu0 %v997, 32
        %v1083 = vpop.permute.xlu0 %1082
        %1084 = vrot.lane.b32.xlu0 %v998, 32
        %v1085 = vpop.permute.xlu0 %1084
        %1086 = vrot.lane.b32.xlu0 %v999, 32
        %v1087 = vpop.permute.xlu0 %1086
        %1088 = vrot.lane.b32.xlu0 %v1000, 32
        %v1089 = vpop.permute.xlu0 %1088
        %1090 = vrot.lane.b32.xlu0 %v1001, 32
        %v1091 = vpop.permute.xlu0 %1090
        %1092 = vrot.lane.b32.xlu0 %v1002, 32
        %v1093 = vpop.permute.xlu0 %1092
        %1094 = vrot.lane.b32.xlu0 %v1003, 32
        %v1095 = vpop.permute.xlu0 %1094
        %1096 = vrot.lane.b32.xlu0 %v1004, 32
        %v1097 = vpop.permute.xlu0 %1096
        %1098 = vrot.lane.b32.xlu0 %v1005, 32
        %v1099 = vpop.permute.xlu0 %1098
        %1100 = vrot.lane.b32.xlu0 %v1006, 32
        %v1101 = vpop.permute.xlu0 %1100
        %1102 = vrot.lane.b32.xlu0 %v1007, 32
        %v1103 = vpop.permute.xlu0 %1102
        %vm1136 = vcmask 523520
        %1137 = vst.msk [vmem:[#allocation7] sm:$0xff] %vm1136, %v1041
        %1138 = vst.msk [vmem:[#allocation7 + $0x48] sm:$0xff] %vm1136, %v1043
        %1139 = vst.msk [vmem:[#allocation7 + $0x90] sm:$0xff] %vm1136, %v1045
        %1140 = vst.msk [vmem:[#allocation7 + $0xd8] sm:$0xff] %vm1136, %v1047
        %1141 = vst.msk [vmem:[#allocation7 + $0x120] sm:$0xff] %vm1136, %v1049
        %1142 = vst.msk [vmem:[#allocation7 + $0x168] sm:$0xff] %vm1136, %v1051
        %1143 = vst.msk [vmem:[#allocation7 + $0x1b0] sm:$0xff] %vm1136, %v1053
        %1144 = vst.msk [vmem:[#allocation7 + $0x1f8] sm:$0xff] %vm1136, %v1055
        %1145 = vst.msk [vmem:[#allocation7 + $0x240] sm:$0xff] %vm1136, %v1057
        %1146 = vst.msk [vmem:[#allocation7 + $0x288] sm:$0xff] %vm1136, %v1059
        %1147 = vst.msk [vmem:[#allocation7 + $0x2d0] sm:$0xff] %vm1136, %v1061
        %1148 = vst.msk [vmem:[#allocation7 + $0x318] sm:$0xff] %vm1136, %v1063
        %1149 = vst.msk [vmem:[#allocation7 + $0x360] sm:$0xff] %vm1136, %v1065
        %1150 = vst.msk [vmem:[#allocation7 + $0x3a8] sm:$0xff] %vm1136, %v1067
        %1151 = vst.msk [vmem:[#allocation7 + $0x3f0] sm:$0xff] %vm1136, %v1069
        %1152 = vst.msk [vmem:[#allocation7 + $0x438] sm:$0xff] %vm1136, %v1071
        %1153 = vst.msk [vmem:[#allocation7 + $0x480] sm:$0xff] %vm1136, %v1073
        %1154 = vst.msk [vmem:[#allocation7 + $0x4c8] sm:$0xff] %vm1136, %v1075
        %1155 = vst.msk [vmem:[#allocation7 + $0x510] sm:$0xff] %vm1136, %v1077
        %1156 = vst.msk [vmem:[#allocation7 + $0x558] sm:$0xff] %vm1136, %v1079
        %1157 = vst.msk [vmem:[#allocation7 + $0x5a0] sm:$0xff] %vm1136, %v1081
        %1158 = vst.msk [vmem:[#allocation7 + $0x5e8] sm:$0xff] %vm1136, %v1083
        %1159 = vst.msk [vmem:[#allocation7 + $0x630] sm:$0xff] %vm1136, %v1085
        %1160 = vst.msk [vmem:[#allocation7 + $0x678] sm:$0xff] %vm1136, %v1087
        %1161 = vst.msk [vmem:[#allocation7 + $0x6c0] sm:$0xff] %vm1136, %v1089
        %1162 = vst.msk [vmem:[#allocation7 + $0x708] sm:$0xff] %vm1136, %v1091
        %1163 = vst.msk [vmem:[#allocation7 + $0x750] sm:$0xff] %vm1136, %v1093
        %1164 = vst.msk [vmem:[#allocation7 + $0x798] sm:$0xff] %vm1136, %v1095
        %1165 = vst.msk [vmem:[#allocation7 + $0x7e0] sm:$0xff] %vm1136, %v1097
        %1166 = vst.msk [vmem:[#allocation7 + $0x828] sm:$0xff] %vm1136, %v1099
        %1167 = vst.msk [vmem:[#allocation7 + $0x870] sm:$0xff] %vm1136, %v1101
        %1168 = vst.msk [vmem:[#allocation7 + $0x8b8] sm:$0xff] %vm1136, %v1103
        %v1169 = vld [vmem:[#allocation2 + $0x2] sm:$0xff]
        %v1170 = vld [vmem:[#allocation2 + $0xa] sm:$0xff]
        %v1171 = vld [vmem:[#allocation2 + $0x1a] sm:$0xff]
        %v1172 = vld [vmem:[#allocation2 + $0x22] sm:$0xff]
        %v1173 = vld [vmem:[#allocation2 + $0x32] sm:$0xff]
        %v1174 = vld [vmem:[#allocation2 + $0x3a] sm:$0xff]
        %v1175 = vld [vmem:[#allocation2 + $0x4a] sm:$0xff]
        %v1176 = vld [vmem:[#allocation2 + $0x52] sm:$0xff]
        %v1177 = vld [vmem:[#allocation2 + $0x62] sm:$0xff]
        %v1178 = vld [vmem:[#allocation2 + $0x6a] sm:$0xff]
        %v1179 = vld [vmem:[#allocation2 + $0x7a] sm:$0xff]
        %v1180 = vld [vmem:[#allocation2 + $0x82] sm:$0xff]
        %v1181 = vld [vmem:[#allocation2 + $0x92] sm:$0xff]
        %v1182 = vld [vmem:[#allocation2 + $0x9a] sm:$0xff]
        %v1183 = vld [vmem:[#allocation2 + $0xaa] sm:$0xff]
        %v1184 = vld [vmem:[#allocation2 + $0xb2] sm:$0xff]
        %v1185 = vld [vmem:[#allocation2 + $0xc2] sm:$0xff]
        %v1186 = vld [vmem:[#allocation2 + $0xca] sm:$0xff]
        %v1187 = vld [vmem:[#allocation2 + $0xda] sm:$0xff]
        %v1188 = vld [vmem:[#allocation2 + $0xe2] sm:$0xff]
        %v1189 = vld [vmem:[#allocation2 + $0xf2] sm:$0xff]
        %v1190 = vld [vmem:[#allocation2 + $0xfa] sm:$0xff]
        %v1191 = vld [vmem:[#allocation2 + $0x10a] sm:$0xff]
        %v1192 = vld [vmem:[#allocation2 + $0x112] sm:$0xff]
        %v1193 = vld [vmem:[#allocation2 + $0x122] sm:$0xff]
        %v1194 = vld [vmem:[#allocation2 + $0x12a] sm:$0xff]
        %v1195 = vld [vmem:[#allocation2 + $0x13a] sm:$0xff]
        %v1196 = vld [vmem:[#allocation2 + $0x142] sm:$0xff]
        %v1197 = vld [vmem:[#allocation2 + $0x152] sm:$0xff]
        %v1198 = vld [vmem:[#allocation2 + $0x15a] sm:$0xff]
        %v1199 = vld [vmem:[#allocation2 + $0x16a] sm:$0xff]
        %v1200 = vld [vmem:[#allocation2 + $0x172] sm:$0xff]
        %1233 = vrot.lane.b32.xlu0 %v1169, 64
        %v1234 = vpop.permute.xlu0 %1233
        %1235 = vrot.lane.b32.xlu0 %v1170, 64
        %v1236 = vpop.permute.xlu0 %1235
        %1237 = vrot.lane.b32.xlu0 %v1171, 64
        %v1238 = vpop.permute.xlu0 %1237
        %1239 = vrot.lane.b32.xlu0 %v1172, 64
        %v1240 = vpop.permute.xlu0 %1239
        %1241 = vrot.lane.b32.xlu0 %v1173, 64
        %v1242 = vpop.permute.xlu0 %1241
        %1243 = vrot.lane.b32.xlu0 %v1174, 64
        %v1244 = vpop.permute.xlu0 %1243
        %1245 = vrot.lane.b32.xlu0 %v1175, 64
        %v1246 = vpop.permute.xlu0 %1245
        %1247 = vrot.lane.b32.xlu0 %v1176, 64
        %v1248 = vpop.permute.xlu0 %1247
        %1249 = vrot.lane.b32.xlu0 %v1177, 64
        %v1250 = vpop.permute.xlu0 %1249
        %1251 = vrot.lane.b32.xlu0 %v1178, 64
        %v1252 = vpop.permute.xlu0 %1251
        %1253 = vrot.lane.b32.xlu0 %v1179, 64
        %v1254 = vpop.permute.xlu0 %1253
        %1255 = vrot.lane.b32.xlu0 %v1180, 64
        %v1256 = vpop.permute.xlu0 %1255
        %1257 = vrot.lane.b32.xlu0 %v1181, 64
        %v1258 = vpop.permute.xlu0 %1257
        %1259 = vrot.lane.b32.xlu0 %v1182, 64
        %v1260 = vpop.permute.xlu0 %1259
        %1261 = vrot.lane.b32.xlu0 %v1183, 64
        %v1262 = vpop.permute.xlu0 %1261
        %1263 = vrot.lane.b32.xlu0 %v1184, 64
        %v1264 = vpop.permute.xlu0 %1263
        %1265 = vrot.lane.b32.xlu0 %v1185, 64
        %v1266 = vpop.permute.xlu0 %1265
        %1267 = vrot.lane.b32.xlu0 %v1186, 64
        %v1268 = vpop.permute.xlu0 %1267
        %1269 = vrot.lane.b32.xlu0 %v1187, 64
        %v1270 = vpop.permute.xlu0 %1269
        %1271 = vrot.lane.b32.xlu0 %v1188, 64
        %v1272 = vpop.permute.xlu0 %1271
        %1273 = vrot.lane.b32.xlu0 %v1189, 64
        %v1274 = vpop.permute.xlu0 %1273
        %1275 = vrot.lane.b32.xlu0 %v1190, 64
        %v1276 = vpop.permute.xlu0 %1275
        %1277 = vrot.lane.b32.xlu0 %v1191, 64
        %v1278 = vpop.permute.xlu0 %1277
        %1279 = vrot.lane.b32.xlu0 %v1192, 64
        %v1280 = vpop.permute.xlu0 %1279
        %1281 = vrot.lane.b32.xlu0 %v1193, 64
        %v1282 = vpop.permute.xlu0 %1281
        %1283 = vrot.lane.b32.xlu0 %v1194, 64
        %v1284 = vpop.permute.xlu0 %1283
        %1285 = vrot.lane.b32.xlu0 %v1195, 64
        %v1286 = vpop.permute.xlu0 %1285
        %1287 = vrot.lane.b32.xlu0 %v1196, 64
        %v1288 = vpop.permute.xlu0 %1287
        %1289 = vrot.lane.b32.xlu0 %v1197, 64
        %v1290 = vpop.permute.xlu0 %1289
        %1291 = vrot.lane.b32.xlu0 %v1198, 64
        %v1292 = vpop.permute.xlu0 %1291
        %1293 = vrot.lane.b32.xlu0 %v1199, 64
        %v1294 = vpop.permute.xlu0 %1293
        %1295 = vrot.lane.b32.xlu0 %v1200, 64
        %v1296 = vpop.permute.xlu0 %1295
        %vm1329 = vcmask 785920
        %1330 = vst.msk [vmem:[#allocation7] sm:$0xff] %vm1329, %v1234
        %1331 = vst.msk [vmem:[#allocation7 + $0x48] sm:$0xff] %vm1329, %v1236
        %1332 = vst.msk [vmem:[#allocation7 + $0x90] sm:$0xff] %vm1329, %v1238
        %1333 = vst.msk [vmem:[#allocation7 + $0xd8] sm:$0xff] %vm1329, %v1240
        %1334 = vst.msk [vmem:[#allocation7 + $0x120] sm:$0xff] %vm1329, %v1242
        %1335 = vst.msk [vmem:[#allocation7 + $0x168] sm:$0xff] %vm1329, %v1244
        %1336 = vst.msk [vmem:[#allocation7 + $0x1b0] sm:$0xff] %vm1329, %v1246
        %1337 = vst.msk [vmem:[#allocation7 + $0x1f8] sm:$0xff] %vm1329, %v1248
        %1338 = vst.msk [vmem:[#allocation7 + $0x240] sm:$0xff] %vm1329, %v1250
        %1339 = vst.msk [vmem:[#allocation7 + $0x288] sm:$0xff] %vm1329, %v1252
        %1340 = vst.msk [vmem:[#allocation7 + $0x2d0] sm:$0xff] %vm1329, %v1254
        %1341 = vst.msk [vmem:[#allocation7 + $0x318] sm:$0xff] %vm1329, %v1256
        %1342 = vst.msk [vmem:[#allocation7 + $0x360] sm:$0xff] %vm1329, %v1258
        %1343 = vst.msk [vmem:[#allocation7 + $0x3a8] sm:$0xff] %vm1329, %v1260
        %1344 = vst.msk [vmem:[#allocation7 + $0x3f0] sm:$0xff] %vm1329, %v1262
        %1345 = vst.msk [vmem:[#allocation7 + $0x438] sm:$0xff] %vm1329, %v1264
        %1346 = vst.msk [vmem:[#allocation7 + $0x480] sm:$0xff] %vm1329, %v1266
        %1347 = vst.msk [vmem:[#allocation7 + $0x4c8] sm:$0xff] %vm1329, %v1268
        %1348 = vst.msk [vmem:[#allocation7 + $0x510] sm:$0xff] %vm1329, %v1270
        %1349 = vst.msk [vmem:[#allocation7 + $0x558] sm:$0xff] %vm1329, %v1272
        %1350 = vst.msk [vmem:[#allocation7 + $0x5a0] sm:$0xff] %vm1329, %v1274
        %1351 = vst.msk [vmem:[#allocation7 + $0x5e8] sm:$0xff] %vm1329, %v1276
        %1352 = vst.msk [vmem:[#allocation7 + $0x630] sm:$0xff] %vm1329, %v1278
        %1353 = vst.msk [vmem:[#allocation7 + $0x678] sm:$0xff] %vm1329, %v1280
        %1354 = vst.msk [vmem:[#allocation7 + $0x6c0] sm:$0xff] %vm1329, %v1282
        %1355 = vst.msk [vmem:[#allocation7 + $0x708] sm:$0xff] %vm1329, %v1284
        %1356 = vst.msk [vmem:[#allocation7 + $0x750] sm:$0xff] %vm1329, %v1286
        %1357 = vst.msk [vmem:[#allocation7 + $0x798] sm:$0xff] %vm1329, %v1288
        %1358 = vst.msk [vmem:[#allocation7 + $0x7e0] sm:$0xff] %vm1329, %v1290
        %1359 = vst.msk [vmem:[#allocation7 + $0x828] sm:$0xff] %vm1329, %v1292
        %1360 = vst.msk [vmem:[#allocation7 + $0x870] sm:$0xff] %vm1329, %v1294
        %1361 = vst.msk [vmem:[#allocation7 + $0x8b8] sm:$0xff] %vm1329, %v1296
        %v1362 = vld [vmem:[%s879] sm:$0xff]
        %v1363 = vld [vmem:[%s879 + $0x8] sm:$0xff]
        %v1364 = vld [vmem:[%s879 + $0x18] sm:$0xff]
        %v1365 = vld [vmem:[%s879 + $0x20] sm:$0xff]
        %v1366 = vld [vmem:[%s879 + $0x30] sm:$0xff]
        %v1367 = vld [vmem:[%s879 + $0x38] sm:$0xff]
        %v1368 = vld [vmem:[%s879 + $0x48] sm:$0xff]
        %v1369 = vld [vmem:[%s879 + $0x50] sm:$0xff]
        %v1370 = vld [vmem:[%s879 + $0x60] sm:$0xff]
        %v1371 = vld [vmem:[%s879 + $0x68] sm:$0xff]
        %v1372 = vld [vmem:[%s879 + $0x78] sm:$0xff]
        %v1373 = vld [vmem:[%s879 + $0x80] sm:$0xff]
        %v1374 = vld [vmem:[%s879 + $0x90] sm:$0xff]
        %v1375 = vld [vmem:[%s879 + $0x98] sm:$0xff]
        %v1376 = vld [vmem:[%s879 + $0xa8] sm:$0xff]
        %v1377 = vld [vmem:[%s879 + $0xb0] sm:$0xff]
        %v1378 = vld [vmem:[%s879 + $0xc0] sm:$0xff]
        %v1379 = vld [vmem:[%s879 + $0xc8] sm:$0xff]
        %v1380 = vld [vmem:[%s879 + $0xd8] sm:$0xff]
        %v1381 = vld [vmem:[%s879 + $0xe0] sm:$0xff]
        %v1382 = vld [vmem:[%s879 + $0xf0] sm:$0xff]
        %v1383 = vld [vmem:[%s879 + $0xf8] sm:$0xff]
        %v1384 = vld [vmem:[%s879 + $0x108] sm:$0xff]
        %v1385 = vld [vmem:[%s879 + $0x110] sm:$0xff]
        %v1386 = vld [vmem:[%s879 + $0x120] sm:$0xff]
        %v1387 = vld [vmem:[%s879 + $0x128] sm:$0xff]
        %v1388 = vld [vmem:[%s879 + $0x138] sm:$0xff]
        %v1389 = vld [vmem:[%s879 + $0x140] sm:$0xff]
        %v1390 = vld [vmem:[%s879 + $0x150] sm:$0xff]
        %v1391 = vld [vmem:[%s879 + $0x158] sm:$0xff]
        %v1392 = vld [vmem:[%s879 + $0x168] sm:$0xff]
        %v1393 = vld [vmem:[%s879 + $0x170] sm:$0xff]
        %1426 = vrot.lane.b32.xlu0 %v1362, 96
        %v1427 = vpop.permute.xlu0 %1426
        %1428 = vrot.lane.b32.xlu0 %v1363, 96
        %v1429 = vpop.permute.xlu0 %1428
        %1430 = vrot.lane.b32.xlu0 %v1364, 96
        %v1431 = vpop.permute.xlu0 %1430
        %1432 = vrot.lane.b32.xlu0 %v1365, 96
        %v1433 = vpop.permute.xlu0 %1432
        %1434 = vrot.lane.b32.xlu0 %v1366, 96
        %v1435 = vpop.permute.xlu0 %1434
        %1436 = vrot.lane.b32.xlu0 %v1367, 96
        %v1437 = vpop.permute.xlu0 %1436
        %1438 = vrot.lane.b32.xlu0 %v1368, 96
        %v1439 = vpop.permute.xlu0 %1438
        %1440 = vrot.lane.b32.xlu0 %v1369, 96
        %v1441 = vpop.permute.xlu0 %1440
        %1442 = vrot.lane.b32.xlu0 %v1370, 96
        %v1443 = vpop.permute.xlu0 %1442
        %1444 = vrot.lane.b32.xlu0 %v1371, 96
        %v1445 = vpop.permute.xlu0 %1444
        %1446 = vrot.lane.b32.xlu0 %v1372, 96
        %v1447 = vpop.permute.xlu0 %1446
        %1448 = vrot.lane.b32.xlu0 %v1373, 96
        %v1449 = vpop.permute.xlu0 %1448
        %1450 = vrot.lane.b32.xlu0 %v1374, 96
        %v1451 = vpop.permute.xlu0 %1450
        %1452 = vrot.lane.b32.xlu0 %v1375, 96
        %v1453 = vpop.permute.xlu0 %1452
        %1454 = vrot.lane.b32.xlu0 %v1376, 96
        %v1455 = vpop.permute.xlu0 %1454
        %1456 = vrot.lane.b32.xlu0 %v1377, 96
        %v1457 = vpop.permute.xlu0 %1456
        %1458 = vrot.lane.b32.xlu0 %v1378, 96
        %v1459 = vpop.permute.xlu0 %1458
        %1460 = vrot.lane.b32.xlu0 %v1379, 96
        %v1461 = vpop.permute.xlu0 %1460
        %1462 = vrot.lane.b32.xlu0 %v1380, 96
        %v1463 = vpop.permute.xlu0 %1462
        %1464 = vrot.lane.b32.xlu0 %v1381, 96
        %v1465 = vpop.permute.xlu0 %1464
        %1466 = vrot.lane.b32.xlu0 %v1382, 96
        %v1467 = vpop.permute.xlu0 %1466
        %1468 = vrot.lane.b32.xlu0 %v1383, 96
        %v1469 = vpop.permute.xlu0 %1468
        %1470 = vrot.lane.b32.xlu0 %v1384, 96
        %v1471 = vpop.permute.xlu0 %1470
        %1472 = vrot.lane.b32.xlu0 %v1385, 96
        %v1473 = vpop.permute.xlu0 %1472
        %1474 = vrot.lane.b32.xlu0 %v1386, 96
        %v1475 = vpop.permute.xlu0 %1474
        %1476 = vrot.lane.b32.xlu0 %v1387, 96
        %v1477 = vpop.permute.xlu0 %1476
        %1478 = vrot.lane.b32.xlu0 %v1388, 96
        %v1479 = vpop.permute.xlu0 %1478
        %1480 = vrot.lane.b32.xlu0 %v1389, 96
        %v1481 = vpop.permute.xlu0 %1480
        %1482 = vrot.lane.b32.xlu0 %v1390, 96
        %v1483 = vpop.permute.xlu0 %1482
        %1484 = vrot.lane.b32.xlu0 %v1391, 96
        %v1485 = vpop.permute.xlu0 %1484
        %1486 = vrot.lane.b32.xlu0 %v1392, 96
        %v1487 = vpop.permute.xlu0 %1486
        %1488 = vrot.lane.b32.xlu0 %v1393, 96
        %v1489 = vpop.permute.xlu0 %1488
        %vm1522 = vcmask 1048320
        %1523 = vst.msk [vmem:[#allocation7] sm:$0xff] %vm1522, %v1427
        %1524 = vst.msk [vmem:[#allocation7 + $0x48] sm:$0xff] %vm1522, %v1429
        %1525 = vst.msk [vmem:[#allocation7 + $0x90] sm:$0xff] %vm1522, %v1431
        %1526 = vst.msk [vmem:[#allocation7 + $0xd8] sm:$0xff] %vm1522, %v1433
        %1527 = vst.msk [vmem:[#allocation7 + $0x120] sm:$0xff] %vm1522, %v1435
        %1528 = vst.msk [vmem:[#allocation7 + $0x168] sm:$0xff] %vm1522, %v1437
        %1529 = vst.msk [vmem:[#allocation7 + $0x1b0] sm:$0xff] %vm1522, %v1439
        %1530 = vst.msk [vmem:[#allocation7 + $0x1f8] sm:$0xff] %vm1522, %v1441
        %1531 = vst.msk [vmem:[#allocation7 + $0x240] sm:$0xff] %vm1522, %v1443
        %1532 = vst.msk [vmem:[#allocation7 + $0x288] sm:$0xff] %vm1522, %v1445
        %1533 = vst.msk [vmem:[#allocation7 + $0x2d0] sm:$0xff] %vm1522, %v1447
        %1534 = vst.msk [vmem:[#allocation7 + $0x318] sm:$0xff] %vm1522, %v1449
        %1535 = vst.msk [vmem:[#allocation7 + $0x360] sm:$0xff] %vm1522, %v1451
        %1536 = vst.msk [vmem:[#allocation7 + $0x3a8] sm:$0xff] %vm1522, %v1453
        %1537 = vst.msk [vmem:[#allocation7 + $0x3f0] sm:$0xff] %vm1522, %v1455
        %1538 = vst.msk [vmem:[#allocation7 + $0x438] sm:$0xff] %vm1522, %v1457
        %1539 = vst.msk [vmem:[#allocation7 + $0x480] sm:$0xff] %vm1522, %v1459
        %1540 = vst.msk [vmem:[#allocation7 + $0x4c8] sm:$0xff] %vm1522, %v1461
        %1541 = vst.msk [vmem:[#allocation7 + $0x510] sm:$0xff] %vm1522, %v1463
        %1542 = vst.msk [vmem:[#allocation7 + $0x558] sm:$0xff] %vm1522, %v1465
        %1543 = vst.msk [vmem:[#allocation7 + $0x5a0] sm:$0xff] %vm1522, %v1467
        %1544 = vst.msk [vmem:[#allocation7 + $0x5e8] sm:$0xff] %vm1522, %v1469
        %1545 = vst.msk [vmem:[#allocation7 + $0x630] sm:$0xff] %vm1522, %v1471
        %1546 = vst.msk [vmem:[#allocation7 + $0x678] sm:$0xff] %vm1522, %v1473
        %1547 = vst.msk [vmem:[#allocation7 + $0x6c0] sm:$0xff] %vm1522, %v1475
        %1548 = vst.msk [vmem:[#allocation7 + $0x708] sm:$0xff] %vm1522, %v1477
        %1549 = vst.msk [vmem:[#allocation7 + $0x750] sm:$0xff] %vm1522, %v1479
        %1550 = vst.msk [vmem:[#allocation7 + $0x798] sm:$0xff] %vm1522, %v1481
        %1551 = vst.msk [vmem:[#allocation7 + $0x7e0] sm:$0xff] %vm1522, %v1483
        %1552 = vst.msk [vmem:[#allocation7 + $0x828] sm:$0xff] %vm1522, %v1485
        %1553 = vst.msk [vmem:[#allocation7 + $0x870] sm:$0xff] %vm1522, %v1487
        %1554 = vst.msk [vmem:[#allocation7 + $0x8b8] sm:$0xff] %vm1522, %v1489
        %v1555 = vld [vmem:[%s879 + $0x1] sm:$0xff]
        %v1556 = vld [vmem:[%s879 + $0x9] sm:$0xff]
        %v1557 = vld [vmem:[%s879 + $0x19] sm:$0xff]
        %v1558 = vld [vmem:[%s879 + $0x21] sm:$0xff]
        %v1559 = vld [vmem:[%s879 + $0x31] sm:$0xff]
        %v1560 = vld [vmem:[%s879 + $0x39] sm:$0xff]
        %v1561 = vld [vmem:[%s879 + $0x49] sm:$0xff]
        %v1562 = vld [vmem:[%s879 + $0x51] sm:$0xff]
        %v1563 = vld [vmem:[%s879 + $0x61] sm:$0xff]
        %v1564 = vld [vmem:[%s879 + $0x69] sm:$0xff]
        %v1565 = vld [vmem:[%s879 + $0x79] sm:$0xff]
        %v1566 = vld [vmem:[%s879 + $0x81] sm:$0xff]
        %v1567 = vld [vmem:[%s879 + $0x91] sm:$0xff]
        %v1568 = vld [vmem:[%s879 + $0x99] sm:$0xff]
        %v1569 = vld [vmem:[%s879 + $0xa9] sm:$0xff]
        %v1570 = vld [vmem:[%s879 + $0xb1] sm:$0xff]
        %v1571 = vld [vmem:[%s879 + $0xc1] sm:$0xff]
        %v1572 = vld [vmem:[%s879 + $0xc9] sm:$0xff]
        %v1573 = vld [vmem:[%s879 + $0xd9] sm:$0xff]
        %v1574 = vld [vmem:[%s879 + $0xe1] sm:$0xff]
        %v1575 = vld [vmem:[%s879 + $0xf1] sm:$0xff]
        %v1576 = vld [vmem:[%s879 + $0xf9] sm:$0xff]
        %v1577 = vld [vmem:[%s879 + $0x109] sm:$0xff]
        %v1578 = vld [vmem:[%s879 + $0x111] sm:$0xff]
        %v1579 = vld [vmem:[%s879 + $0x121] sm:$0xff]
        %v1580 = vld [vmem:[%s879 + $0x129] sm:$0xff]
        %v1581 = vld [vmem:[%s879 + $0x139] sm:$0xff]
        %v1582 = vld [vmem:[%s879 + $0x141] sm:$0xff]
        %v1583 = vld [vmem:[%s879 + $0x151] sm:$0xff]
        %v1584 = vld [vmem:[%s879 + $0x159] sm:$0xff]
        %v1585 = vld [vmem:[%s879 + $0x169] sm:$0xff]
        %v1586 = vld [vmem:[%s879 + $0x171] sm:$0xff]
        %1587 = vst.msk [vmem:[#allocation7 + $0x8] sm:$0xff] %vm823, %v1555
        %1588 = vst.msk [vmem:[#allocation7 + $0x50] sm:$0xff] %vm823, %v1556
        %1589 = vst.msk [vmem:[#allocation7 + $0x98] sm:$0xff] %vm823, %v1557
        %1590 = vst.msk [vmem:[#allocation7 + $0xe0] sm:$0xff] %vm823, %v1558
        %1591 = vst.msk [vmem:[#allocation7 + $0x128] sm:$0xff] %vm823, %v1559
        %1592 = vst.msk [vmem:[#allocation7 + $0x170] sm:$0xff] %vm823, %v1560
        %1593 = vst.msk [vmem:[#allocation7 + $0x1b8] sm:$0xff] %vm823, %v1561
        %1594 = vst.msk [vmem:[#allocation7 + $0x200] sm:$0xff] %vm823, %v1562
        %1595 = vst.msk [vmem:[#allocation7 + $0x248] sm:$0xff] %vm823, %v1563
        %1596 = vst.msk [vmem:[#allocation7 + $0x290] sm:$0xff] %vm823, %v1564
        %1597 = vst.msk [vmem:[#allocation7 + $0x2d8] sm:$0xff] %vm823, %v1565
        %1598 = vst.msk [vmem:[#allocation7 + $0x320] sm:$0xff] %vm823, %v1566
        %1599 = vst.msk [vmem:[#allocation7 + $0x368] sm:$0xff] %vm823, %v1567
        %1600 = vst.msk [vmem:[#allocation7 + $0x3b0] sm:$0xff] %vm823, %v1568
        %1601 = vst.msk [vmem:[#allocation7 + $0x3f8] sm:$0xff] %vm823, %v1569
        %1602 = vst.msk [vmem:[#allocation7 + $0x440] sm:$0xff] %vm823, %v1570
        %1603 = vst.msk [vmem:[#allocation7 + $0x488] sm:$0xff] %vm823, %v1571
        %1604 = vst.msk [vmem:[#allocation7 + $0x4d0] sm:$0xff] %vm823, %v1572
        %1605 = vst.msk [vmem:[#allocation7 + $0x518] sm:$0xff] %vm823, %v1573
        %1606 = vst.msk [vmem:[#allocation7 + $0x560] sm:$0xff] %vm823, %v1574
        %1607 = vst.msk [vmem:[#allocation7 + $0x5a8] sm:$0xff] %vm823, %v1575
        %1608 = vst.msk [vmem:[#allocation7 + $0x5f0] sm:$0xff] %vm823, %v1576
        %1609 = vst.msk [vmem:[#allocation7 + $0x638] sm:$0xff] %vm823, %v1577
        %1610 = vst.msk [vmem:[#allocation7 + $0x680] sm:$0xff] %vm823, %v1578
        %1611 = vst.msk [vmem:[#allocation7 + $0x6c8] sm:$0xff] %vm823, %v1579
        %1612 = vst.msk [vmem:[#allocation7 + $0x710] sm:$0xff] %vm823, %v1580
        %1613 = vst.msk [vmem:[#allocation7 + $0x758] sm:$0xff] %vm823, %v1581
        %1614 = vst.msk [vmem:[#allocation7 + $0x7a0] sm:$0xff] %vm823, %v1582
        %1615 = vst.msk [vmem:[#allocation7 + $0x7e8] sm:$0xff] %vm823, %v1583
        %1616 = vst.msk [vmem:[#allocation7 + $0x830] sm:$0xff] %vm823, %v1584
        %1617 = vst.msk [vmem:[#allocation7 + $0x878] sm:$0xff] %vm823, %v1585
        %1618 = vst.msk [vmem:[#allocation7 + $0x8c0] sm:$0xff] %vm823, %v1586
        %v1619 = vld [vmem:[%s879 + $0x2] sm:$0xff]
        %v1620 = vld [vmem:[%s879 + $0xa] sm:$0xff]
        %v1621 = vld [vmem:[%s879 + $0x1a] sm:$0xff]
        %v1622 = vld [vmem:[%s879 + $0x22] sm:$0xff]
        %v1623 = vld [vmem:[%s879 + $0x32] sm:$0xff]
        %v1624 = vld [vmem:[%s879 + $0x3a] sm:$0xff]
        %v1625 = vld [vmem:[%s879 + $0x4a] sm:$0xff]
        %v1626 = vld [vmem:[%s879 + $0x52] sm:$0xff]
        %v1627 = vld [vmem:[%s879 + $0x62] sm:$0xff]
        %v1628 = vld [vmem:[%s879 + $0x6a] sm:$0xff]
        %v1629 = vld [vmem:[%s879 + $0x7a] sm:$0xff]
        %v1630 = vld [vmem:[%s879 + $0x82] sm:$0xff]
        %v1631 = vld [vmem:[%s879 + $0x92] sm:$0xff]
        %v1632 = vld [vmem:[%s879 + $0x9a] sm:$0xff]
        %v1633 = vld [vmem:[%s879 + $0xaa] sm:$0xff]
        %v1634 = vld [vmem:[%s879 + $0xb2] sm:$0xff]
        %v1635 = vld [vmem:[%s879 + $0xc2] sm:$0xff]
        %v1636 = vld [vmem:[%s879 + $0xca] sm:$0xff]
        %v1637 = vld [vmem:[%s879 + $0xda] sm:$0xff]
        %v1638 = vld [vmem:[%s879 + $0xe2] sm:$0xff]
        %v1639 = vld [vmem:[%s879 + $0xf2] sm:$0xff]
        %v1640 = vld [vmem:[%s879 + $0xfa] sm:$0xff]
        %v1641 = vld [vmem:[%s879 + $0x10a] sm:$0xff]
        %v1642 = vld [vmem:[%s879 + $0x112] sm:$0xff]
        %v1643 = vld [vmem:[%s879 + $0x122] sm:$0xff]
        %v1644 = vld [vmem:[%s879 + $0x12a] sm:$0xff]
        %v1645 = vld [vmem:[%s879 + $0x13a] sm:$0xff]
        %v1646 = vld [vmem:[%s879 + $0x142] sm:$0xff]
        %v1647 = vld [vmem:[%s879 + $0x152] sm:$0xff]
        %v1648 = vld [vmem:[%s879 + $0x15a] sm:$0xff]
        %v1649 = vld [vmem:[%s879 + $0x16a] sm:$0xff]
        %v1650 = vld [vmem:[%s879 + $0x172] sm:$0xff]
        %1683 = vrot.lane.b32.xlu0 %v1619, 32
        %v1684 = vpop.permute.xlu0 %1683
        %1685 = vrot.lane.b32.xlu0 %v1620, 32
        %v1686 = vpop.permute.xlu0 %1685
        %1687 = vrot.lane.b32.xlu0 %v1621, 32
        %v1688 = vpop.permute.xlu0 %1687
        %1689 = vrot.lane.b32.xlu0 %v1622, 32
        %v1690 = vpop.permute.xlu0 %1689
        %1691 = vrot.lane.b32.xlu0 %v1623, 32
        %v1692 = vpop.permute.xlu0 %1691
        %1693 = vrot.lane.b32.xlu0 %v1624, 32
        %v1694 = vpop.permute.xlu0 %1693
        %1695 = vrot.lane.b32.xlu0 %v1625, 32
        %v1696 = vpop.permute.xlu0 %1695
        %1697 = vrot.lane.b32.xlu0 %v1626, 32
        %v1698 = vpop.permute.xlu0 %1697
        %1699 = vrot.lane.b32.xlu0 %v1627, 32
        %v1700 = vpop.permute.xlu0 %1699
        %1701 = vrot.lane.b32.xlu0 %v1628, 32
        %v1702 = vpop.permute.xlu0 %1701
        %1703 = vrot.lane.b32.xlu0 %v1629, 32
        %v1704 = vpop.permute.xlu0 %1703
        %1705 = vrot.lane.b32.xlu0 %v1630, 32
        %v1706 = vpop.permute.xlu0 %1705
        %1707 = vrot.lane.b32.xlu0 %v1631, 32
        %v1708 = vpop.permute.xlu0 %1707
        %1709 = vrot.lane.b32.xlu0 %v1632, 32
        %v1710 = vpop.permute.xlu0 %1709
        %1711 = vrot.lane.b32.xlu0 %v1633, 32
        %v1712 = vpop.permute.xlu0 %1711
        %1713 = vrot.lane.b32.xlu0 %v1634, 32
        %v1714 = vpop.permute.xlu0 %1713
        %1715 = vrot.lane.b32.xlu0 %v1635, 32
        %v1716 = vpop.permute.xlu0 %1715
        %1717 = vrot.lane.b32.xlu0 %v1636, 32
        %v1718 = vpop.permute.xlu0 %1717
        %1719 = vrot.lane.b32.xlu0 %v1637, 32
        %v1720 = vpop.permute.xlu0 %1719
        %1721 = vrot.lane.b32.xlu0 %v1638, 32
        %v1722 = vpop.permute.xlu0 %1721
        %1723 = vrot.lane.b32.xlu0 %v1639, 32
        %v1724 = vpop.permute.xlu0 %1723
        %1725 = vrot.lane.b32.xlu0 %v1640, 32
        %v1726 = vpop.permute.xlu0 %1725
        %1727 = vrot.lane.b32.xlu0 %v1641, 32
        %v1728 = vpop.permute.xlu0 %1727
        %1729 = vrot.lane.b32.xlu0 %v1642, 32
        %v1730 = vpop.permute.xlu0 %1729
        %1731 = vrot.lane.b32.xlu0 %v1643, 32
        %v1732 = vpop.permute.xlu0 %1731
        %1733 = vrot.lane.b32.xlu0 %v1644, 32
        %v1734 = vpop.permute.xlu0 %1733
        %1735 = vrot.lane.b32.xlu0 %v1645, 32
        %v1736 = vpop.permute.xlu0 %1735
        %1737 = vrot.lane.b32.xlu0 %v1646, 32
        %v1738 = vpop.permute.xlu0 %1737
        %1739 = vrot.lane.b32.xlu0 %v1647, 32
        %v1740 = vpop.permute.xlu0 %1739
        %1741 = vrot.lane.b32.xlu0 %v1648, 32
        %v1742 = vpop.permute.xlu0 %1741
        %1743 = vrot.lane.b32.xlu0 %v1649, 32
        %v1744 = vpop.permute.xlu0 %1743
        %1745 = vrot.lane.b32.xlu0 %v1650, 32
        %v1746 = vpop.permute.xlu0 %1745
        %1779 = vst.msk [vmem:[#allocation7 + $0x8] sm:$0xff] %vm1136, %v1684
        %1780 = vst.msk [vmem:[#allocation7 + $0x50] sm:$0xff] %vm1136, %v1686
        %1781 = vst.msk [vmem:[#allocation7 + $0x98] sm:$0xff] %vm1136, %v1688
        %1782 = vst.msk [vmem:[#allocation7 + $0xe0] sm:$0xff] %vm1136, %v1690
        %1783 = vst.msk [vmem:[#allocation7 + $0x128] sm:$0xff] %vm1136, %v1692
        %1784 = vst.msk [vmem:[#allocation7 + $0x170] sm:$0xff] %vm1136, %v1694
        %1785 = vst.msk [vmem:[#allocation7 + $0x1b8] sm:$0xff] %vm1136, %v1696
        %1786 = vst.msk [vmem:[#allocation7 + $0x200] sm:$0xff] %vm1136, %v1698
        %1787 = vst.msk [vmem:[#allocation7 + $0x248] sm:$0xff] %vm1136, %v1700
        %1788 = vst.msk [vmem:[#allocation7 + $0x290] sm:$0xff] %vm1136, %v1702
        %1789 = vst.msk [vmem:[#allocation7 + $0x2d8] sm:$0xff] %vm1136, %v1704
        %1790 = vst.msk [vmem:[#allocation7 + $0x320] sm:$0xff] %vm1136, %v1706
        %1791 = vst.msk [vmem:[#allocation7 + $0x368] sm:$0xff] %vm1136, %v1708
        %1792 = vst.msk [vmem:[#allocation7 + $0x3b0] sm:$0xff] %vm1136, %v1710
        %1793 = vst.msk [vmem:[#allocation7 + $0x3f8] sm:$0xff] %vm1136, %v1712
        %1794 = vst.msk [vmem:[#allocation7 + $0x440] sm:$0xff] %vm1136, %v1714
        %1795 = vst.msk [vmem:[#allocation7 + $0x488] sm:$0xff] %vm1136, %v1716
        %1796 = vst.msk [vmem:[#allocation7 + $0x4d0] sm:$0xff] %vm1136, %v1718
        %1797 = vst.msk [vmem:[#allocation7 + $0x518] sm:$0xff] %vm1136, %v1720
        %1798 = vst.msk [vmem:[#allocation7 + $0x560] sm:$0xff] %vm1136, %v1722
        %1799 = vst.msk [vmem:[#allocation7 + $0x5a8] sm:$0xff] %vm1136, %v1724
        %1800 = vst.msk [vmem:[#allocation7 + $0x5f0] sm:$0xff] %vm1136, %v1726
        %1801 = vst.msk [vmem:[#allocation7 + $0x638] sm:$0xff] %vm1136, %v1728
        %1802 = vst.msk [vmem:[#allocation7 + $0x680] sm:$0xff] %vm1136, %v1730
        %1803 = vst.msk [vmem:[#allocation7 + $0x6c8] sm:$0xff] %vm1136, %v1732
        %1804 = vst.msk [vmem:[#allocation7 + $0x710] sm:$0xff] %vm1136, %v1734
        %1805 = vst.msk [vmem:[#allocation7 + $0x758] sm:$0xff] %vm1136, %v1736
        %1806 = vst.msk [vmem:[#allocation7 + $0x7a0] sm:$0xff] %vm1136, %v1738
        %1807 = vst.msk [vmem:[#allocation7 + $0x7e8] sm:$0xff] %vm1136, %v1740
        %1808 = vst.msk [vmem:[#allocation7 + $0x830] sm:$0xff] %vm1136, %v1742
        %1809 = vst.msk [vmem:[#allocation7 + $0x878] sm:$0xff] %vm1136, %v1744
        %1810 = vst.msk [vmem:[#allocation7 + $0x8c0] sm:$0xff] %vm1136, %v1746
        %s1811 = scalar_lea.vmem [#allocation2], 48
        %v1812 = vld [vmem:[%s1811] sm:$0xff]
        %v1813 = vld [vmem:[%s1811 + $0x8] sm:$0xff]
        %v1814 = vld [vmem:[%s1811 + $0x18] sm:$0xff]
        %v1815 = vld [vmem:[%s1811 + $0x20] sm:$0xff]
        %v1816 = vld [vmem:[%s1811 + $0x30] sm:$0xff]
        %v1817 = vld [vmem:[%s1811 + $0x38] sm:$0xff]
        %v1818 = vld [vmem:[%s1811 + $0x48] sm:$0xff]
        %v1819 = vld [vmem:[%s1811 + $0x50] sm:$0xff]
        %v1820 = vld [vmem:[%s1811 + $0x60] sm:$0xff]
        %v1821 = vld [vmem:[%s1811 + $0x68] sm:$0xff]
        %v1822 = vld [vmem:[%s1811 + $0x78] sm:$0xff]
        %v1823 = vld [vmem:[%s1811 + $0x80] sm:$0xff]
        %v1824 = vld [vmem:[%s1811 + $0x90] sm:$0xff]
        %v1825 = vld [vmem:[%s1811 + $0x98] sm:$0xff]
        %v1826 = vld [vmem:[%s1811 + $0xa8] sm:$0xff]
        %v1827 = vld [vmem:[%s1811 + $0xb0] sm:$0xff]
        %v1828 = vld [vmem:[%s1811 + $0xc0] sm:$0xff]
        %v1829 = vld [vmem:[%s1811 + $0xc8] sm:$0xff]
        %v1830 = vld [vmem:[%s1811 + $0xd8] sm:$0xff]
        %v1831 = vld [vmem:[%s1811 + $0xe0] sm:$0xff]
        %v1832 = vld [vmem:[%s1811 + $0xf0] sm:$0xff]
        %v1833 = vld [vmem:[%s1811 + $0xf8] sm:$0xff]
        %v1834 = vld [vmem:[%s1811 + $0x108] sm:$0xff]
        %v1835 = vld [vmem:[%s1811 + $0x110] sm:$0xff]
        %v1836 = vld [vmem:[%s1811 + $0x120] sm:$0xff]
        %v1837 = vld [vmem:[%s1811 + $0x128] sm:$0xff]
        %v1838 = vld [vmem:[%s1811 + $0x138] sm:$0xff]
        %v1839 = vld [vmem:[%s1811 + $0x140] sm:$0xff]
        %v1840 = vld [vmem:[%s1811 + $0x150] sm:$0xff]
        %v1841 = vld [vmem:[%s1811 + $0x158] sm:$0xff]
        %v1842 = vld [vmem:[%s1811 + $0x168] sm:$0xff]
        %v1843 = vld [vmem:[%s1811 + $0x170] sm:$0xff]
        %1876 = vrot.lane.b32.xlu0 %v1812, 64
        %v1877 = vpop.permute.xlu0 %1876
        %1878 = vrot.lane.b32.xlu0 %v1813, 64
        %v1879 = vpop.permute.xlu0 %1878
        %1880 = vrot.lane.b32.xlu0 %v1814, 64
        %v1881 = vpop.permute.xlu0 %1880
        %1882 = vrot.lane.b32.xlu0 %v1815, 64
        %v1883 = vpop.permute.xlu0 %1882
        %1884 = vrot.lane.b32.xlu0 %v1816, 64
        %v1885 = vpop.permute.xlu0 %1884
        %1886 = vrot.lane.b32.xlu0 %v1817, 64
        %v1887 = vpop.permute.xlu0 %1886
        %1888 = vrot.lane.b32.xlu0 %v1818, 64
        %v1889 = vpop.permute.xlu0 %1888
        %1890 = vrot.lane.b32.xlu0 %v1819, 64
        %v1891 = vpop.permute.xlu0 %1890
        %1892 = vrot.lane.b32.xlu0 %v1820, 64
        %v1893 = vpop.permute.xlu0 %1892
        %1894 = vrot.lane.b32.xlu0 %v1821, 64
        %v1895 = vpop.permute.xlu0 %1894
        %1896 = vrot.lane.b32.xlu0 %v1822, 64
        %v1897 = vpop.permute.xlu0 %1896
        %1898 = vrot.lane.b32.xlu0 %v1823, 64
        %v1899 = vpop.permute.xlu0 %1898
        %1900 = vrot.lane.b32.xlu0 %v1824, 64
        %v1901 = vpop.permute.xlu0 %1900
        %1902 = vrot.lane.b32.xlu0 %v1825, 64
        %v1903 = vpop.permute.xlu0 %1902
        %1904 = vrot.lane.b32.xlu0 %v1826, 64
        %v1905 = vpop.permute.xlu0 %1904
        %1906 = vrot.lane.b32.xlu0 %v1827, 64
        %v1907 = vpop.permute.xlu0 %1906
        %1908 = vrot.lane.b32.xlu0 %v1828, 64
        %v1909 = vpop.permute.xlu0 %1908
        %1910 = vrot.lane.b32.xlu0 %v1829, 64
        %v1911 = vpop.permute.xlu0 %1910
        %1912 = vrot.lane.b32.xlu0 %v1830, 64
        %v1913 = vpop.permute.xlu0 %1912
        %1914 = vrot.lane.b32.xlu0 %v1831, 64
        %v1915 = vpop.permute.xlu0 %1914
        %1916 = vrot.lane.b32.xlu0 %v1832, 64
        %v1917 = vpop.permute.xlu0 %1916
        %1918 = vrot.lane.b32.xlu0 %v1833, 64
        %v1919 = vpop.permute.xlu0 %1918
        %1920 = vrot.lane.b32.xlu0 %v1834, 64
        %v1921 = vpop.permute.xlu0 %1920
        %1922 = vrot.lane.b32.xlu0 %v1835, 64
        %v1923 = vpop.permute.xlu0 %1922
        %1924 = vrot.lane.b32.xlu0 %v1836, 64
        %v1925 = vpop.permute.xlu0 %1924
        %1926 = vrot.lane.b32.xlu0 %v1837, 64
        %v1927 = vpop.permute.xlu0 %1926
        %1928 = vrot.lane.b32.xlu0 %v1838, 64
        %v1929 = vpop.permute.xlu0 %1928
        %1930 = vrot.lane.b32.xlu0 %v1839, 64
        %v1931 = vpop.permute.xlu0 %1930
        %1932 = vrot.lane.b32.xlu0 %v1840, 64
        %v1933 = vpop.permute.xlu0 %1932
        %1934 = vrot.lane.b32.xlu0 %v1841, 64
        %v1935 = vpop.permute.xlu0 %1934
        %1936 = vrot.lane.b32.xlu0 %v1842, 64
        %v1937 = vpop.permute.xlu0 %1936
        %1938 = vrot.lane.b32.xlu0 %v1843, 64
        %v1939 = vpop.permute.xlu0 %1938
        %1972 = vst.msk [vmem:[#allocation7 + $0x8] sm:$0xff] %vm1329, %v1877
        %1973 = vst.msk [vmem:[#allocation7 + $0x50] sm:$0xff] %vm1329, %v1879
        %1974 = vst.msk [vmem:[#allocation7 + $0x98] sm:$0xff] %vm1329, %v1881
        %1975 = vst.msk [vmem:[#allocation7 + $0xe0] sm:$0xff] %vm1329, %v1883
        %1976 = vst.msk [vmem:[#allocation7 + $0x128] sm:$0xff] %vm1329, %v1885
        %1977 = vst.msk [vmem:[#allocation7 + $0x170] sm:$0xff] %vm1329, %v1887
        %1978 = vst.msk [vmem:[#allocation7 + $0x1b8] sm:$0xff] %vm1329, %v1889
        %1979 = vst.msk [vmem:[#allocation7 + $0x200] sm:$0xff] %vm1329, %v1891
        %1980 = vst.msk [vmem:[#allocation7 + $0x248] sm:$0xff] %vm1329, %v1893
        %1981 = vst.msk [vmem:[#allocation7 + $0x290] sm:$0xff] %vm1329, %v1895
        %1982 = vst.msk [vmem:[#allocation7 + $0x2d8] sm:$0xff] %vm1329, %v1897
        %1983 = vst.msk [vmem:[#allocation7 + $0x320] sm:$0xff] %vm1329, %v1899
        %1984 = vst.msk [vmem:[#allocation7 + $0x368] sm:$0xff] %vm1329, %v1901
        %1985 = vst.msk [vmem:[#allocation7 + $0x3b0] sm:$0xff] %vm1329, %v1903
        %1986 = vst.msk [vmem:[#allocation7 + $0x3f8] sm:$0xff] %vm1329, %v1905
        %1987 = vst.msk [vmem:[#allocation7 + $0x440] sm:$0xff] %vm1329, %v1907
        %1988 = vst.msk [vmem:[#allocation7 + $0x488] sm:$0xff] %vm1329, %v1909
        %1989 = vst.msk [vmem:[#allocation7 + $0x4d0] sm:$0xff] %vm1329, %v1911
        %1990 = vst.msk [vmem:[#allocation7 + $0x518] sm:$0xff] %vm1329, %v1913
        %1991 = vst.msk [vmem:[#allocation7 + $0x560] sm:$0xff] %vm1329, %v1915
        %1992 = vst.msk [vmem:[#allocation7 + $0x5a8] sm:$0xff] %vm1329, %v1917
        %1993 = vst.msk [vmem:[#allocation7 + $0x5f0] sm:$0xff] %vm1329, %v1919
        %1994 = vst.msk [vmem:[#allocation7 + $0x638] sm:$0xff] %vm1329, %v1921
        %1995 = vst.msk [vmem:[#allocation7 + $0x680] sm:$0xff] %vm1329, %v1923
        %1996 = vst.msk [vmem:[#allocation7 + $0x6c8] sm:$0xff] %vm1329, %v1925
        %1997 = vst.msk [vmem:[#allocation7 + $0x710] sm:$0xff] %vm1329, %v1927
        %1998 = vst.msk [vmem:[#allocation7 + $0x758] sm:$0xff] %vm1329, %v1929
        %1999 = vst.msk [vmem:[#allocation7 + $0x7a0] sm:$0xff] %vm1329, %v1931
        %2000 = vst.msk [vmem:[#allocation7 + $0x7e8] sm:$0xff] %vm1329, %v1933
        %2001 = vst.msk [vmem:[#allocation7 + $0x830] sm:$0xff] %vm1329, %v1935
        %2002 = vst.msk [vmem:[#allocation7 + $0x878] sm:$0xff] %vm1329, %v1937
        %2003 = vst.msk [vmem:[#allocation7 + $0x8c0] sm:$0xff] %vm1329, %v1939
        %v2004 = vld [vmem:[%s1811 + $0x1] sm:$0xff]
        %v2005 = vld [vmem:[%s1811 + $0x9] sm:$0xff]
        %v2006 = vld [vmem:[%s1811 + $0x19] sm:$0xff]
        %v2007 = vld [vmem:[%s1811 + $0x21] sm:$0xff]
        %v2008 = vld [vmem:[%s1811 + $0x31] sm:$0xff]
        %v2009 = vld [vmem:[%s1811 + $0x39] sm:$0xff]
        %v2010 = vld [vmem:[%s1811 + $0x49] sm:$0xff]
        %v2011 = vld [vmem:[%s1811 + $0x51] sm:$0xff]
        %v2012 = vld [vmem:[%s1811 + $0x61] sm:$0xff]
        %v2013 = vld [vmem:[%s1811 + $0x69] sm:$0xff]
        %v2014 = vld [vmem:[%s1811 + $0x79] sm:$0xff]
        %v2015 = vld [vmem:[%s1811 + $0x81] sm:$0xff]
        %v2016 = vld [vmem:[%s1811 + $0x91] sm:$0xff]
        %v2017 = vld [vmem:[%s1811 + $0x99] sm:$0xff]
        %v2018 = vld [vmem:[%s1811 + $0xa9] sm:$0xff]
        %v2019 = vld [vmem:[%s1811 + $0xb1] sm:$0xff]
        %v2020 = vld [vmem:[%s1811 + $0xc1] sm:$0xff]
        %v2021 = vld [vmem:[%s1811 + $0xc9] sm:$0xff]
        %v2022 = vld [vmem:[%s1811 + $0xd9] sm:$0xff]
        %v2023 = vld [vmem:[%s1811 + $0xe1] sm:$0xff]
        %v2024 = vld [vmem:[%s1811 + $0xf1] sm:$0xff]
        %v2025 = vld [vmem:[%s1811 + $0xf9] sm:$0xff]
        %v2026 = vld [vmem:[%s1811 + $0x109] sm:$0xff]
        %v2027 = vld [vmem:[%s1811 + $0x111] sm:$0xff]
        %v2028 = vld [vmem:[%s1811 + $0x121] sm:$0xff]
        %v2029 = vld [vmem:[%s1811 + $0x129] sm:$0xff]
        %v2030 = vld [vmem:[%s1811 + $0x139] sm:$0xff]
        %v2031 = vld [vmem:[%s1811 + $0x141] sm:$0xff]
        %v2032 = vld [vmem:[%s1811 + $0x151] sm:$0xff]
        %v2033 = vld [vmem:[%s1811 + $0x159] sm:$0xff]
        %v2034 = vld [vmem:[%s1811 + $0x169] sm:$0xff]
        %v2035 = vld [vmem:[%s1811 + $0x171] sm:$0xff]
        %2068 = vrot.lane.b32.xlu0 %v2004, 96
        %v2069 = vpop.permute.xlu0 %2068
        %2070 = vrot.lane.b32.xlu0 %v2005, 96
        %v2071 = vpop.permute.xlu0 %2070
        %2072 = vrot.lane.b32.xlu0 %v2006, 96
        %v2073 = vpop.permute.xlu0 %2072
        %2074 = vrot.lane.b32.xlu0 %v2007, 96
        %v2075 = vpop.permute.xlu0 %2074
        %2076 = vrot.lane.b32.xlu0 %v2008, 96
        %v2077 = vpop.permute.xlu0 %2076
        %2078 = vrot.lane.b32.xlu0 %v2009, 96
        %v2079 = vpop.permute.xlu0 %2078
        %2080 = vrot.lane.b32.xlu0 %v2010, 96
        %v2081 = vpop.permute.xlu0 %2080
        %2082 = vrot.lane.b32.xlu0 %v2011, 96
        %v2083 = vpop.permute.xlu0 %2082
        %2084 = vrot.lane.b32.xlu0 %v2012, 96
        %v2085 = vpop.permute.xlu0 %2084
        %2086 = vrot.lane.b32.xlu0 %v2013, 96
        %v2087 = vpop.permute.xlu0 %2086
        %2088 = vrot.lane.b32.xlu0 %v2014, 96
        %v2089 = vpop.permute.xlu0 %2088
        %2090 = vrot.lane.b32.xlu0 %v2015, 96
        %v2091 = vpop.permute.xlu0 %2090
        %2092 = vrot.lane.b32.xlu0 %v2016, 96
        %v2093 = vpop.permute.xlu0 %2092
        %2094 = vrot.lane.b32.xlu0 %v2017, 96
        %v2095 = vpop.permute.xlu0 %2094
        %2096 = vrot.lane.b32.xlu0 %v2018, 96
        %v2097 = vpop.permute.xlu0 %2096
        %2098 = vrot.lane.b32.xlu0 %v2019, 96
        %v2099 = vpop.permute.xlu0 %2098
        %2100 = vrot.lane.b32.xlu0 %v2020, 96
        %v2101 = vpop.permute.xlu0 %2100
        %2102 = vrot.lane.b32.xlu0 %v2021, 96
        %v2103 = vpop.permute.xlu0 %2102
        %2104 = vrot.lane.b32.xlu0 %v2022, 96
        %v2105 = vpop.permute.xlu0 %2104
        %2106 = vrot.lane.b32.xlu0 %v2023, 96
        %v2107 = vpop.permute.xlu0 %2106
        %2108 = vrot.lane.b32.xlu0 %v2024, 96
        %v2109 = vpop.permute.xlu0 %2108
        %2110 = vrot.lane.b32.xlu0 %v2025, 96
        %v2111 = vpop.permute.xlu0 %2110
        %2112 = vrot.lane.b32.xlu0 %v2026, 96
        %v2113 = vpop.permute.xlu0 %2112
        %2114 = vrot.lane.b32.xlu0 %v2027, 96
        %v2115 = vpop.permute.xlu0 %2114
        %2116 = vrot.lane.b32.xlu0 %v2028, 96
        %v2117 = vpop.permute.xlu0 %2116
        %2118 = vrot.lane.b32.xlu0 %v2029, 96
        %v2119 = vpop.permute.xlu0 %2118
        %2120 = vrot.lane.b32.xlu0 %v2030, 96
        %v2121 = vpop.permute.xlu0 %2120
        %2122 = vrot.lane.b32.xlu0 %v2031, 96
        %v2123 = vpop.permute.xlu0 %2122
        %2124 = vrot.lane.b32.xlu0 %v2032, 96
        %v2125 = vpop.permute.xlu0 %2124
        %2126 = vrot.lane.b32.xlu0 %v2033, 96
        %v2127 = vpop.permute.xlu0 %2126
        %2128 = vrot.lane.b32.xlu0 %v2034, 96
        %v2129 = vpop.permute.xlu0 %2128
        %2130 = vrot.lane.b32.xlu0 %v2035, 96
        %v2131 = vpop.permute.xlu0 %2130
        %2164 = vst.msk [vmem:[#allocation7 + $0x8] sm:$0xff] %vm1522, %v2069
        %2165 = vst.msk [vmem:[#allocation7 + $0x50] sm:$0xff] %vm1522, %v2071
        %2166 = vst.msk [vmem:[#allocation7 + $0x98] sm:$0xff] %vm1522, %v2073
        %2167 = vst.msk [vmem:[#allocation7 + $0xe0] sm:$0xff] %vm1522, %v2075
        %2168 = vst.msk [vmem:[#allocation7 + $0x128] sm:$0xff] %vm1522, %v2077
        %2169 = vst.msk [vmem:[#allocation7 + $0x170] sm:$0xff] %vm1522, %v2079
        %2170 = vst.msk [vmem:[#allocation7 + $0x1b8] sm:$0xff] %vm1522, %v2081
        %2171 = vst.msk [vmem:[#allocation7 + $0x200] sm:$0xff] %vm1522, %v2083
        %2172 = vst.msk [vmem:[#allocation7 + $0x248] sm:$0xff] %vm1522, %v2085
        %2173 = vst.msk [vmem:[#allocation7 + $0x290] sm:$0xff] %vm1522, %v2087
        %2174 = vst.msk [vmem:[#allocation7 + $0x2d8] sm:$0xff] %vm1522, %v2089
        %2175 = vst.msk [vmem:[#allocation7 + $0x320] sm:$0xff] %vm1522, %v2091
        %2176 = vst.msk [vmem:[#allocation7 + $0x368] sm:$0xff] %vm1522, %v2093
        %2177 = vst.msk [vmem:[#allocation7 + $0x3b0] sm:$0xff] %vm1522, %v2095
        %2178 = vst.msk [vmem:[#allocation7 + $0x3f8] sm:$0xff] %vm1522, %v2097
        %2179 = vst.msk [vmem:[#allocation7 + $0x440] sm:$0xff] %vm1522, %v2099
        %2180 = vst.msk [vmem:[#allocation7 + $0x488] sm:$0xff] %vm1522, %v2101
        %2181 = vst.msk [vmem:[#allocation7 + $0x4d0] sm:$0xff] %vm1522, %v2103
        %2182 = vst.msk [vmem:[#allocation7 + $0x518] sm:$0xff] %vm1522, %v2105
        %2183 = vst.msk [vmem:[#allocation7 + $0x560] sm:$0xff] %vm1522, %v2107
        %2184 = vst.msk [vmem:[#allocation7 + $0x5a8] sm:$0xff] %vm1522, %v2109
        %2185 = vst.msk [vmem:[#allocation7 + $0x5f0] sm:$0xff] %vm1522, %v2111
        %2186 = vst.msk [vmem:[#allocation7 + $0x638] sm:$0xff] %vm1522, %v2113
        %2187 = vst.msk [vmem:[#allocation7 + $0x680] sm:$0xff] %vm1522, %v2115
        %2188 = vst.msk [vmem:[#allocation7 + $0x6c8] sm:$0xff] %vm1522, %v2117
        %2189 = vst.msk [vmem:[#allocation7 + $0x710] sm:$0xff] %vm1522, %v2119
        %2190 = vst.msk [vmem:[#allocation7 + $0x758] sm:$0xff] %vm1522, %v2121
        %2191 = vst.msk [vmem:[#allocation7 + $0x7a0] sm:$0xff] %vm1522, %v2123
        %2192 = vst.msk [vmem:[#allocation7 + $0x7e8] sm:$0xff] %vm1522, %v2125
        %2193 = vst.msk [vmem:[#allocation7 + $0x830] sm:$0xff] %vm1522, %v2127
        %2194 = vst.msk [vmem:[#allocation7 + $0x878] sm:$0xff] %vm1522, %v2129
        %2195 = vst.msk [vmem:[#allocation7 + $0x8c0] sm:$0xff] %vm1522, %v2131
        %v2196 = vld [vmem:[%s1811 + $0x2] sm:$0xff]
        %v2197 = vld [vmem:[%s1811 + $0xa] sm:$0xff]
        %v2198 = vld [vmem:[%s1811 + $0x1a] sm:$0xff]
        %v2199 = vld [vmem:[%s1811 + $0x22] sm:$0xff]
        %v2200 = vld [vmem:[%s1811 + $0x32] sm:$0xff]
        %v2201 = vld [vmem:[%s1811 + $0x3a] sm:$0xff]
        %v2202 = vld [vmem:[%s1811 + $0x4a] sm:$0xff]
        %v2203 = vld [vmem:[%s1811 + $0x52] sm:$0xff]
        %v2204 = vld [vmem:[%s1811 + $0x62] sm:$0xff]
        %v2205 = vld [vmem:[%s1811 + $0x6a] sm:$0xff]
        %v2206 = vld [vmem:[%s1811 + $0x7a] sm:$0xff]
        %v2207 = vld [vmem:[%s1811 + $0x82] sm:$0xff]
        %v2208 = vld [vmem:[%s1811 + $0x92] sm:$0xff]
        %v2209 = vld [vmem:[%s1811 + $0x9a] sm:$0xff]
        %v2210 = vld [vmem:[%s1811 + $0xaa] sm:$0xff]
        %v2211 = vld [vmem:[%s1811 + $0xb2] sm:$0xff]
        %v2212 = vld [vmem:[%s1811 + $0xc2] sm:$0xff]
        %v2213 = vld [vmem:[%s1811 + $0xca] sm:$0xff]
        %v2214 = vld [vmem:[%s1811 + $0xda] sm:$0xff]
        %v2215 = vld [vmem:[%s1811 + $0xe2] sm:$0xff]
        %v2216 = vld [vmem:[%s1811 + $0xf2] sm:$0xff]
        %v2217 = vld [vmem:[%s1811 + $0xfa] sm:$0xff]
        %v2218 = vld [vmem:[%s1811 + $0x10a] sm:$0xff]
        %v2219 = vld [vmem:[%s1811 + $0x112] sm:$0xff]
        %v2220 = vld [vmem:[%s1811 + $0x122] sm:$0xff]
        %v2221 = vld [vmem:[%s1811 + $0x12a] sm:$0xff]
        %v2222 = vld [vmem:[%s1811 + $0x13a] sm:$0xff]
        %v2223 = vld [vmem:[%s1811 + $0x142] sm:$0xff]
        %v2224 = vld [vmem:[%s1811 + $0x152] sm:$0xff]
        %v2225 = vld [vmem:[%s1811 + $0x15a] sm:$0xff]
        %v2226 = vld [vmem:[%s1811 + $0x16a] sm:$0xff]
        %v2227 = vld [vmem:[%s1811 + $0x172] sm:$0xff]
        %2228 = vst.msk [vmem:[#allocation7 + $0x10] sm:$0xff] %vm823, %v2196
        %2229 = vst.msk [vmem:[#allocation7 + $0x58] sm:$0xff] %vm823, %v2197
        %2230 = vst.msk [vmem:[#allocation7 + $0xa0] sm:$0xff] %vm823, %v2198
        %2231 = vst.msk [vmem:[#allocation7 + $0xe8] sm:$0xff] %vm823, %v2199
        %2232 = vst.msk [vmem:[#allocation7 + $0x130] sm:$0xff] %vm823, %v2200
        %2233 = vst.msk [vmem:[#allocation7 + $0x178] sm:$0xff] %vm823, %v2201
        %2234 = vst.msk [vmem:[#allocation7 + $0x1c0] sm:$0xff] %vm823, %v2202
        %2235 = vst.msk [vmem:[#allocation7 + $0x208] sm:$0xff] %vm823, %v2203
        %2236 = vst.msk [vmem:[#allocation7 + $0x250] sm:$0xff] %vm823, %v2204
        %2237 = vst.msk [vmem:[#allocation7 + $0x298] sm:$0xff] %vm823, %v2205
        %2238 = vst.msk [vmem:[#allocation7 + $0x2e0] sm:$0xff] %vm823, %v2206
        %2239 = vst.msk [vmem:[#allocation7 + $0x328] sm:$0xff] %vm823, %v2207
        %2240 = vst.msk [vmem:[#allocation7 + $0x370] sm:$0xff] %vm823, %v2208
        %2241 = vst.msk [vmem:[#allocation7 + $0x3b8] sm:$0xff] %vm823, %v2209
        %2242 = vst.msk [vmem:[#allocation7 + $0x400] sm:$0xff] %vm823, %v2210
        %2243 = vst.msk [vmem:[#allocation7 + $0x448] sm:$0xff] %vm823, %v2211
        %2244 = vst.msk [vmem:[#allocation7 + $0x490] sm:$0xff] %vm823, %v2212
        %2245 = vst.msk [vmem:[#allocation7 + $0x4d8] sm:$0xff] %vm823, %v2213
        %2246 = vst.msk [vmem:[#allocation7 + $0x520] sm:$0xff] %vm823, %v2214
        %2247 = vst.msk [vmem:[#allocation7 + $0x568] sm:$0xff] %vm823, %v2215
        %2248 = vst.msk [vmem:[#allocation7 + $0x5b0] sm:$0xff] %vm823, %v2216
        %2249 = vst.msk [vmem:[#allocation7 + $0x5f8] sm:$0xff] %vm823, %v2217
        %2250 = vst.msk [vmem:[#allocation7 + $0x640] sm:$0xff] %vm823, %v2218
        %2251 = vst.msk [vmem:[#allocation7 + $0x688] sm:$0xff] %vm823, %v2219
        %2252 = vst.msk [vmem:[#allocation7 + $0x6d0] sm:$0xff] %vm823, %v2220
        %2253 = vst.msk [vmem:[#allocation7 + $0x718] sm:$0xff] %vm823, %v2221
        %2254 = vst.msk [vmem:[#allocation7 + $0x760] sm:$0xff] %vm823, %v2222
        %2255 = vst.msk [vmem:[#allocation7 + $0x7a8] sm:$0xff] %vm823, %v2223
        %2256 = vst.msk [vmem:[#allocation7 + $0x7f0] sm:$0xff] %vm823, %v2224
        %2257 = vst.msk [vmem:[#allocation7 + $0x838] sm:$0xff] %vm823, %v2225
        %2258 = vst.msk [vmem:[#allocation7 + $0x880] sm:$0xff] %vm823, %v2226
        %2259 = vst.msk [vmem:[#allocation7 + $0x8c8] sm:$0xff] %vm823, %v2227
        %v2260 = vld [vmem:[#allocation7] sm:$0xff]
        %v2261 = vld [vmem:[#allocation7 + $0x8] sm:$0xff]
        %v2262 = vld [vmem:[#allocation7 + $0x10] sm:$0xff]
        %v2263 = vld [vmem:[#allocation7 + $0x48] sm:$0xff]
        %v2264 = vld [vmem:[#allocation7 + $0x50] sm:$0xff]
        %v2265 = vld [vmem:[#allocation7 + $0x58] sm:$0xff]
        %v2266 = vld [vmem:[#allocation7 + $0x90] sm:$0xff]
        %v2267 = vld [vmem:[#allocation7 + $0x98] sm:$0xff]
        %v2268 = vld [vmem:[#allocation7 + $0xa0] sm:$0xff]
        %v2269 = vld [vmem:[#allocation7 + $0xd8] sm:$0xff]
        %v2270 = vld [vmem:[#allocation7 + $0xe0] sm:$0xff]
        %v2271 = vld [vmem:[#allocation7 + $0xe8] sm:$0xff]
        %v2272 = vld [vmem:[#allocation7 + $0x120] sm:$0xff]
        %v2273 = vld [vmem:[#allocation7 + $0x128] sm:$0xff]
        %v2274 = vld [vmem:[#allocation7 + $0x130] sm:$0xff]
        %v2275 = vld [vmem:[#allocation7 + $0x168] sm:$0xff]
        %v2276 = vld [vmem:[#allocation7 + $0x170] sm:$0xff]
        %v2277 = vld [vmem:[#allocation7 + $0x178] sm:$0xff]
        %v2278 = vld [vmem:[#allocation7 + $0x1b0] sm:$0xff]
        %v2279 = vld [vmem:[#allocation7 + $0x1b8] sm:$0xff]
        %v2280 = vld [vmem:[#allocation7 + $0x1c0] sm:$0xff]
        %v2281 = vld [vmem:[#allocation7 + $0x1f8] sm:$0xff]
        %v2282 = vld [vmem:[#allocation7 + $0x200] sm:$0xff]
        %v2283 = vld [vmem:[#allocation7 + $0x208] sm:$0xff]
        %v2284 = vld [vmem:[#allocation7 + $0x240] sm:$0xff]
        %v2285 = vld [vmem:[#allocation7 + $0x248] sm:$0xff]
        %v2286 = vld [vmem:[#allocation7 + $0x250] sm:$0xff]
        %v2287 = vld [vmem:[#allocation7 + $0x288] sm:$0xff]
        %v2288 = vld [vmem:[#allocation7 + $0x290] sm:$0xff]
        %v2289 = vld [vmem:[#allocation7 + $0x298] sm:$0xff]
        %v2290 = vld [vmem:[#allocation7 + $0x2d0] sm:$0xff]
        %v2291 = vld [vmem:[#allocation7 + $0x2d8] sm:$0xff]
        %v2292 = vld [vmem:[#allocation7 + $0x2e0] sm:$0xff]
        %v2293 = vld [vmem:[#allocation7 + $0x318] sm:$0xff]
        %v2294 = vld [vmem:[#allocation7 + $0x320] sm:$0xff]
        %v2295 = vld [vmem:[#allocation7 + $0x328] sm:$0xff]
        %v2296 = vld [vmem:[#allocation7 + $0x360] sm:$0xff]
        %v2297 = vld [vmem:[#allocation7 + $0x368] sm:$0xff]
        %v2298 = vld [vmem:[#allocation7 + $0x370] sm:$0xff]
        %v2299 = vld [vmem:[#allocation7 + $0x3a8] sm:$0xff]
        %v2300 = vld [vmem:[#allocation7 + $0x3b0] sm:$0xff]
        %v2301 = vld [vmem:[#allocation7 + $0x3b8] sm:$0xff]
        %v2302 = vld [vmem:[#allocation7 + $0x3f0] sm:$0xff]
        %v2303 = vld [vmem:[#allocation7 + $0x3f8] sm:$0xff]
        %v2304 = vld [vmem:[#allocation7 + $0x400] sm:$0xff]
        %v2305 = vld [vmem:[#allocation7 + $0x438] sm:$0xff]
        %v2306 = vld [vmem:[#allocation7 + $0x440] sm:$0xff]
        %v2307 = vld [vmem:[#allocation7 + $0x448] sm:$0xff]
        %v2308 = vld [vmem:[#allocation7 + $0x480] sm:$0xff]
        %v2309 = vld [vmem:[#allocation7 + $0x488] sm:$0xff]
        %v2310 = vld [vmem:[#allocation7 + $0x490] sm:$0xff]
        %v2311 = vld [vmem:[#allocation7 + $0x4c8] sm:$0xff]
        %v2312 = vld [vmem:[#allocation7 + $0x4d0] sm:$0xff]
        %v2313 = vld [vmem:[#allocation7 + $0x4d8] sm:$0xff]
        %v2314 = vld [vmem:[#allocation7 + $0x510] sm:$0xff]
        %v2315 = vld [vmem:[#allocation7 + $0x518] sm:$0xff]
        %v2316 = vld [vmem:[#allocation7 + $0x520] sm:$0xff]
        %v2317 = vld [vmem:[#allocation7 + $0x558] sm:$0xff]
        %v2318 = vld [vmem:[#allocation7 + $0x560] sm:$0xff]
        %v2319 = vld [vmem:[#allocation7 + $0x568] sm:$0xff]
        %v2320 = vld [vmem:[#allocation7 + $0x5a0] sm:$0xff]
        %v2321 = vld [vmem:[#allocation7 + $0x5a8] sm:$0xff]
        %v2322 = vld [vmem:[#allocation7 + $0x5b0] sm:$0xff]
        %v2323 = vld [vmem:[#allocation7 + $0x5e8] sm:$0xff]
        %v2324 = vld [vmem:[#allocation7 + $0x5f0] sm:$0xff]
        %v2325 = vld [vmem:[#allocation7 + $0x5f8] sm:$0xff]
        %v2326 = vld [vmem:[#allocation7 + $0x630] sm:$0xff]
        %v2327 = vld [vmem:[#allocation7 + $0x638] sm:$0xff]
        %v2328 = vld [vmem:[#allocation7 + $0x640] sm:$0xff]
        %v2329 = vld [vmem:[#allocation7 + $0x678] sm:$0xff]
        %v2330 = vld [vmem:[#allocation7 + $0x680] sm:$0xff]
        %v2331 = vld [vmem:[#allocation7 + $0x688] sm:$0xff]
        %v2332 = vld [vmem:[#allocation7 + $0x6c0] sm:$0xff]
        %v2333 = vld [vmem:[#allocation7 + $0x6c8] sm:$0xff]
        %v2334 = vld [vmem:[#allocation7 + $0x6d0] sm:$0xff]
        %v2335 = vld [vmem:[#allocation7 + $0x708] sm:$0xff]
        %v2336 = vld [vmem:[#allocation7 + $0x710] sm:$0xff]
        %v2337 = vld [vmem:[#allocation7 + $0x718] sm:$0xff]
        %v2338 = vld [vmem:[#allocation7 + $0x750] sm:$0xff]
        %v2339 = vld [vmem:[#allocation7 + $0x758] sm:$0xff]
        %v2340 = vld [vmem:[#allocation7 + $0x760] sm:$0xff]
        %v2341 = vld [vmem:[#allocation7 + $0x798] sm:$0xff]
        %v2342 = vld [vmem:[#allocation7 + $0x7a0] sm:$0xff]
        %v2343 = vld [vmem:[#allocation7 + $0x7a8] sm:$0xff]
        %v2344 = vld [vmem:[#allocation7 + $0x7e0] sm:$0xff]
        %v2345 = vld [vmem:[#allocation7 + $0x7e8] sm:$0xff]
        %v2346 = vld [vmem:[#allocation7 + $0x7f0] sm:$0xff]
        %v2347 = vld [vmem:[#allocation7 + $0x828] sm:$0xff]
        %v2348 = vld [vmem:[#allocation7 + $0x830] sm:$0xff]
        %v2349 = vld [vmem:[#allocation7 + $0x838] sm:$0xff]
        %v2350 = vld [vmem:[#allocation7 + $0x870] sm:$0xff]
        %v2351 = vld [vmem:[#allocation7 + $0x878] sm:$0xff]
        %v2352 = vld [vmem:[#allocation7 + $0x880] sm:$0xff]
        %v2353 = vld [vmem:[#allocation7 + $0x8b8] sm:$0xff]
        %v2354 = vld [vmem:[#allocation7 + $0x8c0] sm:$0xff]
        %v2355 = vld [vmem:[#allocation7 + $0x8c8] sm:$0xff]
        %v2356 = vld [vmem:[%s3] sm:$0xff]
        %v2357 = vld [vmem:[%s3 + $0x8] sm:$0xff]
        %v2358 = vld [vmem:[%s3 + $0x10] sm:$0xff]
        %v2359 = vld [vmem:[%s3 + $0x18] sm:$0xff]
        %v2360 = vld [vmem:[%s3 + $0x20] sm:$0xff]
        %v2361 = vld [vmem:[%s3 + $0x28] sm:$0xff]
        %v2362 = vld [vmem:[%s3 + $0x30] sm:$0xff]
        %v2363 = vld [vmem:[%s3 + $0x38] sm:$0xff]
        %v2364 = vld [vmem:[%s3 + $0x40] sm:$0xff]
        %v2365 = vld [vmem:[%s3 + $0x48] sm:$0xff]
        %v2366 = vld [vmem:[%s3 + $0x50] sm:$0xff]
        %v2367 = vld [vmem:[%s3 + $0x58] sm:$0xff]
        %v2368 = vld [vmem:[%s3 + $0x60] sm:$0xff]
        %v2369 = vld [vmem:[%s3 + $0x68] sm:$0xff]
        %v2370 = vld [vmem:[%s3 + $0x70] sm:$0xff]
        %v2371 = vld [vmem:[%s3 + $0x78] sm:$0xff]
        %v2372 = vld [vmem:[%s3 + $0x80] sm:$0xff]
        %v2373 = vld [vmem:[%s3 + $0x88] sm:$0xff]
        %v2374 = vld [vmem:[%s3 + $0x90] sm:$0xff]
        %v2375 = vld [vmem:[%s3 + $0x98] sm:$0xff]
        %v2376 = vld [vmem:[%s3 + $0xa0] sm:$0xff]
        %v2377 = vld [vmem:[%s3 + $0xa8] sm:$0xff]
        %v2378 = vld [vmem:[%s3 + $0xb0] sm:$0xff]
        %v2379 = vld [vmem:[%s3 + $0xb8] sm:$0xff]
        %v2380 = vld [vmem:[%s3 + $0xc0] sm:$0xff]
        %v2381 = vld [vmem:[%s3 + $0xc8] sm:$0xff]
        %v2382 = vld [vmem:[%s3 + $0xd0] sm:$0xff]
        %v2383 = vld [vmem:[%s3 + $0xd8] sm:$0xff]
        %v2384 = vld [vmem:[%s3 + $0xe0] sm:$0xff]
        %v2385 = vld [vmem:[%s3 + $0xe8] sm:$0xff]
        %v2386 = vld [vmem:[%s3 + $0xf0] sm:$0xff]
        %v2387 = vld [vmem:[%s3 + $0xf8] sm:$0xff]
        %v2388 = vld [vmem:[%s3 + $0x100] sm:$0xff]
        %v2389 = vld [vmem:[%s3 + $0x108] sm:$0xff]
        %v2390 = vld [vmem:[%s3 + $0x110] sm:$0xff]
        %v2391 = vld [vmem:[%s3 + $0x118] sm:$0xff]
        %v2392 = vld [vmem:[%s4] sm:$0x1]
        %v2394 = vlaneseq
        %v2395 = vshrl.u32 %v2394, 7
        %v2396 = vsub.s32 0, %v2395
        %v2397 = vrot.slane %v2392, %v2396
        %v2400 = vsel %vm823, %v2262, 0
        %v2403 = vsel %vm823, %v2265, 0
        %v2406 = vsel %vm823, %v2268, 0
        %v2409 = vsel %vm823, %v2271, 0
        %v2412 = vsel %vm823, %v2274, 0
        %v2415 = vsel %vm823, %v2277, 0
        %v2418 = vsel %vm823, %v2280, 0
        %v2421 = vsel %vm823, %v2283, 0
        %v2424 = vsel %vm823, %v2286, 0
        %v2427 = vsel %vm823, %v2289, 0
        %v2430 = vsel %vm823, %v2292, 0
        %v2433 = vsel %vm823, %v2295, 0
        %v2436 = vsel %vm823, %v2298, 0
        %v2439 = vsel %vm823, %v2301, 0
        %v2442 = vsel %vm823, %v2304, 0
        %v2445 = vsel %vm823, %v2307, 0
        %v2448 = vsel %vm823, %v2310, 0
        %v2451 = vsel %vm823, %v2313, 0
        %v2454 = vsel %vm823, %v2316, 0
        %v2457 = vsel %vm823, %v2319, 0
        %v2460 = vsel %vm823, %v2322, 0
        %v2463 = vsel %vm823, %v2325, 0
        %v2466 = vsel %vm823, %v2328, 0
        %v2469 = vsel %vm823, %v2331, 0
        %v2472 = vsel %vm823, %v2334, 0
        %v2475 = vsel %vm823, %v2337, 0
        %v2478 = vsel %vm823, %v2340, 0
        %v2481 = vsel %vm823, %v2343, 0
        %v2484 = vsel %vm823, %v2346, 0
        %v2487 = vsel %vm823, %v2349, 0
        %v2490 = vsel %vm823, %v2352, 0
        %v2493 = vsel %vm823, %v2355, 0
        %2495 = vmatprep.subr.mxu0 0.0
        %2496 = vmatpush1.msra.mxu0 %v2356
        %2497 = vmatprep.subr.mxu0 0.0
        %2498 = vmatpush1.msra.mxu0 %v2357
        %2499 = vmatprep.subr.mxu0 0.0
        %2500 = vmatpush1.msra.mxu0 %v2358
        %2501 = vmatprep.subr.mxu0 0.0
        %2502 = vmatpush1.msra.mxu0 %v2359
        %2503 = vmatprep.subr.mxu0 0.0
        %2504 = vmatpush1.msra.mxu0 %v2360
        %2505 = vmatprep.subr.mxu0 0.0
        %2506 = vmatpush1.msra.mxu0 %v2361
        %2507 = vmatprep.subr.mxu0 0.0
        %2508 = vmatpush1.msra.mxu0 %v2362
        %2509 = vmatprep.subr.mxu0 0.0
        %2510 = vmatpush1.msra.mxu0 %v2363
        %2511 = vmatprep.subr.mxu0 0.0
        %2512 = vmatpush1.msra.mxu0 %v2364
        %2513 = vmatprep.subr.mxu0 0.0
        %2514 = vmatpush1.msra.mxu0 %v2365
        %2515 = vmatprep.subr.mxu0 0.0
        %2516 = vmatpush1.msra.mxu0 %v2366
        %2517 = vmatprep.subr.mxu0 0.0
        %2518 = vmatpush1.msra.mxu0 %v2367
        %2519 = vmatprep.subr.mxu0 0.0
        %2520 = vmatpush1.msra.mxu0 %v2368
        %2521 = vmatprep.subr.mxu0 0.0
        %2522 = vmatpush1.msra.mxu0 %v2369
        %2523 = vmatprep.subr.mxu0 0.0
        %2524 = vmatpush1.msra.mxu0 %v2370
        %2525 = vmatprep.subr.mxu0 0.0
        %2526 = vmatpush1.msra.mxu0 %v2371
        %2527 = vmatprep.subr.mxu0 0.0
        %2528 = vmatpush1.msra.mxu0 %v2372
        %2529 = vmatprep.subr.mxu0 0.0
        %2530 = vmatpush1.msra.mxu0 %v2373
        %2531 = vmatprep.subr.mxu0 0.0
        %2532 = vmatpush1.msra.mxu0 %v2374
        %2533 = vmatprep.subr.mxu0 0.0
        %2534 = vmatpush1.msra.mxu0 %v2375
        %2535 = vmatprep.subr.mxu0 0.0
        %2536 = vmatpush1.msra.mxu0 %v2376
        %2537 = vmatprep.subr.mxu0 0.0
        %2538 = vmatpush1.msra.mxu0 %v2377
        %2539 = vmatprep.subr.mxu0 0.0
        %2540 = vmatpush1.msra.mxu0 %v2378
        %2541 = vmatprep.subr.mxu0 0.0
        %2542 = vmatpush1.msra.mxu0 %v2379
        %2543 = vmatprep.subr.mxu0 0.0
        %2544 = vmatpush1.msra.mxu0 %v2380
        %2545 = vmatprep.subr.mxu0 0.0
        %2546 = vmatpush1.msra.mxu0 %v2381
        %2547 = vmatprep.subr.mxu0 0.0
        %2548 = vmatpush1.msra.mxu0 %v2382
        %2549 = vmatprep.subr.mxu0 0.0
        %2550 = vmatpush1.msra.mxu0 %v2383
        %2551 = vmatprep.subr.mxu0 0.0
        %2552 = vmatpush1.msra.mxu0 %v2384
        %2553 = vmatprep.subr.mxu0 0.0
        %2554 = vmatpush1.msra.mxu0 %v2385
        %2555 = vmatprep.subr.mxu0 0.0
        %2556 = vmatpush1.msra.mxu0 %v2386
        %2557 = vmatprep.subr.mxu0 0.0
        %2558 = vmatpush1.msra.mxu0 %v2387
        %2559 = vmatprep.mubr.f32.mxu0 %v2261
        %2560 = vmatmul.mubr.f32.gmra.mrb[0].mxu0 %v2260
        %v2561 = vpop.f32.mrb[0].mxu0
        %v2562 = vadd.f32 %v2397, %v2561
        %v2563 = vpop.f32.mrb[0].mxu0
        %2564 = vmatprep.mubr.f32.mxu0 %v2264
        %2565 = vmatmul.mubr.f32.gmra.mrb[0].mxu0 %v2263
        %v2566 = vpop.f32.mrb[0].mxu0
        %v2567 = vadd.f32 %v2397, %v2566
        %v2568 = vpop.f32.mrb[0].mxu0
        %2569 = vmatprep.mubr.f32.mxu0 %v2267
        %2570 = vmatmul.mubr.f32.gmra.mrb[0].mxu0 %v2266
        %v2571 = vpop.f32.mrb[0].mxu0
        %v2572 = vadd.f32 %v2397, %v2571
        %v2573 = vpop.f32.mrb[0].mxu0
        %2574 = vmatprep.mubr.f32.mxu0 %v2270
        %2575 = vmatmul.mubr.f32.gmra.mrb[0].mxu0 %v2269
        %v2576 = vpop.f32.mrb[0].mxu0
        %v2577 = vadd.f32 %v2397, %v2576
        %v2578 = vpop.f32.mrb[0].mxu0
        %2579 = vmatprep.mubr.f32.mxu0 %v2273
        %2580 = vmatmul.mubr.f32.gmra.mrb[0].mxu0 %v2272
        %v2581 = vpop.f32.mrb[0].mxu0
        %v2582 = vadd.f32 %v2397, %v2581
        %v2583 = vpop.f32.mrb[0].mxu0
        %2584 = vmatprep.mubr.f32.mxu0 %v2276
        %2585 = vmatmul.mubr.f32.gmra.mrb[0].mxu0 %v2275
        %v2586 = vpop.f32.mrb[0].mxu0
        %v2587 = vadd.f32 %v2397, %v2586
        %v2588 = vpop.f32.mrb[0].mxu0
        %2589 = vmatprep.mubr.f32.mxu0 %v2279
        %2590 = vmatmul.mubr.f32.gmra.mrb[0].mxu0 %v2278
        %v2591 = vpop.f32.mrb[0].mxu0
        %v2592 = vadd.f32 %v2397, %v2591
        %v2593 = vpop.f32.mrb[0].mxu0
        %2594 = vmatprep.mubr.f32.mxu0 %v2282
        %2595 = vmatmul.mubr.f32.gmra.mrb[0].mxu0 %v2281
        %v2596 = vpop.f32.mrb[0].mxu0
        %v2597 = vadd.f32 %v2397, %v2596
        %v2598 = vpop.f32.mrb[0].mxu0
        %2599 = vmatprep.mubr.f32.mxu0 %v2285
        %2600 = vmatmul.mubr.f32.gmra.mrb[0].mxu0 %v2284
        %v2601 = vpop.f32.mrb[0].mxu0
        %v2602 = vadd.f32 %v2397, %v2601
        %v2603 = vpop.f32.mrb[0].mxu0
        %2604 = vmatprep.mubr.f32.mxu0 %v2288
        %2605 = vmatmul.mubr.f32.gmra.mrb[0].mxu0 %v2287
        %v2606 = vpop.f32.mrb[0].mxu0
        %v2607 = vadd.f32 %v2397, %v2606
        %v2608 = vpop.f32.mrb[0].mxu0
        %2609 = vmatprep.mubr.f32.mxu0 %v2291
        %2610 = vmatmul.mubr.f32.gmra.mrb[0].mxu0 %v2290
        %v2611 = vpop.f32.mrb[0].mxu0
        %v2612 = vadd.f32 %v2397, %v2611
        %v2613 = vpop.f32.mrb[0].mxu0
        %2614 = vmatprep.mubr.f32.mxu0 %v2294
        %2615 = vmatmul.mubr.f32.gmra.mrb[0].mxu0 %v2293
        %v2616 = vpop.f32.mrb[0].mxu0
        %v2617 = vadd.f32 %v2397, %v2616
        %v2618 = vpop.f32.mrb[0].mxu0
        %2619 = vmatprep.mubr.f32.mxu0 %v2297
        %2620 = vmatmul.mubr.f32.gmra.mrb[0].mxu0 %v2296
        %v2621 = vpop.f32.mrb[0].mxu0
        %v2622 = vadd.f32 %v2397, %v2621
        %v2623 = vpop.f32.mrb[0].mxu0
        %2624 = vmatprep.mubr.f32.mxu0 %v2300
        %2625 = vmatmul.mubr.f32.gmra.mrb[0].mxu0 %v2299
        %v2626 = vpop.f32.mrb[0].mxu0
        %v2627 = vadd.f32 %v2397, %v2626
        %v2628 = vpop.f32.mrb[0].mxu0
        %2629 = vmatprep.mubr.f32.mxu0 %v2303
        %2630 = vmatmul.mubr.f32.gmra.mrb[0].mxu0 %v2302
        %v2631 = vpop.f32.mrb[0].mxu0
        %v2632 = vadd.f32 %v2397, %v2631
        %v2633 = vpop.f32.mrb[0].mxu0
        %2634 = vmatprep.mubr.f32.mxu0 %v2306
        %2635 = vmatmul.mubr.f32.gmra.mrb[0].mxu0 %v2305
        %v2636 = vpop.f32.mrb[0].mxu0
        %v2637 = vadd.f32 %v2397, %v2636
        %v2638 = vpop.f32.mrb[0].mxu0
        %2639 = vmatprep.mubr.f32.mxu0 %v2309
        %2640 = vmatmul.mubr.f32.gmra.mrb[0].mxu0 %v2308
        %v2641 = vpop.f32.mrb[0].mxu0
        %v2642 = vadd.f32 %v2397, %v2641
        %v2643 = vpop.f32.mrb[0].mxu0
        %2644 = vmatprep.mubr.f32.mxu0 %v2312
        %2645 = vmatmul.mubr.f32.gmra.mrb[0].mxu0 %v2311
        %v2646 = vpop.f32.mrb[0].mxu0
        %v2647 = vadd.f32 %v2397, %v2646
        %v2648 = vpop.f32.mrb[0].mxu0
        %2649 = vmatprep.mubr.f32.mxu0 %v2315
        %2650 = vmatmul.mubr.f32.gmra.mrb[0].mxu0 %v2314
        %v2651 = vpop.f32.mrb[0].mxu0
        %v2652 = vadd.f32 %v2397, %v2651
        %v2653 = vpop.f32.mrb[0].mxu0
        %2654 = vmatprep.mubr.f32.mxu0 %v2318
        %2655 = vmatmul.mubr.f32.gmra.mrb[0].mxu0 %v2317
        %v2656 = vpop.f32.mrb[0].mxu0
        %v2657 = vadd.f32 %v2397, %v2656
        %v2658 = vpop.f32.mrb[0].mxu0
        %2659 = vmatprep.mubr.f32.mxu0 %v2321
        %2660 = vmatmul.mubr.f32.gmra.mrb[0].mxu0 %v2320
        %v2661 = vpop.f32.mrb[0].mxu0
        %v2662 = vadd.f32 %v2397, %v2661
        %v2663 = vpop.f32.mrb[0].mxu0
        %2664 = vmatprep.mubr.f32.mxu0 %v2324
        %2665 = vmatmul.mubr.f32.gmra.mrb[0].mxu0 %v2323
        %v2666 = vpop.f32.mrb[0].mxu0
        %v2667 = vadd.f32 %v2397, %v2666
        %v2668 = vpop.f32.mrb[0].mxu0
        %2669 = vmatprep.mubr.f32.mxu0 %v2327
        %2670 = vmatmul.mubr.f32.gmra.mrb[0].mxu0 %v2326
        %v2671 = vpop.f32.mrb[0].mxu0
        %v2672 = vadd.f32 %v2397, %v2671
        %v2673 = vpop.f32.mrb[0].mxu0
        %2674 = vmatprep.mubr.f32.mxu0 %v2330
        %2675 = vmatmul.mubr.f32.gmra.mrb[0].mxu0 %v2329
        %v2676 = vpop.f32.mrb[0].mxu0
        %v2677 = vadd.f32 %v2397, %v2676
        %v2678 = vpop.f32.mrb[0].mxu0
        %2679 = vmatprep.mubr.f32.mxu0 %v2333
        %2680 = vmatmul.mubr.f32.gmra.mrb[0].mxu0 %v2332
        %v2681 = vpop.f32.mrb[0].mxu0
        %v2682 = vadd.f32 %v2397, %v2681
        %v2683 = vpop.f32.mrb[0].mxu0
        %2684 = vmatprep.mubr.f32.mxu0 %v2336
        %2685 = vmatmul.mubr.f32.gmra.mrb[0].mxu0 %v2335
        %v2686 = vpop.f32.mrb[0].mxu0
        %v2687 = vadd.f32 %v2397, %v2686
        %v2688 = vpop.f32.mrb[0].mxu0
        %2689 = vmatprep.mubr.f32.mxu0 %v2339
        %2690 = vmatmul.mubr.f32.gmra.mrb[0].mxu0 %v2338
        %v2691 = vpop.f32.mrb[0].mxu0
        %v2692 = vadd.f32 %v2397, %v2691
        %v2693 = vpop.f32.mrb[0].mxu0
        %2694 = vmatprep.mubr.f32.mxu0 %v2342
        %2695 = vmatmul.mubr.f32.gmra.mrb[0].mxu0 %v2341
        %v2696 = vpop.f32.mrb[0].mxu0
        %v2697 = vadd.f32 %v2397, %v2696
        %v2698 = vpop.f32.mrb[0].mxu0
        %2699 = vmatprep.mubr.f32.mxu0 %v2345
        %2700 = vmatmul.mubr.f32.gmra.mrb[0].mxu0 %v2344
        %v2701 = vpop.f32.mrb[0].mxu0
        %v2702 = vadd.f32 %v2397, %v2701
        %v2703 = vpop.f32.mrb[0].mxu0
        %2704 = vmatprep.mubr.f32.mxu0 %v2348
        %2705 = vmatmul.mubr.f32.gmra.mrb[0].mxu0 %v2347
        %v2706 = vpop.f32.mrb[0].mxu0
        %v2707 = vadd.f32 %v2397, %v2706
        %v2708 = vpop.f32.mrb[0].mxu0
        %2709 = vmatprep.mubr.f32.mxu0 %v2351
        %2710 = vmatmul.mubr.f32.gmra.mrb[0].mxu0 %v2350
        %v2711 = vpop.f32.mrb[0].mxu0
        %v2712 = vadd.f32 %v2397, %v2711
        %v2713 = vpop.f32.mrb[0].mxu0
        %2714 = vmatprep.mubr.f32.mxu0 %v2354
        %2715 = vmatmul.mubr.f32.gmra.mrb[0].mxu0 %v2353
        %v2716 = vpop.f32.mrb[0].mxu0
        %v2717 = vadd.f32 %v2397, %v2716
        %v2718 = vpop.f32.mrb[0].mxu0
        %2719 = vdwg.mxu0
        %2720 = vmatprep.subr.mxu0 0.0
        %2721 = vmatpush1.msra.mxu0 %v2388
        %2722 = vmatprep.subr.mxu0 0.0
        %2723 = vmatpush1.msra.mxu0 %v2389
        %2724 = vmatprep.subr.mxu0 0.0
        %2725 = vmatpush1.msra.mxu0 %v2390
        %2726 = vmatprep.subr.mxu0 0.0
        %2727 = vmatpush1.msra.mxu0 %v2391
        %2728 = vmatprep.subr.mxu0 0.0
        %2729 = vmatpush1.msra.mxu0 0.0
        %2730 = vmatprep.subr.mxu0 0.0
        %2731 = vmatpush1.msra.mxu0 0.0
        %2732 = vmatprep.subr.mxu0 0.0
        %2733 = vmatpush1.msra.mxu0 0.0
        %2734 = vmatprep.subr.mxu0 0.0
        %2735 = vmatpush1.msra.mxu0 0.0
        %2736 = vmatprep.subr.mxu0 0.0
        %2737 = vmatpush1.msra.mxu0 0.0
        %2738 = vmatprep.subr.mxu0 0.0
        %2739 = vmatpush1.msra.mxu0 0.0
        %2740 = vmatprep.subr.mxu0 0.0
        %2741 = vmatpush1.msra.mxu0 0.0
        %2742 = vmatprep.subr.mxu0 0.0
        %2743 = vmatpush1.msra.mxu0 0.0
        %2744 = vmatprep.subr.mxu0 0.0
        %2745 = vmatpush1.msra.mxu0 0.0
        %2746 = vmatprep.subr.mxu0 0.0
        %2747 = vmatpush1.msra.mxu0 0.0
        %2748 = vmatprep.subr.mxu0 0.0
        %2749 = vmatpush1.msra.mxu0 0.0
        %2750 = vmatprep.subr.mxu0 0.0
        %2751 = vmatpush1.msra.mxu0 0.0
        %2752 = vmatprep.subr.mxu0 0.0
        %2753 = vmatpush1.msra.mxu0 0.0
        %2754 = vmatprep.subr.mxu0 0.0
        %2755 = vmatpush1.msra.mxu0 0.0
        %2756 = vmatprep.subr.mxu0 0.0
        %2757 = vmatpush1.msra.mxu0 0.0
        %2758 = vmatprep.subr.mxu0 0.0
        %2759 = vmatpush1.msra.mxu0 0.0
        %2760 = vmatprep.subr.mxu0 0.0
        %2761 = vmatpush1.msra.mxu0 0.0
        %2762 = vmatprep.subr.mxu0 0.0
        %2763 = vmatpush1.msra.mxu0 0.0
        %2764 = vmatprep.subr.mxu0 0.0
        %2765 = vmatpush1.msra.mxu0 0.0
        %2766 = vmatprep.subr.mxu0 0.0
        %2767 = vmatpush1.msra.mxu0 0.0
        %2768 = vmatprep.subr.mxu0 0.0
        %2769 = vmatpush1.msra.mxu0 0.0
        %2770 = vmatprep.subr.mxu0 0.0
        %2771 = vmatpush1.msra.mxu0 0.0
        %2772 = vmatprep.subr.mxu0 0.0
        %2773 = vmatpush1.msra.mxu0 0.0
        %2774 = vmatprep.subr.mxu0 0.0
        %2775 = vmatpush1.msra.mxu0 0.0
        %2776 = vmatprep.subr.mxu0 0.0
        %2777 = vmatpush1.msra.mxu0 0.0
        %2778 = vmatprep.subr.mxu0 0.0
        %2779 = vmatpush1.msra.mxu0 0.0
        %2780 = vmatprep.subr.mxu0 0.0
        %2781 = vmatpush1.msra.mxu0 0.0
        %2782 = vmatprep.subr.mxu0 0.0
        %2783 = vmatpush1.msra.mxu0 0.0
        %2784 = vmatprep.mubr.f32.mxu0 0.0
        %2785 = vmatmul.mubr.f32.gmra.mrb[0].mxu0 %v2400
        %v2786 = vpop.f32.mrb[0].mxu0
        %v2787 = vadd.f32 %v2562, %v2786
        %v2788 = vpop.f32.mrb[0].mxu0
        %2789 = vmatprep.mubr.f32.mxu0 0.0
        %2790 = vmatmul.mubr.f32.gmra.mrb[0].mxu0 %v2403
        %v2791 = vpop.f32.mrb[0].mxu0
        %v2792 = vadd.f32 %v2567, %v2791
        %v2793 = vpop.f32.mrb[0].mxu0
        %2794 = vmatprep.mubr.f32.mxu0 0.0
        %2795 = vmatmul.mubr.f32.gmra.mrb[0].mxu0 %v2406
        %v2796 = vpop.f32.mrb[0].mxu0
        %v2797 = vadd.f32 %v2572, %v2796
        %v2798 = vpop.f32.mrb[0].mxu0
        %2799 = vmatprep.mubr.f32.mxu0 0.0
        %2800 = vmatmul.mubr.f32.gmra.mrb[0].mxu0 %v2409
        %v2801 = vpop.f32.mrb[0].mxu0
        %v2802 = vadd.f32 %v2577, %v2801
        %v2803 = vpop.f32.mrb[0].mxu0
        %2804 = vmatprep.mubr.f32.mxu0 0.0
        %2805 = vmatmul.mubr.f32.gmra.mrb[0].mxu0 %v2412
        %v2806 = vpop.f32.mrb[0].mxu0
        %v2807 = vadd.f32 %v2582, %v2806
        %v2808 = vpop.f32.mrb[0].mxu0
        %2809 = vmatprep.mubr.f32.mxu0 0.0
        %2810 = vmatmul.mubr.f32.gmra.mrb[0].mxu0 %v2415
        %v2811 = vpop.f32.mrb[0].mxu0
        %v2812 = vadd.f32 %v2587, %v2811
        %v2813 = vpop.f32.mrb[0].mxu0
        %2814 = vmatprep.mubr.f32.mxu0 0.0
        %2815 = vmatmul.mubr.f32.gmra.mrb[0].mxu0 %v2418
        %v2816 = vpop.f32.mrb[0].mxu0
        %v2817 = vadd.f32 %v2592, %v2816
        %v2818 = vpop.f32.mrb[0].mxu0
        %2819 = vmatprep.mubr.f32.mxu0 0.0
        %2820 = vmatmul.mubr.f32.gmra.mrb[0].mxu0 %v2421
        %v2821 = vpop.f32.mrb[0].mxu0
        %v2822 = vadd.f32 %v2597, %v2821
        %v2823 = vpop.f32.mrb[0].mxu0
        %2824 = vmatprep.mubr.f32.mxu0 0.0
        %2825 = vmatmul.mubr.f32.gmra.mrb[0].mxu0 %v2424
        %v2826 = vpop.f32.mrb[0].mxu0
        %v2827 = vadd.f32 %v2602, %v2826
        %v2828 = vpop.f32.mrb[0].mxu0
        %2829 = vmatprep.mubr.f32.mxu0 0.0
        %2830 = vmatmul.mubr.f32.gmra.mrb[0].mxu0 %v2427
        %v2831 = vpop.f32.mrb[0].mxu0
        %v2832 = vadd.f32 %v2607, %v2831
        %v2833 = vpop.f32.mrb[0].mxu0
        %2834 = vmatprep.mubr.f32.mxu0 0.0
        %2835 = vmatmul.mubr.f32.gmra.mrb[0].mxu0 %v2430
        %v2836 = vpop.f32.mrb[0].mxu0
        %v2837 = vadd.f32 %v2612, %v2836
        %v2838 = vpop.f32.mrb[0].mxu0
        %2839 = vmatprep.mubr.f32.mxu0 0.0
        %2840 = vmatmul.mubr.f32.gmra.mrb[0].mxu0 %v2433
        %v2841 = vpop.f32.mrb[0].mxu0
        %v2842 = vadd.f32 %v2617, %v2841
        %v2843 = vpop.f32.mrb[0].mxu0
        %2844 = vmatprep.mubr.f32.mxu0 0.0
        %2845 = vmatmul.mubr.f32.gmra.mrb[0].mxu0 %v2436
        %v2846 = vpop.f32.mrb[0].mxu0
        %v2847 = vadd.f32 %v2622, %v2846
        %v2848 = vpop.f32.mrb[0].mxu0
        %2849 = vmatprep.mubr.f32.mxu0 0.0
        %2850 = vmatmul.mubr.f32.gmra.mrb[0].mxu0 %v2439
        %v2851 = vpop.f32.mrb[0].mxu0
        %v2852 = vadd.f32 %v2627, %v2851
        %v2853 = vpop.f32.mrb[0].mxu0
        %2854 = vmatprep.mubr.f32.mxu0 0.0
        %2855 = vmatmul.mubr.f32.gmra.mrb[0].mxu0 %v2442
        %v2856 = vpop.f32.mrb[0].mxu0
        %v2857 = vadd.f32 %v2632, %v2856
        %v2858 = vpop.f32.mrb[0].mxu0
        %2859 = vmatprep.mubr.f32.mxu0 0.0
        %2860 = vmatmul.mubr.f32.gmra.mrb[0].mxu0 %v2445
        %v2861 = vpop.f32.mrb[0].mxu0
        %v2862 = vadd.f32 %v2637, %v2861
        %v2863 = vpop.f32.mrb[0].mxu0
        %2864 = vmatprep.mubr.f32.mxu0 0.0
        %2865 = vmatmul.mubr.f32.gmra.mrb[0].mxu0 %v2448
        %v2866 = vpop.f32.mrb[0].mxu0
        %v2867 = vadd.f32 %v2642, %v2866
        %v2868 = vpop.f32.mrb[0].mxu0
        %2869 = vmatprep.mubr.f32.mxu0 0.0
        %2870 = vmatmul.mubr.f32.gmra.mrb[0].mxu0 %v2451
        %v2871 = vpop.f32.mrb[0].mxu0
        %v2872 = vadd.f32 %v2647, %v2871
        %v2873 = vpop.f32.mrb[0].mxu0
        %2874 = vmatprep.mubr.f32.mxu0 0.0
        %2875 = vmatmul.mubr.f32.gmra.mrb[0].mxu0 %v2454
        %v2876 = vpop.f32.mrb[0].mxu0
        %v2877 = vadd.f32 %v2652, %v2876
        %v2878 = vpop.f32.mrb[0].mxu0
        %2879 = vmatprep.mubr.f32.mxu0 0.0
        %2880 = vmatmul.mubr.f32.gmra.mrb[0].mxu0 %v2457
        %v2881 = vpop.f32.mrb[0].mxu0
        %v2882 = vadd.f32 %v2657, %v2881
        %v2883 = vpop.f32.mrb[0].mxu0
        %2884 = vmatprep.mubr.f32.mxu0 0.0
        %2885 = vmatmul.mubr.f32.gmra.mrb[0].mxu0 %v2460
        %v2886 = vpop.f32.mrb[0].mxu0
        %v2887 = vadd.f32 %v2662, %v2886
        %v2888 = vpop.f32.mrb[0].mxu0
        %2889 = vmatprep.mubr.f32.mxu0 0.0
        %2890 = vmatmul.mubr.f32.gmra.mrb[0].mxu0 %v2463
        %v2891 = vpop.f32.mrb[0].mxu0
        %v2892 = vadd.f32 %v2667, %v2891
        %v2893 = vpop.f32.mrb[0].mxu0
        %2894 = vmatprep.mubr.f32.mxu0 0.0
        %2895 = vmatmul.mubr.f32.gmra.mrb[0].mxu0 %v2466
        %v2896 = vpop.f32.mrb[0].mxu0
        %v2897 = vadd.f32 %v2672, %v2896
        %v2898 = vpop.f32.mrb[0].mxu0
        %2899 = vmatprep.mubr.f32.mxu0 0.0
        %2900 = vmatmul.mubr.f32.gmra.mrb[0].mxu0 %v2469
        %v2901 = vpop.f32.mrb[0].mxu0
        %v2902 = vadd.f32 %v2677, %v2901
        %v2903 = vpop.f32.mrb[0].mxu0
        %2904 = vmatprep.mubr.f32.mxu0 0.0
        %2905 = vmatmul.mubr.f32.gmra.mrb[0].mxu0 %v2472
        %v2906 = vpop.f32.mrb[0].mxu0
        %v2907 = vadd.f32 %v2682, %v2906
        %v2908 = vpop.f32.mrb[0].mxu0
        %2909 = vmatprep.mubr.f32.mxu0 0.0
        %2910 = vmatmul.mubr.f32.gmra.mrb[0].mxu0 %v2475
        %v2911 = vpop.f32.mrb[0].mxu0
        %v2912 = vadd.f32 %v2687, %v2911
        %v2913 = vpop.f32.mrb[0].mxu0
        %2914 = vmatprep.mubr.f32.mxu0 0.0
        %2915 = vmatmul.mubr.f32.gmra.mrb[0].mxu0 %v2478
        %v2916 = vpop.f32.mrb[0].mxu0
        %v2917 = vadd.f32 %v2692, %v2916
        %v2918 = vpop.f32.mrb[0].mxu0
        %2919 = vmatprep.mubr.f32.mxu0 0.0
        %2920 = vmatmul.mubr.f32.gmra.mrb[0].mxu0 %v2481
        %v2921 = vpop.f32.mrb[0].mxu0
        %v2922 = vadd.f32 %v2697, %v2921
        %v2923 = vpop.f32.mrb[0].mxu0
        %2924 = vmatprep.mubr.f32.mxu0 0.0
        %2925 = vmatmul.mubr.f32.gmra.mrb[0].mxu0 %v2484
        %v2926 = vpop.f32.mrb[0].mxu0
        %v2927 = vadd.f32 %v2702, %v2926
        %v2928 = vpop.f32.mrb[0].mxu0
        %2929 = vmatprep.mubr.f32.mxu0 0.0
        %2930 = vmatmul.mubr.f32.gmra.mrb[0].mxu0 %v2487
        %v2931 = vpop.f32.mrb[0].mxu0
        %v2932 = vadd.f32 %v2707, %v2931
        %v2933 = vpop.f32.mrb[0].mxu0
        %2934 = vmatprep.mubr.f32.mxu0 0.0
        %2935 = vmatmul.mubr.f32.gmra.mrb[0].mxu0 %v2490
        %v2936 = vpop.f32.mrb[0].mxu0
        %v2937 = vadd.f32 %v2712, %v2936
        %v2938 = vpop.f32.mrb[0].mxu0
        %2939 = vmatprep.mubr.f32.mxu0 0.0
        %2940 = vmatmul.mubr.f32.gmra.mrb[0].mxu0 %v2493
        %v2941 = vpop.f32.mrb[0].mxu0
        %v2942 = vadd.f32 %v2717, %v2941
        %v2943 = vpop.f32.mrb[0].mxu0
        %2944 = vdwg.mxu0
        %v2945 = vmax.f32 %v2787, 0.0
        %v2946 = vmax.f32 %v2792, 0.0
        %v2947 = vmax.f32 %v2797, 0.0
        %v2948 = vmax.f32 %v2802, 0.0
        %v2949 = vmax.f32 %v2807, 0.0
        %v2950 = vmax.f32 %v2812, 0.0
        %v2951 = vmax.f32 %v2817, 0.0
        %v2952 = vmax.f32 %v2822, 0.0
        %v2953 = vmax.f32 %v2827, 0.0
        %v2954 = vmax.f32 %v2832, 0.0
        %v2955 = vmax.f32 %v2837, 0.0
        %v2956 = vmax.f32 %v2842, 0.0
        %v2957 = vmax.f32 %v2847, 0.0
        %v2958 = vmax.f32 %v2852, 0.0
        %v2959 = vmax.f32 %v2857, 0.0
        %v2960 = vmax.f32 %v2862, 0.0
        %v2961 = vmax.f32 %v2867, 0.0
        %v2962 = vmax.f32 %v2872, 0.0
        %v2963 = vmax.f32 %v2877, 0.0
        %v2964 = vmax.f32 %v2882, 0.0
        %v2965 = vmax.f32 %v2887, 0.0
        %v2966 = vmax.f32 %v2892, 0.0
        %v2967 = vmax.f32 %v2897, 0.0
        %v2968 = vmax.f32 %v2902, 0.0
        %v2969 = vmax.f32 %v2907, 0.0
        %v2970 = vmax.f32 %v2912, 0.0
        %v2971 = vmax.f32 %v2917, 0.0
        %v2972 = vmax.f32 %v2922, 0.0
        %v2973 = vmax.f32 %v2927, 0.0
        %v2974 = vmax.f32 %v2932, 0.0
        %v2975 = vmax.f32 %v2937, 0.0
        %v2976 = vmax.f32 %v2942, 0.0
        %2977 = vst.msk [vmem:[%s491] sm:$0xff] %vm823, %v2945
        %2978 = vst.msk [vmem:[%s491 + $0x8] sm:$0xff] %vm823, %v2946
        %2979 = vst.msk [vmem:[%s491 + $0x10] sm:$0xff] %vm823, %v2947
        %2980 = vst.msk [vmem:[%s491 + $0x18] sm:$0xff] %vm823, %v2948
        %2981 = vst.msk [vmem:[%s491 + $0x20] sm:$0xff] %vm823, %v2949
        %2982 = vst.msk [vmem:[%s491 + $0x28] sm:$0xff] %vm823, %v2950
        %2983 = vst.msk [vmem:[%s491 + $0x30] sm:$0xff] %vm823, %v2951
        %2984 = vst.msk [vmem:[%s491 + $0x38] sm:$0xff] %vm823, %v2952
        %2985 = vst.msk [vmem:[%s491 + $0x40] sm:$0xff] %vm823, %v2953
        %2986 = vst.msk [vmem:[%s491 + $0x48] sm:$0xff] %vm823, %v2954
        %2987 = vst.msk [vmem:[%s491 + $0x50] sm:$0xff] %vm823, %v2955
        %2988 = vst.msk [vmem:[%s491 + $0x58] sm:$0xff] %vm823, %v2956
        %2989 = vst.msk [vmem:[%s491 + $0x60] sm:$0xff] %vm823, %v2957
        %2990 = vst.msk [vmem:[%s491 + $0x68] sm:$0xff] %vm823, %v2958
        %2991 = vst.msk [vmem:[%s491 + $0x70] sm:$0xff] %vm823, %v2959
        %2992 = vst.msk [vmem:[%s491 + $0x78] sm:$0xff] %vm823, %v2960
        %2993 = vst.msk [vmem:[%s491 + $0x80] sm:$0xff] %vm823, %v2961
        %2994 = vst.msk [vmem:[%s491 + $0x88] sm:$0xff] %vm823, %v2962
        %2995 = vst.msk [vmem:[%s491 + $0x90] sm:$0xff] %vm823, %v2963
        %2996 = vst.msk [vmem:[%s491 + $0x98] sm:$0xff] %vm823, %v2964
        %2997 = vst.msk [vmem:[%s491 + $0xa0] sm:$0xff] %vm823, %v2965
        %2998 = vst.msk [vmem:[%s491 + $0xa8] sm:$0xff] %vm823, %v2966
        %2999 = vst.msk [vmem:[%s491 + $0xb0] sm:$0xff] %vm823, %v2967
        %3000 = vst.msk [vmem:[%s491 + $0xb8] sm:$0xff] %vm823, %v2968
        %3001 = vst.msk [vmem:[%s491 + $0xc0] sm:$0xff] %vm823, %v2969
        %3002 = vst.msk [vmem:[%s491 + $0xc8] sm:$0xff] %vm823, %v2970
        %3003 = vst.msk [vmem:[%s491 + $0xd0] sm:$0xff] %vm823, %v2971
        %3004 = vst.msk [vmem:[%s491 + $0xd8] sm:$0xff] %vm823, %v2972
        %3005 = vst.msk [vmem:[%s491 + $0xe0] sm:$0xff] %vm823, %v2973
        %3006 = vst.msk [vmem:[%s491 + $0xe8] sm:$0xff] %vm823, %v2974
        %3007 = vst.msk [vmem:[%s491 + $0xf0] sm:$0xff] %vm823, %v2975
        %3008 = vst.msk [vmem:[%s491 + $0xf8] sm:$0xff] %vm823, %v2976
        %v3041 = vcombine.high %v2945, %v2945
        %v3043 = vunpack.c.l.s4 1983009808
        %v3044 = vunpack.c.0.s8 %v3043
        %v3045 = vlaneseq
        %v3046 = vshrl.u32 %v3045, 7
        %v3047 = vsub.s32 %v3044, %v3046
        %v3048 = vrot.slane %v2945, %v3047
        %v3050 = vunpack.c.l.s4 1983009808
        %v3051 = vunpack.c.0.s8 %v3050
        %v3052 = vlaneseq
        %v3053 = vshrl.u32 %v3052, 7
        %v3054 = vsub.s32 %v3051, %v3053
        %v3055 = vrot.slane %v3041, %v3054
        %v3056 = vcombine.high %v3048, %v3048
        %v3057 = vcombine.high %v3055, %v3055
        %v3058 = vcombine.high %v2946, %v2946
        %v3060 = vunpack.c.l.s4 1983009808
        %v3061 = vunpack.c.0.s8 %v3060
        %v3062 = vlaneseq
        %v3063 = vshrl.u32 %v3062, 7
        %v3064 = vsub.s32 %v3061, %v3063
        %v3065 = vrot.slane %v2946, %v3064
        %v3067 = vunpack.c.l.s4 1983009808
        %v3068 = vunpack.c.0.s8 %v3067
        %v3069 = vlaneseq
        %v3070 = vshrl.u32 %v3069, 7
        %v3071 = vsub.s32 %v3068, %v3070
        %v3072 = vrot.slane %v3058, %v3071
        %v3073 = vcombine.high %v3065, %v3065
        %v3074 = vcombine.high %v3072, %v3072
        %v3075 = vcombine.high %v2947, %v2947
        %v3077 = vunpack.c.l.s4 1983009808
        %v3078 = vunpack.c.0.s8 %v3077
        %v3079 = vlaneseq
        %v3080 = vshrl.u32 %v3079, 7
        %v3081 = vsub.s32 %v3078, %v3080
        %v3082 = vrot.slane %v2947, %v3081
        %v3084 = vunpack.c.l.s4 1983009808
        %v3085 = vunpack.c.0.s8 %v3084
        %v3086 = vlaneseq
        %v3087 = vshrl.u32 %v3086, 7
        %v3088 = vsub.s32 %v3085, %v3087
        %v3089 = vrot.slane %v3075, %v3088
        %v3090 = vcombine.high %v3082, %v3082
        %v3091 = vcombine.high %v3089, %v3089
        %v3092 = vcombine.high %v2948, %v2948
        %v3094 = vunpack.c.l.s4 1983009808
        %v3095 = vunpack.c.0.s8 %v3094
        %v3096 = vlaneseq
        %v3097 = vshrl.u32 %v3096, 7
        %v3098 = vsub.s32 %v3095, %v3097
        %v3099 = vrot.slane %v2948, %v3098
        %v3101 = vunpack.c.l.s4 1983009808
        %v3102 = vunpack.c.0.s8 %v3101
        %v3103 = vlaneseq
        %v3104 = vshrl.u32 %v3103, 7
        %v3105 = vsub.s32 %v3102, %v3104
        %v3106 = vrot.slane %v3092, %v3105
        %v3107 = vcombine.high %v3099, %v3099
        %v3108 = vcombine.high %v3106, %v3106
        %v3109 = vcombine.high %v2949, %v2949
        %v3111 = vunpack.c.l.s4 1983009808
        %v3112 = vunpack.c.0.s8 %v3111
        %v3113 = vlaneseq
        %v3114 = vshrl.u32 %v3113, 7
        %v3115 = vsub.s32 %v3112, %v3114
        %v3116 = vrot.slane %v2949, %v3115
        %v3118 = vunpack.c.l.s4 1983009808
        %v3119 = vunpack.c.0.s8 %v3118
        %v3120 = vlaneseq
        %v3121 = vshrl.u32 %v3120, 7
        %v3122 = vsub.s32 %v3119, %v3121
        %v3123 = vrot.slane %v3109, %v3122
        %v3124 = vcombine.high %v3116, %v3116
        %v3125 = vcombine.high %v3123, %v3123
        %v3126 = vcombine.high %v2950, %v2950
        %v3128 = vunpack.c.l.s4 1983009808
        %v3129 = vunpack.c.0.s8 %v3128
        %v3130 = vlaneseq
        %v3131 = vshrl.u32 %v3130, 7
        %v3132 = vsub.s32 %v3129, %v3131
        %v3133 = vrot.slane %v2950, %v3132
        %v3135 = vunpack.c.l.s4 1983009808
        %v3136 = vunpack.c.0.s8 %v3135
        %v3137 = vlaneseq
        %v3138 = vshrl.u32 %v3137, 7
        %v3139 = vsub.s32 %v3136, %v3138
        %v3140 = vrot.slane %v3126, %v3139
        %v3141 = vcombine.high %v3133, %v3133
        %v3142 = vcombine.high %v3140, %v3140
        %v3143 = vcombine.high %v2951, %v2951
        %v3145 = vunpack.c.l.s4 1983009808
        %v3146 = vunpack.c.0.s8 %v3145
        %v3147 = vlaneseq
        %v3148 = vshrl.u32 %v3147, 7
        %v3149 = vsub.s32 %v3146, %v3148
        %v3150 = vrot.slane %v2951, %v3149
        %v3152 = vunpack.c.l.s4 1983009808
        %v3153 = vunpack.c.0.s8 %v3152
        %v3154 = vlaneseq
        %v3155 = vshrl.u32 %v3154, 7
        %v3156 = vsub.s32 %v3153, %v3155
        %v3157 = vrot.slane %v3143, %v3156
        %v3158 = vcombine.high %v3150, %v3150
        %v3159 = vcombine.high %v3157, %v3157
        %v3160 = vcombine.high %v2952, %v2952
        %v3162 = vunpack.c.l.s4 1983009808
        %v3163 = vunpack.c.0.s8 %v3162
        %v3164 = vlaneseq
        %v3165 = vshrl.u32 %v3164, 7
        %v3166 = vsub.s32 %v3163, %v3165
        %v3167 = vrot.slane %v2952, %v3166
        %v3169 = vunpack.c.l.s4 1983009808
        %v3170 = vunpack.c.0.s8 %v3169
        %v3171 = vlaneseq
        %v3172 = vshrl.u32 %v3171, 7
        %v3173 = vsub.s32 %v3170, %v3172
        %v3174 = vrot.slane %v3160, %v3173
        %v3175 = vcombine.high %v3167, %v3167
        %v3176 = vcombine.high %v3174, %v3174
        %v3177 = vcombine.high %v2953, %v2953
        %v3179 = vunpack.c.l.s4 1983009808
        %v3180 = vunpack.c.0.s8 %v3179
        %v3181 = vlaneseq
        %v3182 = vshrl.u32 %v3181, 7
        %v3183 = vsub.s32 %v3180, %v3182
        %v3184 = vrot.slane %v2953, %v3183
        %v3186 = vunpack.c.l.s4 1983009808
        %v3187 = vunpack.c.0.s8 %v3186
        %v3188 = vlaneseq
        %v3189 = vshrl.u32 %v3188, 7
        %v3190 = vsub.s32 %v3187, %v3189
        %v3191 = vrot.slane %v3177, %v3190
        %v3192 = vcombine.high %v3184, %v3184
        %v3193 = vcombine.high %v3191, %v3191
        %v3194 = vcombine.high %v2954, %v2954
        %v3196 = vunpack.c.l.s4 1983009808
        %v3197 = vunpack.c.0.s8 %v3196
        %v3198 = vlaneseq
        %v3199 = vshrl.u32 %v3198, 7
        %v3200 = vsub.s32 %v3197, %v3199
        %v3201 = vrot.slane %v2954, %v3200
        %v3203 = vunpack.c.l.s4 1983009808
        %v3204 = vunpack.c.0.s8 %v3203
        %v3205 = vlaneseq
        %v3206 = vshrl.u32 %v3205, 7
        %v3207 = vsub.s32 %v3204, %v3206
        %v3208 = vrot.slane %v3194, %v3207
        %v3209 = vcombine.high %v3201, %v3201
        %v3210 = vcombine.high %v3208, %v3208
        %v3211 = vcombine.high %v2955, %v2955
        %v3213 = vunpack.c.l.s4 1983009808
        %v3214 = vunpack.c.0.s8 %v3213
        %v3215 = vlaneseq
        %v3216 = vshrl.u32 %v3215, 7
        %v3217 = vsub.s32 %v3214, %v3216
        %v3218 = vrot.slane %v2955, %v3217
        %v3220 = vunpack.c.l.s4 1983009808
        %v3221 = vunpack.c.0.s8 %v3220
        %v3222 = vlaneseq
        %v3223 = vshrl.u32 %v3222, 7
        %v3224 = vsub.s32 %v3221, %v3223
        %v3225 = vrot.slane %v3211, %v3224
        %v3226 = vcombine.high %v3218, %v3218
        %v3227 = vcombine.high %v3225, %v3225
        %v3228 = vcombine.high %v2956, %v2956
        %v3230 = vunpack.c.l.s4 1983009808
        %v3231 = vunpack.c.0.s8 %v3230
        %v3232 = vlaneseq
        %v3233 = vshrl.u32 %v3232, 7
        %v3234 = vsub.s32 %v3231, %v3233
        %v3235 = vrot.slane %v2956, %v3234
        %v3237 = vunpack.c.l.s4 1983009808
        %v3238 = vunpack.c.0.s8 %v3237
        %v3239 = vlaneseq
        %v3240 = vshrl.u32 %v3239, 7
        %v3241 = vsub.s32 %v3238, %v3240
        %v3242 = vrot.slane %v3228, %v3241
        %v3243 = vcombine.high %v3235, %v3235
        %v3244 = vcombine.high %v3242, %v3242
        %v3245 = vcombine.high %v2957, %v2957
        %v3247 = vunpack.c.l.s4 1983009808
        %v3248 = vunpack.c.0.s8 %v3247
        %v3249 = vlaneseq
        %v3250 = vshrl.u32 %v3249, 7
        %v3251 = vsub.s32 %v3248, %v3250
        %v3252 = vrot.slane %v2957, %v3251
        %v3254 = vunpack.c.l.s4 1983009808
        %v3255 = vunpack.c.0.s8 %v3254
        %v3256 = vlaneseq
        %v3257 = vshrl.u32 %v3256, 7
        %v3258 = vsub.s32 %v3255, %v3257
        %v3259 = vrot.slane %v3245, %v3258
        %v3260 = vcombine.high %v3252, %v3252
        %v3261 = vcombine.high %v3259, %v3259
        %v3262 = vcombine.high %v2958, %v2958
        %v3264 = vunpack.c.l.s4 1983009808
        %v3265 = vunpack.c.0.s8 %v3264
        %v3266 = vlaneseq
        %v3267 = vshrl.u32 %v3266, 7
        %v3268 = vsub.s32 %v3265, %v3267
        %v3269 = vrot.slane %v2958, %v3268
        %v3271 = vunpack.c.l.s4 1983009808
        %v3272 = vunpack.c.0.s8 %v3271
        %v3273 = vlaneseq
        %v3274 = vshrl.u32 %v3273, 7
        %v3275 = vsub.s32 %v3272, %v3274
        %v3276 = vrot.slane %v3262, %v3275
        %v3277 = vcombine.high %v3269, %v3269
        %v3278 = vcombine.high %v3276, %v3276
        %v3279 = vcombine.high %v2959, %v2959
        %v3281 = vunpack.c.l.s4 1983009808
        %v3282 = vunpack.c.0.s8 %v3281
        %v3283 = vlaneseq
        %v3284 = vshrl.u32 %v3283, 7
        %v3285 = vsub.s32 %v3282, %v3284
        %v3286 = vrot.slane %v2959, %v3285
        %v3288 = vunpack.c.l.s4 1983009808
        %v3289 = vunpack.c.0.s8 %v3288
        %v3290 = vlaneseq
        %v3291 = vshrl.u32 %v3290, 7
        %v3292 = vsub.s32 %v3289, %v3291
        %v3293 = vrot.slane %v3279, %v3292
        %v3294 = vcombine.high %v3286, %v3286
        %v3295 = vcombine.high %v3293, %v3293
        %v3296 = vcombine.high %v2960, %v2960
        %v3298 = vunpack.c.l.s4 1983009808
        %v3299 = vunpack.c.0.s8 %v3298
        %v3300 = vlaneseq
        %v3301 = vshrl.u32 %v3300, 7
        %v3302 = vsub.s32 %v3299, %v3301
        %v3303 = vrot.slane %v2960, %v3302
        %v3305 = vunpack.c.l.s4 1983009808
        %v3306 = vunpack.c.0.s8 %v3305
        %v3307 = vlaneseq
        %v3308 = vshrl.u32 %v3307, 7
        %v3309 = vsub.s32 %v3306, %v3308
        %v3310 = vrot.slane %v3296, %v3309
        %v3311 = vcombine.high %v3303, %v3303
        %v3312 = vcombine.high %v3310, %v3310
        %v3313 = vcombine.high %v2961, %v2961
        %v3315 = vunpack.c.l.s4 1983009808
        %v3316 = vunpack.c.0.s8 %v3315
        %v3317 = vlaneseq
        %v3318 = vshrl.u32 %v3317, 7
        %v3319 = vsub.s32 %v3316, %v3318
        %v3320 = vrot.slane %v2961, %v3319
        %v3322 = vunpack.c.l.s4 1983009808
        %v3323 = vunpack.c.0.s8 %v3322
        %v3324 = vlaneseq
        %v3325 = vshrl.u32 %v3324, 7
        %v3326 = vsub.s32 %v3323, %v3325
        %v3327 = vrot.slane %v3313, %v3326
        %v3328 = vcombine.high %v3320, %v3320
        %v3329 = vcombine.high %v3327, %v3327
        %v3330 = vcombine.high %v2962, %v2962
        %v3332 = vunpack.c.l.s4 1983009808
        %v3333 = vunpack.c.0.s8 %v3332
        %v3334 = vlaneseq
        %v3335 = vshrl.u32 %v3334, 7
        %v3336 = vsub.s32 %v3333, %v3335
        %v3337 = vrot.slane %v2962, %v3336
        %v3339 = vunpack.c.l.s4 1983009808
        %v3340 = vunpack.c.0.s8 %v3339
        %v3341 = vlaneseq
        %v3342 = vshrl.u32 %v3341, 7
        %v3343 = vsub.s32 %v3340, %v3342
        %v3344 = vrot.slane %v3330, %v3343
        %v3345 = vcombine.high %v3337, %v3337
        %v3346 = vcombine.high %v3344, %v3344
        %v3347 = vcombine.high %v2963, %v2963
        %v3349 = vunpack.c.l.s4 1983009808
        %v3350 = vunpack.c.0.s8 %v3349
        %v3351 = vlaneseq
        %v3352 = vshrl.u32 %v3351, 7
        %v3353 = vsub.s32 %v3350, %v3352
        %v3354 = vrot.slane %v2963, %v3353
        %v3356 = vunpack.c.l.s4 1983009808
        %v3357 = vunpack.c.0.s8 %v3356
        %v3358 = vlaneseq
        %v3359 = vshrl.u32 %v3358, 7
        %v3360 = vsub.s32 %v3357, %v3359
        %v3361 = vrot.slane %v3347, %v3360
        %v3362 = vcombine.high %v3354, %v3354
        %v3363 = vcombine.high %v3361, %v3361
        %v3364 = vcombine.high %v2964, %v2964
        %v3366 = vunpack.c.l.s4 1983009808
        %v3367 = vunpack.c.0.s8 %v3366
        %v3368 = vlaneseq
        %v3369 = vshrl.u32 %v3368, 7
        %v3370 = vsub.s32 %v3367, %v3369
        %v3371 = vrot.slane %v2964, %v3370
        %v3373 = vunpack.c.l.s4 1983009808
        %v3374 = vunpack.c.0.s8 %v3373
        %v3375 = vlaneseq
        %v3376 = vshrl.u32 %v3375, 7
        %v3377 = vsub.s32 %v3374, %v3376
        %v3378 = vrot.slane %v3364, %v3377
        %v3379 = vcombine.high %v3371, %v3371
        %v3380 = vcombine.high %v3378, %v3378
        %v3381 = vcombine.high %v2965, %v2965
        %v3383 = vunpack.c.l.s4 1983009808
        %v3384 = vunpack.c.0.s8 %v3383
        %v3385 = vlaneseq
        %v3386 = vshrl.u32 %v3385, 7
        %v3387 = vsub.s32 %v3384, %v3386
        %v3388 = vrot.slane %v2965, %v3387
        %v3390 = vunpack.c.l.s4 1983009808
        %v3391 = vunpack.c.0.s8 %v3390
        %v3392 = vlaneseq
        %v3393 = vshrl.u32 %v3392, 7
        %v3394 = vsub.s32 %v3391, %v3393
        %v3395 = vrot.slane %v3381, %v3394
        %v3396 = vcombine.high %v3388, %v3388
        %v3397 = vcombine.high %v3395, %v3395
        %v3398 = vcombine.high %v2966, %v2966
        %v3400 = vunpack.c.l.s4 1983009808
        %v3401 = vunpack.c.0.s8 %v3400
        %v3402 = vlaneseq
        %v3403 = vshrl.u32 %v3402, 7
        %v3404 = vsub.s32 %v3401, %v3403
        %v3405 = vrot.slane %v2966, %v3404
        %v3407 = vunpack.c.l.s4 1983009808
        %v3408 = vunpack.c.0.s8 %v3407
        %v3409 = vlaneseq
        %v3410 = vshrl.u32 %v3409, 7
        %v3411 = vsub.s32 %v3408, %v3410
        %v3412 = vrot.slane %v3398, %v3411
        %v3413 = vcombine.high %v3405, %v3405
        %v3414 = vcombine.high %v3412, %v3412
        %v3415 = vcombine.high %v2967, %v2967
        %v3417 = vunpack.c.l.s4 1983009808
        %v3418 = vunpack.c.0.s8 %v3417
        %v3419 = vlaneseq
        %v3420 = vshrl.u32 %v3419, 7
        %v3421 = vsub.s32 %v3418, %v3420
        %v3422 = vrot.slane %v2967, %v3421
        %v3424 = vunpack.c.l.s4 1983009808
        %v3425 = vunpack.c.0.s8 %v3424
        %v3426 = vlaneseq
        %v3427 = vshrl.u32 %v3426, 7
        %v3428 = vsub.s32 %v3425, %v3427
        %v3429 = vrot.slane %v3415, %v3428
        %v3430 = vcombine.high %v3422, %v3422
        %v3431 = vcombine.high %v3429, %v3429
        %v3432 = vcombine.high %v2968, %v2968
        %v3434 = vunpack.c.l.s4 1983009808
        %v3435 = vunpack.c.0.s8 %v3434
        %v3436 = vlaneseq
        %v3437 = vshrl.u32 %v3436, 7
        %v3438 = vsub.s32 %v3435, %v3437
        %v3439 = vrot.slane %v2968, %v3438
        %v3441 = vunpack.c.l.s4 1983009808
        %v3442 = vunpack.c.0.s8 %v3441
        %v3443 = vlaneseq
        %v3444 = vshrl.u32 %v3443, 7
        %v3445 = vsub.s32 %v3442, %v3444
        %v3446 = vrot.slane %v3432, %v3445
        %v3447 = vcombine.high %v3439, %v3439
        %v3448 = vcombine.high %v3446, %v3446
        %v3449 = vcombine.high %v2969, %v2969
        %v3451 = vunpack.c.l.s4 1983009808
        %v3452 = vunpack.c.0.s8 %v3451
        %v3453 = vlaneseq
        %v3454 = vshrl.u32 %v3453, 7
        %v3455 = vsub.s32 %v3452, %v3454
        %v3456 = vrot.slane %v2969, %v3455
        %v3458 = vunpack.c.l.s4 1983009808
        %v3459 = vunpack.c.0.s8 %v3458
        %v3460 = vlaneseq
        %v3461 = vshrl.u32 %v3460, 7
        %v3462 = vsub.s32 %v3459, %v3461
        %v3463 = vrot.slane %v3449, %v3462
        %v3464 = vcombine.high %v3456, %v3456
        %v3465 = vcombine.high %v3463, %v3463
        %v3466 = vcombine.high %v2970, %v2970
        %v3468 = vunpack.c.l.s4 1983009808
        %v3469 = vunpack.c.0.s8 %v3468
        %v3470 = vlaneseq
        %v3471 = vshrl.u32 %v3470, 7
        %v3472 = vsub.s32 %v3469, %v3471
        %v3473 = vrot.slane %v2970, %v3472
        %v3475 = vunpack.c.l.s4 1983009808
        %v3476 = vunpack.c.0.s8 %v3475
        %v3477 = vlaneseq
        %v3478 = vshrl.u32 %v3477, 7
        %v3479 = vsub.s32 %v3476, %v3478
        %v3480 = vrot.slane %v3466, %v3479
        %v3481 = vcombine.high %v3473, %v3473
        %v3482 = vcombine.high %v3480, %v3480
        %v3483 = vcombine.high %v2971, %v2971
        %v3485 = vunpack.c.l.s4 1983009808
        %v3486 = vunpack.c.0.s8 %v3485
        %v3487 = vlaneseq
        %v3488 = vshrl.u32 %v3487, 7
        %v3489 = vsub.s32 %v3486, %v3488
        %v3490 = vrot.slane %v2971, %v3489
        %v3492 = vunpack.c.l.s4 1983009808
        %v3493 = vunpack.c.0.s8 %v3492
        %v3494 = vlaneseq
        %v3495 = vshrl.u32 %v3494, 7
        %v3496 = vsub.s32 %v3493, %v3495
        %v3497 = vrot.slane %v3483, %v3496
        %v3498 = vcombine.high %v3490, %v3490
        %v3499 = vcombine.high %v3497, %v3497
        %v3500 = vcombine.high %v2972, %v2972
        %v3502 = vunpack.c.l.s4 1983009808
        %v3503 = vunpack.c.0.s8 %v3502
        %v3504 = vlaneseq
        %v3505 = vshrl.u32 %v3504, 7
        %v3506 = vsub.s32 %v3503, %v3505
        %v3507 = vrot.slane %v2972, %v3506
        %v3509 = vunpack.c.l.s4 1983009808
        %v3510 = vunpack.c.0.s8 %v3509
        %v3511 = vlaneseq
        %v3512 = vshrl.u32 %v3511, 7
        %v3513 = vsub.s32 %v3510, %v3512
        %v3514 = vrot.slane %v3500, %v3513
        %v3515 = vcombine.high %v3507, %v3507
        %v3516 = vcombine.high %v3514, %v3514
        %v3517 = vcombine.high %v2973, %v2973
        %v3519 = vunpack.c.l.s4 1983009808
        %v3520 = vunpack.c.0.s8 %v3519
        %v3521 = vlaneseq
        %v3522 = vshrl.u32 %v3521, 7
        %v3523 = vsub.s32 %v3520, %v3522
        %v3524 = vrot.slane %v2973, %v3523
        %v3526 = vunpack.c.l.s4 1983009808
        %v3527 = vunpack.c.0.s8 %v3526
        %v3528 = vlaneseq
        %v3529 = vshrl.u32 %v3528, 7
        %v3530 = vsub.s32 %v3527, %v3529
        %v3531 = vrot.slane %v3517, %v3530
        %v3532 = vcombine.high %v3524, %v3524
        %v3533 = vcombine.high %v3531, %v3531
        %v3534 = vcombine.high %v2974, %v2974
        %v3536 = vunpack.c.l.s4 1983009808
        %v3537 = vunpack.c.0.s8 %v3536
        %v3538 = vlaneseq
        %v3539 = vshrl.u32 %v3538, 7
        %v3540 = vsub.s32 %v3537, %v3539
        %v3541 = vrot.slane %v2974, %v3540
        %v3543 = vunpack.c.l.s4 1983009808
        %v3544 = vunpack.c.0.s8 %v3543
        %v3545 = vlaneseq
        %v3546 = vshrl.u32 %v3545, 7
        %v3547 = vsub.s32 %v3544, %v3546
        %v3548 = vrot.slane %v3534, %v3547
        %v3549 = vcombine.high %v3541, %v3541
        %v3550 = vcombine.high %v3548, %v3548
        %v3551 = vcombine.high %v2975, %v2975
        %v3553 = vunpack.c.l.s4 1983009808
        %v3554 = vunpack.c.0.s8 %v3553
        %v3555 = vlaneseq
        %v3556 = vshrl.u32 %v3555, 7
        %v3557 = vsub.s32 %v3554, %v3556
        %v3558 = vrot.slane %v2975, %v3557
        %v3560 = vunpack.c.l.s4 1983009808
        %v3561 = vunpack.c.0.s8 %v3560
        %v3562 = vlaneseq
        %v3563 = vshrl.u32 %v3562, 7
        %v3564 = vsub.s32 %v3561, %v3563
        %v3565 = vrot.slane %v3551, %v3564
        %v3566 = vcombine.high %v3558, %v3558
        %v3567 = vcombine.high %v3565, %v3565
        %v3568 = vcombine.high %v2976, %v2976
        %v3570 = vunpack.c.l.s4 1983009808
        %v3571 = vunpack.c.0.s8 %v3570
        %v3572 = vlaneseq
        %v3573 = vshrl.u32 %v3572, 7
        %v3574 = vsub.s32 %v3571, %v3573
        %v3575 = vrot.slane %v2976, %v3574
        %v3577 = vunpack.c.l.s4 1983009808
        %v3578 = vunpack.c.0.s8 %v3577
        %v3579 = vlaneseq
        %v3580 = vshrl.u32 %v3579, 7
        %v3581 = vsub.s32 %v3578, %v3580
        %v3582 = vrot.slane %v3568, %v3581
        %v3583 = vcombine.high %v3575, %v3575
        %v3584 = vcombine.high %v3582, %v3582
        %v3713 = vsel %vm826, %v3048, -inf
        %v3714 = vrot.slane %v3713, 4
        %v3715 = vmax.f32 %v3713, %v3714
        %v3716 = vrot.slane %v3715, 2
        %v3717 = vmax.f32 %v3715, %v3716
        %v3718 = vrot.slane %v3717, 1
        %v3719 = vmax.f32 %v3717, %v3718
        %v3720 = vsel %vm826, %v3056, -inf
        %v3721 = vrot.slane %v3720, 4
        %v3722 = vmax.f32 %v3720, %v3721
        %v3723 = vrot.slane %v3722, 2
        %v3724 = vmax.f32 %v3722, %v3723
        %v3725 = vrot.slane %v3724, 1
        %v3726 = vmax.f32 %v3724, %v3725
        %v3727 = vsel %vm826, %v3055, -inf
        %v3728 = vrot.slane %v3727, 4
        %v3729 = vmax.f32 %v3727, %v3728
        %v3730 = vrot.slane %v3729, 2
        %v3731 = vmax.f32 %v3729, %v3730
        %v3732 = vrot.slane %v3731, 1
        %v3733 = vmax.f32 %v3731, %v3732
        %v3734 = vsel %vm826, %v3057, -inf
        %v3735 = vrot.slane %v3734, 4
        %v3736 = vmax.f32 %v3734, %v3735
        %v3737 = vrot.slane %v3736, 2
        %v3738 = vmax.f32 %v3736, %v3737
        %v3739 = vrot.slane %v3738, 1
        %v3740 = vmax.f32 %v3738, %v3739
        %v3741 = vsel %vm826, %v3065, -inf
        %v3742 = vrot.slane %v3741, 4
        %v3743 = vmax.f32 %v3741, %v3742
        %v3744 = vrot.slane %v3743, 2
        %v3745 = vmax.f32 %v3743, %v3744
        %v3746 = vrot.slane %v3745, 1
        %v3747 = vmax.f32 %v3745, %v3746
        %v3748 = vsel %vm826, %v3073, -inf
        %v3749 = vrot.slane %v3748, 4
        %v3750 = vmax.f32 %v3748, %v3749
        %v3751 = vrot.slane %v3750, 2
        %v3752 = vmax.f32 %v3750, %v3751
        %v3753 = vrot.slane %v3752, 1
        %v3754 = vmax.f32 %v3752, %v3753
        %v3755 = vsel %vm826, %v3072, -inf
        %v3756 = vrot.slane %v3755, 4
        %v3757 = vmax.f32 %v3755, %v3756
        %v3758 = vrot.slane %v3757, 2
        %v3759 = vmax.f32 %v3757, %v3758
        %v3760 = vrot.slane %v3759, 1
        %v3761 = vmax.f32 %v3759, %v3760
        %v3762 = vsel %vm826, %v3074, -inf
        %v3763 = vrot.slane %v3762, 4
        %v3764 = vmax.f32 %v3762, %v3763
        %v3765 = vrot.slane %v3764, 2
        %v3766 = vmax.f32 %v3764, %v3765
        %v3767 = vrot.slane %v3766, 1
        %v3768 = vmax.f32 %v3766, %v3767
        %v3769 = vsel %vm826, %v3082, -inf
        %v3770 = vrot.slane %v3769, 4
        %v3771 = vmax.f32 %v3769, %v3770
        %v3772 = vrot.slane %v3771, 2
        %v3773 = vmax.f32 %v3771, %v3772
        %v3774 = vrot.slane %v3773, 1
        %v3775 = vmax.f32 %v3773, %v3774
        %v3776 = vsel %vm826, %v3090, -inf
        %v3777 = vrot.slane %v3776, 4
        %v3778 = vmax.f32 %v3776, %v3777
        %v3779 = vrot.slane %v3778, 2
        %v3780 = vmax.f32 %v3778, %v3779
        %v3781 = vrot.slane %v3780, 1
        %v3782 = vmax.f32 %v3780, %v3781
        %v3783 = vsel %vm826, %v3089, -inf
        %v3784 = vrot.slane %v3783, 4
        %v3785 = vmax.f32 %v3783, %v3784
        %v3786 = vrot.slane %v3785, 2
        %v3787 = vmax.f32 %v3785, %v3786
        %v3788 = vrot.slane %v3787, 1
        %v3789 = vmax.f32 %v3787, %v3788
        %v3790 = vsel %vm826, %v3091, -inf
        %v3791 = vrot.slane %v3790, 4
        %v3792 = vmax.f32 %v3790, %v3791
        %v3793 = vrot.slane %v3792, 2
        %v3794 = vmax.f32 %v3792, %v3793
        %v3795 = vrot.slane %v3794, 1
        %v3796 = vmax.f32 %v3794, %v3795
        %v3797 = vsel %vm826, %v3099, -inf
        %v3798 = vrot.slane %v3797, 4
        %v3799 = vmax.f32 %v3797, %v3798
        %v3800 = vrot.slane %v3799, 2
        %v3801 = vmax.f32 %v3799, %v3800
        %v3802 = vrot.slane %v3801, 1
        %v3803 = vmax.f32 %v3801, %v3802
        %v3804 = vsel %vm826, %v3107, -inf
        %v3805 = vrot.slane %v3804, 4
        %v3806 = vmax.f32 %v3804, %v3805
        %v3807 = vrot.slane %v3806, 2
        %v3808 = vmax.f32 %v3806, %v3807
        %v3809 = vrot.slane %v3808, 1
        %v3810 = vmax.f32 %v3808, %v3809
        %v3811 = vsel %vm826, %v3106, -inf
        %v3812 = vrot.slane %v3811, 4
        %v3813 = vmax.f32 %v3811, %v3812
        %v3814 = vrot.slane %v3813, 2
        %v3815 = vmax.f32 %v3813, %v3814
        %v3816 = vrot.slane %v3815, 1
        %v3817 = vmax.f32 %v3815, %v3816
        %v3818 = vsel %vm826, %v3108, -inf
        %v3819 = vrot.slane %v3818, 4
        %v3820 = vmax.f32 %v3818, %v3819
        %v3821 = vrot.slane %v3820, 2
        %v3822 = vmax.f32 %v3820, %v3821
        %v3823 = vrot.slane %v3822, 1
        %v3824 = vmax.f32 %v3822, %v3823
        %v3825 = vsel %vm826, %v3116, -inf
        %v3826 = vrot.slane %v3825, 4
        %v3827 = vmax.f32 %v3825, %v3826
        %v3828 = vrot.slane %v3827, 2
        %v3829 = vmax.f32 %v3827, %v3828
        %v3830 = vrot.slane %v3829, 1
        %v3831 = vmax.f32 %v3829, %v3830
        %v3832 = vsel %vm826, %v3124, -inf
        %v3833 = vrot.slane %v3832, 4
        %v3834 = vmax.f32 %v3832, %v3833
        %v3835 = vrot.slane %v3834, 2
        %v3836 = vmax.f32 %v3834, %v3835
        %v3837 = vrot.slane %v3836, 1
        %v3838 = vmax.f32 %v3836, %v3837
        %v3839 = vsel %vm826, %v3123, -inf
        %v3840 = vrot.slane %v3839, 4
        %v3841 = vmax.f32 %v3839, %v3840
        %v3842 = vrot.slane %v3841, 2
        %v3843 = vmax.f32 %v3841, %v3842
        %v3844 = vrot.slane %v3843, 1
        %v3845 = vmax.f32 %v3843, %v3844
        %v3846 = vsel %vm826, %v3125, -inf
        %v3847 = vrot.slane %v3846, 4
        %v3848 = vmax.f32 %v3846, %v3847
        %v3849 = vrot.slane %v3848, 2
        %v3850 = vmax.f32 %v3848, %v3849
        %v3851 = vrot.slane %v3850, 1
        %v3852 = vmax.f32 %v3850, %v3851
        %v3853 = vsel %vm826, %v3133, -inf
        %v3854 = vrot.slane %v3853, 4
        %v3855 = vmax.f32 %v3853, %v3854
        %v3856 = vrot.slane %v3855, 2
        %v3857 = vmax.f32 %v3855, %v3856
        %v3858 = vrot.slane %v3857, 1
        %v3859 = vmax.f32 %v3857, %v3858
        %v3860 = vsel %vm826, %v3141, -inf
        %v3861 = vrot.slane %v3860, 4
        %v3862 = vmax.f32 %v3860, %v3861
        %v3863 = vrot.slane %v3862, 2
        %v3864 = vmax.f32 %v3862, %v3863
        %v3865 = vrot.slane %v3864, 1
        %v3866 = vmax.f32 %v3864, %v3865
        %v3867 = vsel %vm826, %v3140, -inf
        %v3868 = vrot.slane %v3867, 4
        %v3869 = vmax.f32 %v3867, %v3868
        %v3870 = vrot.slane %v3869, 2
        %v3871 = vmax.f32 %v3869, %v3870
        %v3872 = vrot.slane %v3871, 1
        %v3873 = vmax.f32 %v3871, %v3872
        %v3874 = vsel %vm826, %v3142, -inf
        %v3875 = vrot.slane %v3874, 4
        %v3876 = vmax.f32 %v3874, %v3875
        %v3877 = vrot.slane %v3876, 2
        %v3878 = vmax.f32 %v3876, %v3877
        %v3879 = vrot.slane %v3878, 1
        %v3880 = vmax.f32 %v3878, %v3879
        %v3881 = vsel %vm826, %v3150, -inf
        %v3882 = vrot.slane %v3881, 4
        %v3883 = vmax.f32 %v3881, %v3882
        %v3884 = vrot.slane %v3883, 2
        %v3885 = vmax.f32 %v3883, %v3884
        %v3886 = vrot.slane %v3885, 1
        %v3887 = vmax.f32 %v3885, %v3886
        %v3888 = vsel %vm826, %v3158, -inf
        %v3889 = vrot.slane %v3888, 4
        %v3890 = vmax.f32 %v3888, %v3889
        %v3891 = vrot.slane %v3890, 2
        %v3892 = vmax.f32 %v3890, %v3891
        %v3893 = vrot.slane %v3892, 1
        %v3894 = vmax.f32 %v3892, %v3893
        %v3895 = vsel %vm826, %v3157, -inf
        %v3896 = vrot.slane %v3895, 4
        %v3897 = vmax.f32 %v3895, %v3896
        %v3898 = vrot.slane %v3897, 2
        %v3899 = vmax.f32 %v3897, %v3898
        %v3900 = vrot.slane %v3899, 1
        %v3901 = vmax.f32 %v3899, %v3900
        %v3902 = vsel %vm826, %v3159, -inf
        %v3903 = vrot.slane %v3902, 4
        %v3904 = vmax.f32 %v3902, %v3903
        %v3905 = vrot.slane %v3904, 2
        %v3906 = vmax.f32 %v3904, %v3905
        %v3907 = vrot.slane %v3906, 1
        %v3908 = vmax.f32 %v3906, %v3907
        %v3909 = vsel %vm826, %v3167, -inf
        %v3910 = vrot.slane %v3909, 4
        %v3911 = vmax.f32 %v3909, %v3910
        %v3912 = vrot.slane %v3911, 2
        %v3913 = vmax.f32 %v3911, %v3912
        %v3914 = vrot.slane %v3913, 1
        %v3915 = vmax.f32 %v3913, %v3914
        %v3916 = vsel %vm826, %v3175, -inf
        %v3917 = vrot.slane %v3916, 4
        %v3918 = vmax.f32 %v3916, %v3917
        %v3919 = vrot.slane %v3918, 2
        %v3920 = vmax.f32 %v3918, %v3919
        %v3921 = vrot.slane %v3920, 1
        %v3922 = vmax.f32 %v3920, %v3921
        %v3923 = vsel %vm826, %v3174, -inf
        %v3924 = vrot.slane %v3923, 4
        %v3925 = vmax.f32 %v3923, %v3924
        %v3926 = vrot.slane %v3925, 2
        %v3927 = vmax.f32 %v3925, %v3926
        %v3928 = vrot.slane %v3927, 1
        %v3929 = vmax.f32 %v3927, %v3928
        %v3930 = vsel %vm826, %v3176, -inf
        %v3931 = vrot.slane %v3930, 4
        %v3932 = vmax.f32 %v3930, %v3931
        %v3933 = vrot.slane %v3932, 2
        %v3934 = vmax.f32 %v3932, %v3933
        %v3935 = vrot.slane %v3934, 1
        %v3936 = vmax.f32 %v3934, %v3935
        %v3937 = vsel %vm826, %v3184, -inf
        %v3938 = vrot.slane %v3937, 4
        %v3939 = vmax.f32 %v3937, %v3938
        %v3940 = vrot.slane %v3939, 2
        %v3941 = vmax.f32 %v3939, %v3940
        %v3942 = vrot.slane %v3941, 1
        %v3943 = vmax.f32 %v3941, %v3942
        %v3944 = vsel %vm826, %v3192, -inf
        %v3945 = vrot.slane %v3944, 4
        %v3946 = vmax.f32 %v3944, %v3945
        %v3947 = vrot.slane %v3946, 2
        %v3948 = vmax.f32 %v3946, %v3947
        %v3949 = vrot.slane %v3948, 1
        %v3950 = vmax.f32 %v3948, %v3949
        %v3951 = vsel %vm826, %v3191, -inf
        %v3952 = vrot.slane %v3951, 4
        %v3953 = vmax.f32 %v3951, %v3952
        %v3954 = vrot.slane %v3953, 2
        %v3955 = vmax.f32 %v3953, %v3954
        %v3956 = vrot.slane %v3955, 1
        %v3957 = vmax.f32 %v3955, %v3956
        %v3958 = vsel %vm826, %v3193, -inf
        %v3959 = vrot.slane %v3958, 4
        %v3960 = vmax.f32 %v3958, %v3959
        %v3961 = vrot.slane %v3960, 2
        %v3962 = vmax.f32 %v3960, %v3961
        %v3963 = vrot.slane %v3962, 1
        %v3964 = vmax.f32 %v3962, %v3963
        %v3965 = vsel %vm826, %v3201, -inf
        %v3966 = vrot.slane %v3965, 4
        %v3967 = vmax.f32 %v3965, %v3966
        %v3968 = vrot.slane %v3967, 2
        %v3969 = vmax.f32 %v3967, %v3968
        %v3970 = vrot.slane %v3969, 1
        %v3971 = vmax.f32 %v3969, %v3970
        %v3972 = vsel %vm826, %v3209, -inf
        %v3973 = vrot.slane %v3972, 4
        %v3974 = vmax.f32 %v3972, %v3973
        %v3975 = vrot.slane %v3974, 2
        %v3976 = vmax.f32 %v3974, %v3975
        %v3977 = vrot.slane %v3976, 1
        %v3978 = vmax.f32 %v3976, %v3977
        %v3979 = vsel %vm826, %v3208, -inf
        %v3980 = vrot.slane %v3979, 4
        %v3981 = vmax.f32 %v3979, %v3980
        %v3982 = vrot.slane %v3981, 2
        %v3983 = vmax.f32 %v3981, %v3982
        %v3984 = vrot.slane %v3983, 1
        %v3985 = vmax.f32 %v3983, %v3984
        %v3986 = vsel %vm826, %v3210, -inf
        %v3987 = vrot.slane %v3986, 4
        %v3988 = vmax.f32 %v3986, %v3987
        %v3989 = vrot.slane %v3988, 2
        %v3990 = vmax.f32 %v3988, %v3989
        %v3991 = vrot.slane %v3990, 1
        %v3992 = vmax.f32 %v3990, %v3991
        %v3993 = vsel %vm826, %v3218, -inf
        %v3994 = vrot.slane %v3993, 4
        %v3995 = vmax.f32 %v3993, %v3994
        %v3996 = vrot.slane %v3995, 2
        %v3997 = vmax.f32 %v3995, %v3996
        %v3998 = vrot.slane %v3997, 1
        %v3999 = vmax.f32 %v3997, %v3998
        %v4000 = vsel %vm826, %v3226, -inf
        %v4001 = vrot.slane %v4000, 4
        %v4002 = vmax.f32 %v4000, %v4001
        %v4003 = vrot.slane %v4002, 2
        %v4004 = vmax.f32 %v4002, %v4003
        %v4005 = vrot.slane %v4004, 1
        %v4006 = vmax.f32 %v4004, %v4005
        %v4007 = vsel %vm826, %v3225, -inf
        %v4008 = vrot.slane %v4007, 4
        %v4009 = vmax.f32 %v4007, %v4008
        %v4010 = vrot.slane %v4009, 2
        %v4011 = vmax.f32 %v4009, %v4010
        %v4012 = vrot.slane %v4011, 1
        %v4013 = vmax.f32 %v4011, %v4012
        %v4014 = vsel %vm826, %v3227, -inf
        %v4015 = vrot.slane %v4014, 4
        %v4016 = vmax.f32 %v4014, %v4015
        %v4017 = vrot.slane %v4016, 2
        %v4018 = vmax.f32 %v4016, %v4017
        %v4019 = vrot.slane %v4018, 1
        %v4020 = vmax.f32 %v4018, %v4019
        %v4021 = vsel %vm826, %v3235, -inf
        %v4022 = vrot.slane %v4021, 4
        %v4023 = vmax.f32 %v4021, %v4022
        %v4024 = vrot.slane %v4023, 2
        %v4025 = vmax.f32 %v4023, %v4024
        %v4026 = vrot.slane %v4025, 1
        %v4027 = vmax.f32 %v4025, %v4026
        %v4028 = vsel %vm826, %v3243, -inf
        %v4029 = vrot.slane %v4028, 4
        %v4030 = vmax.f32 %v4028, %v4029
        %v4031 = vrot.slane %v4030, 2
        %v4032 = vmax.f32 %v4030, %v4031
        %v4033 = vrot.slane %v4032, 1
        %v4034 = vmax.f32 %v4032, %v4033
        %v4035 = vsel %vm826, %v3242, -inf
        %v4036 = vrot.slane %v4035, 4
        %v4037 = vmax.f32 %v4035, %v4036
        %v4038 = vrot.slane %v4037, 2
        %v4039 = vmax.f32 %v4037, %v4038
        %v4040 = vrot.slane %v4039, 1
        %v4041 = vmax.f32 %v4039, %v4040
        %v4042 = vsel %vm826, %v3244, -inf
        %v4043 = vrot.slane %v4042, 4
        %v4044 = vmax.f32 %v4042, %v4043
        %v4045 = vrot.slane %v4044, 2
        %v4046 = vmax.f32 %v4044, %v4045
        %v4047 = vrot.slane %v4046, 1
        %v4048 = vmax.f32 %v4046, %v4047
        %v4049 = vsel %vm826, %v3252, -inf
        %v4050 = vrot.slane %v4049, 4
        %v4051 = vmax.f32 %v4049, %v4050
        %v4052 = vrot.slane %v4051, 2
        %v4053 = vmax.f32 %v4051, %v4052
        %v4054 = vrot.slane %v4053, 1
        %v4055 = vmax.f32 %v4053, %v4054
        %v4056 = vsel %vm826, %v3260, -inf
        %v4057 = vrot.slane %v4056, 4
        %v4058 = vmax.f32 %v4056, %v4057
        %v4059 = vrot.slane %v4058, 2
        %v4060 = vmax.f32 %v4058, %v4059
        %v4061 = vrot.slane %v4060, 1
        %v4062 = vmax.f32 %v4060, %v4061
        %v4063 = vsel %vm826, %v3259, -inf
        %v4064 = vrot.slane %v4063, 4
        %v4065 = vmax.f32 %v4063, %v4064
        %v4066 = vrot.slane %v4065, 2
        %v4067 = vmax.f32 %v4065, %v4066
        %v4068 = vrot.slane %v4067, 1
        %v4069 = vmax.f32 %v4067, %v4068
        %v4070 = vsel %vm826, %v3261, -inf
        %v4071 = vrot.slane %v4070, 4
        %v4072 = vmax.f32 %v4070, %v4071
        %v4073 = vrot.slane %v4072, 2
        %v4074 = vmax.f32 %v4072, %v4073
        %v4075 = vrot.slane %v4074, 1
        %v4076 = vmax.f32 %v4074, %v4075
        %v4077 = vsel %vm826, %v3269, -inf
        %v4078 = vrot.slane %v4077, 4
        %v4079 = vmax.f32 %v4077, %v4078
        %v4080 = vrot.slane %v4079, 2
        %v4081 = vmax.f32 %v4079, %v4080
        %v4082 = vrot.slane %v4081, 1
        %v4083 = vmax.f32 %v4081, %v4082
        %v4084 = vsel %vm826, %v3277, -inf
        %v4085 = vrot.slane %v4084, 4
        %v4086 = vmax.f32 %v4084, %v4085
        %v4087 = vrot.slane %v4086, 2
        %v4088 = vmax.f32 %v4086, %v4087
        %v4089 = vrot.slane %v4088, 1
        %v4090 = vmax.f32 %v4088, %v4089
        %v4091 = vsel %vm826, %v3276, -inf
        %v4092 = vrot.slane %v4091, 4
        %v4093 = vmax.f32 %v4091, %v4092
        %v4094 = vrot.slane %v4093, 2
        %v4095 = vmax.f32 %v4093, %v4094
        %v4096 = vrot.slane %v4095, 1
        %v4097 = vmax.f32 %v4095, %v4096
        %v4098 = vsel %vm826, %v3278, -inf
        %v4099 = vrot.slane %v4098, 4
        %v4100 = vmax.f32 %v4098, %v4099
        %v4101 = vrot.slane %v4100, 2
        %v4102 = vmax.f32 %v4100, %v4101
        %v4103 = vrot.slane %v4102, 1
        %v4104 = vmax.f32 %v4102, %v4103
        %v4105 = vsel %vm826, %v3286, -inf
        %v4106 = vrot.slane %v4105, 4
        %v4107 = vmax.f32 %v4105, %v4106
        %v4108 = vrot.slane %v4107, 2
        %v4109 = vmax.f32 %v4107, %v4108
        %v4110 = vrot.slane %v4109, 1
        %v4111 = vmax.f32 %v4109, %v4110
        %v4112 = vsel %vm826, %v3294, -inf
        %v4113 = vrot.slane %v4112, 4
        %v4114 = vmax.f32 %v4112, %v4113
        %v4115 = vrot.slane %v4114, 2
        %v4116 = vmax.f32 %v4114, %v4115
        %v4117 = vrot.slane %v4116, 1
        %v4118 = vmax.f32 %v4116, %v4117
        %v4119 = vsel %vm826, %v3293, -inf
        %v4120 = vrot.slane %v4119, 4
        %v4121 = vmax.f32 %v4119, %v4120
        %v4122 = vrot.slane %v4121, 2
        %v4123 = vmax.f32 %v4121, %v4122
        %v4124 = vrot.slane %v4123, 1
        %v4125 = vmax.f32 %v4123, %v4124
        %v4126 = vsel %vm826, %v3295, -inf
        %v4127 = vrot.slane %v4126, 4
        %v4128 = vmax.f32 %v4126, %v4127
        %v4129 = vrot.slane %v4128, 2
        %v4130 = vmax.f32 %v4128, %v4129
        %v4131 = vrot.slane %v4130, 1
        %v4132 = vmax.f32 %v4130, %v4131
        %v4133 = vsel %vm826, %v3303, -inf
        %v4134 = vrot.slane %v4133, 4
        %v4135 = vmax.f32 %v4133, %v4134
        %v4136 = vrot.slane %v4135, 2
        %v4137 = vmax.f32 %v4135, %v4136
        %v4138 = vrot.slane %v4137, 1
        %v4139 = vmax.f32 %v4137, %v4138
        %v4140 = vsel %vm826, %v3311, -inf
        %v4141 = vrot.slane %v4140, 4
        %v4142 = vmax.f32 %v4140, %v4141
        %v4143 = vrot.slane %v4142, 2
        %v4144 = vmax.f32 %v4142, %v4143
        %v4145 = vrot.slane %v4144, 1
        %v4146 = vmax.f32 %v4144, %v4145
        %v4147 = vsel %vm826, %v3310, -inf
        %v4148 = vrot.slane %v4147, 4
        %v4149 = vmax.f32 %v4147, %v4148
        %v4150 = vrot.slane %v4149, 2
        %v4151 = vmax.f32 %v4149, %v4150
        %v4152 = vrot.slane %v4151, 1
        %v4153 = vmax.f32 %v4151, %v4152
        %v4154 = vsel %vm826, %v3312, -inf
        %v4155 = vrot.slane %v4154, 4
        %v4156 = vmax.f32 %v4154, %v4155
        %v4157 = vrot.slane %v4156, 2
        %v4158 = vmax.f32 %v4156, %v4157
        %v4159 = vrot.slane %v4158, 1
        %v4160 = vmax.f32 %v4158, %v4159
        %v4161 = vsel %vm826, %v3320, -inf
        %v4162 = vrot.slane %v4161, 4
        %v4163 = vmax.f32 %v4161, %v4162
        %v4164 = vrot.slane %v4163, 2
        %v4165 = vmax.f32 %v4163, %v4164
        %v4166 = vrot.slane %v4165, 1
        %v4167 = vmax.f32 %v4165, %v4166
        %v4168 = vsel %vm826, %v3328, -inf
        %v4169 = vrot.slane %v4168, 4
        %v4170 = vmax.f32 %v4168, %v4169
        %v4171 = vrot.slane %v4170, 2
        %v4172 = vmax.f32 %v4170, %v4171
        %v4173 = vrot.slane %v4172, 1
        %v4174 = vmax.f32 %v4172, %v4173
        %v4175 = vsel %vm826, %v3327, -inf
        %v4176 = vrot.slane %v4175, 4
        %v4177 = vmax.f32 %v4175, %v4176
        %v4178 = vrot.slane %v4177, 2
        %v4179 = vmax.f32 %v4177, %v4178
        %v4180 = vrot.slane %v4179, 1
        %v4181 = vmax.f32 %v4179, %v4180
        %v4182 = vsel %vm826, %v3329, -inf
        %v4183 = vrot.slane %v4182, 4
        %v4184 = vmax.f32 %v4182, %v4183
        %v4185 = vrot.slane %v4184, 2
        %v4186 = vmax.f32 %v4184, %v4185
        %v4187 = vrot.slane %v4186, 1
        %v4188 = vmax.f32 %v4186, %v4187
        %v4189 = vsel %vm826, %v3337, -inf
        %v4190 = vrot.slane %v4189, 4
        %v4191 = vmax.f32 %v4189, %v4190
        %v4192 = vrot.slane %v4191, 2
        %v4193 = vmax.f32 %v4191, %v4192
        %v4194 = vrot.slane %v4193, 1
        %v4195 = vmax.f32 %v4193, %v4194
        %v4196 = vsel %vm826, %v3345, -inf
        %v4197 = vrot.slane %v4196, 4
        %v4198 = vmax.f32 %v4196, %v4197
        %v4199 = vrot.slane %v4198, 2
        %v4200 = vmax.f32 %v4198, %v4199
        %v4201 = vrot.slane %v4200, 1
        %v4202 = vmax.f32 %v4200, %v4201
        %v4203 = vsel %vm826, %v3344, -inf
        %v4204 = vrot.slane %v4203, 4
        %v4205 = vmax.f32 %v4203, %v4204
        %v4206 = vrot.slane %v4205, 2
        %v4207 = vmax.f32 %v4205, %v4206
        %v4208 = vrot.slane %v4207, 1
        %v4209 = vmax.f32 %v4207, %v4208
        %v4210 = vsel %vm826, %v3346, -inf
        %v4211 = vrot.slane %v4210, 4
        %v4212 = vmax.f32 %v4210, %v4211
        %v4213 = vrot.slane %v4212, 2
        %v4214 = vmax.f32 %v4212, %v4213
        %v4215 = vrot.slane %v4214, 1
        %v4216 = vmax.f32 %v4214, %v4215
        %v4217 = vsel %vm826, %v3354, -inf
        %v4218 = vrot.slane %v4217, 4
        %v4219 = vmax.f32 %v4217, %v4218
        %v4220 = vrot.slane %v4219, 2
        %v4221 = vmax.f32 %v4219, %v4220
        %v4222 = vrot.slane %v4221, 1
        %v4223 = vmax.f32 %v4221, %v4222
        %v4224 = vsel %vm826, %v3362, -inf
        %v4225 = vrot.slane %v4224, 4
        %v4226 = vmax.f32 %v4224, %v4225
        %v4227 = vrot.slane %v4226, 2
        %v4228 = vmax.f32 %v4226, %v4227
        %v4229 = vrot.slane %v4228, 1
        %v4230 = vmax.f32 %v4228, %v4229
        %v4231 = vsel %vm826, %v3361, -inf
        %v4232 = vrot.slane %v4231, 4
        %v4233 = vmax.f32 %v4231, %v4232
        %v4234 = vrot.slane %v4233, 2
        %v4235 = vmax.f32 %v4233, %v4234
        %v4236 = vrot.slane %v4235, 1
        %v4237 = vmax.f32 %v4235, %v4236
        %v4238 = vsel %vm826, %v3363, -inf
        %v4239 = vrot.slane %v4238, 4
        %v4240 = vmax.f32 %v4238, %v4239
        %v4241 = vrot.slane %v4240, 2
        %v4242 = vmax.f32 %v4240, %v4241
        %v4243 = vrot.slane %v4242, 1
        %v4244 = vmax.f32 %v4242, %v4243
        %v4245 = vsel %vm826, %v3371, -inf
        %v4246 = vrot.slane %v4245, 4
        %v4247 = vmax.f32 %v4245, %v4246
        %v4248 = vrot.slane %v4247, 2
        %v4249 = vmax.f32 %v4247, %v4248
        %v4250 = vrot.slane %v4249, 1
        %v4251 = vmax.f32 %v4249, %v4250
        %v4252 = vsel %vm826, %v3379, -inf
        %v4253 = vrot.slane %v4252, 4
        %v4254 = vmax.f32 %v4252, %v4253
        %v4255 = vrot.slane %v4254, 2
        %v4256 = vmax.f32 %v4254, %v4255
        %v4257 = vrot.slane %v4256, 1
        %v4258 = vmax.f32 %v4256, %v4257
        %v4259 = vsel %vm826, %v3378, -inf
        %v4260 = vrot.slane %v4259, 4
        %v4261 = vmax.f32 %v4259, %v4260
        %v4262 = vrot.slane %v4261, 2
        %v4263 = vmax.f32 %v4261, %v4262
        %v4264 = vrot.slane %v4263, 1
        %v4265 = vmax.f32 %v4263, %v4264
        %v4266 = vsel %vm826, %v3380, -inf
        %v4267 = vrot.slane %v4266, 4
        %v4268 = vmax.f32 %v4266, %v4267
        %v4269 = vrot.slane %v4268, 2
        %v4270 = vmax.f32 %v4268, %v4269
        %v4271 = vrot.slane %v4270, 1
        %v4272 = vmax.f32 %v4270, %v4271
        %v4273 = vsel %vm826, %v3388, -inf
        %v4274 = vrot.slane %v4273, 4
        %v4275 = vmax.f32 %v4273, %v4274
        %v4276 = vrot.slane %v4275, 2
        %v4277 = vmax.f32 %v4275, %v4276
        %v4278 = vrot.slane %v4277, 1
        %v4279 = vmax.f32 %v4277, %v4278
        %v4280 = vsel %vm826, %v3396, -inf
        %v4281 = vrot.slane %v4280, 4
        %v4282 = vmax.f32 %v4280, %v4281
        %v4283 = vrot.slane %v4282, 2
        %v4284 = vmax.f32 %v4282, %v4283
        %v4285 = vrot.slane %v4284, 1
        %v4286 = vmax.f32 %v4284, %v4285
        %v4287 = vsel %vm826, %v3395, -inf
        %v4288 = vrot.slane %v4287, 4
        %v4289 = vmax.f32 %v4287, %v4288
        %v4290 = vrot.slane %v4289, 2
        %v4291 = vmax.f32 %v4289, %v4290
        %v4292 = vrot.slane %v4291, 1
        %v4293 = vmax.f32 %v4291, %v4292
        %v4294 = vsel %vm826, %v3397, -inf
        %v4295 = vrot.slane %v4294, 4
        %v4296 = vmax.f32 %v4294, %v4295
        %v4297 = vrot.slane %v4296, 2
        %v4298 = vmax.f32 %v4296, %v4297
        %v4299 = vrot.slane %v4298, 1
        %v4300 = vmax.f32 %v4298, %v4299
        %v4301 = vsel %vm826, %v3405, -inf
        %v4302 = vrot.slane %v4301, 4
        %v4303 = vmax.f32 %v4301, %v4302
        %v4304 = vrot.slane %v4303, 2
        %v4305 = vmax.f32 %v4303, %v4304
        %v4306 = vrot.slane %v4305, 1
        %v4307 = vmax.f32 %v4305, %v4306
        %v4308 = vsel %vm826, %v3413, -inf
        %v4309 = vrot.slane %v4308, 4
        %v4310 = vmax.f32 %v4308, %v4309
        %v4311 = vrot.slane %v4310, 2
        %v4312 = vmax.f32 %v4310, %v4311
        %v4313 = vrot.slane %v4312, 1
        %v4314 = vmax.f32 %v4312, %v4313
        %v4315 = vsel %vm826, %v3412, -inf
        %v4316 = vrot.slane %v4315, 4
        %v4317 = vmax.f32 %v4315, %v4316
        %v4318 = vrot.slane %v4317, 2
        %v4319 = vmax.f32 %v4317, %v4318
        %v4320 = vrot.slane %v4319, 1
        %v4321 = vmax.f32 %v4319, %v4320
        %v4322 = vsel %vm826, %v3414, -inf
        %v4323 = vrot.slane %v4322, 4
        %v4324 = vmax.f32 %v4322, %v4323
        %v4325 = vrot.slane %v4324, 2
        %v4326 = vmax.f32 %v4324, %v4325
        %v4327 = vrot.slane %v4326, 1
        %v4328 = vmax.f32 %v4326, %v4327
        %v4329 = vsel %vm826, %v3422, -inf
        %v4330 = vrot.slane %v4329, 4
        %v4331 = vmax.f32 %v4329, %v4330
        %v4332 = vrot.slane %v4331, 2
        %v4333 = vmax.f32 %v4331, %v4332
        %v4334 = vrot.slane %v4333, 1
        %v4335 = vmax.f32 %v4333, %v4334
        %v4336 = vsel %vm826, %v3430, -inf
        %v4337 = vrot.slane %v4336, 4
        %v4338 = vmax.f32 %v4336, %v4337
        %v4339 = vrot.slane %v4338, 2
        %v4340 = vmax.f32 %v4338, %v4339
        %v4341 = vrot.slane %v4340, 1
        %v4342 = vmax.f32 %v4340, %v4341
        %v4343 = vsel %vm826, %v3429, -inf
        %v4344 = vrot.slane %v4343, 4
        %v4345 = vmax.f32 %v4343, %v4344
        %v4346 = vrot.slane %v4345, 2
        %v4347 = vmax.f32 %v4345, %v4346
        %v4348 = vrot.slane %v4347, 1
        %v4349 = vmax.f32 %v4347, %v4348
        %v4350 = vsel %vm826, %v3431, -inf
        %v4351 = vrot.slane %v4350, 4
        %v4352 = vmax.f32 %v4350, %v4351
        %v4353 = vrot.slane %v4352, 2
        %v4354 = vmax.f32 %v4352, %v4353
        %v4355 = vrot.slane %v4354, 1
        %v4356 = vmax.f32 %v4354, %v4355
        %v4357 = vsel %vm826, %v3439, -inf
        %v4358 = vrot.slane %v4357, 4
        %v4359 = vmax.f32 %v4357, %v4358
        %v4360 = vrot.slane %v4359, 2
        %v4361 = vmax.f32 %v4359, %v4360
        %v4362 = vrot.slane %v4361, 1
        %v4363 = vmax.f32 %v4361, %v4362
        %v4364 = vsel %vm826, %v3447, -inf
        %v4365 = vrot.slane %v4364, 4
        %v4366 = vmax.f32 %v4364, %v4365
        %v4367 = vrot.slane %v4366, 2
        %v4368 = vmax.f32 %v4366, %v4367
        %v4369 = vrot.slane %v4368, 1
        %v4370 = vmax.f32 %v4368, %v4369
        %v4371 = vsel %vm826, %v3446, -inf
        %v4372 = vrot.slane %v4371, 4
        %v4373 = vmax.f32 %v4371, %v4372
        %v4374 = vrot.slane %v4373, 2
        %v4375 = vmax.f32 %v4373, %v4374
        %v4376 = vrot.slane %v4375, 1
        %v4377 = vmax.f32 %v4375, %v4376
        %v4378 = vsel %vm826, %v3448, -inf
        %v4379 = vrot.slane %v4378, 4
        %v4380 = vmax.f32 %v4378, %v4379
        %v4381 = vrot.slane %v4380, 2
        %v4382 = vmax.f32 %v4380, %v4381
        %v4383 = vrot.slane %v4382, 1
        %v4384 = vmax.f32 %v4382, %v4383
        %v4385 = vsel %vm826, %v3456, -inf
        %v4386 = vrot.slane %v4385, 4
        %v4387 = vmax.f32 %v4385, %v4386
        %v4388 = vrot.slane %v4387, 2
        %v4389 = vmax.f32 %v4387, %v4388
        %v4390 = vrot.slane %v4389, 1
        %v4391 = vmax.f32 %v4389, %v4390
        %v4392 = vsel %vm826, %v3464, -inf
        %v4393 = vrot.slane %v4392, 4
        %v4394 = vmax.f32 %v4392, %v4393
        %v4395 = vrot.slane %v4394, 2
        %v4396 = vmax.f32 %v4394, %v4395
        %v4397 = vrot.slane %v4396, 1
        %v4398 = vmax.f32 %v4396, %v4397
        %v4399 = vsel %vm826, %v3463, -inf
        %v4400 = vrot.slane %v4399, 4
        %v4401 = vmax.f32 %v4399, %v4400
        %v4402 = vrot.slane %v4401, 2
        %v4403 = vmax.f32 %v4401, %v4402
        %v4404 = vrot.slane %v4403, 1
        %v4405 = vmax.f32 %v4403, %v4404
        %v4406 = vsel %vm826, %v3465, -inf
        %v4407 = vrot.slane %v4406, 4
        %v4408 = vmax.f32 %v4406, %v4407
        %v4409 = vrot.slane %v4408, 2
        %v4410 = vmax.f32 %v4408, %v4409
        %v4411 = vrot.slane %v4410, 1
        %v4412 = vmax.f32 %v4410, %v4411
        %v4413 = vsel %vm826, %v3473, -inf
        %v4414 = vrot.slane %v4413, 4
        %v4415 = vmax.f32 %v4413, %v4414
        %v4416 = vrot.slane %v4415, 2
        %v4417 = vmax.f32 %v4415, %v4416
        %v4418 = vrot.slane %v4417, 1
        %v4419 = vmax.f32 %v4417, %v4418
        %v4420 = vsel %vm826, %v3481, -inf
        %v4421 = vrot.slane %v4420, 4
        %v4422 = vmax.f32 %v4420, %v4421
        %v4423 = vrot.slane %v4422, 2
        %v4424 = vmax.f32 %v4422, %v4423
        %v4425 = vrot.slane %v4424, 1
        %v4426 = vmax.f32 %v4424, %v4425
        %v4427 = vsel %vm826, %v3480, -inf
        %v4428 = vrot.slane %v4427, 4
        %v4429 = vmax.f32 %v4427, %v4428
        %v4430 = vrot.slane %v4429, 2
        %v4431 = vmax.f32 %v4429, %v4430
        %v4432 = vrot.slane %v4431, 1
        %v4433 = vmax.f32 %v4431, %v4432
        %v4434 = vsel %vm826, %v3482, -inf
        %v4435 = vrot.slane %v4434, 4
        %v4436 = vmax.f32 %v4434, %v4435
        %v4437 = vrot.slane %v4436, 2
        %v4438 = vmax.f32 %v4436, %v4437
        %v4439 = vrot.slane %v4438, 1
        %v4440 = vmax.f32 %v4438, %v4439
        %v4441 = vsel %vm826, %v3490, -inf
        %v4442 = vrot.slane %v4441, 4
        %v4443 = vmax.f32 %v4441, %v4442
        %v4444 = vrot.slane %v4443, 2
        %v4445 = vmax.f32 %v4443, %v4444
        %v4446 = vrot.slane %v4445, 1
        %v4447 = vmax.f32 %v4445, %v4446
        %v4448 = vsel %vm826, %v3498, -inf
        %v4449 = vrot.slane %v4448, 4
        %v4450 = vmax.f32 %v4448, %v4449
        %v4451 = vrot.slane %v4450, 2
        %v4452 = vmax.f32 %v4450, %v4451
        %v4453 = vrot.slane %v4452, 1
        %v4454 = vmax.f32 %v4452, %v4453
        %v4455 = vsel %vm826, %v3497, -inf
        %v4456 = vrot.slane %v4455, 4
        %v4457 = vmax.f32 %v4455, %v4456
        %v4458 = vrot.slane %v4457, 2
        %v4459 = vmax.f32 %v4457, %v4458
        %v4460 = vrot.slane %v4459, 1
        %v4461 = vmax.f32 %v4459, %v4460
        %v4462 = vsel %vm826, %v3499, -inf
        %v4463 = vrot.slane %v4462, 4
        %v4464 = vmax.f32 %v4462, %v4463
        %v4465 = vrot.slane %v4464, 2
        %v4466 = vmax.f32 %v4464, %v4465
        %v4467 = vrot.slane %v4466, 1
        %v4468 = vmax.f32 %v4466, %v4467
        %v4469 = vsel %vm826, %v3507, -inf
        %v4470 = vrot.slane %v4469, 4
        %v4471 = vmax.f32 %v4469, %v4470
        %v4472 = vrot.slane %v4471, 2
        %v4473 = vmax.f32 %v4471, %v4472
        %v4474 = vrot.slane %v4473, 1
        %v4475 = vmax.f32 %v4473, %v4474
        %v4476 = vsel %vm826, %v3515, -inf
        %v4477 = vrot.slane %v4476, 4
        %v4478 = vmax.f32 %v4476, %v4477
        %v4479 = vrot.slane %v4478, 2
        %v4480 = vmax.f32 %v4478, %v4479
        %v4481 = vrot.slane %v4480, 1
        %v4482 = vmax.f32 %v4480, %v4481
        %v4483 = vsel %vm826, %v3514, -inf
        %v4484 = vrot.slane %v4483, 4
        %v4485 = vmax.f32 %v4483, %v4484
        %v4486 = vrot.slane %v4485, 2
        %v4487 = vmax.f32 %v4485, %v4486
        %v4488 = vrot.slane %v4487, 1
        %v4489 = vmax.f32 %v4487, %v4488
        %v4490 = vsel %vm826, %v3516, -inf
        %v4491 = vrot.slane %v4490, 4
        %v4492 = vmax.f32 %v4490, %v4491
        %v4493 = vrot.slane %v4492, 2
        %v4494 = vmax.f32 %v4492, %v4493
        %v4495 = vrot.slane %v4494, 1
        %v4496 = vmax.f32 %v4494, %v4495
        %v4497 = vsel %vm826, %v3524, -inf
        %v4498 = vrot.slane %v4497, 4
        %v4499 = vmax.f32 %v4497, %v4498
        %v4500 = vrot.slane %v4499, 2
        %v4501 = vmax.f32 %v4499, %v4500
        %v4502 = vrot.slane %v4501, 1
        %v4503 = vmax.f32 %v4501, %v4502
        %v4504 = vsel %vm826, %v3532, -inf
        %v4505 = vrot.slane %v4504, 4
        %v4506 = vmax.f32 %v4504, %v4505
        %v4507 = vrot.slane %v4506, 2
        %v4508 = vmax.f32 %v4506, %v4507
        %v4509 = vrot.slane %v4508, 1
        %v4510 = vmax.f32 %v4508, %v4509
        %v4511 = vsel %vm826, %v3531, -inf
        %v4512 = vrot.slane %v4511, 4
        %v4513 = vmax.f32 %v4511, %v4512
        %v4514 = vrot.slane %v4513, 2
        %v4515 = vmax.f32 %v4513, %v4514
        %v4516 = vrot.slane %v4515, 1
        %v4517 = vmax.f32 %v4515, %v4516
        %v4518 = vsel %vm826, %v3533, -inf
        %v4519 = vrot.slane %v4518, 4
        %v4520 = vmax.f32 %v4518, %v4519
        %v4521 = vrot.slane %v4520, 2
        %v4522 = vmax.f32 %v4520, %v4521
        %v4523 = vrot.slane %v4522, 1
        %v4524 = vmax.f32 %v4522, %v4523
        %v4525 = vsel %vm826, %v3541, -inf
        %v4526 = vrot.slane %v4525, 4
        %v4527 = vmax.f32 %v4525, %v4526
        %v4528 = vrot.slane %v4527, 2
        %v4529 = vmax.f32 %v4527, %v4528
        %v4530 = vrot.slane %v4529, 1
        %v4531 = vmax.f32 %v4529, %v4530
        %v4532 = vsel %vm826, %v3549, -inf
        %v4533 = vrot.slane %v4532, 4
        %v4534 = vmax.f32 %v4532, %v4533
        %v4535 = vrot.slane %v4534, 2
        %v4536 = vmax.f32 %v4534, %v4535
        %v4537 = vrot.slane %v4536, 1
        %v4538 = vmax.f32 %v4536, %v4537
        %v4539 = vsel %vm826, %v3548, -inf
        %v4540 = vrot.slane %v4539, 4
        %v4541 = vmax.f32 %v4539, %v4540
        %v4542 = vrot.slane %v4541, 2
        %v4543 = vmax.f32 %v4541, %v4542
        %v4544 = vrot.slane %v4543, 1
        %v4545 = vmax.f32 %v4543, %v4544
        %v4546 = vsel %vm826, %v3550, -inf
        %v4547 = vrot.slane %v4546, 4
        %v4548 = vmax.f32 %v4546, %v4547
        %v4549 = vrot.slane %v4548, 2
        %v4550 = vmax.f32 %v4548, %v4549
        %v4551 = vrot.slane %v4550, 1
        %v4552 = vmax.f32 %v4550, %v4551
        %v4553 = vsel %vm826, %v3558, -inf
        %v4554 = vrot.slane %v4553, 4
        %v4555 = vmax.f32 %v4553, %v4554
        %v4556 = vrot.slane %v4555, 2
        %v4557 = vmax.f32 %v4555, %v4556
        %v4558 = vrot.slane %v4557, 1
        %v4559 = vmax.f32 %v4557, %v4558
        %v4560 = vsel %vm826, %v3566, -inf
        %v4561 = vrot.slane %v4560, 4
        %v4562 = vmax.f32 %v4560, %v4561
        %v4563 = vrot.slane %v4562, 2
        %v4564 = vmax.f32 %v4562, %v4563
        %v4565 = vrot.slane %v4564, 1
        %v4566 = vmax.f32 %v4564, %v4565
        %v4567 = vsel %vm826, %v3565, -inf
        %v4568 = vrot.slane %v4567, 4
        %v4569 = vmax.f32 %v4567, %v4568
        %v4570 = vrot.slane %v4569, 2
        %v4571 = vmax.f32 %v4569, %v4570
        %v4572 = vrot.slane %v4571, 1
        %v4573 = vmax.f32 %v4571, %v4572
        %v4574 = vsel %vm826, %v3567, -inf
        %v4575 = vrot.slane %v4574, 4
        %v4576 = vmax.f32 %v4574, %v4575
        %v4577 = vrot.slane %v4576, 2
        %v4578 = vmax.f32 %v4576, %v4577
        %v4579 = vrot.slane %v4578, 1
        %v4580 = vmax.f32 %v4578, %v4579
        %v4581 = vsel %vm826, %v3575, -inf
        %v4582 = vrot.slane %v4581, 4
        %v4583 = vmax.f32 %v4581, %v4582
        %v4584 = vrot.slane %v4583, 2
        %v4585 = vmax.f32 %v4583, %v4584
        %v4586 = vrot.slane %v4585, 1
        %v4587 = vmax.f32 %v4585, %v4586
        %v4588 = vsel %vm826, %v3583, -inf
        %v4589 = vrot.slane %v4588, 4
        %v4590 = vmax.f32 %v4588, %v4589
        %v4591 = vrot.slane %v4590, 2
        %v4592 = vmax.f32 %v4590, %v4591
        %v4593 = vrot.slane %v4592, 1
        %v4594 = vmax.f32 %v4592, %v4593
        %v4595 = vsel %vm826, %v3582, -inf
        %v4596 = vrot.slane %v4595, 4
        %v4597 = vmax.f32 %v4595, %v4596
        %v4598 = vrot.slane %v4597, 2
        %v4599 = vmax.f32 %v4597, %v4598
        %v4600 = vrot.slane %v4599, 1
        %v4601 = vmax.f32 %v4599, %v4600
        %v4602 = vsel %vm826, %v3584, -inf
        %v4603 = vrot.slane %v4602, 4
        %v4604 = vmax.f32 %v4602, %v4603
        %v4605 = vrot.slane %v4604, 2
        %v4606 = vmax.f32 %v4604, %v4605
        %v4607 = vrot.slane %v4606, 1
        %v4608 = vmax.f32 %v4606, %v4607
        %v4609 = vsel %vm823, %v3719, -inf
        %v4610 = vsel %vm823, %v3775, -inf
        %v4611 = vmax.f32 %v4609, %v4610
        %v4612 = vsel %vm823, %v3726, -inf
        %v4613 = vsel %vm823, %v3782, -inf
        %v4614 = vmax.f32 %v4612, %v4613
        %v4615 = vsel %vm823, %v3733, -inf
        %v4616 = vsel %vm823, %v3789, -inf
        %v4617 = vmax.f32 %v4615, %v4616
        %v4618 = vsel %vm823, %v3740, -inf
        %v4619 = vsel %vm823, %v3796, -inf
        %v4620 = vmax.f32 %v4618, %v4619
        %v4621 = vsel %vm823, %v3747, -inf
        %v4622 = vsel %vm823, %v3803, -inf
        %v4623 = vmax.f32 %v4621, %v4622
        %v4624 = vsel %vm823, %v3754, -inf
        %v4625 = vsel %vm823, %v3810, -inf
        %v4626 = vmax.f32 %v4624, %v4625
        %v4627 = vsel %vm823, %v3761, -inf
        %v4628 = vsel %vm823, %v3817, -inf
        %v4629 = vmax.f32 %v4627, %v4628
        %v4630 = vsel %vm823, %v3768, -inf
        %v4631 = vsel %vm823, %v3824, -inf
        %v4632 = vmax.f32 %v4630, %v4631
        %v4633 = vsel %vm823, %v3831, -inf
        %v4634 = vsel %vm823, %v3887, -inf
        %v4635 = vmax.f32 %v4633, %v4634
        %v4636 = vsel %vm823, %v3838, -inf
        %v4637 = vsel %vm823, %v3894, -inf
        %v4638 = vmax.f32 %v4636, %v4637
        %v4639 = vsel %vm823, %v3845, -inf
        %v4640 = vsel %vm823, %v3901, -inf
        %v4641 = vmax.f32 %v4639, %v4640
        %v4642 = vsel %vm823, %v3852, -inf
        %v4643 = vsel %vm823, %v3908, -inf
        %v4644 = vmax.f32 %v4642, %v4643
        %v4645 = vsel %vm823, %v3859, -inf
        %v4646 = vsel %vm823, %v3915, -inf
        %v4647 = vmax.f32 %v4645, %v4646
        %v4648 = vsel %vm823, %v3866, -inf
        %v4649 = vsel %vm823, %v3922, -inf
        %v4650 = vmax.f32 %v4648, %v4649
        %v4651 = vsel %vm823, %v3873, -inf
        %v4652 = vsel %vm823, %v3929, -inf
        %v4653 = vmax.f32 %v4651, %v4652
        %v4654 = vsel %vm823, %v3880, -inf
        %v4655 = vsel %vm823, %v3936, -inf
        %v4656 = vmax.f32 %v4654, %v4655
        %v4657 = vsel %vm823, %v3943, -inf
        %v4658 = vsel %vm823, %v3999, -inf
        %v4659 = vmax.f32 %v4657, %v4658
        %v4660 = vsel %vm823, %v3950, -inf
        %v4661 = vsel %vm823, %v4006, -inf
        %v4662 = vmax.f32 %v4660, %v4661
        %v4663 = vsel %vm823, %v3957, -inf
        %v4664 = vsel %vm823, %v4013, -inf
        %v4665 = vmax.f32 %v4663, %v4664
        %v4666 = vsel %vm823, %v3964, -inf
        %v4667 = vsel %vm823, %v4020, -inf
        %v4668 = vmax.f32 %v4666, %v4667
        %v4669 = vsel %vm823, %v3971, -inf
        %v4670 = vsel %vm823, %v4027, -inf
        %v4671 = vmax.f32 %v4669, %v4670
        %v4672 = vsel %vm823, %v3978, -inf
        %v4673 = vsel %vm823, %v4034, -inf
        %v4674 = vmax.f32 %v4672, %v4673
        %v4675 = vsel %vm823, %v3985, -inf
        %v4676 = vsel %vm823, %v4041, -inf
        %v4677 = vmax.f32 %v4675, %v4676
        %v4678 = vsel %vm823, %v3992, -inf
        %v4679 = vsel %vm823, %v4048, -inf
        %v4680 = vmax.f32 %v4678, %v4679
        %v4681 = vsel %vm823, %v4055, -inf
        %v4682 = vsel %vm823, %v4111, -inf
        %v4683 = vmax.f32 %v4681, %v4682
        %v4684 = vsel %vm823, %v4062, -inf
        %v4685 = vsel %vm823, %v4118, -inf
        %v4686 = vmax.f32 %v4684, %v4685
        %v4687 = vsel %vm823, %v4069, -inf
        %v4688 = vsel %vm823, %v4125, -inf
        %v4689 = vmax.f32 %v4687, %v4688
        %v4690 = vsel %vm823, %v4076, -inf
        %v4691 = vsel %vm823, %v4132, -inf
        %v4692 = vmax.f32 %v4690, %v4691
        %v4693 = vsel %vm823, %v4083, -inf
        %v4694 = vsel %vm823, %v4139, -inf
        %v4695 = vmax.f32 %v4693, %v4694
        %v4696 = vsel %vm823, %v4090, -inf
        %v4697 = vsel %vm823, %v4146, -inf
        %v4698 = vmax.f32 %v4696, %v4697
        %v4699 = vsel %vm823, %v4097, -inf
        %v4700 = vsel %vm823, %v4153, -inf
        %v4701 = vmax.f32 %v4699, %v4700
        %v4702 = vsel %vm823, %v4104, -inf
        %v4703 = vsel %vm823, %v4160, -inf
        %v4704 = vmax.f32 %v4702, %v4703
        %v4705 = vsel %vm823, %v4167, -inf
        %v4706 = vsel %vm823, %v4223, -inf
        %v4707 = vmax.f32 %v4705, %v4706
        %v4708 = vsel %vm823, %v4174, -inf
        %v4709 = vsel %vm823, %v4230, -inf
        %v4710 = vmax.f32 %v4708, %v4709
        %v4711 = vsel %vm823, %v4181, -inf
        %v4712 = vsel %vm823, %v4237, -inf
        %v4713 = vmax.f32 %v4711, %v4712
        %v4714 = vsel %vm823, %v4188, -inf
        %v4715 = vsel %vm823, %v4244, -inf
        %v4716 = vmax.f32 %v4714, %v4715
        %v4717 = vsel %vm823, %v4195, -inf
        %v4718 = vsel %vm823, %v4251, -inf
        %v4719 = vmax.f32 %v4717, %v4718
        %v4720 = vsel %vm823, %v4202, -inf
        %v4721 = vsel %vm823, %v4258, -inf
        %v4722 = vmax.f32 %v4720, %v4721
        %v4723 = vsel %vm823, %v4209, -inf
        %v4724 = vsel %vm823, %v4265, -inf
        %v4725 = vmax.f32 %v4723, %v4724
        %v4726 = vsel %vm823, %v4216, -inf
        %v4727 = vsel %vm823, %v4272, -inf
        %v4728 = vmax.f32 %v4726, %v4727
        %v4729 = vsel %vm823, %v4279, -inf
        %v4730 = vsel %vm823, %v4335, -inf
        %v4731 = vmax.f32 %v4729, %v4730
        %v4732 = vsel %vm823, %v4286, -inf
        %v4733 = vsel %vm823, %v4342, -inf
        %v4734 = vmax.f32 %v4732, %v4733
        %v4735 = vsel %vm823, %v4293, -inf
        %v4736 = vsel %vm823, %v4349, -inf
        %v4737 = vmax.f32 %v4735, %v4736
        %v4738 = vsel %vm823, %v4300, -inf
        %v4739 = vsel %vm823, %v4356, -inf
        %v4740 = vmax.f32 %v4738, %v4739
        %v4741 = vsel %vm823, %v4307, -inf
        %v4742 = vsel %vm823, %v4363, -inf
        %v4743 = vmax.f32 %v4741, %v4742
        %v4744 = vsel %vm823, %v4314, -inf
        %v4745 = vsel %vm823, %v4370, -inf
        %v4746 = vmax.f32 %v4744, %v4745
        %v4747 = vsel %vm823, %v4321, -inf
        %v4748 = vsel %vm823, %v4377, -inf
        %v4749 = vmax.f32 %v4747, %v4748
        %v4750 = vsel %vm823, %v4328, -inf
        %v4751 = vsel %vm823, %v4384, -inf
        %v4752 = vmax.f32 %v4750, %v4751
        %v4753 = vsel %vm823, %v4391, -inf
        %v4754 = vsel %vm823, %v4447, -inf
        %v4755 = vmax.f32 %v4753, %v4754
        %v4756 = vsel %vm823, %v4398, -inf
        %v4757 = vsel %vm823, %v4454, -inf
        %v4758 = vmax.f32 %v4756, %v4757
        %v4759 = vsel %vm823, %v4405, -inf
        %v4760 = vsel %vm823, %v4461, -inf
        %v4761 = vmax.f32 %v4759, %v4760
        %v4762 = vsel %vm823, %v4412, -inf
        %v4763 = vsel %vm823, %v4468, -inf
        %v4764 = vmax.f32 %v4762, %v4763
        %v4765 = vsel %vm823, %v4419, -inf
        %v4766 = vsel %vm823, %v4475, -inf
        %v4767 = vmax.f32 %v4765, %v4766
        %v4768 = vsel %vm823, %v4426, -inf
        %v4769 = vsel %vm823, %v4482, -inf
        %v4770 = vmax.f32 %v4768, %v4769
        %v4771 = vsel %vm823, %v4433, -inf
        %v4772 = vsel %vm823, %v4489, -inf
        %v4773 = vmax.f32 %v4771, %v4772
        %v4774 = vsel %vm823, %v4440, -inf
        %v4775 = vsel %vm823, %v4496, -inf
        %v4776 = vmax.f32 %v4774, %v4775
        %v4777 = vsel %vm823, %v4503, -inf
        %v4778 = vsel %vm823, %v4559, -inf
        %v4779 = vmax.f32 %v4777, %v4778
        %v4780 = vsel %vm823, %v4510, -inf
        %v4781 = vsel %vm823, %v4566, -inf
        %v4782 = vmax.f32 %v4780, %v4781
        %v4783 = vsel %vm823, %v4517, -inf
        %v4784 = vsel %vm823, %v4573, -inf
        %v4785 = vmax.f32 %v4783, %v4784
        %v4786 = vsel %vm823, %v4524, -inf
        %v4787 = vsel %vm823, %v4580, -inf
        %v4788 = vmax.f32 %v4786, %v4787
        %v4789 = vsel %vm823, %v4531, -inf
        %v4790 = vsel %vm823, %v4587, -inf
        %v4791 = vmax.f32 %v4789, %v4790
        %v4792 = vsel %vm823, %v4538, -inf
        %v4793 = vsel %vm823, %v4594, -inf
        %v4794 = vmax.f32 %v4792, %v4793
        %v4795 = vsel %vm823, %v4545, -inf
        %v4796 = vsel %vm823, %v4601, -inf
        %v4797 = vmax.f32 %v4795, %v4796
        %v4798 = vsel %vm823, %v4552, -inf
        %v4799 = vsel %vm823, %v4608, -inf
        %v4800 = vmax.f32 %v4798, %v4799
        %4801 = vst.msk [vmem:[#allocation3] sm:$0xff] %vm823, 0.0
        %4802 = vst.msk [vmem:[#allocation3 + $0x8] sm:$0x3] %vm826, 0.0
        %4803 = vst.msk [vmem:[#allocation3 + $0x10] sm:$0xff] %vm823, 0.0
        %4804 = vst.msk [vmem:[#allocation3 + $0x18] sm:$0x3] %vm826, 0.0
        %4805 = vst.msk [vmem:[#allocation3 + $0x20] sm:$0xff] %vm823, 0.0
        %4806 = vst.msk [vmem:[#allocation3 + $0x28] sm:$0x3] %vm826, 0.0
        %4807 = vst.msk [vmem:[#allocation3 + $0x30] sm:$0xff] %vm823, 0.0
        %4808 = vst.msk [vmem:[#allocation3 + $0x38] sm:$0x3] %vm826, 0.0
        %4809 = vst.msk [vmem:[#allocation3 + $0x40] sm:$0xff] %vm823, 0.0
        %4810 = vst.msk [vmem:[#allocation3 + $0x48] sm:$0x3] %vm826, 0.0
        %4811 = vst.msk [vmem:[#allocation3 + $0x50] sm:$0xff] %vm823, 0.0
        %4812 = vst.msk [vmem:[#allocation3 + $0x58] sm:$0x3] %vm826, 0.0
        %4813 = vst.msk [vmem:[#allocation3 + $0x60] sm:$0xff] %vm823, 0.0
        %4814 = vst.msk [vmem:[#allocation3 + $0x68] sm:$0x3] %vm826, 0.0
        %4815 = vst.msk [vmem:[#allocation3 + $0x70] sm:$0xff] %vm823, 0.0
        %4816 = vst.msk [vmem:[#allocation3 + $0x78] sm:$0x3] %vm826, 0.0
        %4817 = vst.msk [vmem:[#allocation3 + $0x80] sm:$0xff] %vm823, 0.0
        %4818 = vst.msk [vmem:[#allocation3 + $0x88] sm:$0x3] %vm826, 0.0
        %4819 = vst.msk [vmem:[#allocation3 + $0x90] sm:$0xff] %vm823, 0.0
        %4820 = vst.msk [vmem:[#allocation3 + $0x98] sm:$0x3] %vm826, 0.0
        %vm4885 = vcmask 1041409
        %v4886 = vsel %vm4885, %v4614, %v4611
        %vm4887 = vcmask 1042434
        %v4888 = vsel %vm4887, %v4617, %v4886
        %vm4889 = vcmask 1043459
        %v4890 = vsel %vm4889, %v4620, %v4888
        %vm4891 = vcmask 1044484
        %v4892 = vsel %vm4891, %v4623, %v4890
        %vm4893 = vcmask 1045509
        %v4894 = vsel %vm4893, %v4626, %v4892
        %vm4895 = vcmask 1046534
        %v4896 = vsel %vm4895, %v4629, %v4894
        %vm4897 = vcmask 1047559
        %v4898 = vsel %vm4897, %v4632, %v4896
        %v4899 = vsel %vm4885, %v4638, %v4635
        %v4900 = vsel %vm4887, %v4641, %v4899
        %v4901 = vsel %vm4889, %v4644, %v4900
        %v4902 = vsel %vm4891, %v4647, %v4901
        %v4903 = vsel %vm4893, %v4650, %v4902
        %v4904 = vsel %vm4895, %v4653, %v4903
        %v4905 = vsel %vm4897, %v4656, %v4904
        %v4906 = vsel %vm4885, %v4662, %v4659
        %v4907 = vsel %vm4887, %v4665, %v4906
        %v4908 = vsel %vm4889, %v4668, %v4907
        %v4909 = vsel %vm4891, %v4671, %v4908
        %v4910 = vsel %vm4893, %v4674, %v4909
        %v4911 = vsel %vm4895, %v4677, %v4910
        %v4912 = vsel %vm4897, %v4680, %v4911
        %v4913 = vsel %vm4885, %v4686, %v4683
        %v4914 = vsel %vm4887, %v4689, %v4913
        %v4915 = vsel %vm4889, %v4692, %v4914
        %v4916 = vsel %vm4891, %v4695, %v4915
        %v4917 = vsel %vm4893, %v4698, %v4916
        %v4918 = vsel %vm4895, %v4701, %v4917
        %v4919 = vsel %vm4897, %v4704, %v4918
        %v4920 = vsel %vm4885, %v4710, %v4707
        %v4921 = vsel %vm4887, %v4713, %v4920
        %v4922 = vsel %vm4889, %v4716, %v4921
        %v4923 = vsel %vm4891, %v4719, %v4922
        %v4924 = vsel %vm4893, %v4722, %v4923
        %v4925 = vsel %vm4895, %v4725, %v4924
        %v4926 = vsel %vm4897, %v4728, %v4925
        %v4927 = vsel %vm4885, %v4734, %v4731
        %v4928 = vsel %vm4887, %v4737, %v4927
        %v4929 = vsel %vm4889, %v4740, %v4928
        %v4930 = vsel %vm4891, %v4743, %v4929
        %v4931 = vsel %vm4893, %v4746, %v4930
        %v4932 = vsel %vm4895, %v4749, %v4931
        %v4933 = vsel %vm4897, %v4752, %v4932
        %v4934 = vsel %vm4885, %v4758, %v4755
        %v4935 = vsel %vm4887, %v4761, %v4934
        %v4936 = vsel %vm4889, %v4764, %v4935
        %v4937 = vsel %vm4891, %v4767, %v4936
        %v4938 = vsel %vm4893, %v4770, %v4937
        %v4939 = vsel %vm4895, %v4773, %v4938
        %v4940 = vsel %vm4897, %v4776, %v4939
        %v4941 = vsel %vm4885, %v4782, %v4779
        %v4942 = vsel %vm4887, %v4785, %v4941
        %v4943 = vsel %vm4889, %v4788, %v4942
        %v4944 = vsel %vm4891, %v4791, %v4943
        %v4945 = vsel %vm4893, %v4794, %v4944
        %v4946 = vsel %vm4895, %v4797, %v4945
        %v4947 = vsel %vm4897, %v4800, %v4946
        %s4956 = scalar_lea.vmem [#allocation3], 16
        %4957 = vst.msk [vmem:[%s4956 + $0x1] sm:$0xff] %vm823, %v4898
        %4958 = vst.msk [vmem:[%s4956 + $0x11] sm:$0xff] %vm823, %v4905
        %4959 = vst.msk [vmem:[%s4956 + $0x21] sm:$0xff] %vm823, %v4912
        %4960 = vst.msk [vmem:[%s4956 + $0x31] sm:$0xff] %vm823, %v4919
        %4961 = vst.msk [vmem:[%s4956 + $0x41] sm:$0xff] %vm823, %v4926
        %4962 = vst.msk [vmem:[%s4956 + $0x51] sm:$0xff] %vm823, %v4933
        %4963 = vst.msk [vmem:[%s4956 + $0x61] sm:$0xff] %vm823, %v4940
        %4964 = vst.msk [vmem:[%s4956 + $0x71] sm:$0xff] %vm823, %v4947
        %v4965 = vld [vmem:[#allocation3] sm:$0xff]
        %v4966 = vld [vmem:[#allocation3 + $0x10] sm:$0xff]
        %v4967 = vld [vmem:[#allocation3 + $0x20] sm:$0xff]
        %v4968 = vld [vmem:[#allocation3 + $0x30] sm:$0xff]
        %v4969 = vld [vmem:[#allocation3 + $0x40] sm:$0xff]
        %v4970 = vld [vmem:[#allocation3 + $0x50] sm:$0xff]
        %v4971 = vld [vmem:[#allocation3 + $0x60] sm:$0xff]
        %v4972 = vld [vmem:[#allocation3 + $0x70] sm:$0xff]
        %4973 = vst.msk [vmem:[#allocation7] sm:$0xff] %vm823, %v4965
        %4974 = vst.msk [vmem:[#allocation7 + $0x48] sm:$0xff] %vm823, %v4966
        %4975 = vst.msk [vmem:[#allocation7 + $0x90] sm:$0xff] %vm823, %v4967
        %4976 = vst.msk [vmem:[#allocation7 + $0xd8] sm:$0xff] %vm823, %v4968
        %4977 = vst.msk [vmem:[#allocation7 + $0x120] sm:$0xff] %vm823, %v4969
        %4978 = vst.msk [vmem:[#allocation7 + $0x168] sm:$0xff] %vm823, %v4970
        %4979 = vst.msk [vmem:[#allocation7 + $0x1b0] sm:$0xff] %vm823, %v4971
        %4980 = vst.msk [vmem:[#allocation7 + $0x1f8] sm:$0xff] %vm823, %v4972
        %v4981 = vld [vmem:[#allocation3 + $0x1] sm:$0xff]
        %v4982 = vld [vmem:[#allocation3 + $0x11] sm:$0xff]
        %v4983 = vld [vmem:[#allocation3 + $0x21] sm:$0xff]
        %v4984 = vld [vmem:[#allocation3 + $0x31] sm:$0xff]
        %v4985 = vld [vmem:[#allocation3 + $0x41] sm:$0xff]
        %v4986 = vld [vmem:[#allocation3 + $0x51] sm:$0xff]
        %v4987 = vld [vmem:[#allocation3 + $0x61] sm:$0xff]
        %v4988 = vld [vmem:[#allocation3 + $0x71] sm:$0xff]
        %4997 = vrot.lane.b32.xlu0 %v4981, 32
        %v4998 = vpop.permute.xlu0 %4997
        %4999 = vrot.lane.b32.xlu0 %v4982, 32
        %v5000 = vpop.permute.xlu0 %4999
        %5001 = vrot.lane.b32.xlu0 %v4983, 32
        %v5002 = vpop.permute.xlu0 %5001
        %5003 = vrot.lane.b32.xlu0 %v4984, 32
        %v5004 = vpop.permute.xlu0 %5003
        %5005 = vrot.lane.b32.xlu0 %v4985, 32
        %v5006 = vpop.permute.xlu0 %5005
        %5007 = vrot.lane.b32.xlu0 %v4986, 32
        %v5008 = vpop.permute.xlu0 %5007
        %5009 = vrot.lane.b32.xlu0 %v4987, 32
        %v5010 = vpop.permute.xlu0 %5009
        %5011 = vrot.lane.b32.xlu0 %v4988, 32
        %v5012 = vpop.permute.xlu0 %5011
        %5021 = vst.msk [vmem:[#allocation7] sm:$0xff] %vm1136, %v4998
        %5022 = vst.msk [vmem:[#allocation7 + $0x48] sm:$0xff] %vm1136, %v5000
        %5023 = vst.msk [vmem:[#allocation7 + $0x90] sm:$0xff] %vm1136, %v5002
        %5024 = vst.msk [vmem:[#allocation7 + $0xd8] sm:$0xff] %vm1136, %v5004
        %5025 = vst.msk [vmem:[#allocation7 + $0x120] sm:$0xff] %vm1136, %v5006
        %5026 = vst.msk [vmem:[#allocation7 + $0x168] sm:$0xff] %vm1136, %v5008
        %5027 = vst.msk [vmem:[#allocation7 + $0x1b0] sm:$0xff] %vm1136, %v5010
        %5028 = vst.msk [vmem:[#allocation7 + $0x1f8] sm:$0xff] %vm1136, %v5012
        %v5029 = vld [vmem:[#allocation3 + $0x2] sm:$0xff]
        %v5030 = vld [vmem:[#allocation3 + $0x12] sm:$0xff]
        %v5031 = vld [vmem:[#allocation3 + $0x22] sm:$0xff]
        %v5032 = vld [vmem:[#allocation3 + $0x32] sm:$0xff]
        %v5033 = vld [vmem:[#allocation3 + $0x42] sm:$0xff]
        %v5034 = vld [vmem:[#allocation3 + $0x52] sm:$0xff]
        %v5035 = vld [vmem:[#allocation3 + $0x62] sm:$0xff]
        %v5036 = vld [vmem:[#allocation3 + $0x72] sm:$0xff]
        %5045 = vrot.lane.b32.xlu0 %v5029, 64
        %v5046 = vpop.permute.xlu0 %5045
        %5047 = vrot.lane.b32.xlu0 %v5030, 64
        %v5048 = vpop.permute.xlu0 %5047
        %5049 = vrot.lane.b32.xlu0 %v5031, 64
        %v5050 = vpop.permute.xlu0 %5049
        %5051 = vrot.lane.b32.xlu0 %v5032, 64
        %v5052 = vpop.permute.xlu0 %5051
        %5053 = vrot.lane.b32.xlu0 %v5033, 64
        %v5054 = vpop.permute.xlu0 %5053
        %5055 = vrot.lane.b32.xlu0 %v5034, 64
        %v5056 = vpop.permute.xlu0 %5055
        %5057 = vrot.lane.b32.xlu0 %v5035, 64
        %v5058 = vpop.permute.xlu0 %5057
        %5059 = vrot.lane.b32.xlu0 %v5036, 64
        %v5060 = vpop.permute.xlu0 %5059
        %5069 = vst.msk [vmem:[#allocation7] sm:$0xff] %vm1329, %v5046
        %5070 = vst.msk [vmem:[#allocation7 + $0x48] sm:$0xff] %vm1329, %v5048
        %5071 = vst.msk [vmem:[#allocation7 + $0x90] sm:$0xff] %vm1329, %v5050
        %5072 = vst.msk [vmem:[#allocation7 + $0xd8] sm:$0xff] %vm1329, %v5052
        %5073 = vst.msk [vmem:[#allocation7 + $0x120] sm:$0xff] %vm1329, %v5054
        %5074 = vst.msk [vmem:[#allocation7 + $0x168] sm:$0xff] %vm1329, %v5056
        %5075 = vst.msk [vmem:[#allocation7 + $0x1b0] sm:$0xff] %vm1329, %v5058
        %5076 = vst.msk [vmem:[#allocation7 + $0x1f8] sm:$0xff] %vm1329, %v5060
        %v5077 = vld [vmem:[%s4956] sm:$0xff]
        %v5078 = vld [vmem:[%s4956 + $0x10] sm:$0xff]
        %v5079 = vld [vmem:[%s4956 + $0x20] sm:$0xff]
        %v5080 = vld [vmem:[%s4956 + $0x30] sm:$0xff]
        %v5081 = vld [vmem:[%s4956 + $0x40] sm:$0xff]
        %v5082 = vld [vmem:[%s4956 + $0x50] sm:$0xff]
        %v5083 = vld [vmem:[%s4956 + $0x60] sm:$0xff]
        %v5084 = vld [vmem:[%s4956 + $0x70] sm:$0xff]
        %5093 = vrot.lane.b32.xlu0 %v5077, 96
        %v5094 = vpop.permute.xlu0 %5093
        %5095 = vrot.lane.b32.xlu0 %v5078, 96
        %v5096 = vpop.permute.xlu0 %5095
        %5097 = vrot.lane.b32.xlu0 %v5079, 96
        %v5098 = vpop.permute.xlu0 %5097
        %5099 = vrot.lane.b32.xlu0 %v5080, 96
        %v5100 = vpop.permute.xlu0 %5099
        %5101 = vrot.lane.b32.xlu0 %v5081, 96
        %v5102 = vpop.permute.xlu0 %5101
        %5103 = vrot.lane.b32.xlu0 %v5082, 96
        %v5104 = vpop.permute.xlu0 %5103
        %5105 = vrot.lane.b32.xlu0 %v5083, 96
        %v5106 = vpop.permute.xlu0 %5105
        %5107 = vrot.lane.b32.xlu0 %v5084, 96
        %v5108 = vpop.permute.xlu0 %5107
        %5117 = vst.msk [vmem:[#allocation7] sm:$0xff] %vm1522, %v5094
        %5118 = vst.msk [vmem:[#allocation7 + $0x48] sm:$0xff] %vm1522, %v5096
        %5119 = vst.msk [vmem:[#allocation7 + $0x90] sm:$0xff] %vm1522, %v5098
        %5120 = vst.msk [vmem:[#allocation7 + $0xd8] sm:$0xff] %vm1522, %v5100
        %5121 = vst.msk [vmem:[#allocation7 + $0x120] sm:$0xff] %vm1522, %v5102
        %5122 = vst.msk [vmem:[#allocation7 + $0x168] sm:$0xff] %vm1522, %v5104
        %5123 = vst.msk [vmem:[#allocation7 + $0x1b0] sm:$0xff] %vm1522, %v5106
        %5124 = vst.msk [vmem:[#allocation7 + $0x1f8] sm:$0xff] %vm1522, %v5108
        %v5125 = vld [vmem:[%s4956 + $0x1] sm:$0xff]
        %v5126 = vld [vmem:[%s4956 + $0x11] sm:$0xff]
        %v5127 = vld [vmem:[%s4956 + $0x21] sm:$0xff]
        %v5128 = vld [vmem:[%s4956 + $0x31] sm:$0xff]
        %v5129 = vld [vmem:[%s4956 + $0x41] sm:$0xff]
        %v5130 = vld [vmem:[%s4956 + $0x51] sm:$0xff]
        %v5131 = vld [vmem:[%s4956 + $0x61] sm:$0xff]
        %v5132 = vld [vmem:[%s4956 + $0x71] sm:$0xff]
        %5133 = vst.msk [vmem:[#allocation7 + $0x8] sm:$0xff] %vm823, %v5125
        %5134 = vst.msk [vmem:[#allocation7 + $0x50] sm:$0xff] %vm823, %v5126
        %5135 = vst.msk [vmem:[#allocation7 + $0x98] sm:$0xff] %vm823, %v5127
        %5136 = vst.msk [vmem:[#allocation7 + $0xe0] sm:$0xff] %vm823, %v5128
        %5137 = vst.msk [vmem:[#allocation7 + $0x128] sm:$0xff] %vm823, %v5129
        %5138 = vst.msk [vmem:[#allocation7 + $0x170] sm:$0xff] %vm823, %v5130
        %5139 = vst.msk [vmem:[#allocation7 + $0x1b8] sm:$0xff] %vm823, %v5131
        %5140 = vst.msk [vmem:[#allocation7 + $0x200] sm:$0xff] %vm823, %v5132
        %v5141 = vld [vmem:[%s4956 + $0x2] sm:$0xff]
        %v5142 = vld [vmem:[%s4956 + $0x12] sm:$0xff]
        %v5143 = vld [vmem:[%s4956 + $0x22] sm:$0xff]
        %v5144 = vld [vmem:[%s4956 + $0x32] sm:$0xff]
        %v5145 = vld [vmem:[%s4956 + $0x42] sm:$0xff]
        %v5146 = vld [vmem:[%s4956 + $0x52] sm:$0xff]
        %v5147 = vld [vmem:[%s4956 + $0x62] sm:$0xff]
        %v5148 = vld [vmem:[%s4956 + $0x72] sm:$0xff]
        %5157 = vrot.lane.b32.xlu0 %v5141, 32
        %v5158 = vpop.permute.xlu0 %5157
        %5159 = vrot.lane.b32.xlu0 %v5142, 32
        %v5160 = vpop.permute.xlu0 %5159
        %5161 = vrot.lane.b32.xlu0 %v5143, 32
        %v5162 = vpop.permute.xlu0 %5161
        %5163 = vrot.lane.b32.xlu0 %v5144, 32
        %v5164 = vpop.permute.xlu0 %5163
        %5165 = vrot.lane.b32.xlu0 %v5145, 32
        %v5166 = vpop.permute.xlu0 %5165
        %5167 = vrot.lane.b32.xlu0 %v5146, 32
        %v5168 = vpop.permute.xlu0 %5167
        %5169 = vrot.lane.b32.xlu0 %v5147, 32
        %v5170 = vpop.permute.xlu0 %5169
        %5171 = vrot.lane.b32.xlu0 %v5148, 32
        %v5172 = vpop.permute.xlu0 %5171
        %5181 = vst.msk [vmem:[#allocation7 + $0x8] sm:$0xff] %vm1136, %v5158
        %5182 = vst.msk [vmem:[#allocation7 + $0x50] sm:$0xff] %vm1136, %v5160
        %5183 = vst.msk [vmem:[#allocation7 + $0x98] sm:$0xff] %vm1136, %v5162
        %5184 = vst.msk [vmem:[#allocation7 + $0xe0] sm:$0xff] %vm1136, %v5164
        %5185 = vst.msk [vmem:[#allocation7 + $0x128] sm:$0xff] %vm1136, %v5166
        %5186 = vst.msk [vmem:[#allocation7 + $0x170] sm:$0xff] %vm1136, %v5168
        %5187 = vst.msk [vmem:[#allocation7 + $0x1b8] sm:$0xff] %vm1136, %v5170
        %5188 = vst.msk [vmem:[#allocation7 + $0x200] sm:$0xff] %vm1136, %v5172
        %s5189 = scalar_lea.vmem [#allocation3], 32
        %v5190 = vld [vmem:[%s5189] sm:$0xff]
        %v5191 = vld [vmem:[%s5189 + $0x10] sm:$0xff]
        %v5192 = vld [vmem:[%s5189 + $0x20] sm:$0xff]
        %v5193 = vld [vmem:[%s5189 + $0x30] sm:$0xff]
        %v5194 = vld [vmem:[%s5189 + $0x40] sm:$0xff]
        %v5195 = vld [vmem:[%s5189 + $0x50] sm:$0xff]
        %v5196 = vld [vmem:[%s5189 + $0x60] sm:$0xff]
        %v5197 = vld [vmem:[%s5189 + $0x70] sm:$0xff]
        %5206 = vrot.lane.b32.xlu0 %v5190, 64
        %v5207 = vpop.permute.xlu0 %5206
        %5208 = vrot.lane.b32.xlu0 %v5191, 64
        %v5209 = vpop.permute.xlu0 %5208
        %5210 = vrot.lane.b32.xlu0 %v5192, 64
        %v5211 = vpop.permute.xlu0 %5210
        %5212 = vrot.lane.b32.xlu0 %v5193, 64
        %v5213 = vpop.permute.xlu0 %5212
        %5214 = vrot.lane.b32.xlu0 %v5194, 64
        %v5215 = vpop.permute.xlu0 %5214
        %5216 = vrot.lane.b32.xlu0 %v5195, 64
        %v5217 = vpop.permute.xlu0 %5216
        %5218 = vrot.lane.b32.xlu0 %v5196, 64
        %v5219 = vpop.permute.xlu0 %5218
        %5220 = vrot.lane.b32.xlu0 %v5197, 64
        %v5221 = vpop.permute.xlu0 %5220
        %5230 = vst.msk [vmem:[#allocation7 + $0x8] sm:$0xff] %vm1329, %v5207
        %5231 = vst.msk [vmem:[#allocation7 + $0x50] sm:$0xff] %vm1329, %v5209
        %5232 = vst.msk [vmem:[#allocation7 + $0x98] sm:$0xff] %vm1329, %v5211
        %5233 = vst.msk [vmem:[#allocation7 + $0xe0] sm:$0xff] %vm1329, %v5213
        %5234 = vst.msk [vmem:[#allocation7 + $0x128] sm:$0xff] %vm1329, %v5215
        %5235 = vst.msk [vmem:[#allocation7 + $0x170] sm:$0xff] %vm1329, %v5217
        %5236 = vst.msk [vmem:[#allocation7 + $0x1b8] sm:$0xff] %vm1329, %v5219
        %5237 = vst.msk [vmem:[#allocation7 + $0x200] sm:$0xff] %vm1329, %v5221
        %v5238 = vld [vmem:[%s5189 + $0x1] sm:$0xff]
        %v5239 = vld [vmem:[%s5189 + $0x11] sm:$0xff]
        %v5240 = vld [vmem:[%s5189 + $0x21] sm:$0xff]
        %v5241 = vld [vmem:[%s5189 + $0x31] sm:$0xff]
        %v5242 = vld [vmem:[%s5189 + $0x41] sm:$0xff]
        %v5243 = vld [vmem:[%s5189 + $0x51] sm:$0xff]
        %v5244 = vld [vmem:[%s5189 + $0x61] sm:$0xff]
        %v5245 = vld [vmem:[%s5189 + $0x71] sm:$0xff]
        %5254 = vrot.lane.b32.xlu0 %v5238, 96
        %v5255 = vpop.permute.xlu0 %5254
        %5256 = vrot.lane.b32.xlu0 %v5239, 96
        %v5257 = vpop.permute.xlu0 %5256
        %5258 = vrot.lane.b32.xlu0 %v5240, 96
        %v5259 = vpop.permute.xlu0 %5258
        %5260 = vrot.lane.b32.xlu0 %v5241, 96
        %v5261 = vpop.permute.xlu0 %5260
        %5262 = vrot.lane.b32.xlu0 %v5242, 96
        %v5263 = vpop.permute.xlu0 %5262
        %5264 = vrot.lane.b32.xlu0 %v5243, 96
        %v5265 = vpop.permute.xlu0 %5264
        %5266 = vrot.lane.b32.xlu0 %v5244, 96
        %v5267 = vpop.permute.xlu0 %5266
        %5268 = vrot.lane.b32.xlu0 %v5245, 96
        %v5269 = vpop.permute.xlu0 %5268
        %5278 = vst.msk [vmem:[#allocation7 + $0x8] sm:$0xff] %vm1522, %v5255
        %5279 = vst.msk [vmem:[#allocation7 + $0x50] sm:$0xff] %vm1522, %v5257
        %5280 = vst.msk [vmem:[#allocation7 + $0x98] sm:$0xff] %vm1522, %v5259
        %5281 = vst.msk [vmem:[#allocation7 + $0xe0] sm:$0xff] %vm1522, %v5261
        %5282 = vst.msk [vmem:[#allocation7 + $0x128] sm:$0xff] %vm1522, %v5263
        %5283 = vst.msk [vmem:[#allocation7 + $0x170] sm:$0xff] %vm1522, %v5265
        %5284 = vst.msk [vmem:[#allocation7 + $0x1b8] sm:$0xff] %vm1522, %v5267
        %5285 = vst.msk [vmem:[#allocation7 + $0x200] sm:$0xff] %vm1522, %v5269
        %v5286 = vld [vmem:[%s5189 + $0x2] sm:$0xff]
        %v5287 = vld [vmem:[%s5189 + $0x12] sm:$0xff]
        %v5288 = vld [vmem:[%s5189 + $0x22] sm:$0xff]
        %v5289 = vld [vmem:[%s5189 + $0x32] sm:$0xff]
        %v5290 = vld [vmem:[%s5189 + $0x42] sm:$0xff]
        %v5291 = vld [vmem:[%s5189 + $0x52] sm:$0xff]
        %v5292 = vld [vmem:[%s5189 + $0x62] sm:$0xff]
        %v5293 = vld [vmem:[%s5189 + $0x72] sm:$0xff]
        %5294 = vst.msk [vmem:[#allocation7 + $0x10] sm:$0xff] %vm823, %v5286
        %5295 = vst.msk [vmem:[#allocation7 + $0x58] sm:$0xff] %vm823, %v5287
        %5296 = vst.msk [vmem:[#allocation7 + $0xa0] sm:$0xff] %vm823, %v5288
        %5297 = vst.msk [vmem:[#allocation7 + $0xe8] sm:$0xff] %vm823, %v5289
        %5298 = vst.msk [vmem:[#allocation7 + $0x130] sm:$0xff] %vm823, %v5290
        %5299 = vst.msk [vmem:[#allocation7 + $0x178] sm:$0xff] %vm823, %v5291
        %5300 = vst.msk [vmem:[#allocation7 + $0x1c0] sm:$0xff] %vm823, %v5292
        %5301 = vst.msk [vmem:[#allocation7 + $0x208] sm:$0xff] %vm823, %v5293
        %v5302 = vld [vmem:[#allocation7] sm:$0xff]
        %v5303 = vld [vmem:[#allocation7 + $0x8] sm:$0xff]
        %v5304 = vld [vmem:[#allocation7 + $0x10] sm:$0xff]
        %v5305 = vld [vmem:[#allocation7 + $0x48] sm:$0xff]
        %v5306 = vld [vmem:[#allocation7 + $0x50] sm:$0xff]
        %v5307 = vld [vmem:[#allocation7 + $0x58] sm:$0xff]
        %v5308 = vld [vmem:[#allocation7 + $0x90] sm:$0xff]
        %v5309 = vld [vmem:[#allocation7 + $0x98] sm:$0xff]
        %v5310 = vld [vmem:[#allocation7 + $0xa0] sm:$0xff]
        %v5311 = vld [vmem:[#allocation7 + $0xd8] sm:$0xff]
        %v5312 = vld [vmem:[#allocation7 + $0xe0] sm:$0xff]
        %v5313 = vld [vmem:[#allocation7 + $0xe8] sm:$0xff]
        %v5314 = vld [vmem:[#allocation7 + $0x120] sm:$0xff]
        %v5315 = vld [vmem:[#allocation7 + $0x128] sm:$0xff]
        %v5316 = vld [vmem:[#allocation7 + $0x130] sm:$0xff]
        %v5317 = vld [vmem:[#allocation7 + $0x168] sm:$0xff]
        %v5318 = vld [vmem:[#allocation7 + $0x170] sm:$0xff]
        %v5319 = vld [vmem:[#allocation7 + $0x178] sm:$0xff]
        %v5320 = vld [vmem:[#allocation7 + $0x1b0] sm:$0xff]
        %v5321 = vld [vmem:[#allocation7 + $0x1b8] sm:$0xff]
        %v5322 = vld [vmem:[#allocation7 + $0x1c0] sm:$0xff]
        %v5323 = vld [vmem:[#allocation7 + $0x1f8] sm:$0xff]
        %v5324 = vld [vmem:[#allocation7 + $0x200] sm:$0xff]
        %v5325 = vld [vmem:[#allocation7 + $0x208] sm:$0xff]
        %v5326 = vld [vmem:[%s5] sm:$0xff]
        %v5327 = vld [vmem:[%s5 + $0x8] sm:$0xff]
        %v5328 = vld [vmem:[%s5 + $0x10] sm:$0xff]
        %v5329 = vld [vmem:[%s5 + $0x18] sm:$0xff]
        %v5330 = vld [vmem:[%s5 + $0x20] sm:$0xff]
        %v5331 = vld [vmem:[%s5 + $0x28] sm:$0xff]
        %v5332 = vld [vmem:[%s5 + $0x30] sm:$0xff]
        %v5333 = vld [vmem:[%s5 + $0x38] sm:$0xff]
        %v5334 = vld [vmem:[%s5 + $0x40] sm:$0xff]
        %v5335 = vld [vmem:[%s5 + $0x48] sm:$0xff]
        %v5336 = vld [vmem:[%s5 + $0x50] sm:$0xff]
        %v5337 = vld [vmem:[%s5 + $0x58] sm:$0xff]
        %v5338 = vld [vmem:[%s5 + $0x60] sm:$0xff]
        %v5339 = vld [vmem:[%s5 + $0x68] sm:$0xff]
        %v5340 = vld [vmem:[%s5 + $0x70] sm:$0xff]
        %v5341 = vld [vmem:[%s5 + $0x78] sm:$0xff]
        %v5342 = vld [vmem:[%s5 + $0x80] sm:$0xff]
        %v5343 = vld [vmem:[%s5 + $0x88] sm:$0xff]
        %v5344 = vld [vmem:[%s5 + $0x90] sm:$0xff]
        %v5345 = vld [vmem:[%s5 + $0x98] sm:$0xff]
        %v5346 = vld [vmem:[%s5 + $0xa0] sm:$0xff]
        %v5347 = vld [vmem:[%s5 + $0xa8] sm:$0xff]
        %v5348 = vld [vmem:[%s5 + $0xb0] sm:$0xff]
        %v5349 = vld [vmem:[%s5 + $0xb8] sm:$0xff]
        %v5350 = vld [vmem:[%s5 + $0xc0] sm:$0xff]
        %v5351 = vld [vmem:[%s5 + $0xc8] sm:$0xff]
        %v5352 = vld [vmem:[%s5 + $0xd0] sm:$0xff]
        %v5353 = vld [vmem:[%s5 + $0xd8] sm:$0xff]
        %v5354 = vld [vmem:[%s5 + $0xe0] sm:$0xff]
        %v5355 = vld [vmem:[%s5 + $0xe8] sm:$0xff]
        %v5356 = vld [vmem:[%s5 + $0xf0] sm:$0xff]
        %v5357 = vld [vmem:[%s5 + $0xf8] sm:$0xff]
        %v5358 = vld [vmem:[%s5 + $0x100] sm:$0xff]
        %v5359 = vld [vmem:[%s5 + $0x108] sm:$0xff]
        %v5360 = vld [vmem:[%s5 + $0x110] sm:$0xff]
        %v5361 = vld [vmem:[%s5 + $0x118] sm:$0xff]
        %v5362 = vld [vmem:[%s6] sm:$0x1]
        %v5364 = vlaneseq
        %v5365 = vshrl.u32 %v5364, 7
        %v5366 = vsub.s32 0, %v5365
        %v5367 = vrot.slane %v5362, %v5366
        %v5370 = vsel %vm823, %v5304, 0
        %v5373 = vsel %vm823, %v5307, 0
        %v5376 = vsel %vm823, %v5310, 0
        %v5379 = vsel %vm823, %v5313, 0
        %v5382 = vsel %vm823, %v5316, 0
        %v5385 = vsel %vm823, %v5319, 0
        %v5388 = vsel %vm823, %v5322, 0
        %v5391 = vsel %vm823, %v5325, 0
        %5393 = vmatprep.subr.mxu0 0.0
        %5394 = vmatpush1.msra.mxu0 %v5326
        %5395 = vmatprep.subr.mxu0 0.0
        %5396 = vmatpush1.msra.mxu0 %v5327
        %5397 = vmatprep.subr.mxu0 0.0
        %5398 = vmatpush1.msra.mxu0 %v5328
        %5399 = vmatprep.subr.mxu0 0.0
        %5400 = vmatpush1.msra.mxu0 %v5329
        %5401 = vmatprep.subr.mxu0 0.0
        %5402 = vmatpush1.msra.mxu0 %v5330
        %5403 = vmatprep.subr.mxu0 0.0
        %5404 = vmatpush1.msra.mxu0 %v5331
        %5405 = vmatprep.subr.mxu0 0.0
        %5406 = vmatpush1.msra.mxu0 %v5332
        %5407 = vmatprep.subr.mxu0 0.0
        %5408 = vmatpush1.msra.mxu0 %v5333
        %5409 = vmatprep.subr.mxu0 0.0
        %5410 = vmatpush1.msra.mxu0 %v5334
        %5411 = vmatprep.subr.mxu0 0.0
        %5412 = vmatpush1.msra.mxu0 %v5335
        %5413 = vmatprep.subr.mxu0 0.0
        %5414 = vmatpush1.msra.mxu0 %v5336
        %5415 = vmatprep.subr.mxu0 0.0
        %5416 = vmatpush1.msra.mxu0 %v5337
        %5417 = vmatprep.subr.mxu0 0.0
        %5418 = vmatpush1.msra.mxu0 %v5338
        %5419 = vmatprep.subr.mxu0 0.0
        %5420 = vmatpush1.msra.mxu0 %v5339
        %5421 = vmatprep.subr.mxu0 0.0
        %5422 = vmatpush1.msra.mxu0 %v5340
        %5423 = vmatprep.subr.mxu0 0.0
        %5424 = vmatpush1.msra.mxu0 %v5341
        %5425 = vmatprep.subr.mxu0 0.0
        %5426 = vmatpush1.msra.mxu0 %v5342
        %5427 = vmatprep.subr.mxu0 0.0
        %5428 = vmatpush1.msra.mxu0 %v5343
        %5429 = vmatprep.subr.mxu0 0.0
        %5430 = vmatpush1.msra.mxu0 %v5344
        %5431 = vmatprep.subr.mxu0 0.0
        %5432 = vmatpush1.msra.mxu0 %v5345
        %5433 = vmatprep.subr.mxu0 0.0
        %5434 = vmatpush1.msra.mxu0 %v5346
        %5435 = vmatprep.subr.mxu0 0.0
        %5436 = vmatpush1.msra.mxu0 %v5347
        %5437 = vmatprep.subr.mxu0 0.0
        %5438 = vmatpush1.msra.mxu0 %v5348
        %5439 = vmatprep.subr.mxu0 0.0
        %5440 = vmatpush1.msra.mxu0 %v5349
        %5441 = vmatprep.subr.mxu0 0.0
        %5442 = vmatpush1.msra.mxu0 %v5350
        %5443 = vmatprep.subr.mxu0 0.0
        %5444 = vmatpush1.msra.mxu0 %v5351
        %5445 = vmatprep.subr.mxu0 0.0
        %5446 = vmatpush1.msra.mxu0 %v5352
        %5447 = vmatprep.subr.mxu0 0.0
        %5448 = vmatpush1.msra.mxu0 %v5353
        %5449 = vmatprep.subr.mxu0 0.0
        %5450 = vmatpush1.msra.mxu0 %v5354
        %5451 = vmatprep.subr.mxu0 0.0
        %5452 = vmatpush1.msra.mxu0 %v5355
        %5453 = vmatprep.subr.mxu0 0.0
        %5454 = vmatpush1.msra.mxu0 %v5356
        %5455 = vmatprep.subr.mxu0 0.0
        %5456 = vmatpush1.msra.mxu0 %v5357
        %5457 = vmatprep.mubr.f32.mxu0 %v5303
        %5458 = vmatmul.mubr.f32.gmra.mrb[0].mxu0 %v5302
        %v5459 = vpop.f32.mrb[0].mxu0
        %v5460 = vadd.f32 %v5367, %v5459
        %v5461 = vpop.f32.mrb[0].mxu0
        %5462 = vmatprep.mubr.f32.mxu0 %v5306
        %5463 = vmatmul.mubr.f32.gmra.mrb[0].mxu0 %v5305
        %v5464 = vpop.f32.mrb[0].mxu0
        %v5465 = vadd.f32 %v5367, %v5464
        %v5466 = vpop.f32.mrb[0].mxu0
        %5467 = vmatprep.mubr.f32.mxu0 %v5309
        %5468 = vmatmul.mubr.f32.gmra.mrb[0].mxu0 %v5308
        %v5469 = vpop.f32.mrb[0].mxu0
        %v5470 = vadd.f32 %v5367, %v5469
        %v5471 = vpop.f32.mrb[0].mxu0
        %5472 = vmatprep.mubr.f32.mxu0 %v5312
        %5473 = vmatmul.mubr.f32.gmra.mrb[0].mxu0 %v5311
        %v5474 = vpop.f32.mrb[0].mxu0
        %v5475 = vadd.f32 %v5367, %v5474
        %v5476 = vpop.f32.mrb[0].mxu0
        %5477 = vmatprep.mubr.f32.mxu0 %v5315
        %5478 = vmatmul.mubr.f32.gmra.mrb[0].mxu0 %v5314
        %v5479 = vpop.f32.mrb[0].mxu0
        %v5480 = vadd.f32 %v5367, %v5479
        %v5481 = vpop.f32.mrb[0].mxu0
        %5482 = vmatprep.mubr.f32.mxu0 %v5318
        %5483 = vmatmul.mubr.f32.gmra.mrb[0].mxu0 %v5317
        %v5484 = vpop.f32.mrb[0].mxu0
        %v5485 = vadd.f32 %v5367, %v5484
        %v5486 = vpop.f32.mrb[0].mxu0
        %5487 = vmatprep.mubr.f32.mxu0 %v5321
        %5488 = vmatmul.mubr.f32.gmra.mrb[0].mxu0 %v5320
        %v5489 = vpop.f32.mrb[0].mxu0
        %v5490 = vadd.f32 %v5367, %v5489
        %v5491 = vpop.f32.mrb[0].mxu0
        %5492 = vmatprep.mubr.f32.mxu0 %v5324
        %5493 = vmatmul.mubr.f32.gmra.mrb[0].mxu0 %v5323
        %v5494 = vpop.f32.mrb[0].mxu0
        %v5495 = vadd.f32 %v5367, %v5494
        %v5496 = vpop.f32.mrb[0].mxu0
        %5497 = vdwg.mxu0
        %5498 = vmatprep.subr.mxu0 0.0
        %5499 = vmatpush1.msra.mxu0 %v5358
        %5500 = vmatprep.subr.mxu0 0.0
        %5501 = vmatpush1.msra.mxu0 %v5359
        %5502 = vmatprep.subr.mxu0 0.0
        %5503 = vmatpush1.msra.mxu0 %v5360
        %5504 = vmatprep.subr.mxu0 0.0
        %5505 = vmatpush1.msra.mxu0 %v5361
        %5506 = vmatprep.subr.mxu0 0.0
        %5507 = vmatpush1.msra.mxu0 0.0
        %5508 = vmatprep.subr.mxu0 0.0
        %5509 = vmatpush1.msra.mxu0 0.0
        %5510 = vmatprep.subr.mxu0 0.0
        %5511 = vmatpush1.msra.mxu0 0.0
        %5512 = vmatprep.subr.mxu0 0.0
        %5513 = vmatpush1.msra.mxu0 0.0
        %5514 = vmatprep.subr.mxu0 0.0
        %5515 = vmatpush1.msra.mxu0 0.0
        %5516 = vmatprep.subr.mxu0 0.0
        %5517 = vmatpush1.msra.mxu0 0.0
        %5518 = vmatprep.subr.mxu0 0.0
        %5519 = vmatpush1.msra.mxu0 0.0
        %5520 = vmatprep.subr.mxu0 0.0
        %5521 = vmatpush1.msra.mxu0 0.0
        %5522 = vmatprep.subr.mxu0 0.0
        %5523 = vmatpush1.msra.mxu0 0.0
        %5524 = vmatprep.subr.mxu0 0.0
        %5525 = vmatpush1.msra.mxu0 0.0
        %5526 = vmatprep.subr.mxu0 0.0
        %5527 = vmatpush1.msra.mxu0 0.0
        %5528 = vmatprep.subr.mxu0 0.0
        %5529 = vmatpush1.msra.mxu0 0.0
        %5530 = vmatprep.subr.mxu0 0.0
        %5531 = vmatpush1.msra.mxu0 0.0
        %5532 = vmatprep.subr.mxu0 0.0
        %5533 = vmatpush1.msra.mxu0 0.0
        %5534 = vmatprep.subr.mxu0 0.0
        %5535 = vmatpush1.msra.mxu0 0.0
        %5536 = vmatprep.subr.mxu0 0.0
        %5537 = vmatpush1.msra.mxu0 0.0
        %5538 = vmatprep.subr.mxu0 0.0
        %5539 = vmatpush1.msra.mxu0 0.0
        %5540 = vmatprep.subr.mxu0 0.0
        %5541 = vmatpush1.msra.mxu0 0.0
        %5542 = vmatprep.subr.mxu0 0.0
        %5543 = vmatpush1.msra.mxu0 0.0
        %5544 = vmatprep.subr.mxu0 0.0
        %5545 = vmatpush1.msra.mxu0 0.0
        %5546 = vmatprep.subr.mxu0 0.0
        %5547 = vmatpush1.msra.mxu0 0.0
        %5548 = vmatprep.subr.mxu0 0.0
        %5549 = vmatpush1.msra.mxu0 0.0
        %5550 = vmatprep.subr.mxu0 0.0
        %5551 = vmatpush1.msra.mxu0 0.0
        %5552 = vmatprep.subr.mxu0 0.0
        %5553 = vmatpush1.msra.mxu0 0.0
        %5554 = vmatprep.subr.mxu0 0.0
        %5555 = vmatpush1.msra.mxu0 0.0
        %5556 = vmatprep.subr.mxu0 0.0
        %5557 = vmatpush1.msra.mxu0 0.0
        %5558 = vmatprep.subr.mxu0 0.0
        %5559 = vmatpush1.msra.mxu0 0.0
        %5560 = vmatprep.subr.mxu0 0.0
        %5561 = vmatpush1.msra.mxu0 0.0
        %5562 = vmatprep.mubr.f32.mxu0 0.0
        %5563 = vmatmul.mubr.f32.gmra.mrb[0].mxu0 %v5370
        %v5564 = vpop.f32.mrb[0].mxu0
        %v5565 = vadd.f32 %v5460, %v5564
        %v5566 = vpop.f32.mrb[0].mxu0
        %5567 = vmatprep.mubr.f32.mxu0 0.0
        %5568 = vmatmul.mubr.f32.gmra.mrb[0].mxu0 %v5373
        %v5569 = vpop.f32.mrb[0].mxu0
        %v5570 = vadd.f32 %v5465, %v5569
        %v5571 = vpop.f32.mrb[0].mxu0
        %5572 = vmatprep.mubr.f32.mxu0 0.0
        %5573 = vmatmul.mubr.f32.gmra.mrb[0].mxu0 %v5376
        %v5574 = vpop.f32.mrb[0].mxu0
        %v5575 = vadd.f32 %v5470, %v5574
        %v5576 = vpop.f32.mrb[0].mxu0
        %5577 = vmatprep.mubr.f32.mxu0 0.0
        %5578 = vmatmul.mubr.f32.gmra.mrb[0].mxu0 %v5379
        %v5579 = vpop.f32.mrb[0].mxu0
        %v5580 = vadd.f32 %v5475, %v5579
        %v5581 = vpop.f32.mrb[0].mxu0
        %5582 = vmatprep.mubr.f32.mxu0 0.0
        %5583 = vmatmul.mubr.f32.gmra.mrb[0].mxu0 %v5382
        %v5584 = vpop.f32.mrb[0].mxu0
        %v5585 = vadd.f32 %v5480, %v5584
        %v5586 = vpop.f32.mrb[0].mxu0
        %5587 = vmatprep.mubr.f32.mxu0 0.0
        %5588 = vmatmul.mubr.f32.gmra.mrb[0].mxu0 %v5385
        %v5589 = vpop.f32.mrb[0].mxu0
        %v5590 = vadd.f32 %v5485, %v5589
        %v5591 = vpop.f32.mrb[0].mxu0
        %5592 = vmatprep.mubr.f32.mxu0 0.0
        %5593 = vmatmul.mubr.f32.gmra.mrb[0].mxu0 %v5388
        %v5594 = vpop.f32.mrb[0].mxu0
        %v5595 = vadd.f32 %v5490, %v5594
        %v5596 = vpop.f32.mrb[0].mxu0
        %5597 = vmatprep.mubr.f32.mxu0 0.0
        %5598 = vmatmul.mubr.f32.gmra.mrb[0].mxu0 %v5391
        %v5599 = vpop.f32.mrb[0].mxu0
        %v5600 = vadd.f32 %v5495, %v5599
        %v5601 = vpop.f32.mrb[0].mxu0
        %5602 = vdwg.mxu0
        %v5603 = vmax.f32 %v5565, 0.0
        %v5604 = vmax.f32 %v5570, 0.0
        %v5605 = vmax.f32 %v5575, 0.0
        %v5606 = vmax.f32 %v5580, 0.0
        %v5607 = vmax.f32 %v5585, 0.0
        %v5608 = vmax.f32 %v5590, 0.0
        %v5609 = vmax.f32 %v5595, 0.0
        %v5610 = vmax.f32 %v5600, 0.0
        %vm5611 = vcmask 523264
        %5612 = vst.msk [vmem:[#allocation4] sm:$0xff] %vm5611, 0.0
        %vm5613 = vcmask 517120
        %5614 = vst.msk [vmem:[#allocation4 + $0x8] sm:$0x3] %vm5613, 0.0
        %5615 = vst.msk [vmem:[#allocation4 + $0x10] sm:$0xff] %vm5611, 0.0
        %5616 = vst.msk [vmem:[#allocation4 + $0x18] sm:$0x3] %vm5613, 0.0
        %5617 = vst.msk [vmem:[#allocation4 + $0x20] sm:$0xff] %vm5611, 0.0
        %5618 = vst.msk [vmem:[#allocation4 + $0x28] sm:$0x3] %vm5613, 0.0
        %5619 = vst.msk [vmem:[#allocation4 + $0x30] sm:$0xff] %vm5611, 0.0
        %5620 = vst.msk [vmem:[#allocation4 + $0x38] sm:$0x3] %vm5613, 0.0
        %5621 = vst.msk [vmem:[#allocation4 + $0x40] sm:$0xff] %vm5611, 0.0
        %5622 = vst.msk [vmem:[#allocation4 + $0x48] sm:$0x3] %vm5613, 0.0
        %5623 = vst.msk [vmem:[#allocation4 + $0x50] sm:$0xff] %vm5611, 0.0
        %5624 = vst.msk [vmem:[#allocation4 + $0x58] sm:$0x3] %vm5613, 0.0
        %5625 = vst.msk [vmem:[#allocation4 + $0x60] sm:$0xff] %vm5611, 0.0
        %5626 = vst.msk [vmem:[#allocation4 + $0x68] sm:$0x3] %vm5613, 0.0
        %5627 = vst.msk [vmem:[#allocation4 + $0x70] sm:$0xff] %vm5611, 0.0
        %5628 = vst.msk [vmem:[#allocation4 + $0x78] sm:$0x3] %vm5613, 0.0
        %5629 = vst.msk [vmem:[#allocation4 + $0x80] sm:$0xff] %vm5611, 0.0
        %5630 = vst.msk [vmem:[#allocation4 + $0x88] sm:$0x3] %vm5613, 0.0
        %5631 = vst.msk [vmem:[#allocation4 + $0x90] sm:$0xff] %vm5611, 0.0
        %5632 = vst.msk [vmem:[#allocation4 + $0x98] sm:$0x3] %vm5613, 0.0
        %s5633 = scalar_lea.vmem [#allocation4], 16
        %5634 = vst.msk [vmem:[%s5633 + $0x1] sm:$0xff] %vm5611, %v5603
        %5635 = vst.msk [vmem:[%s5633 + $0x11] sm:$0xff] %vm5611, %v5604
        %5636 = vst.msk [vmem:[%s5633 + $0x21] sm:$0xff] %vm5611, %v5605
        %5637 = vst.msk [vmem:[%s5633 + $0x31] sm:$0xff] %vm5611, %v5606
        %5638 = vst.msk [vmem:[%s5633 + $0x41] sm:$0xff] %vm5611, %v5607
        %5639 = vst.msk [vmem:[%s5633 + $0x51] sm:$0xff] %vm5611, %v5608
        %5640 = vst.msk [vmem:[%s5633 + $0x61] sm:$0xff] %vm5611, %v5609
        %5641 = vst.msk [vmem:[%s5633 + $0x71] sm:$0xff] %vm5611, %v5610
        %v5642 = vld [vmem:[#allocation4] sm:$0xff]
        %v5643 = vld [vmem:[#allocation4 + $0x10] sm:$0xff]
        %v5644 = vld [vmem:[#allocation4 + $0x20] sm:$0xff]
        %v5645 = vld [vmem:[#allocation4 + $0x30] sm:$0xff]
        %v5646 = vld [vmem:[#allocation4 + $0x40] sm:$0xff]
        %v5647 = vld [vmem:[#allocation4 + $0x50] sm:$0xff]
        %v5648 = vld [vmem:[#allocation4 + $0x60] sm:$0xff]
        %v5649 = vld [vmem:[#allocation4 + $0x70] sm:$0xff]
        %5650 = vst.msk [vmem:[#allocation7] sm:$0xff] %vm5611, %v5642
        %5651 = vst.msk [vmem:[#allocation7 + $0x48] sm:$0xff] %vm5611, %v5643
        %5652 = vst.msk [vmem:[#allocation7 + $0x90] sm:$0xff] %vm5611, %v5644
        %5653 = vst.msk [vmem:[#allocation7 + $0xd8] sm:$0xff] %vm5611, %v5645
        %5654 = vst.msk [vmem:[#allocation7 + $0x120] sm:$0xff] %vm5611, %v5646
        %5655 = vst.msk [vmem:[#allocation7 + $0x168] sm:$0xff] %vm5611, %v5647
        %5656 = vst.msk [vmem:[#allocation7 + $0x1b0] sm:$0xff] %vm5611, %v5648
        %5657 = vst.msk [vmem:[#allocation7 + $0x1f8] sm:$0xff] %vm5611, %v5649
        %v5658 = vld [vmem:[#allocation4 + $0x1] sm:$0xff]
        %v5659 = vld [vmem:[#allocation4 + $0x11] sm:$0xff]
        %v5660 = vld [vmem:[#allocation4 + $0x21] sm:$0xff]
        %v5661 = vld [vmem:[#allocation4 + $0x31] sm:$0xff]
        %v5662 = vld [vmem:[#allocation4 + $0x41] sm:$0xff]
        %v5663 = vld [vmem:[#allocation4 + $0x51] sm:$0xff]
        %v5664 = vld [vmem:[#allocation4 + $0x61] sm:$0xff]
        %v5665 = vld [vmem:[#allocation4 + $0x71] sm:$0xff]
        %5674 = vrot.lane.b32.xlu0 %v5658, 64
        %v5675 = vpop.permute.xlu0 %5674
        %5676 = vrot.lane.b32.xlu0 %v5659, 64
        %v5677 = vpop.permute.xlu0 %5676
        %5678 = vrot.lane.b32.xlu0 %v5660, 64
        %v5679 = vpop.permute.xlu0 %5678
        %5680 = vrot.lane.b32.xlu0 %v5661, 64
        %v5681 = vpop.permute.xlu0 %5680
        %5682 = vrot.lane.b32.xlu0 %v5662, 64
        %v5683 = vpop.permute.xlu0 %5682
        %5684 = vrot.lane.b32.xlu0 %v5663, 64
        %v5685 = vpop.permute.xlu0 %5684
        %5686 = vrot.lane.b32.xlu0 %v5664, 64
        %v5687 = vpop.permute.xlu0 %5686
        %5688 = vrot.lane.b32.xlu0 %v5665, 64
        %v5689 = vpop.permute.xlu0 %5688
        %vm5698 = vcmask 1048064
        %5699 = vst.msk [vmem:[#allocation7] sm:$0xff] %vm5698, %v5675
        %5700 = vst.msk [vmem:[#allocation7 + $0x48] sm:$0xff] %vm5698, %v5677
        %5701 = vst.msk [vmem:[#allocation7 + $0x90] sm:$0xff] %vm5698, %v5679
        %5702 = vst.msk [vmem:[#allocation7 + $0xd8] sm:$0xff] %vm5698, %v5681
        %5703 = vst.msk [vmem:[#allocation7 + $0x120] sm:$0xff] %vm5698, %v5683
        %5704 = vst.msk [vmem:[#allocation7 + $0x168] sm:$0xff] %vm5698, %v5685
        %5705 = vst.msk [vmem:[#allocation7 + $0x1b0] sm:$0xff] %vm5698, %v5687
        %5706 = vst.msk [vmem:[#allocation7 + $0x1f8] sm:$0xff] %vm5698, %v5689
        %v5707 = vld [vmem:[#allocation4 + $0x2] sm:$0xff]
        %v5708 = vld [vmem:[#allocation4 + $0x12] sm:$0xff]
        %v5709 = vld [vmem:[#allocation4 + $0x22] sm:$0xff]
        %v5710 = vld [vmem:[#allocation4 + $0x32] sm:$0xff]
        %v5711 = vld [vmem:[#allocation4 + $0x42] sm:$0xff]
        %v5712 = vld [vmem:[#allocation4 + $0x52] sm:$0xff]
        %v5713 = vld [vmem:[#allocation4 + $0x62] sm:$0xff]
        %v5714 = vld [vmem:[#allocation4 + $0x72] sm:$0xff]
        %5715 = vst.msk [vmem:[#allocation7 + $0x8] sm:$0xff] %vm5611, %v5707
        %5716 = vst.msk [vmem:[#allocation7 + $0x50] sm:$0xff] %vm5611, %v5708
        %5717 = vst.msk [vmem:[#allocation7 + $0x98] sm:$0xff] %vm5611, %v5709
        %5718 = vst.msk [vmem:[#allocation7 + $0xe0] sm:$0xff] %vm5611, %v5710
        %5719 = vst.msk [vmem:[#allocation7 + $0x128] sm:$0xff] %vm5611, %v5711
        %5720 = vst.msk [vmem:[#allocation7 + $0x170] sm:$0xff] %vm5611, %v5712
        %5721 = vst.msk [vmem:[#allocation7 + $0x1b8] sm:$0xff] %vm5611, %v5713
        %5722 = vst.msk [vmem:[#allocation7 + $0x200] sm:$0xff] %vm5611, %v5714
        %v5723 = vld [vmem:[%s5633] sm:$0xff]
        %v5724 = vld [vmem:[%s5633 + $0x10] sm:$0xff]
        %v5725 = vld [vmem:[%s5633 + $0x20] sm:$0xff]
        %v5726 = vld [vmem:[%s5633 + $0x30] sm:$0xff]
        %v5727 = vld [vmem:[%s5633 + $0x40] sm:$0xff]
        %v5728 = vld [vmem:[%s5633 + $0x50] sm:$0xff]
        %v5729 = vld [vmem:[%s5633 + $0x60] sm:$0xff]
        %v5730 = vld [vmem:[%s5633 + $0x70] sm:$0xff]
        %5739 = vrot.lane.b32.xlu0 %v5723, 64
        %v5740 = vpop.permute.xlu0 %5739
        %5741 = vrot.lane.b32.xlu0 %v5724, 64
        %v5742 = vpop.permute.xlu0 %5741
        %5743 = vrot.lane.b32.xlu0 %v5725, 64
        %v5744 = vpop.permute.xlu0 %5743
        %5745 = vrot.lane.b32.xlu0 %v5726, 64
        %v5746 = vpop.permute.xlu0 %5745
        %5747 = vrot.lane.b32.xlu0 %v5727, 64
        %v5748 = vpop.permute.xlu0 %5747
        %5749 = vrot.lane.b32.xlu0 %v5728, 64
        %v5750 = vpop.permute.xlu0 %5749
        %5751 = vrot.lane.b32.xlu0 %v5729, 64
        %v5752 = vpop.permute.xlu0 %5751
        %5753 = vrot.lane.b32.xlu0 %v5730, 64
        %v5754 = vpop.permute.xlu0 %5753
        %5763 = vst.msk [vmem:[#allocation7 + $0x8] sm:$0xff] %vm5698, %v5740
        %5764 = vst.msk [vmem:[#allocation7 + $0x50] sm:$0xff] %vm5698, %v5742
        %5765 = vst.msk [vmem:[#allocation7 + $0x98] sm:$0xff] %vm5698, %v5744
        %5766 = vst.msk [vmem:[#allocation7 + $0xe0] sm:$0xff] %vm5698, %v5746
        %5767 = vst.msk [vmem:[#allocation7 + $0x128] sm:$0xff] %vm5698, %v5748
        %5768 = vst.msk [vmem:[#allocation7 + $0x170] sm:$0xff] %vm5698, %v5750
        %5769 = vst.msk [vmem:[#allocation7 + $0x1b8] sm:$0xff] %vm5698, %v5752
        %5770 = vst.msk [vmem:[#allocation7 + $0x200] sm:$0xff] %vm5698, %v5754
        %v5771 = vld [vmem:[%s5633 + $0x1] sm:$0xff]
        %v5772 = vld [vmem:[%s5633 + $0x11] sm:$0xff]
        %v5773 = vld [vmem:[%s5633 + $0x21] sm:$0xff]
        %v5774 = vld [vmem:[%s5633 + $0x31] sm:$0xff]
        %v5775 = vld [vmem:[%s5633 + $0x41] sm:$0xff]
        %v5776 = vld [vmem:[%s5633 + $0x51] sm:$0xff]
        %v5777 = vld [vmem:[%s5633 + $0x61] sm:$0xff]
        %v5778 = vld [vmem:[%s5633 + $0x71] sm:$0xff]
        %5779 = vst.msk [vmem:[#allocation7 + $0x10] sm:$0xff] %vm5611, %v5771
        %5780 = vst.msk [vmem:[#allocation7 + $0x58] sm:$0xff] %vm5611, %v5772
        %5781 = vst.msk [vmem:[#allocation7 + $0xa0] sm:$0xff] %vm5611, %v5773
        %5782 = vst.msk [vmem:[#allocation7 + $0xe8] sm:$0xff] %vm5611, %v5774
        %5783 = vst.msk [vmem:[#allocation7 + $0x130] sm:$0xff] %vm5611, %v5775
        %5784 = vst.msk [vmem:[#allocation7 + $0x178] sm:$0xff] %vm5611, %v5776
        %5785 = vst.msk [vmem:[#allocation7 + $0x1c0] sm:$0xff] %vm5611, %v5777
        %5786 = vst.msk [vmem:[#allocation7 + $0x208] sm:$0xff] %vm5611, %v5778
        %v5787 = vld [vmem:[%s5633 + $0x2] sm:$0xff]
        %v5788 = vld [vmem:[%s5633 + $0x12] sm:$0xff]
        %v5789 = vld [vmem:[%s5633 + $0x22] sm:$0xff]
        %v5790 = vld [vmem:[%s5633 + $0x32] sm:$0xff]
        %v5791 = vld [vmem:[%s5633 + $0x42] sm:$0xff]
        %v5792 = vld [vmem:[%s5633 + $0x52] sm:$0xff]
        %v5793 = vld [vmem:[%s5633 + $0x62] sm:$0xff]
        %v5794 = vld [vmem:[%s5633 + $0x72] sm:$0xff]
        %5803 = vrot.lane.b32.xlu0 %v5787, 64
        %v5804 = vpop.permute.xlu0 %5803
        %5805 = vrot.lane.b32.xlu0 %v5788, 64
        %v5806 = vpop.permute.xlu0 %5805
        %5807 = vrot.lane.b32.xlu0 %v5789, 64
        %v5808 = vpop.permute.xlu0 %5807
        %5809 = vrot.lane.b32.xlu0 %v5790, 64
        %v5810 = vpop.permute.xlu0 %5809
        %5811 = vrot.lane.b32.xlu0 %v5791, 64
        %v5812 = vpop.permute.xlu0 %5811
        %5813 = vrot.lane.b32.xlu0 %v5792, 64
        %v5814 = vpop.permute.xlu0 %5813
        %5815 = vrot.lane.b32.xlu0 %v5793, 64
        %v5816 = vpop.permute.xlu0 %5815
        %5817 = vrot.lane.b32.xlu0 %v5794, 64
        %v5818 = vpop.permute.xlu0 %5817
        %5827 = vst.msk [vmem:[#allocation7 + $0x10] sm:$0xff] %vm5698, %v5804
        %5828 = vst.msk [vmem:[#allocation7 + $0x58] sm:$0xff] %vm5698, %v5806
        %5829 = vst.msk [vmem:[#allocation7 + $0xa0] sm:$0xff] %vm5698, %v5808
        %5830 = vst.msk [vmem:[#allocation7 + $0xe8] sm:$0xff] %vm5698, %v5810
        %5831 = vst.msk [vmem:[#allocation7 + $0x130] sm:$0xff] %vm5698, %v5812
        %5832 = vst.msk [vmem:[#allocation7 + $0x178] sm:$0xff] %vm5698, %v5814
        %5833 = vst.msk [vmem:[#allocation7 + $0x1c0] sm:$0xff] %vm5698, %v5816
        %5834 = vst.msk [vmem:[#allocation7 + $0x208] sm:$0xff] %vm5698, %v5818
        %s5835 = scalar_lea.vmem [#allocation4], 32
        %v5836 = vld [vmem:[%s5835] sm:$0xff]
        %v5837 = vld [vmem:[%s5835 + $0x10] sm:$0xff]
        %v5838 = vld [vmem:[%s5835 + $0x20] sm:$0xff]
        %v5839 = vld [vmem:[%s5835 + $0x30] sm:$0xff]
        %v5840 = vld [vmem:[%s5835 + $0x40] sm:$0xff]
        %v5841 = vld [vmem:[%s5835 + $0x50] sm:$0xff]
        %v5842 = vld [vmem:[%s5835 + $0x60] sm:$0xff]
        %v5843 = vld [vmem:[%s5835 + $0x70] sm:$0xff]
        %5844 = vst.msk [vmem:[#allocation7 + $0x18] sm:$0xff] %vm5611, %v5836
        %5845 = vst.msk [vmem:[#allocation7 + $0x60] sm:$0xff] %vm5611, %v5837
        %5846 = vst.msk [vmem:[#allocation7 + $0xa8] sm:$0xff] %vm5611, %v5838
        %5847 = vst.msk [vmem:[#allocation7 + $0xf0] sm:$0xff] %vm5611, %v5839
        %5848 = vst.msk [vmem:[#allocation7 + $0x138] sm:$0xff] %vm5611, %v5840
        %5849 = vst.msk [vmem:[#allocation7 + $0x180] sm:$0xff] %vm5611, %v5841
        %5850 = vst.msk [vmem:[#allocation7 + $0x1c8] sm:$0xff] %vm5611, %v5842
        %5851 = vst.msk [vmem:[#allocation7 + $0x210] sm:$0xff] %vm5611, %v5843
        %v5852 = vld [vmem:[%s5835 + $0x1] sm:$0xff]
        %v5853 = vld [vmem:[%s5835 + $0x11] sm:$0xff]
        %v5854 = vld [vmem:[%s5835 + $0x21] sm:$0xff]
        %v5855 = vld [vmem:[%s5835 + $0x31] sm:$0xff]
        %v5856 = vld [vmem:[%s5835 + $0x41] sm:$0xff]
        %v5857 = vld [vmem:[%s5835 + $0x51] sm:$0xff]
        %v5858 = vld [vmem:[%s5835 + $0x61] sm:$0xff]
        %v5859 = vld [vmem:[%s5835 + $0x71] sm:$0xff]
        %5868 = vrot.lane.b32.xlu0 %v5852, 64
        %v5869 = vpop.permute.xlu0 %5868
        %5870 = vrot.lane.b32.xlu0 %v5853, 64
        %v5871 = vpop.permute.xlu0 %5870
        %5872 = vrot.lane.b32.xlu0 %v5854, 64
        %v5873 = vpop.permute.xlu0 %5872
        %5874 = vrot.lane.b32.xlu0 %v5855, 64
        %v5875 = vpop.permute.xlu0 %5874
        %5876 = vrot.lane.b32.xlu0 %v5856, 64
        %v5877 = vpop.permute.xlu0 %5876
        %5878 = vrot.lane.b32.xlu0 %v5857, 64
        %v5879 = vpop.permute.xlu0 %5878
        %5880 = vrot.lane.b32.xlu0 %v5858, 64
        %v5881 = vpop.permute.xlu0 %5880
        %5882 = vrot.lane.b32.xlu0 %v5859, 64
        %v5883 = vpop.permute.xlu0 %5882
        %5892 = vst.msk [vmem:[#allocation7 + $0x18] sm:$0xff] %vm5698, %v5869
        %5893 = vst.msk [vmem:[#allocation7 + $0x60] sm:$0xff] %vm5698, %v5871
        %5894 = vst.msk [vmem:[#allocation7 + $0xa8] sm:$0xff] %vm5698, %v5873
        %5895 = vst.msk [vmem:[#allocation7 + $0xf0] sm:$0xff] %vm5698, %v5875
        %5896 = vst.msk [vmem:[#allocation7 + $0x138] sm:$0xff] %vm5698, %v5877
        %5897 = vst.msk [vmem:[#allocation7 + $0x180] sm:$0xff] %vm5698, %v5879
        %5898 = vst.msk [vmem:[#allocation7 + $0x1c8] sm:$0xff] %vm5698, %v5881
        %5899 = vst.msk [vmem:[#allocation7 + $0x210] sm:$0xff] %vm5698, %v5883
        %v5900 = vld [vmem:[%s5835 + $0x2] sm:$0xff]
        %v5901 = vld [vmem:[%s5835 + $0x12] sm:$0xff]
        %v5902 = vld [vmem:[%s5835 + $0x22] sm:$0xff]
        %v5903 = vld [vmem:[%s5835 + $0x32] sm:$0xff]
        %v5904 = vld [vmem:[%s5835 + $0x42] sm:$0xff]
        %v5905 = vld [vmem:[%s5835 + $0x52] sm:$0xff]
        %v5906 = vld [vmem:[%s5835 + $0x62] sm:$0xff]
        %v5907 = vld [vmem:[%s5835 + $0x72] sm:$0xff]
        %5908 = vst.msk [vmem:[#allocation7 + $0x20] sm:$0xff] %vm5611, %v5900
        %5909 = vst.msk [vmem:[#allocation7 + $0x68] sm:$0xff] %vm5611, %v5901
        %5910 = vst.msk [vmem:[#allocation7 + $0xb0] sm:$0xff] %vm5611, %v5902
        %5911 = vst.msk [vmem:[#allocation7 + $0xf8] sm:$0xff] %vm5611, %v5903
        %5912 = vst.msk [vmem:[#allocation7 + $0x140] sm:$0xff] %vm5611, %v5904
        %5913 = vst.msk [vmem:[#allocation7 + $0x188] sm:$0xff] %vm5611, %v5905
        %5914 = vst.msk [vmem:[#allocation7 + $0x1d0] sm:$0xff] %vm5611, %v5906
        %5915 = vst.msk [vmem:[#allocation7 + $0x218] sm:$0xff] %vm5611, %v5907
        %v5916 = vld [vmem:[#allocation7] sm:$0xff]
        %v5917 = vld [vmem:[#allocation7 + $0x8] sm:$0xff]
        %v5918 = vld [vmem:[#allocation7 + $0x10] sm:$0xff]
        %v5919 = vld [vmem:[#allocation7 + $0x18] sm:$0xff]
        %v5920 = vld [vmem:[#allocation7 + $0x20] sm:$0xff]
        %v5921 = vld [vmem:[#allocation7 + $0x48] sm:$0xff]
        %v5922 = vld [vmem:[#allocation7 + $0x50] sm:$0xff]
        %v5923 = vld [vmem:[#allocation7 + $0x58] sm:$0xff]
        %v5924 = vld [vmem:[#allocation7 + $0x60] sm:$0xff]
        %v5925 = vld [vmem:[#allocation7 + $0x68] sm:$0xff]
        %v5926 = vld [vmem:[#allocation7 + $0x90] sm:$0xff]
        %v5927 = vld [vmem:[#allocation7 + $0x98] sm:$0xff]
        %v5928 = vld [vmem:[#allocation7 + $0xa0] sm:$0xff]
        %v5929 = vld [vmem:[#allocation7 + $0xa8] sm:$0xff]
        %v5930 = vld [vmem:[#allocation7 + $0xb0] sm:$0xff]
        %v5931 = vld [vmem:[#allocation7 + $0xd8] sm:$0xff]
        %v5932 = vld [vmem:[#allocation7 + $0xe0] sm:$0xff]
        %v5933 = vld [vmem:[#allocation7 + $0xe8] sm:$0xff]
        %v5934 = vld [vmem:[#allocation7 + $0xf0] sm:$0xff]
        %v5935 = vld [vmem:[#allocation7 + $0xf8] sm:$0xff]
        %v5936 = vld [vmem:[#allocation7 + $0x120] sm:$0xff]
        %v5937 = vld [vmem:[#allocation7 + $0x128] sm:$0xff]
        %v5938 = vld [vmem:[#allocation7 + $0x130] sm:$0xff]
        %v5939 = vld [vmem:[#allocation7 + $0x138] sm:$0xff]
        %v5940 = vld [vmem:[#allocation7 + $0x140] sm:$0xff]
        %v5941 = vld [vmem:[#allocation7 + $0x168] sm:$0xff]
        %v5942 = vld [vmem:[#allocation7 + $0x170] sm:$0xff]
        %v5943 = vld [vmem:[#allocation7 + $0x178] sm:$0xff]
        %v5944 = vld [vmem:[#allocation7 + $0x180] sm:$0xff]
        %v5945 = vld [vmem:[#allocation7 + $0x188] sm:$0xff]
        %v5946 = vld [vmem:[#allocation7 + $0x1b0] sm:$0xff]
        %v5947 = vld [vmem:[#allocation7 + $0x1b8] sm:$0xff]
        %v5948 = vld [vmem:[#allocation7 + $0x1c0] sm:$0xff]
        %v5949 = vld [vmem:[#allocation7 + $0x1c8] sm:$0xff]
        %v5950 = vld [vmem:[#allocation7 + $0x1d0] sm:$0xff]
        %v5951 = vld [vmem:[#allocation7 + $0x1f8] sm:$0xff]
        %v5952 = vld [vmem:[#allocation7 + $0x200] sm:$0xff]
        %v5953 = vld [vmem:[#allocation7 + $0x208] sm:$0xff]
        %v5954 = vld [vmem:[#allocation7 + $0x210] sm:$0xff]
        %v5955 = vld [vmem:[#allocation7 + $0x218] sm:$0xff]
        %v5956 = vld [vmem:[%s7] sm:$0xff]
        %v5957 = vld [vmem:[%s7 + $0x8] sm:$0xff]
        %v5958 = vld [vmem:[%s7 + $0x10] sm:$0xff]
        %v5959 = vld [vmem:[%s7 + $0x18] sm:$0xff]
        %v5960 = vld [vmem:[%s7 + $0x20] sm:$0xff]
        %v5961 = vld [vmem:[%s7 + $0x28] sm:$0xff]
        %v5962 = vld [vmem:[%s7 + $0x30] sm:$0xff]
        %v5963 = vld [vmem:[%s7 + $0x38] sm:$0xff]
        %v5964 = vld [vmem:[%s7 + $0x40] sm:$0xff]
        %v5965 = vld [vmem:[%s7 + $0x48] sm:$0xff]
        %v5966 = vld [vmem:[%s7 + $0x50] sm:$0xff]
        %v5967 = vld [vmem:[%s7 + $0x58] sm:$0xff]
        %v5968 = vld [vmem:[%s7 + $0x60] sm:$0xff]
        %v5969 = vld [vmem:[%s7 + $0x68] sm:$0xff]
        %v5970 = vld [vmem:[%s7 + $0x70] sm:$0xff]
        %v5971 = vld [vmem:[%s7 + $0x78] sm:$0xff]
        %v5972 = vld [vmem:[%s7 + $0x80] sm:$0xff]
        %v5973 = vld [vmem:[%s7 + $0x88] sm:$0xff]
        %v5974 = vld [vmem:[%s7 + $0x90] sm:$0xff]
        %v5975 = vld [vmem:[%s7 + $0x98] sm:$0xff]
        %v5976 = vld [vmem:[%s7 + $0xa0] sm:$0xff]
        %v5977 = vld [vmem:[%s7 + $0xa8] sm:$0xff]
        %v5978 = vld [vmem:[%s7 + $0xb0] sm:$0xff]
        %v5979 = vld [vmem:[%s7 + $0xb8] sm:$0xff]
        %v5980 = vld [vmem:[%s7 + $0xc0] sm:$0xff]
        %v5981 = vld [vmem:[%s7 + $0xc8] sm:$0xff]
        %v5982 = vld [vmem:[%s7 + $0xd0] sm:$0xff]
        %v5983 = vld [vmem:[%s7 + $0xd8] sm:$0xff]
        %v5984 = vld [vmem:[%s7 + $0xe0] sm:$0xff]
        %v5985 = vld [vmem:[%s7 + $0xe8] sm:$0xff]
        %v5986 = vld [vmem:[%s7 + $0xf0] sm:$0xff]
        %v5987 = vld [vmem:[%s7 + $0xf8] sm:$0xff]
        %v5988 = vld [vmem:[%s7 + $0x100] sm:$0xff]
        %v5989 = vld [vmem:[%s7 + $0x108] sm:$0xff]
        %v5990 = vld [vmem:[%s7 + $0x110] sm:$0xff]
        %v5991 = vld [vmem:[%s7 + $0x118] sm:$0xff]
        %v5992 = vld [vmem:[%s7 + $0x120] sm:$0xff]
        %v5993 = vld [vmem:[%s7 + $0x128] sm:$0xff]
        %v5994 = vld [vmem:[%s7 + $0x130] sm:$0xff]
        %v5995 = vld [vmem:[%s7 + $0x138] sm:$0xff]
        %v5996 = vld [vmem:[%s7 + $0x140] sm:$0xff]
        %v5997 = vld [vmem:[%s7 + $0x148] sm:$0xff]
        %v5998 = vld [vmem:[%s7 + $0x150] sm:$0xff]
        %v5999 = vld [vmem:[%s7 + $0x158] sm:$0xff]
        %v6000 = vld [vmem:[%s7 + $0x160] sm:$0xff]
        %v6001 = vld [vmem:[%s7 + $0x168] sm:$0xff]
        %v6002 = vld [vmem:[%s7 + $0x170] sm:$0xff]
        %v6003 = vld [vmem:[%s7 + $0x178] sm:$0xff]
        %v6004 = vld [vmem:[%s7 + $0x180] sm:$0xff]
        %v6005 = vld [vmem:[%s7 + $0x188] sm:$0xff]
        %v6006 = vld [vmem:[%s7 + $0x190] sm:$0xff]
        %v6007 = vld [vmem:[%s7 + $0x198] sm:$0xff]
        %v6008 = vld [vmem:[%s7 + $0x1a0] sm:$0xff]
        %v6009 = vld [vmem:[%s7 + $0x1a8] sm:$0xff]
        %v6010 = vld [vmem:[%s7 + $0x1b0] sm:$0xff]
        %v6011 = vld [vmem:[%s7 + $0x1b8] sm:$0xff]
        %v6012 = vld [vmem:[%s7 + $0x1c0] sm:$0xff]
        %v6013 = vld [vmem:[%s7 + $0x1c8] sm:$0xff]
        %v6014 = vld [vmem:[%s7 + $0x1d0] sm:$0xff]
        %v6015 = vld [vmem:[%s7 + $0x1d8] sm:$0xff]
        %v6016 = vld [vmem:[%s7 + $0x1e0] sm:$0xff]
        %v6017 = vld [vmem:[%s7 + $0x1e8] sm:$0xff]
        %v6018 = vld [vmem:[%s7 + $0x1f0] sm:$0xff]
        %v6019 = vld [vmem:[%s7 + $0x1f8] sm:$0xff]
        %v6020 = vld [vmem:[%s7 + $0x200] sm:$0xff]
        %v6021 = vld [vmem:[%s7 + $0x208] sm:$0xff]
        %v6022 = vld [vmem:[%s7 + $0x210] sm:$0xff]
        %v6023 = vld [vmem:[%s7 + $0x218] sm:$0xff]
        %v6024 = vld [vmem:[%s7 + $0x220] sm:$0xff]
        %v6025 = vld [vmem:[%s7 + $0x228] sm:$0xff]
        %v6026 = vld [vmem:[%s7 + $0x230] sm:$0xff]
        %v6027 = vld [vmem:[%s7 + $0x238] sm:$0xff]
        %v6028 = vld [vmem:[%s8] sm:$0x1]
        %v6030 = vlaneseq
        %v6031 = vshrl.u32 %v6030, 7
        %v6032 = vsub.s32 0, %v6031
        %v6033 = vrot.slane %v6028, %v6032
        %v6036 = vsel %vm5611, %v5920, 0
        %v6039 = vsel %vm5611, %v5925, 0
        %v6042 = vsel %vm5611, %v5930, 0
        %v6045 = vsel %vm5611, %v5935, 0
        %v6048 = vsel %vm5611, %v5940, 0
        %v6051 = vsel %vm5611, %v5945, 0
        %v6054 = vsel %vm5611, %v5950, 0
        %v6057 = vsel %vm5611, %v5955, 0
        %6059 = vmatprep.subr.mxu0 0.0
        %6060 = vmatpush1.msra.mxu0 %v5956
        %6061 = vmatprep.subr.mxu0 0.0
        %6062 = vmatpush1.msra.mxu0 %v5957
        %6063 = vmatprep.subr.mxu0 0.0
        %6064 = vmatpush1.msra.mxu0 %v5958
        %6065 = vmatprep.subr.mxu0 0.0
        %6066 = vmatpush1.msra.mxu0 %v5959
        %6067 = vmatprep.subr.mxu0 0.0
        %6068 = vmatpush1.msra.mxu0 %v5960
        %6069 = vmatprep.subr.mxu0 0.0
        %6070 = vmatpush1.msra.mxu0 %v5961
        %6071 = vmatprep.subr.mxu0 0.0
        %6072 = vmatpush1.msra.mxu0 %v5962
        %6073 = vmatprep.subr.mxu0 0.0
        %6074 = vmatpush1.msra.mxu0 %v5963
        %6075 = vmatprep.subr.mxu0 0.0
        %6076 = vmatpush1.msra.mxu0 %v5964
        %6077 = vmatprep.subr.mxu0 0.0
        %6078 = vmatpush1.msra.mxu0 %v5965
        %6079 = vmatprep.subr.mxu0 0.0
        %6080 = vmatpush1.msra.mxu0 %v5966
        %6081 = vmatprep.subr.mxu0 0.0
        %6082 = vmatpush1.msra.mxu0 %v5967
        %6083 = vmatprep.subr.mxu0 0.0
        %6084 = vmatpush1.msra.mxu0 %v5968
        %6085 = vmatprep.subr.mxu0 0.0
        %6086 = vmatpush1.msra.mxu0 %v5969
        %6087 = vmatprep.subr.mxu0 0.0
        %6088 = vmatpush1.msra.mxu0 %v5970
        %6089 = vmatprep.subr.mxu0 0.0
        %6090 = vmatpush1.msra.mxu0 %v5971
        %6091 = vmatprep.subr.mxu0 0.0
        %6092 = vmatpush1.msra.mxu0 %v5972
        %6093 = vmatprep.subr.mxu0 0.0
        %6094 = vmatpush1.msra.mxu0 %v5973
        %6095 = vmatprep.subr.mxu0 0.0
        %6096 = vmatpush1.msra.mxu0 %v5974
        %6097 = vmatprep.subr.mxu0 0.0
        %6098 = vmatpush1.msra.mxu0 %v5975
        %6099 = vmatprep.subr.mxu0 0.0
        %6100 = vmatpush1.msra.mxu0 %v5976
        %6101 = vmatprep.subr.mxu0 0.0
        %6102 = vmatpush1.msra.mxu0 %v5977
        %6103 = vmatprep.subr.mxu0 0.0
        %6104 = vmatpush1.msra.mxu0 %v5978
        %6105 = vmatprep.subr.mxu0 0.0
        %6106 = vmatpush1.msra.mxu0 %v5979
        %6107 = vmatprep.subr.mxu0 0.0
        %6108 = vmatpush1.msra.mxu0 %v5980
        %6109 = vmatprep.subr.mxu0 0.0
        %6110 = vmatpush1.msra.mxu0 %v5981
        %6111 = vmatprep.subr.mxu0 0.0
        %6112 = vmatpush1.msra.mxu0 %v5982
        %6113 = vmatprep.subr.mxu0 0.0
        %6114 = vmatpush1.msra.mxu0 %v5983
        %6115 = vmatprep.subr.mxu0 0.0
        %6116 = vmatpush1.msra.mxu0 %v5984
        %6117 = vmatprep.subr.mxu0 0.0
        %6118 = vmatpush1.msra.mxu0 %v5985
        %6119 = vmatprep.subr.mxu0 0.0
        %6120 = vmatpush1.msra.mxu0 %v5986
        %6121 = vmatprep.subr.mxu0 0.0
        %6122 = vmatpush1.msra.mxu0 %v5987
        %6123 = vmatprep.mubr.f32.mxu0 %v5917
        %6124 = vmatmul.mubr.f32.gmra.mrb[0].mxu0 %v5916
        %v6125 = vpop.f32.mrb[0].mxu0
        %v6126 = vadd.f32 %v6033, %v6125
        %v6127 = vpop.f32.mrb[0].mxu0
        %6128 = vmatprep.mubr.f32.mxu0 %v5922
        %6129 = vmatmul.mubr.f32.gmra.mrb[0].mxu0 %v5921
        %v6130 = vpop.f32.mrb[0].mxu0
        %v6131 = vadd.f32 %v6033, %v6130
        %v6132 = vpop.f32.mrb[0].mxu0
        %6133 = vmatprep.mubr.f32.mxu0 %v5927
        %6134 = vmatmul.mubr.f32.gmra.mrb[0].mxu0 %v5926
        %v6135 = vpop.f32.mrb[0].mxu0
        %v6136 = vadd.f32 %v6033, %v6135
        %v6137 = vpop.f32.mrb[0].mxu0
        %6138 = vmatprep.mubr.f32.mxu0 %v5932
        %6139 = vmatmul.mubr.f32.gmra.mrb[0].mxu0 %v5931
        %v6140 = vpop.f32.mrb[0].mxu0
        %v6141 = vadd.f32 %v6033, %v6140
        %v6142 = vpop.f32.mrb[0].mxu0
        %6143 = vmatprep.mubr.f32.mxu0 %v5937
        %6144 = vmatmul.mubr.f32.gmra.mrb[0].mxu0 %v5936
        %v6145 = vpop.f32.mrb[0].mxu0
        %v6146 = vadd.f32 %v6033, %v6145
        %v6147 = vpop.f32.mrb[0].mxu0
        %6148 = vmatprep.mubr.f32.mxu0 %v5942
        %6149 = vmatmul.mubr.f32.gmra.mrb[0].mxu0 %v5941
        %v6150 = vpop.f32.mrb[0].mxu0
        %v6151 = vadd.f32 %v6033, %v6150
        %v6152 = vpop.f32.mrb[0].mxu0
        %6153 = vmatprep.mubr.f32.mxu0 %v5947
        %6154 = vmatmul.mubr.f32.gmra.mrb[0].mxu0 %v5946
        %v6155 = vpop.f32.mrb[0].mxu0
        %v6156 = vadd.f32 %v6033, %v6155
        %v6157 = vpop.f32.mrb[0].mxu0
        %6158 = vmatprep.mubr.f32.mxu0 %v5952
        %6159 = vmatmul.mubr.f32.gmra.mrb[0].mxu0 %v5951
        %v6160 = vpop.f32.mrb[0].mxu0
        %v6161 = vadd.f32 %v6033, %v6160
        %v6162 = vpop.f32.mrb[0].mxu0
        %6163 = vdwg.mxu0
        %6164 = vmatprep.subr.mxu0 0.0
        %6165 = vmatpush1.msra.mxu0 %v5988
        %6166 = vmatprep.subr.mxu0 0.0
        %6167 = vmatpush1.msra.mxu0 %v5989
        %6168 = vmatprep.subr.mxu0 0.0
        %6169 = vmatpush1.msra.mxu0 %v5990
        %6170 = vmatprep.subr.mxu0 0.0
        %6171 = vmatpush1.msra.mxu0 %v5991
        %6172 = vmatprep.subr.mxu0 0.0
        %6173 = vmatpush1.msra.mxu0 %v5992
        %6174 = vmatprep.subr.mxu0 0.0
        %6175 = vmatpush1.msra.mxu0 %v5993
        %6176 = vmatprep.subr.mxu0 0.0
        %6177 = vmatpush1.msra.mxu0 %v5994
        %6178 = vmatprep.subr.mxu0 0.0
        %6179 = vmatpush1.msra.mxu0 %v5995
        %6180 = vmatprep.subr.mxu0 0.0
        %6181 = vmatpush1.msra.mxu0 %v5996
        %6182 = vmatprep.subr.mxu0 0.0
        %6183 = vmatpush1.msra.mxu0 %v5997
        %6184 = vmatprep.subr.mxu0 0.0
        %6185 = vmatpush1.msra.mxu0 %v5998
        %6186 = vmatprep.subr.mxu0 0.0
        %6187 = vmatpush1.msra.mxu0 %v5999
        %6188 = vmatprep.subr.mxu0 0.0
        %6189 = vmatpush1.msra.mxu0 %v6000
        %6190 = vmatprep.subr.mxu0 0.0
        %6191 = vmatpush1.msra.mxu0 %v6001
        %6192 = vmatprep.subr.mxu0 0.0
        %6193 = vmatpush1.msra.mxu0 %v6002
        %6194 = vmatprep.subr.mxu0 0.0
        %6195 = vmatpush1.msra.mxu0 %v6003
        %6196 = vmatprep.subr.mxu0 0.0
        %6197 = vmatpush1.msra.mxu0 %v6004
        %6198 = vmatprep.subr.mxu0 0.0
        %6199 = vmatpush1.msra.mxu0 %v6005
        %6200 = vmatprep.subr.mxu0 0.0
        %6201 = vmatpush1.msra.mxu0 %v6006
        %6202 = vmatprep.subr.mxu0 0.0
        %6203 = vmatpush1.msra.mxu0 %v6007
        %6204 = vmatprep.subr.mxu0 0.0
        %6205 = vmatpush1.msra.mxu0 %v6008
        %6206 = vmatprep.subr.mxu0 0.0
        %6207 = vmatpush1.msra.mxu0 %v6009
        %6208 = vmatprep.subr.mxu0 0.0
        %6209 = vmatpush1.msra.mxu0 %v6010
        %6210 = vmatprep.subr.mxu0 0.0
        %6211 = vmatpush1.msra.mxu0 %v6011
        %6212 = vmatprep.subr.mxu0 0.0
        %6213 = vmatpush1.msra.mxu0 %v6012
        %6214 = vmatprep.subr.mxu0 0.0
        %6215 = vmatpush1.msra.mxu0 %v6013
        %6216 = vmatprep.subr.mxu0 0.0
        %6217 = vmatpush1.msra.mxu0 %v6014
        %6218 = vmatprep.subr.mxu0 0.0
        %6219 = vmatpush1.msra.mxu0 %v6015
        %6220 = vmatprep.subr.mxu0 0.0
        %6221 = vmatpush1.msra.mxu0 %v6016
        %6222 = vmatprep.subr.mxu0 0.0
        %6223 = vmatpush1.msra.mxu0 %v6017
        %6224 = vmatprep.subr.mxu0 0.0
        %6225 = vmatpush1.msra.mxu0 %v6018
        %6226 = vmatprep.subr.mxu0 0.0
        %6227 = vmatpush1.msra.mxu0 %v6019
        %6228 = vmatprep.mubr.f32.mxu0 %v5919
        %6229 = vmatmul.mubr.f32.gmra.mrb[0].mxu0 %v5918
        %v6230 = vpop.f32.mrb[0].mxu0
        %v6231 = vadd.f32 %v6126, %v6230
        %v6232 = vpop.f32.mrb[0].mxu0
        %6233 = vmatprep.mubr.f32.mxu0 %v5924
        %6234 = vmatmul.mubr.f32.gmra.mrb[0].mxu0 %v5923
        %v6235 = vpop.f32.mrb[0].mxu0
        %v6236 = vadd.f32 %v6131, %v6235
        %v6237 = vpop.f32.mrb[0].mxu0
        %6238 = vmatprep.mubr.f32.mxu0 %v5929
        %6239 = vmatmul.mubr.f32.gmra.mrb[0].mxu0 %v5928
        %v6240 = vpop.f32.mrb[0].mxu0
        %v6241 = vadd.f32 %v6136, %v6240
        %v6242 = vpop.f32.mrb[0].mxu0
        %6243 = vmatprep.mubr.f32.mxu0 %v5934
        %6244 = vmatmul.mubr.f32.gmra.mrb[0].mxu0 %v5933
        %v6245 = vpop.f32.mrb[0].mxu0
        %v6246 = vadd.f32 %v6141, %v6245
        %v6247 = vpop.f32.mrb[0].mxu0
        %6248 = vmatprep.mubr.f32.mxu0 %v5939
        %6249 = vmatmul.mubr.f32.gmra.mrb[0].mxu0 %v5938
        %v6250 = vpop.f32.mrb[0].mxu0
        %v6251 = vadd.f32 %v6146, %v6250
        %v6252 = vpop.f32.mrb[0].mxu0
        %6253 = vmatprep.mubr.f32.mxu0 %v5944
        %6254 = vmatmul.mubr.f32.gmra.mrb[0].mxu0 %v5943
        %v6255 = vpop.f32.mrb[0].mxu0
        %v6256 = vadd.f32 %v6151, %v6255
        %v6257 = vpop.f32.mrb[0].mxu0
        %6258 = vmatprep.mubr.f32.mxu0 %v5949
        %6259 = vmatmul.mubr.f32.gmra.mrb[0].mxu0 %v5948
        %v6260 = vpop.f32.mrb[0].mxu0
        %v6261 = vadd.f32 %v6156, %v6260
        %v6262 = vpop.f32.mrb[0].mxu0
        %6263 = vmatprep.mubr.f32.mxu0 %v5954
        %6264 = vmatmul.mubr.f32.gmra.mrb[0].mxu0 %v5953
        %v6265 = vpop.f32.mrb[0].mxu0
        %v6266 = vadd.f32 %v6161, %v6265
        %v6267 = vpop.f32.mrb[0].mxu0
        %6268 = vdwg.mxu0
        %6269 = vmatprep.subr.mxu0 0.0
        %6270 = vmatpush1.msra.mxu0 %v6020
        %6271 = vmatprep.subr.mxu0 0.0
        %6272 = vmatpush1.msra.mxu0 %v6021
        %6273 = vmatprep.subr.mxu0 0.0
        %6274 = vmatpush1.msra.mxu0 %v6022
        %6275 = vmatprep.subr.mxu0 0.0
        %6276 = vmatpush1.msra.mxu0 %v6023
        %6277 = vmatprep.subr.mxu0 0.0
        %6278 = vmatpush1.msra.mxu0 %v6024
        %6279 = vmatprep.subr.mxu0 0.0
        %6280 = vmatpush1.msra.mxu0 %v6025
        %6281 = vmatprep.subr.mxu0 0.0
        %6282 = vmatpush1.msra.mxu0 %v6026
        %6283 = vmatprep.subr.mxu0 0.0
        %6284 = vmatpush1.msra.mxu0 %v6027
        %6285 = vmatprep.subr.mxu0 0.0
        %6286 = vmatpush1.msra.mxu0 0.0
        %6287 = vmatprep.subr.mxu0 0.0
        %6288 = vmatpush1.msra.mxu0 0.0
        %6289 = vmatprep.subr.mxu0 0.0
        %6290 = vmatpush1.msra.mxu0 0.0
        %6291 = vmatprep.subr.mxu0 0.0
        %6292 = vmatpush1.msra.mxu0 0.0
        %6293 = vmatprep.subr.mxu0 0.0
        %6294 = vmatpush1.msra.mxu0 0.0
        %6295 = vmatprep.subr.mxu0 0.0
        %6296 = vmatpush1.msra.mxu0 0.0
        %6297 = vmatprep.subr.mxu0 0.0
        %6298 = vmatpush1.msra.mxu0 0.0
        %6299 = vmatprep.subr.mxu0 0.0
        %6300 = vmatpush1.msra.mxu0 0.0
        %6301 = vmatprep.subr.mxu0 0.0
        %6302 = vmatpush1.msra.mxu0 0.0
        %6303 = vmatprep.subr.mxu0 0.0
        %6304 = vmatpush1.msra.mxu0 0.0
        %6305 = vmatprep.subr.mxu0 0.0
        %6306 = vmatpush1.msra.mxu0 0.0
        %6307 = vmatprep.subr.mxu0 0.0
        %6308 = vmatpush1.msra.mxu0 0.0
        %6309 = vmatprep.subr.mxu0 0.0
        %6310 = vmatpush1.msra.mxu0 0.0
        %6311 = vmatprep.subr.mxu0 0.0
        %6312 = vmatpush1.msra.mxu0 0.0
        %6313 = vmatprep.subr.mxu0 0.0
        %6314 = vmatpush1.msra.mxu0 0.0
        %6315 = vmatprep.subr.mxu0 0.0
        %6316 = vmatpush1.msra.mxu0 0.0
        %6317 = vmatprep.subr.mxu0 0.0
        %6318 = vmatpush1.msra.mxu0 0.0
        %6319 = vmatprep.subr.mxu0 0.0
        %6320 = vmatpush1.msra.mxu0 0.0
        %6321 = vmatprep.subr.mxu0 0.0
        %6322 = vmatpush1.msra.mxu0 0.0
        %6323 = vmatprep.subr.mxu0 0.0
        %6324 = vmatpush1.msra.mxu0 0.0
        %6325 = vmatprep.subr.mxu0 0.0
        %6326 = vmatpush1.msra.mxu0 0.0
        %6327 = vmatprep.subr.mxu0 0.0
        %6328 = vmatpush1.msra.mxu0 0.0
        %6329 = vmatprep.subr.mxu0 0.0
        %6330 = vmatpush1.msra.mxu0 0.0
        %6331 = vmatprep.subr.mxu0 0.0
        %6332 = vmatpush1.msra.mxu0 0.0
        %6333 = vmatprep.mubr.f32.mxu0 0.0
        %6334 = vmatmul.mubr.f32.gmra.mrb[0].mxu0 %v6036
        %v6335 = vpop.f32.mrb[0].mxu0
        %v6336 = vadd.f32 %v6231, %v6335
        %v6337 = vpop.f32.mrb[0].mxu0
        %6338 = vmatprep.mubr.f32.mxu0 0.0
        %6339 = vmatmul.mubr.f32.gmra.mrb[0].mxu0 %v6039
        %v6340 = vpop.f32.mrb[0].mxu0
        %v6341 = vadd.f32 %v6236, %v6340
        %v6342 = vpop.f32.mrb[0].mxu0
        %6343 = vmatprep.mubr.f32.mxu0 0.0
        %6344 = vmatmul.mubr.f32.gmra.mrb[0].mxu0 %v6042
        %v6345 = vpop.f32.mrb[0].mxu0
        %v6346 = vadd.f32 %v6241, %v6345
        %v6347 = vpop.f32.mrb[0].mxu0
        %6348 = vmatprep.mubr.f32.mxu0 0.0
        %6349 = vmatmul.mubr.f32.gmra.mrb[0].mxu0 %v6045
        %v6350 = vpop.f32.mrb[0].mxu0
        %v6351 = vadd.f32 %v6246, %v6350
        %v6352 = vpop.f32.mrb[0].mxu0
        %6353 = vmatprep.mubr.f32.mxu0 0.0
        %6354 = vmatmul.mubr.f32.gmra.mrb[0].mxu0 %v6048
        %v6355 = vpop.f32.mrb[0].mxu0
        %v6356 = vadd.f32 %v6251, %v6355
        %v6357 = vpop.f32.mrb[0].mxu0
        %6358 = vmatprep.mubr.f32.mxu0 0.0
        %6359 = vmatmul.mubr.f32.gmra.mrb[0].mxu0 %v6051
        %v6360 = vpop.f32.mrb[0].mxu0
        %v6361 = vadd.f32 %v6256, %v6360
        %v6362 = vpop.f32.mrb[0].mxu0
        %6363 = vmatprep.mubr.f32.mxu0 0.0
        %6364 = vmatmul.mubr.f32.gmra.mrb[0].mxu0 %v6054
        %v6365 = vpop.f32.mrb[0].mxu0
        %v6366 = vadd.f32 %v6261, %v6365
        %v6367 = vpop.f32.mrb[0].mxu0
        %6368 = vmatprep.mubr.f32.mxu0 0.0
        %6369 = vmatmul.mubr.f32.gmra.mrb[0].mxu0 %v6057
        %v6370 = vpop.f32.mrb[0].mxu0
        %v6371 = vadd.f32 %v6266, %v6370
        %v6372 = vpop.f32.mrb[0].mxu0
        %6373 = vdwg.mxu0
        %v6374 = vmax.f32 %v6336, 0.0
        %v6375 = vmax.f32 %v6341, 0.0
        %v6376 = vmax.f32 %v6346, 0.0
        %v6377 = vmax.f32 %v6351, 0.0
        %v6378 = vmax.f32 %v6356, 0.0
        %v6379 = vmax.f32 %v6361, 0.0
        %v6380 = vmax.f32 %v6366, 0.0
        %v6381 = vmax.f32 %v6371, 0.0
        %6382 = vst.msk [vmem:[%s498] sm:$0xff] %vm5611, %v6374
        %6383 = vst.msk [vmem:[%s498 + $0x8] sm:$0xff] %vm5611, %v6375
        %6384 = vst.msk [vmem:[%s498 + $0x10] sm:$0xff] %vm5611, %v6376
        %6385 = vst.msk [vmem:[%s498 + $0x18] sm:$0xff] %vm5611, %v6377
        %6386 = vst.msk [vmem:[%s498 + $0x20] sm:$0xff] %vm5611, %v6378
        %6387 = vst.msk [vmem:[%s498 + $0x28] sm:$0xff] %vm5611, %v6379
        %6388 = vst.msk [vmem:[%s498 + $0x30] sm:$0xff] %vm5611, %v6380
        %6389 = vst.msk [vmem:[%s498 + $0x38] sm:$0xff] %vm5611, %v6381
        %v6398 = vcombine.high %v6374, %v6374
        %v6400 = vunpack.c.l.s4 1983009808
        %v6401 = vunpack.c.0.s8 %v6400
        %v6402 = vlaneseq
        %v6403 = vshrl.u32 %v6402, 7
        %v6404 = vsub.s32 %v6401, %v6403
        %v6405 = vrot.slane %v6374, %v6404
        %v6407 = vunpack.c.l.s4 1983009808
        %v6408 = vunpack.c.0.s8 %v6407
        %v6409 = vlaneseq
        %v6410 = vshrl.u32 %v6409, 7
        %v6411 = vsub.s32 %v6408, %v6410
        %v6412 = vrot.slane %v6398, %v6411
        %v6413 = vcombine.high %v6405, %v6405
        %v6414 = vcombine.high %v6412, %v6412
        %v6415 = vcombine.high %v6375, %v6375
        %v6417 = vunpack.c.l.s4 1983009808
        %v6418 = vunpack.c.0.s8 %v6417
        %v6419 = vlaneseq
        %v6420 = vshrl.u32 %v6419, 7
        %v6421 = vsub.s32 %v6418, %v6420
        %v6422 = vrot.slane %v6375, %v6421
        %v6424 = vunpack.c.l.s4 1983009808
        %v6425 = vunpack.c.0.s8 %v6424
        %v6426 = vlaneseq
        %v6427 = vshrl.u32 %v6426, 7
        %v6428 = vsub.s32 %v6425, %v6427
        %v6429 = vrot.slane %v6415, %v6428
        %v6430 = vcombine.high %v6422, %v6422
        %v6431 = vcombine.high %v6429, %v6429
        %v6432 = vcombine.high %v6376, %v6376
        %v6434 = vunpack.c.l.s4 1983009808
        %v6435 = vunpack.c.0.s8 %v6434
        %v6436 = vlaneseq
        %v6437 = vshrl.u32 %v6436, 7
        %v6438 = vsub.s32 %v6435, %v6437
        %v6439 = vrot.slane %v6376, %v6438
        %v6441 = vunpack.c.l.s4 1983009808
        %v6442 = vunpack.c.0.s8 %v6441
        %v6443 = vlaneseq
        %v6444 = vshrl.u32 %v6443, 7
        %v6445 = vsub.s32 %v6442, %v6444
        %v6446 = vrot.slane %v6432, %v6445
        %v6447 = vcombine.high %v6439, %v6439
        %v6448 = vcombine.high %v6446, %v6446
        %v6449 = vcombine.high %v6377, %v6377
        %v6451 = vunpack.c.l.s4 1983009808
        %v6452 = vunpack.c.0.s8 %v6451
        %v6453 = vlaneseq
        %v6454 = vshrl.u32 %v6453, 7
        %v6455 = vsub.s32 %v6452, %v6454
        %v6456 = vrot.slane %v6377, %v6455
        %v6458 = vunpack.c.l.s4 1983009808
        %v6459 = vunpack.c.0.s8 %v6458
        %v6460 = vlaneseq
        %v6461 = vshrl.u32 %v6460, 7
        %v6462 = vsub.s32 %v6459, %v6461
        %v6463 = vrot.slane %v6449, %v6462
        %v6464 = vcombine.high %v6456, %v6456
        %v6465 = vcombine.high %v6463, %v6463
        %v6466 = vcombine.high %v6378, %v6378
        %v6468 = vunpack.c.l.s4 1983009808
        %v6469 = vunpack.c.0.s8 %v6468
        %v6470 = vlaneseq
        %v6471 = vshrl.u32 %v6470, 7
        %v6472 = vsub.s32 %v6469, %v6471
        %v6473 = vrot.slane %v6378, %v6472
        %v6475 = vunpack.c.l.s4 1983009808
        %v6476 = vunpack.c.0.s8 %v6475
        %v6477 = vlaneseq
        %v6478 = vshrl.u32 %v6477, 7
        %v6479 = vsub.s32 %v6476, %v6478
        %v6480 = vrot.slane %v6466, %v6479
        %v6481 = vcombine.high %v6473, %v6473
        %v6482 = vcombine.high %v6480, %v6480
        %v6483 = vcombine.high %v6379, %v6379
        %v6485 = vunpack.c.l.s4 1983009808
        %v6486 = vunpack.c.0.s8 %v6485
        %v6487 = vlaneseq
        %v6488 = vshrl.u32 %v6487, 7
        %v6489 = vsub.s32 %v6486, %v6488
        %v6490 = vrot.slane %v6379, %v6489
        %v6492 = vunpack.c.l.s4 1983009808
        %v6493 = vunpack.c.0.s8 %v6492
        %v6494 = vlaneseq
        %v6495 = vshrl.u32 %v6494, 7
        %v6496 = vsub.s32 %v6493, %v6495
        %v6497 = vrot.slane %v6483, %v6496
        %v6498 = vcombine.high %v6490, %v6490
        %v6499 = vcombine.high %v6497, %v6497
        %v6500 = vcombine.high %v6380, %v6380
        %v6502 = vunpack.c.l.s4 1983009808
        %v6503 = vunpack.c.0.s8 %v6502
        %v6504 = vlaneseq
        %v6505 = vshrl.u32 %v6504, 7
        %v6506 = vsub.s32 %v6503, %v6505
        %v6507 = vrot.slane %v6380, %v6506
        %v6509 = vunpack.c.l.s4 1983009808
        %v6510 = vunpack.c.0.s8 %v6509
        %v6511 = vlaneseq
        %v6512 = vshrl.u32 %v6511, 7
        %v6513 = vsub.s32 %v6510, %v6512
        %v6514 = vrot.slane %v6500, %v6513
        %v6515 = vcombine.high %v6507, %v6507
        %v6516 = vcombine.high %v6514, %v6514
        %v6517 = vcombine.high %v6381, %v6381
        %v6519 = vunpack.c.l.s4 1983009808
        %v6520 = vunpack.c.0.s8 %v6519
        %v6521 = vlaneseq
        %v6522 = vshrl.u32 %v6521, 7
        %v6523 = vsub.s32 %v6520, %v6522
        %v6524 = vrot.slane %v6381, %v6523
        %v6526 = vunpack.c.l.s4 1983009808
        %v6527 = vunpack.c.0.s8 %v6526
        %v6528 = vlaneseq
        %v6529 = vshrl.u32 %v6528, 7
        %v6530 = vsub.s32 %v6527, %v6529
        %v6531 = vrot.slane %v6517, %v6530
        %v6532 = vcombine.high %v6524, %v6524
        %v6533 = vcombine.high %v6531, %v6531
        %v6566 = vsel %vm5613, %v6405, -inf
        %v6567 = vrot.slane %v6566, 4
        %v6568 = vmax.f32 %v6566, %v6567
        %v6569 = vrot.slane %v6568, 2
        %v6570 = vmax.f32 %v6568, %v6569
        %v6571 = vrot.slane %v6570, 1
        %v6572 = vmax.f32 %v6570, %v6571
        %v6573 = vsel %vm5613, %v6413, -inf
        %v6574 = vrot.slane %v6573, 4
        %v6575 = vmax.f32 %v6573, %v6574
        %v6576 = vrot.slane %v6575, 2
        %v6577 = vmax.f32 %v6575, %v6576
        %v6578 = vrot.slane %v6577, 1
        %v6579 = vmax.f32 %v6577, %v6578
        %v6580 = vsel %vm5613, %v6412, -inf
        %v6581 = vrot.slane %v6580, 4
        %v6582 = vmax.f32 %v6580, %v6581
        %v6583 = vrot.slane %v6582, 2
        %v6584 = vmax.f32 %v6582, %v6583
        %v6585 = vrot.slane %v6584, 1
        %v6586 = vmax.f32 %v6584, %v6585
        %v6587 = vsel %vm5613, %v6414, -inf
        %v6588 = vrot.slane %v6587, 4
        %v6589 = vmax.f32 %v6587, %v6588
        %v6590 = vrot.slane %v6589, 2
        %v6591 = vmax.f32 %v6589, %v6590
        %v6592 = vrot.slane %v6591, 1
        %v6593 = vmax.f32 %v6591, %v6592
        %v6594 = vsel %vm5613, %v6422, -inf
        %v6595 = vrot.slane %v6594, 4
        %v6596 = vmax.f32 %v6594, %v6595
        %v6597 = vrot.slane %v6596, 2
        %v6598 = vmax.f32 %v6596, %v6597
        %v6599 = vrot.slane %v6598, 1
        %v6600 = vmax.f32 %v6598, %v6599
        %v6601 = vsel %vm5613, %v6430, -inf
        %v6602 = vrot.slane %v6601, 4
        %v6603 = vmax.f32 %v6601, %v6602
        %v6604 = vrot.slane %v6603, 2
        %v6605 = vmax.f32 %v6603, %v6604
        %v6606 = vrot.slane %v6605, 1
        %v6607 = vmax.f32 %v6605, %v6606
        %v6608 = vsel %vm5613, %v6429, -inf
        %v6609 = vrot.slane %v6608, 4
        %v6610 = vmax.f32 %v6608, %v6609
        %v6611 = vrot.slane %v6610, 2
        %v6612 = vmax.f32 %v6610, %v6611
        %v6613 = vrot.slane %v6612, 1
        %v6614 = vmax.f32 %v6612, %v6613
        %v6615 = vsel %vm5613, %v6431, -inf
        %v6616 = vrot.slane %v6615, 4
        %v6617 = vmax.f32 %v6615, %v6616
        %v6618 = vrot.slane %v6617, 2
        %v6619 = vmax.f32 %v6617, %v6618
        %v6620 = vrot.slane %v6619, 1
        %v6621 = vmax.f32 %v6619, %v6620
        %v6622 = vsel %vm5613, %v6439, -inf
        %v6623 = vrot.slane %v6622, 4
        %v6624 = vmax.f32 %v6622, %v6623
        %v6625 = vrot.slane %v6624, 2
        %v6626 = vmax.f32 %v6624, %v6625
        %v6627 = vrot.slane %v6626, 1
        %v6628 = vmax.f32 %v6626, %v6627
        %v6629 = vsel %vm5613, %v6447, -inf
        %v6630 = vrot.slane %v6629, 4
        %v6631 = vmax.f32 %v6629, %v6630
        %v6632 = vrot.slane %v6631, 2
        %v6633 = vmax.f32 %v6631, %v6632
        %v6634 = vrot.slane %v6633, 1
        %v6635 = vmax.f32 %v6633, %v6634
        %v6636 = vsel %vm5613, %v6446, -inf
        %v6637 = vrot.slane %v6636, 4
        %v6638 = vmax.f32 %v6636, %v6637
        %v6639 = vrot.slane %v6638, 2
        %v6640 = vmax.f32 %v6638, %v6639
        %v6641 = vrot.slane %v6640, 1
        %v6642 = vmax.f32 %v6640, %v6641
        %v6643 = vsel %vm5613, %v6448, -inf
        %v6644 = vrot.slane %v6643, 4
        %v6645 = vmax.f32 %v6643, %v6644
        %v6646 = vrot.slane %v6645, 2
        %v6647 = vmax.f32 %v6645, %v6646
        %v6648 = vrot.slane %v6647, 1
        %v6649 = vmax.f32 %v6647, %v6648
        %v6650 = vsel %vm5613, %v6456, -inf
        %v6651 = vrot.slane %v6650, 4
        %v6652 = vmax.f32 %v6650, %v6651
        %v6653 = vrot.slane %v6652, 2
        %v6654 = vmax.f32 %v6652, %v6653
        %v6655 = vrot.slane %v6654, 1
        %v6656 = vmax.f32 %v6654, %v6655
        %v6657 = vsel %vm5613, %v6464, -inf
        %v6658 = vrot.slane %v6657, 4
        %v6659 = vmax.f32 %v6657, %v6658
        %v6660 = vrot.slane %v6659, 2
        %v6661 = vmax.f32 %v6659, %v6660
        %v6662 = vrot.slane %v6661, 1
        %v6663 = vmax.f32 %v6661, %v6662
        %v6664 = vsel %vm5613, %v6463, -inf
        %v6665 = vrot.slane %v6664, 4
        %v6666 = vmax.f32 %v6664, %v6665
        %v6667 = vrot.slane %v6666, 2
        %v6668 = vmax.f32 %v6666, %v6667
        %v6669 = vrot.slane %v6668, 1
        %v6670 = vmax.f32 %v6668, %v6669
        %v6671 = vsel %vm5613, %v6465, -inf
        %v6672 = vrot.slane %v6671, 4
        %v6673 = vmax.f32 %v6671, %v6672
        %v6674 = vrot.slane %v6673, 2
        %v6675 = vmax.f32 %v6673, %v6674
        %v6676 = vrot.slane %v6675, 1
        %v6677 = vmax.f32 %v6675, %v6676
        %v6678 = vsel %vm5613, %v6473, -inf
        %v6679 = vrot.slane %v6678, 4
        %v6680 = vmax.f32 %v6678, %v6679
        %v6681 = vrot.slane %v6680, 2
        %v6682 = vmax.f32 %v6680, %v6681
        %v6683 = vrot.slane %v6682, 1
        %v6684 = vmax.f32 %v6682, %v6683
        %v6685 = vsel %vm5613, %v6481, -inf
        %v6686 = vrot.slane %v6685, 4
        %v6687 = vmax.f32 %v6685, %v6686
        %v6688 = vrot.slane %v6687, 2
        %v6689 = vmax.f32 %v6687, %v6688
        %v6690 = vrot.slane %v6689, 1
        %v6691 = vmax.f32 %v6689, %v6690
        %v6692 = vsel %vm5613, %v6480, -inf
        %v6693 = vrot.slane %v6692, 4
        %v6694 = vmax.f32 %v6692, %v6693
        %v6695 = vrot.slane %v6694, 2
        %v6696 = vmax.f32 %v6694, %v6695
        %v6697 = vrot.slane %v6696, 1
        %v6698 = vmax.f32 %v6696, %v6697
        %v6699 = vsel %vm5613, %v6482, -inf
        %v6700 = vrot.slane %v6699, 4
        %v6701 = vmax.f32 %v6699, %v6700
        %v6702 = vrot.slane %v6701, 2
        %v6703 = vmax.f32 %v6701, %v6702
        %v6704 = vrot.slane %v6703, 1
        %v6705 = vmax.f32 %v6703, %v6704
        %v6706 = vsel %vm5613, %v6490, -inf
        %v6707 = vrot.slane %v6706, 4
        %v6708 = vmax.f32 %v6706, %v6707
        %v6709 = vrot.slane %v6708, 2
        %v6710 = vmax.f32 %v6708, %v6709
        %v6711 = vrot.slane %v6710, 1
        %v6712 = vmax.f32 %v6710, %v6711
        %v6713 = vsel %vm5613, %v6498, -inf
        %v6714 = vrot.slane %v6713, 4
        %v6715 = vmax.f32 %v6713, %v6714
        %v6716 = vrot.slane %v6715, 2
        %v6717 = vmax.f32 %v6715, %v6716
        %v6718 = vrot.slane %v6717, 1
        %v6719 = vmax.f32 %v6717, %v6718
        %v6720 = vsel %vm5613, %v6497, -inf
        %v6721 = vrot.slane %v6720, 4
        %v6722 = vmax.f32 %v6720, %v6721
        %v6723 = vrot.slane %v6722, 2
        %v6724 = vmax.f32 %v6722, %v6723
        %v6725 = vrot.slane %v6724, 1
        %v6726 = vmax.f32 %v6724, %v6725
        %v6727 = vsel %vm5613, %v6499, -inf
        %v6728 = vrot.slane %v6727, 4
        %v6729 = vmax.f32 %v6727, %v6728
        %v6730 = vrot.slane %v6729, 2
        %v6731 = vmax.f32 %v6729, %v6730
        %v6732 = vrot.slane %v6731, 1
        %v6733 = vmax.f32 %v6731, %v6732
        %v6734 = vsel %vm5613, %v6507, -inf
        %v6735 = vrot.slane %v6734, 4
        %v6736 = vmax.f32 %v6734, %v6735
        %v6737 = vrot.slane %v6736, 2
        %v6738 = vmax.f32 %v6736, %v6737
        %v6739 = vrot.slane %v6738, 1
        %v6740 = vmax.f32 %v6738, %v6739
        %v6741 = vsel %vm5613, %v6515, -inf
        %v6742 = vrot.slane %v6741, 4
        %v6743 = vmax.f32 %v6741, %v6742
        %v6744 = vrot.slane %v6743, 2
        %v6745 = vmax.f32 %v6743, %v6744
        %v6746 = vrot.slane %v6745, 1
        %v6747 = vmax.f32 %v6745, %v6746
        %v6748 = vsel %vm5613, %v6514, -inf
        %v6749 = vrot.slane %v6748, 4
        %v6750 = vmax.f32 %v6748, %v6749
        %v6751 = vrot.slane %v6750, 2
        %v6752 = vmax.f32 %v6750, %v6751
        %v6753 = vrot.slane %v6752, 1
        %v6754 = vmax.f32 %v6752, %v6753
        %v6755 = vsel %vm5613, %v6516, -inf
        %v6756 = vrot.slane %v6755, 4
        %v6757 = vmax.f32 %v6755, %v6756
        %v6758 = vrot.slane %v6757, 2
        %v6759 = vmax.f32 %v6757, %v6758
        %v6760 = vrot.slane %v6759, 1
        %v6761 = vmax.f32 %v6759, %v6760
        %v6762 = vsel %vm5613, %v6524, -inf
        %v6763 = vrot.slane %v6762, 4
        %v6764 = vmax.f32 %v6762, %v6763
        %v6765 = vrot.slane %v6764, 2
        %v6766 = vmax.f32 %v6764, %v6765
        %v6767 = vrot.slane %v6766, 1
        %v6768 = vmax.f32 %v6766, %v6767
        %v6769 = vsel %vm5613, %v6532, -inf
        %v6770 = vrot.slane %v6769, 4
        %v6771 = vmax.f32 %v6769, %v6770
        %v6772 = vrot.slane %v6771, 2
        %v6773 = vmax.f32 %v6771, %v6772
        %v6774 = vrot.slane %v6773, 1
        %v6775 = vmax.f32 %v6773, %v6774
        %v6776 = vsel %vm5613, %v6531, -inf
        %v6777 = vrot.slane %v6776, 4
        %v6778 = vmax.f32 %v6776, %v6777
        %v6779 = vrot.slane %v6778, 2
        %v6780 = vmax.f32 %v6778, %v6779
        %v6781 = vrot.slane %v6780, 1
        %v6782 = vmax.f32 %v6780, %v6781
        %v6783 = vsel %vm5613, %v6533, -inf
        %v6784 = vrot.slane %v6783, 4
        %v6785 = vmax.f32 %v6783, %v6784
        %v6786 = vrot.slane %v6785, 2
        %v6787 = vmax.f32 %v6785, %v6786
        %v6788 = vrot.slane %v6787, 1
        %v6789 = vmax.f32 %v6787, %v6788
        %v6790 = vsel %vm5611, %v6572, -inf
        %v6791 = vsel %vm5611, %v6600, -inf
        %v6792 = vmax.f32 %v6790, %v6791
        %v6793 = vsel %vm5611, %v6579, -inf
        %v6794 = vsel %vm5611, %v6607, -inf
        %v6795 = vmax.f32 %v6793, %v6794
        %v6796 = vsel %vm5611, %v6586, -inf
        %v6797 = vsel %vm5611, %v6614, -inf
        %v6798 = vmax.f32 %v6796, %v6797
        %v6799 = vsel %vm5611, %v6593, -inf
        %v6800 = vsel %vm5611, %v6621, -inf
        %v6801 = vmax.f32 %v6799, %v6800
        %v6802 = vsel %vm5611, %v6628, -inf
        %v6803 = vsel %vm5611, %v6656, -inf
        %v6804 = vmax.f32 %v6802, %v6803
        %v6805 = vsel %vm5611, %v6635, -inf
        %v6806 = vsel %vm5611, %v6663, -inf
        %v6807 = vmax.f32 %v6805, %v6806
        %v6808 = vsel %vm5611, %v6642, -inf
        %v6809 = vsel %vm5611, %v6670, -inf
        %v6810 = vmax.f32 %v6808, %v6809
        %v6811 = vsel %vm5611, %v6649, -inf
        %v6812 = vsel %vm5611, %v6677, -inf
        %v6813 = vmax.f32 %v6811, %v6812
        %v6814 = vsel %vm5611, %v6684, -inf
        %v6815 = vsel %vm5611, %v6712, -inf
        %v6816 = vmax.f32 %v6814, %v6815
        %v6817 = vsel %vm5611, %v6691, -inf
        %v6818 = vsel %vm5611, %v6719, -inf
        %v6819 = vmax.f32 %v6817, %v6818
        %v6820 = vsel %vm5611, %v6698, -inf
        %v6821 = vsel %vm5611, %v6726, -inf
        %v6822 = vmax.f32 %v6820, %v6821
        %v6823 = vsel %vm5611, %v6705, -inf
        %v6824 = vsel %vm5611, %v6733, -inf
        %v6825 = vmax.f32 %v6823, %v6824
        %v6826 = vsel %vm5611, %v6740, -inf
        %v6827 = vsel %vm5611, %v6768, -inf
        %v6828 = vmax.f32 %v6826, %v6827
        %v6829 = vsel %vm5611, %v6747, -inf
        %v6830 = vsel %vm5611, %v6775, -inf
        %v6831 = vmax.f32 %v6829, %v6830
        %v6832 = vsel %vm5611, %v6754, -inf
        %v6833 = vsel %vm5611, %v6782, -inf
        %v6834 = vmax.f32 %v6832, %v6833
        %v6835 = vsel %vm5611, %v6761, -inf
        %v6836 = vsel %vm5611, %v6789, -inf
        %v6837 = vmax.f32 %v6835, %v6836
        %vm6838 = vcmask 521216
        %6839 = vst.msk [vmem:[#allocation5] sm:$0x3f] %vm6838, 0.0
        %6840 = vst.msk [vmem:[#allocation5 + $0x8] sm:$0x3f] %vm6838, 0.0
        %6841 = vst.msk [vmem:[#allocation5 + $0x10] sm:$0x3f] %vm6838, 0.0
        %6842 = vst.msk [vmem:[#allocation5 + $0x18] sm:$0x3f] %vm6838, 0.0
        %6843 = vst.msk [vmem:[#allocation5 + $0x20] sm:$0x3f] %vm6838, 0.0
        %6844 = vst.msk [vmem:[#allocation5 + $0x28] sm:$0x3f] %vm6838, 0.0
        %v6861 = vsel %vm4885, %v6795, %v6792
        %v6862 = vsel %vm4887, %v6798, %v6861
        %v6863 = vsel %vm4889, %v6801, %v6862
        %v6864 = vsel %vm4885, %v6807, %v6804
        %v6865 = vsel %vm4887, %v6810, %v6864
        %v6866 = vsel %vm4889, %v6813, %v6865
        %v6867 = vsel %vm4885, %v6819, %v6816
        %v6868 = vsel %vm4887, %v6822, %v6867
        %v6869 = vsel %vm4889, %v6825, %v6868
        %v6870 = vsel %vm4885, %v6831, %v6828
        %v6871 = vsel %vm4887, %v6834, %v6870
        %v6872 = vsel %vm4889, %v6837, %v6871
        %s6877 = scalar_lea.vmem [#allocation5], 8
        %vm6878 = vcmask 519168
        %6879 = vst.msk [vmem:[%s6877 + $0x1] sm:$0xf] %vm6878, %v6863
        %6880 = vst.msk [vmem:[%s6877 + $0x9] sm:$0xf] %vm6878, %v6866
        %6881 = vst.msk [vmem:[%s6877 + $0x11] sm:$0xf] %vm6878, %v6869
        %6882 = vst.msk [vmem:[%s6877 + $0x19] sm:$0xf] %vm6878, %v6872
        %v6883 = vld [vmem:[#allocation5] sm:$0xf]
        %v6884 = vld [vmem:[#allocation5 + $0x8] sm:$0xf]
        %v6885 = vld [vmem:[#allocation5 + $0x10] sm:$0xf]
        %v6886 = vld [vmem:[#allocation5 + $0x18] sm:$0xf]
        %v6891 = vcombine.low %v6883, %v6884
        %v6892 = vcombine.low %v6885, %v6886
        %6895 = vst.msk [vmem:[#allocation7] sm:$0xff] %vm5611, %v6891
        %6896 = vst.msk [vmem:[#allocation7 + $0x48] sm:$0xff] %vm5611, %v6892
        %v6897 = vld [vmem:[#allocation5 + $0x1] sm:$0xf]
        %v6898 = vld [vmem:[#allocation5 + $0x9] sm:$0xf]
        %v6899 = vld [vmem:[#allocation5 + $0x11] sm:$0xf]
        %v6900 = vld [vmem:[#allocation5 + $0x19] sm:$0xf]
        %v6905 = vcombine.low %v6897, %v6898
        %v6906 = vcombine.low %v6899, %v6900
        %6907 = vrot.lane.b32.xlu0 %v6905, 64
        %v6908 = vpop.permute.xlu0 %6907
        %6909 = vrot.lane.b32.xlu0 %v6906, 64
        %v6910 = vpop.permute.xlu0 %6909
        %6913 = vst.msk [vmem:[#allocation7] sm:$0xff] %vm5698, %v6908
        %6914 = vst.msk [vmem:[#allocation7 + $0x48] sm:$0xff] %vm5698, %v6910
        %v6915 = vld [vmem:[#allocation5 + $0x2] sm:$0xf]
        %v6916 = vld [vmem:[#allocation5 + $0xa] sm:$0xf]
        %v6917 = vld [vmem:[#allocation5 + $0x12] sm:$0xf]
        %v6918 = vld [vmem:[#allocation5 + $0x1a] sm:$0xf]
        %v6923 = vcombine.low %v6915, %v6916
        %v6924 = vcombine.low %v6917, %v6918
        %6927 = vst.msk [vmem:[#allocation7 + $0x8] sm:$0xff] %vm5611, %v6923
        %6928 = vst.msk [vmem:[#allocation7 + $0x50] sm:$0xff] %vm5611, %v6924
        %v6929 = vld [vmem:[%s6877] sm:$0xf]
        %v6930 = vld [vmem:[%s6877 + $0x8] sm:$0xf]
        %v6931 = vld [vmem:[%s6877 + $0x10] sm:$0xf]
        %v6932 = vld [vmem:[%s6877 + $0x18] sm:$0xf]
        %v6937 = vcombine.low %v6929, %v6930
        %v6938 = vcombine.low %v6931, %v6932
        %6939 = vrot.lane.b32.xlu0 %v6937, 64
        %v6940 = vpop.permute.xlu0 %6939
        %6941 = vrot.lane.b32.xlu0 %v6938, 64
        %v6942 = vpop.permute.xlu0 %6941
        %6945 = vst.msk [vmem:[#allocation7 + $0x8] sm:$0xff] %vm5698, %v6940
        %6946 = vst.msk [vmem:[#allocation7 + $0x50] sm:$0xff] %vm5698, %v6942
        %v6947 = vld [vmem:[%s6877 + $0x1] sm:$0xf]
        %v6948 = vld [vmem:[%s6877 + $0x9] sm:$0xf]
        %v6949 = vld [vmem:[%s6877 + $0x11] sm:$0xf]
        %v6950 = vld [vmem:[%s6877 + $0x19] sm:$0xf]
        %v6955 = vcombine.low %v6947, %v6948
        %v6956 = vcombine.low %v6949, %v6950
        %6959 = vst.msk [vmem:[#allocation7 + $0x10] sm:$0xff] %vm5611, %v6955
        %6960 = vst.msk [vmem:[#allocation7 + $0x58] sm:$0xff] %vm5611, %v6956
        %v6961 = vld [vmem:[%s6877 + $0x2] sm:$0xf]
        %v6962 = vld [vmem:[%s6877 + $0xa] sm:$0xf]
        %v6963 = vld [vmem:[%s6877 + $0x12] sm:$0xf]
        %v6964 = vld [vmem:[%s6877 + $0x1a] sm:$0xf]
        %v6969 = vcombine.low %v6961, %v6962
        %v6970 = vcombine.low %v6963, %v6964
        %6971 = vrot.lane.b32.xlu0 %v6969, 64
        %v6972 = vpop.permute.xlu0 %6971
        %6973 = vrot.lane.b32.xlu0 %v6970, 64
        %v6974 = vpop.permute.xlu0 %6973
        %6977 = vst.msk [vmem:[#allocation7 + $0x10] sm:$0xff] %vm5698, %v6972
        %6978 = vst.msk [vmem:[#allocation7 + $0x58] sm:$0xff] %vm5698, %v6974
        %s6979 = scalar_lea.vmem [#allocation5], 16
        %v6980 = vld [vmem:[%s6979] sm:$0xf]
        %v6981 = vld [vmem:[%s6979 + $0x8] sm:$0xf]
        %v6982 = vld [vmem:[%s6979 + $0x10] sm:$0xf]
        %v6983 = vld [vmem:[%s6979 + $0x18] sm:$0xf]
        %v6988 = vcombine.low %v6980, %v6981
        %v6989 = vcombine.low %v6982, %v6983
        %6992 = vst.msk [vmem:[#allocation7 + $0x18] sm:$0xff] %vm5611, %v6988
        %6993 = vst.msk [vmem:[#allocation7 + $0x60] sm:$0xff] %vm5611, %v6989
        %v6994 = vld [vmem:[%s6979 + $0x1] sm:$0xf]
        %v6995 = vld [vmem:[%s6979 + $0x9] sm:$0xf]
        %v6996 = vld [vmem:[%s6979 + $0x11] sm:$0xf]
        %v6997 = vld [vmem:[%s6979 + $0x19] sm:$0xf]
        %v7002 = vcombine.low %v6994, %v6995
        %v7003 = vcombine.low %v6996, %v6997
        %7004 = vrot.lane.b32.xlu0 %v7002, 64
        %v7005 = vpop.permute.xlu0 %7004
        %7006 = vrot.lane.b32.xlu0 %v7003, 64
        %v7007 = vpop.permute.xlu0 %7006
        %7010 = vst.msk [vmem:[#allocation7 + $0x18] sm:$0xff] %vm5698, %v7005
        %7011 = vst.msk [vmem:[#allocation7 + $0x60] sm:$0xff] %vm5698, %v7007
        %v7012 = vld [vmem:[%s6979 + $0x2] sm:$0xf]
        %v7013 = vld [vmem:[%s6979 + $0xa] sm:$0xf]
        %v7014 = vld [vmem:[%s6979 + $0x12] sm:$0xf]
        %v7015 = vld [vmem:[%s6979 + $0x1a] sm:$0xf]
        %v7020 = vcombine.low %v7012, %v7013
        %v7021 = vcombine.low %v7014, %v7015
        %7024 = vst.msk [vmem:[#allocation7 + $0x20] sm:$0xff] %vm5611, %v7020
        %7025 = vst.msk [vmem:[#allocation7 + $0x68] sm:$0xff] %vm5611, %v7021
        %v7026 = vld [vmem:[#allocation7] sm:$0xff]
        %v7027 = vld [vmem:[#allocation7 + $0x8] sm:$0xff]
        %v7028 = vld [vmem:[#allocation7 + $0x10] sm:$0xff]
        %v7029 = vld [vmem:[#allocation7 + $0x18] sm:$0xff]
        %v7030 = vld [vmem:[#allocation7 + $0x20] sm:$0xff]
        %v7031 = vld [vmem:[#allocation7 + $0x48] sm:$0xff]
        %v7032 = vld [vmem:[#allocation7 + $0x50] sm:$0xff]
        %v7033 = vld [vmem:[#allocation7 + $0x58] sm:$0xff]
        %v7034 = vld [vmem:[#allocation7 + $0x60] sm:$0xff]
        %v7035 = vld [vmem:[#allocation7 + $0x68] sm:$0xff]
        %v7036 = vld [vmem:[%s9] sm:$0xff]
        %v7037 = vld [vmem:[%s9 + $0x8] sm:$0xff]
        %v7038 = vld [vmem:[%s9 + $0x10] sm:$0xff]
        %v7039 = vld [vmem:[%s9 + $0x18] sm:$0xff]
        %v7040 = vld [vmem:[%s9 + $0x20] sm:$0xff]
        %v7041 = vld [vmem:[%s9 + $0x28] sm:$0xff]
        %v7042 = vld [vmem:[%s9 + $0x30] sm:$0xff]
        %v7043 = vld [vmem:[%s9 + $0x38] sm:$0xff]
        %v7044 = vld [vmem:[%s9 + $0x40] sm:$0xff]
        %v7045 = vld [vmem:[%s9 + $0x48] sm:$0xff]
        %v7046 = vld [vmem:[%s9 + $0x50] sm:$0xff]
        %v7047 = vld [vmem:[%s9 + $0x58] sm:$0xff]
        %v7048 = vld [vmem:[%s9 + $0x60] sm:$0xff]
        %v7049 = vld [vmem:[%s9 + $0x68] sm:$0xff]
        %v7050 = vld [vmem:[%s9 + $0x70] sm:$0xff]
        %v7051 = vld [vmem:[%s9 + $0x78] sm:$0xff]
        %v7052 = vld [vmem:[%s9 + $0x80] sm:$0xff]
        %v7053 = vld [vmem:[%s9 + $0x88] sm:$0xff]
        %v7054 = vld [vmem:[%s9 + $0x90] sm:$0xff]
        %v7055 = vld [vmem:[%s9 + $0x98] sm:$0xff]
        %v7056 = vld [vmem:[%s9 + $0xa0] sm:$0xff]
        %v7057 = vld [vmem:[%s9 + $0xa8] sm:$0xff]
        %v7058 = vld [vmem:[%s9 + $0xb0] sm:$0xff]
        %v7059 = vld [vmem:[%s9 + $0xb8] sm:$0xff]
        %v7060 = vld [vmem:[%s9 + $0xc0] sm:$0xff]
        %v7061 = vld [vmem:[%s9 + $0xc8] sm:$0xff]
        %v7062 = vld [vmem:[%s9 + $0xd0] sm:$0xff]
        %v7063 = vld [vmem:[%s9 + $0xd8] sm:$0xff]
        %v7064 = vld [vmem:[%s9 + $0xe0] sm:$0xff]
        %v7065 = vld [vmem:[%s9 + $0xe8] sm:$0xff]
        %v7066 = vld [vmem:[%s9 + $0xf0] sm:$0xff]
        %v7067 = vld [vmem:[%s9 + $0xf8] sm:$0xff]
        %v7068 = vld [vmem:[%s9 + $0x100] sm:$0xff]
        %v7069 = vld [vmem:[%s9 + $0x108] sm:$0xff]
        %v7070 = vld [vmem:[%s9 + $0x110] sm:$0xff]
        %v7071 = vld [vmem:[%s9 + $0x118] sm:$0xff]
        %v7072 = vld [vmem:[%s9 + $0x120] sm:$0xff]
        %v7073 = vld [vmem:[%s9 + $0x128] sm:$0xff]
        %v7074 = vld [vmem:[%s9 + $0x130] sm:$0xff]
        %v7075 = vld [vmem:[%s9 + $0x138] sm:$0xff]
        %v7076 = vld [vmem:[%s9 + $0x140] sm:$0xff]
        %v7077 = vld [vmem:[%s9 + $0x148] sm:$0xff]
        %v7078 = vld [vmem:[%s9 + $0x150] sm:$0xff]
        %v7079 = vld [vmem:[%s9 + $0x158] sm:$0xff]
        %v7080 = vld [vmem:[%s9 + $0x160] sm:$0xff]
        %v7081 = vld [vmem:[%s9 + $0x168] sm:$0xff]
        %v7082 = vld [vmem:[%s9 + $0x170] sm:$0xff]
        %v7083 = vld [vmem:[%s9 + $0x178] sm:$0xff]
        %v7084 = vld [vmem:[%s9 + $0x180] sm:$0xff]
        %v7085 = vld [vmem:[%s9 + $0x188] sm:$0xff]
        %v7086 = vld [vmem:[%s9 + $0x190] sm:$0xff]
        %v7087 = vld [vmem:[%s9 + $0x198] sm:$0xff]
        %v7088 = vld [vmem:[%s9 + $0x1a0] sm:$0xff]
        %v7089 = vld [vmem:[%s9 + $0x1a8] sm:$0xff]
        %v7090 = vld [vmem:[%s9 + $0x1b0] sm:$0xff]
        %v7091 = vld [vmem:[%s9 + $0x1b8] sm:$0xff]
        %v7092 = vld [vmem:[%s9 + $0x1c0] sm:$0xff]
        %v7093 = vld [vmem:[%s9 + $0x1c8] sm:$0xff]
        %v7094 = vld [vmem:[%s9 + $0x1d0] sm:$0xff]
        %v7095 = vld [vmem:[%s9 + $0x1d8] sm:$0xff]
        %v7096 = vld [vmem:[%s9 + $0x1e0] sm:$0xff]
        %v7097 = vld [vmem:[%s9 + $0x1e8] sm:$0xff]
        %v7098 = vld [vmem:[%s9 + $0x1f0] sm:$0xff]
        %v7099 = vld [vmem:[%s9 + $0x1f8] sm:$0xff]
        %v7100 = vld [vmem:[%s9 + $0x200] sm:$0xff]
        %v7101 = vld [vmem:[%s9 + $0x208] sm:$0xff]
        %v7102 = vld [vmem:[%s9 + $0x210] sm:$0xff]
        %v7103 = vld [vmem:[%s9 + $0x218] sm:$0xff]
        %v7104 = vld [vmem:[%s9 + $0x220] sm:$0xff]
        %v7105 = vld [vmem:[%s9 + $0x228] sm:$0xff]
        %v7106 = vld [vmem:[%s9 + $0x230] sm:$0xff]
        %v7107 = vld [vmem:[%s9 + $0x238] sm:$0xff]
        %v7108 = vld [vmem:[%s10] sm:$0x1]
        %v7110 = vlaneseq
        %v7111 = vshrl.u32 %v7110, 7
        %v7112 = vsub.s32 0, %v7111
        %v7113 = vrot.slane %v7108, %v7112
        %v7116 = vsel %vm5611, %v7030, 0
        %v7119 = vsel %vm5611, %v7035, 0
        %7121 = vmatprep.subr.mxu0 0.0
        %7122 = vmatpush1.msra.mxu0 %v7036
        %7123 = vmatprep.subr.mxu0 0.0
        %7124 = vmatpush1.msra.mxu0 %v7037
        %7125 = vmatprep.subr.mxu0 0.0
        %7126 = vmatpush1.msra.mxu0 %v7038
        %7127 = vmatprep.subr.mxu0 0.0
        %7128 = vmatpush1.msra.mxu0 %v7039
        %7129 = vmatprep.subr.mxu0 0.0
        %7130 = vmatpush1.msra.mxu0 %v7040
        %7131 = vmatprep.subr.mxu0 0.0
        %7132 = vmatpush1.msra.mxu0 %v7041
        %7133 = vmatprep.subr.mxu0 0.0
        %7134 = vmatpush1.msra.mxu0 %v7042
        %7135 = vmatprep.subr.mxu0 0.0
        %7136 = vmatpush1.msra.mxu0 %v7043
        %7137 = vmatprep.subr.mxu0 0.0
        %7138 = vmatpush1.msra.mxu0 %v7044
        %7139 = vmatprep.subr.mxu0 0.0
        %7140 = vmatpush1.msra.mxu0 %v7045
        %7141 = vmatprep.subr.mxu0 0.0
        %7142 = vmatpush1.msra.mxu0 %v7046
        %7143 = vmatprep.subr.mxu0 0.0
        %7144 = vmatpush1.msra.mxu0 %v7047
        %7145 = vmatprep.subr.mxu0 0.0
        %7146 = vmatpush1.msra.mxu0 %v7048
        %7147 = vmatprep.subr.mxu0 0.0
        %7148 = vmatpush1.msra.mxu0 %v7049
        %7149 = vmatprep.subr.mxu0 0.0
        %7150 = vmatpush1.msra.mxu0 %v7050
        %7151 = vmatprep.subr.mxu0 0.0
        %7152 = vmatpush1.msra.mxu0 %v7051
        %7153 = vmatprep.subr.mxu0 0.0
        %7154 = vmatpush1.msra.mxu0 %v7052
        %7155 = vmatprep.subr.mxu0 0.0
        %7156 = vmatpush1.msra.mxu0 %v7053
        %7157 = vmatprep.subr.mxu0 0.0
        %7158 = vmatpush1.msra.mxu0 %v7054
        %7159 = vmatprep.subr.mxu0 0.0
        %7160 = vmatpush1.msra.mxu0 %v7055
        %7161 = vmatprep.subr.mxu0 0.0
        %7162 = vmatpush1.msra.mxu0 %v7056
        %7163 = vmatprep.subr.mxu0 0.0
        %7164 = vmatpush1.msra.mxu0 %v7057
        %7165 = vmatprep.subr.mxu0 0.0
        %7166 = vmatpush1.msra.mxu0 %v7058
        %7167 = vmatprep.subr.mxu0 0.0
        %7168 = vmatpush1.msra.mxu0 %v7059
        %7169 = vmatprep.subr.mxu0 0.0
        %7170 = vmatpush1.msra.mxu0 %v7060
        %7171 = vmatprep.subr.mxu0 0.0
        %7172 = vmatpush1.msra.mxu0 %v7061
        %7173 = vmatprep.subr.mxu0 0.0
        %7174 = vmatpush1.msra.mxu0 %v7062
        %7175 = vmatprep.subr.mxu0 0.0
        %7176 = vmatpush1.msra.mxu0 %v7063
        %7177 = vmatprep.subr.mxu0 0.0
        %7178 = vmatpush1.msra.mxu0 %v7064
        %7179 = vmatprep.subr.mxu0 0.0
        %7180 = vmatpush1.msra.mxu0 %v7065
        %7181 = vmatprep.subr.mxu0 0.0
        %7182 = vmatpush1.msra.mxu0 %v7066
        %7183 = vmatprep.subr.mxu0 0.0
        %7184 = vmatpush1.msra.mxu0 %v7067
        %7185 = vmatprep.mubr.f32.mxu0 %v7027
        %7186 = vmatmul.mubr.f32.gmra.mrb[0].mxu0 %v7026
        %v7187 = vpop.f32.mrb[0].mxu0
        %v7188 = vadd.f32 %v7113, %v7187
        %v7189 = vpop.f32.mrb[0].mxu0
        %7190 = vmatprep.mubr.f32.mxu0 %v7032
        %7191 = vmatmul.mubr.f32.gmra.mrb[0].mxu0 %v7031
        %v7192 = vpop.f32.mrb[0].mxu0
        %v7193 = vadd.f32 %v7113, %v7192
        %v7194 = vpop.f32.mrb[0].mxu0
        %7195 = vdwg.mxu0
        %7196 = vmatprep.subr.mxu0 0.0
        %7197 = vmatpush1.msra.mxu0 %v7068
        %7198 = vmatprep.subr.mxu0 0.0
        %7199 = vmatpush1.msra.mxu0 %v7069
        %7200 = vmatprep.subr.mxu0 0.0
        %7201 = vmatpush1.msra.mxu0 %v7070
        %7202 = vmatprep.subr.mxu0 0.0
        %7203 = vmatpush1.msra.mxu0 %v7071
        %7204 = vmatprep.subr.mxu0 0.0
        %7205 = vmatpush1.msra.mxu0 %v7072
        %7206 = vmatprep.subr.mxu0 0.0
        %7207 = vmatpush1.msra.mxu0 %v7073
        %7208 = vmatprep.subr.mxu0 0.0
        %7209 = vmatpush1.msra.mxu0 %v7074
        %7210 = vmatprep.subr.mxu0 0.0
        %7211 = vmatpush1.msra.mxu0 %v7075
        %7212 = vmatprep.subr.mxu0 0.0
        %7213 = vmatpush1.msra.mxu0 %v7076
        %7214 = vmatprep.subr.mxu0 0.0
        %7215 = vmatpush1.msra.mxu0 %v7077
        %7216 = vmatprep.subr.mxu0 0.0
        %7217 = vmatpush1.msra.mxu0 %v7078
        %7218 = vmatprep.subr.mxu0 0.0
        %7219 = vmatpush1.msra.mxu0 %v7079
        %7220 = vmatprep.subr.mxu0 0.0
        %7221 = vmatpush1.msra.mxu0 %v7080
        %7222 = vmatprep.subr.mxu0 0.0
        %7223 = vmatpush1.msra.mxu0 %v7081
        %7224 = vmatprep.subr.mxu0 0.0
        %7225 = vmatpush1.msra.mxu0 %v7082
        %7226 = vmatprep.subr.mxu0 0.0
        %7227 = vmatpush1.msra.mxu0 %v7083
        %7228 = vmatprep.subr.mxu0 0.0
        %7229 = vmatpush1.msra.mxu0 %v7084
        %7230 = vmatprep.subr.mxu0 0.0
        %7231 = vmatpush1.msra.mxu0 %v7085
        %7232 = vmatprep.subr.mxu0 0.0
        %7233 = vmatpush1.msra.mxu0 %v7086
        %7234 = vmatprep.subr.mxu0 0.0
        %7235 = vmatpush1.msra.mxu0 %v7087
        %7236 = vmatprep.subr.mxu0 0.0
        %7237 = vmatpush1.msra.mxu0 %v7088
        %7238 = vmatprep.subr.mxu0 0.0
        %7239 = vmatpush1.msra.mxu0 %v7089
        %7240 = vmatprep.subr.mxu0 0.0
        %7241 = vmatpush1.msra.mxu0 %v7090
        %7242 = vmatprep.subr.mxu0 0.0
        %7243 = vmatpush1.msra.mxu0 %v7091
        %7244 = vmatprep.subr.mxu0 0.0
        %7245 = vmatpush1.msra.mxu0 %v7092
        %7246 = vmatprep.subr.mxu0 0.0
        %7247 = vmatpush1.msra.mxu0 %v7093
        %7248 = vmatprep.subr.mxu0 0.0
        %7249 = vmatpush1.msra.mxu0 %v7094
        %7250 = vmatprep.subr.mxu0 0.0
        %7251 = vmatpush1.msra.mxu0 %v7095
        %7252 = vmatprep.subr.mxu0 0.0
        %7253 = vmatpush1.msra.mxu0 %v7096
        %7254 = vmatprep.subr.mxu0 0.0
        %7255 = vmatpush1.msra.mxu0 %v7097
        %7256 = vmatprep.subr.mxu0 0.0
        %7257 = vmatpush1.msra.mxu0 %v7098
        %7258 = vmatprep.subr.mxu0 0.0
        %7259 = vmatpush1.msra.mxu0 %v7099
        %7260 = vmatprep.mubr.f32.mxu0 %v7029
        %7261 = vmatmul.mubr.f32.gmra.mrb[0].mxu0 %v7028
        %v7262 = vpop.f32.mrb[0].mxu0
        %v7263 = vadd.f32 %v7188, %v7262
        %v7264 = vpop.f32.mrb[0].mxu0
        %7265 = vmatprep.mubr.f32.mxu0 %v7034
        %7266 = vmatmul.mubr.f32.gmra.mrb[0].mxu0 %v7033
        %v7267 = vpop.f32.mrb[0].mxu0
        %v7268 = vadd.f32 %v7193, %v7267
        %v7269 = vpop.f32.mrb[0].mxu0
        %7270 = vdwg.mxu0
        %7271 = vmatprep.subr.mxu0 0.0
        %7272 = vmatpush1.msra.mxu0 %v7100
        %7273 = vmatprep.subr.mxu0 0.0
        %7274 = vmatpush1.msra.mxu0 %v7101
        %7275 = vmatprep.subr.mxu0 0.0
        %7276 = vmatpush1.msra.mxu0 %v7102
        %7277 = vmatprep.subr.mxu0 0.0
        %7278 = vmatpush1.msra.mxu0 %v7103
        %7279 = vmatprep.subr.mxu0 0.0
        %7280 = vmatpush1.msra.mxu0 %v7104
        %7281 = vmatprep.subr.mxu0 0.0
        %7282 = vmatpush1.msra.mxu0 %v7105
        %7283 = vmatprep.subr.mxu0 0.0
        %7284 = vmatpush1.msra.mxu0 %v7106
        %7285 = vmatprep.subr.mxu0 0.0
        %7286 = vmatpush1.msra.mxu0 %v7107
        %7287 = vmatprep.subr.mxu0 0.0
        %7288 = vmatpush1.msra.mxu0 0.0
        %7289 = vmatprep.subr.mxu0 0.0
        %7290 = vmatpush1.msra.mxu0 0.0
        %7291 = vmatprep.subr.mxu0 0.0
        %7292 = vmatpush1.msra.mxu0 0.0
        %7293 = vmatprep.subr.mxu0 0.0
        %7294 = vmatpush1.msra.mxu0 0.0
        %7295 = vmatprep.subr.mxu0 0.0
        %7296 = vmatpush1.msra.mxu0 0.0
        %7297 = vmatprep.subr.mxu0 0.0
        %7298 = vmatpush1.msra.mxu0 0.0
        %7299 = vmatprep.subr.mxu0 0.0
        %7300 = vmatpush1.msra.mxu0 0.0
        %7301 = vmatprep.subr.mxu0 0.0
        %7302 = vmatpush1.msra.mxu0 0.0
        %7303 = vmatprep.subr.mxu0 0.0
        %7304 = vmatpush1.msra.mxu0 0.0
        %7305 = vmatprep.subr.mxu0 0.0
        %7306 = vmatpush1.msra.mxu0 0.0
        %7307 = vmatprep.subr.mxu0 0.0
        %7308 = vmatpush1.msra.mxu0 0.0
        %7309 = vmatprep.subr.mxu0 0.0
        %7310 = vmatpush1.msra.mxu0 0.0
        %7311 = vmatprep.subr.mxu0 0.0
        %7312 = vmatpush1.msra.mxu0 0.0
        %7313 = vmatprep.subr.mxu0 0.0
        %7314 = vmatpush1.msra.mxu0 0.0
        %7315 = vmatprep.subr.mxu0 0.0
        %7316 = vmatpush1.msra.mxu0 0.0
        %7317 = vmatprep.subr.mxu0 0.0
        %7318 = vmatpush1.msra.mxu0 0.0
        %7319 = vmatprep.subr.mxu0 0.0
        %7320 = vmatpush1.msra.mxu0 0.0
        %7321 = vmatprep.subr.mxu0 0.0
        %7322 = vmatpush1.msra.mxu0 0.0
        %7323 = vmatprep.subr.mxu0 0.0
        %7324 = vmatpush1.msra.mxu0 0.0
        %7325 = vmatprep.subr.mxu0 0.0
        %7326 = vmatpush1.msra.mxu0 0.0
        %7327 = vmatprep.subr.mxu0 0.0
        %7328 = vmatpush1.msra.mxu0 0.0
        %7329 = vmatprep.subr.mxu0 0.0
        %7330 = vmatpush1.msra.mxu0 0.0
        %7331 = vmatprep.subr.mxu0 0.0
        %7332 = vmatpush1.msra.mxu0 0.0
        %7333 = vmatprep.subr.mxu0 0.0
        %7334 = vmatpush1.msra.mxu0 0.0
        %7335 = vmatprep.mubr.f32.mxu0 0.0
        %7336 = vmatmul.mubr.f32.gmra.mrb[0].mxu0 %v7116
        %v7337 = vpop.f32.mrb[0].mxu0
        %v7338 = vadd.f32 %v7263, %v7337
        %v7339 = vpop.f32.mrb[0].mxu0
        %7340 = vmatprep.mubr.f32.mxu0 0.0
        %7341 = vmatmul.mubr.f32.gmra.mrb[0].mxu0 %v7119
        %v7342 = vpop.f32.mrb[0].mxu0
        %v7343 = vadd.f32 %v7268, %v7342
        %v7344 = vpop.f32.mrb[0].mxu0
        %7345 = vdwg.mxu0
        %v7346 = vmax.f32 %v7338, 0.0
        %v7347 = vmax.f32 %v7343, 0.0
        %v7350 = vcombine.high %v7346, %v7346
        %v7351 = vcombine.high %v7347, %v7347
        %7354 = vst [vmem:[#allocation6] sm:$0x3f] 0.0
        %7355 = vst [vmem:[#allocation6 + $0x8] sm:$0x3f] 0.0
        %7356 = vst [vmem:[#allocation6 + $0x10] sm:$0x3f] 0.0
        %7357 = vst [vmem:[#allocation6 + $0x18] sm:$0x3f] 0.0
        %7358 = vst [vmem:[#allocation6 + $0x20] sm:$0x3f] 0.0
        %7359 = vst [vmem:[#allocation6 + $0x28] sm:$0x3f] 0.0
        %s7360 = scalar_lea.vmem [#allocation6], 8
        %7361 = vst [vmem:[%s7360 + $0x1] sm:$0xf] %v7346
        %7362 = vst [vmem:[%s7360 + $0x9] sm:$0xf] %v7350
        %7363 = vst [vmem:[%s7360 + $0x11] sm:$0xf] %v7347
        %7364 = vst [vmem:[%s7360 + $0x19] sm:$0xf] %v7351
        %v7365 = vld [vmem:[#allocation6] sm:$0xf]
        %v7366 = vld [vmem:[#allocation6 + $0x8] sm:$0xf]
        %v7367 = vld [vmem:[#allocation6 + $0x10] sm:$0xf]
        %v7368 = vld [vmem:[#allocation6 + $0x18] sm:$0xf]
        %v7373 = vcombine.low %v7365, %v7366
        %v7374 = vcombine.low %v7367, %v7368
        %7377 = vst [vmem:[#allocation7] sm:$0xff] %v7373
        %7378 = vst [vmem:[#allocation7 + $0x48] sm:$0xff] %v7374
        %v7379 = vld [vmem:[#allocation6 + $0x1] sm:$0xf]
        %v7380 = vld [vmem:[#allocation6 + $0x9] sm:$0xf]
        %v7381 = vld [vmem:[#allocation6 + $0x11] sm:$0xf]
        %v7382 = vld [vmem:[#allocation6 + $0x19] sm:$0xf]
        %v7387 = vcombine.low %v7379, %v7380
        %v7388 = vcombine.low %v7381, %v7382
        %7391 = vst [vmem:[#allocation7 + $0x8] sm:$0xff] %v7387
        %7392 = vst [vmem:[#allocation7 + $0x50] sm:$0xff] %v7388
        %v7393 = vld [vmem:[#allocation6 + $0x2] sm:$0xf]
        %v7394 = vld [vmem:[#allocation6 + $0xa] sm:$0xf]
        %v7395 = vld [vmem:[#allocation6 + $0x12] sm:$0xf]
        %v7396 = vld [vmem:[#allocation6 + $0x1a] sm:$0xf]
        %v7401 = vcombine.low %v7393, %v7394
        %v7402 = vcombine.low %v7395, %v7396
        %7405 = vst [vmem:[#allocation7 + $0x10] sm:$0xff] %v7401
        %7406 = vst [vmem:[#allocation7 + $0x58] sm:$0xff] %v7402
        %v7407 = vld [vmem:[%s7360] sm:$0xf]
        %v7408 = vld [vmem:[%s7360 + $0x8] sm:$0xf]
        %v7409 = vld [vmem:[%s7360 + $0x10] sm:$0xf]
        %v7410 = vld [vmem:[%s7360 + $0x18] sm:$0xf]
        %v7415 = vcombine.low %v7407, %v7408
        %v7416 = vcombine.low %v7409, %v7410
        %7419 = vst [vmem:[#allocation7 + $0x18] sm:$0xff] %v7415
        %7420 = vst [vmem:[#allocation7 + $0x60] sm:$0xff] %v7416
        %v7421 = vld [vmem:[%s7360 + $0x1] sm:$0xf]
        %v7422 = vld [vmem:[%s7360 + $0x9] sm:$0xf]
        %v7423 = vld [vmem:[%s7360 + $0x11] sm:$0xf]
        %v7424 = vld [vmem:[%s7360 + $0x19] sm:$0xf]
        %v7429 = vcombine.low %v7421, %v7422
        %v7430 = vcombine.low %v7423, %v7424
        %7433 = vst [vmem:[#allocation7 + $0x20] sm:$0xff] %v7429
        %7434 = vst [vmem:[#allocation7 + $0x68] sm:$0xff] %v7430
        %v7435 = vld [vmem:[%s7360 + $0x2] sm:$0xf]
        %v7436 = vld [vmem:[%s7360 + $0xa] sm:$0xf]
        %v7437 = vld [vmem:[%s7360 + $0x12] sm:$0xf]
        %v7438 = vld [vmem:[%s7360 + $0x1a] sm:$0xf]
        %v7443 = vcombine.low %v7435, %v7436
        %v7444 = vcombine.low %v7437, %v7438
        %7447 = vst [vmem:[#allocation7 + $0x28] sm:$0xff] %v7443
        %7448 = vst [vmem:[#allocation7 + $0x70] sm:$0xff] %v7444
        %s7449 = scalar_lea.vmem [#allocation6], 16
        %v7450 = vld [vmem:[%s7449] sm:$0xf]
        %v7451 = vld [vmem:[%s7449 + $0x8] sm:$0xf]
        %v7452 = vld [vmem:[%s7449 + $0x10] sm:$0xf]
        %v7453 = vld [vmem:[%s7449 + $0x18] sm:$0xf]
        %v7458 = vcombine.low %v7450, %v7451
        %v7459 = vcombine.low %v7452, %v7453
        %7462 = vst [vmem:[#allocation7 + $0x30] sm:$0xff] %v7458
        %7463 = vst [vmem:[#allocation7 + $0x78] sm:$0xff] %v7459
        %v7464 = vld [vmem:[%s7449 + $0x1] sm:$0xf]
        %v7465 = vld [vmem:[%s7449 + $0x9] sm:$0xf]
        %v7466 = vld [vmem:[%s7449 + $0x11] sm:$0xf]
        %v7467 = vld [vmem:[%s7449 + $0x19] sm:$0xf]
        %v7472 = vcombine.low %v7464, %v7465
        %v7473 = vcombine.low %v7466, %v7467
        %7476 = vst [vmem:[#allocation7 + $0x38] sm:$0xff] %v7472
        %7477 = vst [vmem:[#allocation7 + $0x80] sm:$0xff] %v7473
        %v7478 = vld [vmem:[%s7449 + $0x2] sm:$0xf]
        %v7479 = vld [vmem:[%s7449 + $0xa] sm:$0xf]
        %v7480 = vld [vmem:[%s7449 + $0x12] sm:$0xf]
        %v7481 = vld [vmem:[%s7449 + $0x1a] sm:$0xf]
        %v7486 = vcombine.low %v7478, %v7479
        %v7487 = vcombine.low %v7480, %v7481
        %7490 = vst [vmem:[#allocation7 + $0x40] sm:$0xff] %v7486
        %7491 = vst [vmem:[#allocation7 + $0x88] sm:$0xff] %v7487
        %v7492 = vld [vmem:[#allocation7] sm:$0xff]
        %v7493 = vld [vmem:[#allocation7 + $0x8] sm:$0xff]
        %v7494 = vld [vmem:[#allocation7 + $0x10] sm:$0xff]
        %v7495 = vld [vmem:[#allocation7 + $0x18] sm:$0xff]
        %v7496 = vld [vmem:[#allocation7 + $0x20] sm:$0xff]
        %v7497 = vld [vmem:[#allocation7 + $0x28] sm:$0xff]
        %v7498 = vld [vmem:[#allocation7 + $0x30] sm:$0xff]
        %v7499 = vld [vmem:[#allocation7 + $0x38] sm:$0xff]
        %v7500 = vld [vmem:[#allocation7 + $0x40] sm:$0xff]
        %v7501 = vld [vmem:[#allocation7 + $0x48] sm:$0xff]
        %v7502 = vld [vmem:[#allocation7 + $0x50] sm:$0xff]
        %v7503 = vld [vmem:[#allocation7 + $0x58] sm:$0xff]
        %v7504 = vld [vmem:[#allocation7 + $0x60] sm:$0xff]
        %v7505 = vld [vmem:[#allocation7 + $0x68] sm:$0xff]
        %v7506 = vld [vmem:[#allocation7 + $0x70] sm:$0xff]
        %v7507 = vld [vmem:[#allocation7 + $0x78] sm:$0xff]
        %v7508 = vld [vmem:[#allocation7 + $0x80] sm:$0xff]
        %v7509 = vld [vmem:[#allocation7 + $0x88] sm:$0xff]
        %v7510 = vld [vmem:[%s11] sm:$0xff]
        %v7511 = vld [vmem:[%s11 + $0x8] sm:$0xff]
        %v7512 = vld [vmem:[%s11 + $0x10] sm:$0xff]
        %v7513 = vld [vmem:[%s11 + $0x18] sm:$0xff]
        %v7514 = vld [vmem:[%s11 + $0x20] sm:$0xff]
        %v7515 = vld [vmem:[%s11 + $0x28] sm:$0xff]
        %v7516 = vld [vmem:[%s11 + $0x30] sm:$0xff]
        %v7517 = vld [vmem:[%s11 + $0x38] sm:$0xff]
        %v7518 = vld [vmem:[%s11 + $0x40] sm:$0xff]
        %v7519 = vld [vmem:[%s11 + $0x48] sm:$0xff]
        %v7520 = vld [vmem:[%s11 + $0x50] sm:$0xff]
        %v7521 = vld [vmem:[%s11 + $0x58] sm:$0xff]
        %v7522 = vld [vmem:[%s11 + $0x60] sm:$0xff]
        %v7523 = vld [vmem:[%s11 + $0x68] sm:$0xff]
        %v7524 = vld [vmem:[%s11 + $0x70] sm:$0xff]
        %v7525 = vld [vmem:[%s11 + $0x78] sm:$0xff]
        %v7526 = vld [vmem:[%s11 + $0x80] sm:$0xff]
        %v7527 = vld [vmem:[%s11 + $0x88] sm:$0xff]
        %v7528 = vld [vmem:[%s11 + $0x90] sm:$0xff]
        %v7529 = vld [vmem:[%s11 + $0x98] sm:$0xff]
        %v7530 = vld [vmem:[%s11 + $0xa0] sm:$0xff]
        %v7531 = vld [vmem:[%s11 + $0xa8] sm:$0xff]
        %v7532 = vld [vmem:[%s11 + $0xb0] sm:$0xff]
        %v7533 = vld [vmem:[%s11 + $0xb8] sm:$0xff]
        %v7534 = vld [vmem:[%s11 + $0xc0] sm:$0xff]
        %v7535 = vld [vmem:[%s11 + $0xc8] sm:$0xff]
        %v7536 = vld [vmem:[%s11 + $0xd0] sm:$0xff]
        %v7537 = vld [vmem:[%s11 + $0xd8] sm:$0xff]
        %v7538 = vld [vmem:[%s11 + $0xe0] sm:$0xff]
        %v7539 = vld [vmem:[%s11 + $0xe8] sm:$0xff]
        %v7540 = vld [vmem:[%s11 + $0xf0] sm:$0xff]
        %v7541 = vld [vmem:[%s11 + $0xf8] sm:$0xff]
        %v7542 = vld [vmem:[%s11 + $0x100] sm:$0xff]
        %v7543 = vld [vmem:[%s11 + $0x108] sm:$0xff]
        %v7544 = vld [vmem:[%s11 + $0x110] sm:$0xff]
        %v7545 = vld [vmem:[%s11 + $0x118] sm:$0xff]
        %v7546 = vld [vmem:[%s11 + $0x120] sm:$0xff]
        %v7547 = vld [vmem:[%s11 + $0x128] sm:$0xff]
        %v7548 = vld [vmem:[%s11 + $0x130] sm:$0xff]
        %v7549 = vld [vmem:[%s11 + $0x138] sm:$0xff]
        %v7550 = vld [vmem:[%s11 + $0x140] sm:$0xff]
        %v7551 = vld [vmem:[%s11 + $0x148] sm:$0xff]
        %v7552 = vld [vmem:[%s11 + $0x150] sm:$0xff]
        %v7553 = vld [vmem:[%s11 + $0x158] sm:$0xff]
        %v7554 = vld [vmem:[%s11 + $0x160] sm:$0xff]
        %v7555 = vld [vmem:[%s11 + $0x168] sm:$0xff]
        %v7556 = vld [vmem:[%s11 + $0x170] sm:$0xff]
        %v7557 = vld [vmem:[%s11 + $0x178] sm:$0xff]
        %v7558 = vld [vmem:[%s11 + $0x180] sm:$0xff]
        %v7559 = vld [vmem:[%s11 + $0x188] sm:$0xff]
        %v7560 = vld [vmem:[%s11 + $0x190] sm:$0xff]
        %v7561 = vld [vmem:[%s11 + $0x198] sm:$0xff]
        %v7562 = vld [vmem:[%s11 + $0x1a0] sm:$0xff]
        %v7563 = vld [vmem:[%s11 + $0x1a8] sm:$0xff]
        %v7564 = vld [vmem:[%s11 + $0x1b0] sm:$0xff]
        %v7565 = vld [vmem:[%s11 + $0x1b8] sm:$0xff]
        %v7566 = vld [vmem:[%s11 + $0x1c0] sm:$0xff]
        %v7567 = vld [vmem:[%s11 + $0x1c8] sm:$0xff]
        %v7568 = vld [vmem:[%s11 + $0x1d0] sm:$0xff]
        %v7569 = vld [vmem:[%s11 + $0x1d8] sm:$0xff]
        %v7570 = vld [vmem:[%s11 + $0x1e0] sm:$0xff]
        %v7571 = vld [vmem:[%s11 + $0x1e8] sm:$0xff]
        %v7572 = vld [vmem:[%s11 + $0x1f0] sm:$0xff]
        %v7573 = vld [vmem:[%s11 + $0x1f8] sm:$0xff]
        %v7574 = vld [vmem:[%s11 + $0x200] sm:$0xff]
        %v7575 = vld [vmem:[%s11 + $0x208] sm:$0xff]
        %v7576 = vld [vmem:[%s11 + $0x210] sm:$0xff]
        %v7577 = vld [vmem:[%s11 + $0x218] sm:$0xff]
        %v7578 = vld [vmem:[%s11 + $0x220] sm:$0xff]
        %v7579 = vld [vmem:[%s11 + $0x228] sm:$0xff]
        %v7580 = vld [vmem:[%s11 + $0x230] sm:$0xff]
        %v7581 = vld [vmem:[%s11 + $0x238] sm:$0xff]
        %v7582 = vld [vmem:[%s11 + $0x240] sm:$0xff]
        %v7583 = vld [vmem:[%s11 + $0x248] sm:$0xff]
        %v7584 = vld [vmem:[%s11 + $0x250] sm:$0xff]
        %v7585 = vld [vmem:[%s11 + $0x258] sm:$0xff]
        %v7586 = vld [vmem:[%s11 + $0x260] sm:$0xff]
        %v7587 = vld [vmem:[%s11 + $0x268] sm:$0xff]
        %v7588 = vld [vmem:[%s11 + $0x270] sm:$0xff]
        %v7589 = vld [vmem:[%s11 + $0x278] sm:$0xff]
        %v7590 = vld [vmem:[%s11 + $0x280] sm:$0xff]
        %v7591 = vld [vmem:[%s11 + $0x288] sm:$0xff]
        %v7592 = vld [vmem:[%s11 + $0x290] sm:$0xff]
        %v7593 = vld [vmem:[%s11 + $0x298] sm:$0xff]
        %v7594 = vld [vmem:[%s11 + $0x2a0] sm:$0xff]
        %v7595 = vld [vmem:[%s11 + $0x2a8] sm:$0xff]
        %v7596 = vld [vmem:[%s11 + $0x2b0] sm:$0xff]
        %v7597 = vld [vmem:[%s11 + $0x2b8] sm:$0xff]
        %v7598 = vld [vmem:[%s11 + $0x2c0] sm:$0xff]
        %v7599 = vld [vmem:[%s11 + $0x2c8] sm:$0xff]
        %v7600 = vld [vmem:[%s11 + $0x2d0] sm:$0xff]
        %v7601 = vld [vmem:[%s11 + $0x2d8] sm:$0xff]
        %v7602 = vld [vmem:[%s11 + $0x2e0] sm:$0xff]
        %v7603 = vld [vmem:[%s11 + $0x2e8] sm:$0xff]
        %v7604 = vld [vmem:[%s11 + $0x2f0] sm:$0xff]
        %v7605 = vld [vmem:[%s11 + $0x2f8] sm:$0xff]
        %v7606 = vld [vmem:[%s11 + $0x300] sm:$0xff]
        %v7607 = vld [vmem:[%s11 + $0x308] sm:$0xff]
        %v7608 = vld [vmem:[%s11 + $0x310] sm:$0xff]
        %v7609 = vld [vmem:[%s11 + $0x318] sm:$0xff]
        %v7610 = vld [vmem:[%s11 + $0x320] sm:$0xff]
        %v7611 = vld [vmem:[%s11 + $0x328] sm:$0xff]
        %v7612 = vld [vmem:[%s11 + $0x330] sm:$0xff]
        %v7613 = vld [vmem:[%s11 + $0x338] sm:$0xff]
        %v7614 = vld [vmem:[%s11 + $0x340] sm:$0xff]
        %v7615 = vld [vmem:[%s11 + $0x348] sm:$0xff]
        %v7616 = vld [vmem:[%s11 + $0x350] sm:$0xff]
        %v7617 = vld [vmem:[%s11 + $0x358] sm:$0xff]
        %v7618 = vld [vmem:[%s11 + $0x360] sm:$0xff]
        %v7619 = vld [vmem:[%s11 + $0x368] sm:$0xff]
        %v7620 = vld [vmem:[%s11 + $0x370] sm:$0xff]
        %v7621 = vld [vmem:[%s11 + $0x378] sm:$0xff]
        %v7622 = vld [vmem:[%s11 + $0x380] sm:$0xff]
        %v7623 = vld [vmem:[%s11 + $0x388] sm:$0xff]
        %v7624 = vld [vmem:[%s11 + $0x390] sm:$0xff]
        %v7625 = vld [vmem:[%s11 + $0x398] sm:$0xff]
        %v7626 = vld [vmem:[%s11 + $0x3a0] sm:$0xff]
        %v7627 = vld [vmem:[%s11 + $0x3a8] sm:$0xff]
        %v7628 = vld [vmem:[%s11 + $0x3b0] sm:$0xff]
        %v7629 = vld [vmem:[%s11 + $0x3b8] sm:$0xff]
        %v7630 = vld [vmem:[%s11 + $0x3c0] sm:$0xff]
        %v7631 = vld [vmem:[%s11 + $0x3c8] sm:$0xff]
        %v7632 = vld [vmem:[%s11 + $0x3d0] sm:$0xff]
        %v7633 = vld [vmem:[%s11 + $0x3d8] sm:$0xff]
        %v7634 = vld [vmem:[%s11 + $0x3e0] sm:$0xff]
        %v7635 = vld [vmem:[%s11 + $0x3e8] sm:$0xff]
        %v7636 = vld [vmem:[%s11 + $0x3f0] sm:$0xff]
        %v7637 = vld [vmem:[%s11 + $0x3f8] sm:$0xff]
        %v7638 = vld [vmem:[%s11 + $0x400] sm:$0xff]
        %v7639 = vld [vmem:[%s11 + $0x408] sm:$0xff]
        %v7640 = vld [vmem:[%s11 + $0x410] sm:$0xff]
        %v7641 = vld [vmem:[%s11 + $0x418] sm:$0xff]
        %v7642 = vld [vmem:[%s11 + $0x420] sm:$0xff]
        %v7643 = vld [vmem:[%s11 + $0x428] sm:$0xff]
        %v7644 = vld [vmem:[%s11 + $0x430] sm:$0xff]
        %v7645 = vld [vmem:[%s11 + $0x438] sm:$0xff]
        %v7646 = vld [vmem:[%s11 + $0x440] sm:$0xff]
        %v7647 = vld [vmem:[%s11 + $0x448] sm:$0xff]
        %v7648 = vld [vmem:[%s11 + $0x450] sm:$0xff]
        %v7649 = vld [vmem:[%s11 + $0x458] sm:$0xff]
        %v7650 = vld [vmem:[%s11 + $0x460] sm:$0xff]
        %v7651 = vld [vmem:[%s11 + $0x468] sm:$0xff]
        %v7652 = vld [vmem:[%s11 + $0x470] sm:$0xff]
        %v7653 = vld [vmem:[%s11 + $0x478] sm:$0xff]
        %v7654 = vld [vmem:[%s12] sm:$0x1]
        %v7656 = vlaneseq
        %v7657 = vshrl.u32 %v7656, 7
        %v7658 = vsub.s32 0, %v7657
        %v7659 = vrot.slane %v7654, %v7658
        %7661 = vmatprep.subr.mxu0 0.0
        %7662 = vmatpush1.msra.mxu0 %v7510
        %7663 = vmatprep.subr.mxu0 0.0
        %7664 = vmatpush1.msra.mxu0 %v7511
        %7665 = vmatprep.subr.mxu0 0.0
        %7666 = vmatpush1.msra.mxu0 %v7512
        %7667 = vmatprep.subr.mxu0 0.0
        %7668 = vmatpush1.msra.mxu0 %v7513
        %7669 = vmatprep.subr.mxu0 0.0
        %7670 = vmatpush1.msra.mxu0 %v7514
        %7671 = vmatprep.subr.mxu0 0.0
        %7672 = vmatpush1.msra.mxu0 %v7515
        %7673 = vmatprep.subr.mxu0 0.0
        %7674 = vmatpush1.msra.mxu0 %v7516
        %7675 = vmatprep.subr.mxu0 0.0
        %7676 = vmatpush1.msra.mxu0 %v7517
        %7677 = vmatprep.subr.mxu0 0.0
        %7678 = vmatpush1.msra.mxu0 %v7518
        %7679 = vmatprep.subr.mxu0 0.0
        %7680 = vmatpush1.msra.mxu0 %v7519
        %7681 = vmatprep.subr.mxu0 0.0
        %7682 = vmatpush1.msra.mxu0 %v7520
        %7683 = vmatprep.subr.mxu0 0.0
        %7684 = vmatpush1.msra.mxu0 %v7521
        %7685 = vmatprep.subr.mxu0 0.0
        %7686 = vmatpush1.msra.mxu0 %v7522
        %7687 = vmatprep.subr.mxu0 0.0
        %7688 = vmatpush1.msra.mxu0 %v7523
        %7689 = vmatprep.subr.mxu0 0.0
        %7690 = vmatpush1.msra.mxu0 %v7524
        %7691 = vmatprep.subr.mxu0 0.0
        %7692 = vmatpush1.msra.mxu0 %v7525
        %7693 = vmatprep.subr.mxu0 0.0
        %7694 = vmatpush1.msra.mxu0 %v7526
        %7695 = vmatprep.subr.mxu0 0.0
        %7696 = vmatpush1.msra.mxu0 %v7527
        %7697 = vmatprep.subr.mxu0 0.0
        %7698 = vmatpush1.msra.mxu0 %v7528
        %7699 = vmatprep.subr.mxu0 0.0
        %7700 = vmatpush1.msra.mxu0 %v7529
        %7701 = vmatprep.subr.mxu0 0.0
        %7702 = vmatpush1.msra.mxu0 %v7530
        %7703 = vmatprep.subr.mxu0 0.0
        %7704 = vmatpush1.msra.mxu0 %v7531
        %7705 = vmatprep.subr.mxu0 0.0
        %7706 = vmatpush1.msra.mxu0 %v7532
        %7707 = vmatprep.subr.mxu0 0.0
        %7708 = vmatpush1.msra.mxu0 %v7533
        %7709 = vmatprep.subr.mxu0 0.0
        %7710 = vmatpush1.msra.mxu0 %v7534
        %7711 = vmatprep.subr.mxu0 0.0
        %7712 = vmatpush1.msra.mxu0 %v7535
        %7713 = vmatprep.subr.mxu0 0.0
        %7714 = vmatpush1.msra.mxu0 %v7536
        %7715 = vmatprep.subr.mxu0 0.0
        %7716 = vmatpush1.msra.mxu0 %v7537
        %7717 = vmatprep.subr.mxu0 0.0
        %7718 = vmatpush1.msra.mxu0 %v7538
        %7719 = vmatprep.subr.mxu0 0.0
        %7720 = vmatpush1.msra.mxu0 %v7539
        %7721 = vmatprep.subr.mxu0 0.0
        %7722 = vmatpush1.msra.mxu0 %v7540
        %7723 = vmatprep.subr.mxu0 0.0
        %7724 = vmatpush1.msra.mxu0 %v7541
        %7725 = vmatprep.mubr.f32.mxu0 %v7493
        %7726 = vmatmul.mubr.f32.gmra.mrb[0].mxu0 %v7492
        %v7727 = vpop.f32.mrb[0].mxu0
        %v7728 = vadd.f32 %v7659, %v7727
        %v7729 = vpop.f32.mrb[0].mxu0
        %7730 = vmatprep.mubr.f32.mxu0 %v7502
        %7731 = vmatmul.mubr.f32.gmra.mrb[0].mxu0 %v7501
        %v7732 = vpop.f32.mrb[0].mxu0
        %v7733 = vadd.f32 %v7659, %v7732
        %v7734 = vpop.f32.mrb[0].mxu0
        %7735 = vdwg.mxu0
        %7736 = vmatprep.subr.mxu0 0.0
        %7737 = vmatpush1.msra.mxu0 %v7542
        %7738 = vmatprep.subr.mxu0 0.0
        %7739 = vmatpush1.msra.mxu0 %v7543
        %7740 = vmatprep.subr.mxu0 0.0
        %7741 = vmatpush1.msra.mxu0 %v7544
        %7742 = vmatprep.subr.mxu0 0.0
        %7743 = vmatpush1.msra.mxu0 %v7545
        %7744 = vmatprep.subr.mxu0 0.0
        %7745 = vmatpush1.msra.mxu0 %v7546
        %7746 = vmatprep.subr.mxu0 0.0
        %7747 = vmatpush1.msra.mxu0 %v7547
        %7748 = vmatprep.subr.mxu0 0.0
        %7749 = vmatpush1.msra.mxu0 %v7548
        %7750 = vmatprep.subr.mxu0 0.0
        %7751 = vmatpush1.msra.mxu0 %v7549
        %7752 = vmatprep.subr.mxu0 0.0
        %7753 = vmatpush1.msra.mxu0 %v7550
        %7754 = vmatprep.subr.mxu0 0.0
        %7755 = vmatpush1.msra.mxu0 %v7551
        %7756 = vmatprep.subr.mxu0 0.0
        %7757 = vmatpush1.msra.mxu0 %v7552
        %7758 = vmatprep.subr.mxu0 0.0
        %7759 = vmatpush1.msra.mxu0 %v7553
        %7760 = vmatprep.subr.mxu0 0.0
        %7761 = vmatpush1.msra.mxu0 %v7554
        %7762 = vmatprep.subr.mxu0 0.0
        %7763 = vmatpush1.msra.mxu0 %v7555
        %7764 = vmatprep.subr.mxu0 0.0
        %7765 = vmatpush1.msra.mxu0 %v7556
        %7766 = vmatprep.subr.mxu0 0.0
        %7767 = vmatpush1.msra.mxu0 %v7557
        %7768 = vmatprep.subr.mxu0 0.0
        %7769 = vmatpush1.msra.mxu0 %v7558
        %7770 = vmatprep.subr.mxu0 0.0
        %7771 = vmatpush1.msra.mxu0 %v7559
        %7772 = vmatprep.subr.mxu0 0.0
        %7773 = vmatpush1.msra.mxu0 %v7560
        %7774 = vmatprep.subr.mxu0 0.0
        %7775 = vmatpush1.msra.mxu0 %v7561
        %7776 = vmatprep.subr.mxu0 0.0
        %7777 = vmatpush1.msra.mxu0 %v7562
        %7778 = vmatprep.subr.mxu0 0.0
        %7779 = vmatpush1.msra.mxu0 %v7563
        %7780 = vmatprep.subr.mxu0 0.0
        %7781 = vmatpush1.msra.mxu0 %v7564
        %7782 = vmatprep.subr.mxu0 0.0
        %7783 = vmatpush1.msra.mxu0 %v7565
        %7784 = vmatprep.subr.mxu0 0.0
        %7785 = vmatpush1.msra.mxu0 %v7566
        %7786 = vmatprep.subr.mxu0 0.0
        %7787 = vmatpush1.msra.mxu0 %v7567
        %7788 = vmatprep.subr.mxu0 0.0
        %7789 = vmatpush1.msra.mxu0 %v7568
        %7790 = vmatprep.subr.mxu0 0.0
        %7791 = vmatpush1.msra.mxu0 %v7569
        %7792 = vmatprep.subr.mxu0 0.0
        %7793 = vmatpush1.msra.mxu0 %v7570
        %7794 = vmatprep.subr.mxu0 0.0
        %7795 = vmatpush1.msra.mxu0 %v7571
        %7796 = vmatprep.subr.mxu0 0.0
        %7797 = vmatpush1.msra.mxu0 %v7572
        %7798 = vmatprep.subr.mxu0 0.0
        %7799 = vmatpush1.msra.mxu0 %v7573
        %7800 = vmatprep.mubr.f32.mxu0 %v7495
        %7801 = vmatmul.mubr.f32.gmra.mrb[0].mxu0 %v7494
        %v7802 = vpop.f32.mrb[0].mxu0
        %v7803 = vadd.f32 %v7728, %v7802
        %v7804 = vpop.f32.mrb[0].mxu0
        %7805 = vmatprep.mubr.f32.mxu0 %v7504
        %7806 = vmatmul.mubr.f32.gmra.mrb[0].mxu0 %v7503
        %v7807 = vpop.f32.mrb[0].mxu0
        %v7808 = vadd.f32 %v7733, %v7807
        %v7809 = vpop.f32.mrb[0].mxu0
        %7810 = vdwg.mxu0
        %7811 = vmatprep.subr.mxu0 0.0
        %7812 = vmatpush1.msra.mxu0 %v7574
        %7813 = vmatprep.subr.mxu0 0.0
        %7814 = vmatpush1.msra.mxu0 %v7575
        %7815 = vmatprep.subr.mxu0 0.0
        %7816 = vmatpush1.msra.mxu0 %v7576
        %7817 = vmatprep.subr.mxu0 0.0
        %7818 = vmatpush1.msra.mxu0 %v7577
        %7819 = vmatprep.subr.mxu0 0.0
        %7820 = vmatpush1.msra.mxu0 %v7578
        %7821 = vmatprep.subr.mxu0 0.0
        %7822 = vmatpush1.msra.mxu0 %v7579
        %7823 = vmatprep.subr.mxu0 0.0
        %7824 = vmatpush1.msra.mxu0 %v7580
        %7825 = vmatprep.subr.mxu0 0.0
        %7826 = vmatpush1.msra.mxu0 %v7581
        %7827 = vmatprep.subr.mxu0 0.0
        %7828 = vmatpush1.msra.mxu0 %v7582
        %7829 = vmatprep.subr.mxu0 0.0
        %7830 = vmatpush1.msra.mxu0 %v7583
        %7831 = vmatprep.subr.mxu0 0.0
        %7832 = vmatpush1.msra.mxu0 %v7584
        %7833 = vmatprep.subr.mxu0 0.0
        %7834 = vmatpush1.msra.mxu0 %v7585
        %7835 = vmatprep.subr.mxu0 0.0
        %7836 = vmatpush1.msra.mxu0 %v7586
        %7837 = vmatprep.subr.mxu0 0.0
        %7838 = vmatpush1.msra.mxu0 %v7587
        %7839 = vmatprep.subr.mxu0 0.0
        %7840 = vmatpush1.msra.mxu0 %v7588
        %7841 = vmatprep.subr.mxu0 0.0
        %7842 = vmatpush1.msra.mxu0 %v7589
        %7843 = vmatprep.subr.mxu0 0.0
        %7844 = vmatpush1.msra.mxu0 %v7590
        %7845 = vmatprep.subr.mxu0 0.0
        %7846 = vmatpush1.msra.mxu0 %v7591
        %7847 = vmatprep.subr.mxu0 0.0
        %7848 = vmatpush1.msra.mxu0 %v7592
        %7849 = vmatprep.subr.mxu0 0.0
        %7850 = vmatpush1.msra.mxu0 %v7593
        %7851 = vmatprep.subr.mxu0 0.0
        %7852 = vmatpush1.msra.mxu0 %v7594
        %7853 = vmatprep.subr.mxu0 0.0
        %7854 = vmatpush1.msra.mxu0 %v7595
        %7855 = vmatprep.subr.mxu0 0.0
        %7856 = vmatpush1.msra.mxu0 %v7596
        %7857 = vmatprep.subr.mxu0 0.0
        %7858 = vmatpush1.msra.mxu0 %v7597
        %7859 = vmatprep.subr.mxu0 0.0
        %7860 = vmatpush1.msra.mxu0 %v7598
        %7861 = vmatprep.subr.mxu0 0.0
        %7862 = vmatpush1.msra.mxu0 %v7599
        %7863 = vmatprep.subr.mxu0 0.0
        %7864 = vmatpush1.msra.mxu0 %v7600
        %7865 = vmatprep.subr.mxu0 0.0
        %7866 = vmatpush1.msra.mxu0 %v7601
        %7867 = vmatprep.subr.mxu0 0.0
        %7868 = vmatpush1.msra.mxu0 %v7602
        %7869 = vmatprep.subr.mxu0 0.0
        %7870 = vmatpush1.msra.mxu0 %v7603
        %7871 = vmatprep.subr.mxu0 0.0
        %7872 = vmatpush1.msra.mxu0 %v7604
        %7873 = vmatprep.subr.mxu0 0.0
        %7874 = vmatpush1.msra.mxu0 %v7605
        %7875 = vmatprep.mubr.f32.mxu0 %v7497
        %7876 = vmatmul.mubr.f32.gmra.mrb[0].mxu0 %v7496
        %v7877 = vpop.f32.mrb[0].mxu0
        %v7878 = vadd.f32 %v7803, %v7877
        %v7879 = vpop.f32.mrb[0].mxu0
        %7880 = vmatprep.mubr.f32.mxu0 %v7506
        %7881 = vmatmul.mubr.f32.gmra.mrb[0].mxu0 %v7505
        %v7882 = vpop.f32.mrb[0].mxu0
        %v7883 = vadd.f32 %v7808, %v7882
        %v7884 = vpop.f32.mrb[0].mxu0
        %7885 = vdwg.mxu0
        %7886 = vmatprep.subr.mxu0 0.0
        %7887 = vmatpush1.msra.mxu0 %v7606
        %7888 = vmatprep.subr.mxu0 0.0
        %7889 = vmatpush1.msra.mxu0 %v7607
        %7890 = vmatprep.subr.mxu0 0.0
        %7891 = vmatpush1.msra.mxu0 %v7608
        %7892 = vmatprep.subr.mxu0 0.0
        %7893 = vmatpush1.msra.mxu0 %v7609
        %7894 = vmatprep.subr.mxu0 0.0
        %7895 = vmatpush1.msra.mxu0 %v7610
        %7896 = vmatprep.subr.mxu0 0.0
        %7897 = vmatpush1.msra.mxu0 %v7611
        %7898 = vmatprep.subr.mxu0 0.0
        %7899 = vmatpush1.msra.mxu0 %v7612
        %7900 = vmatprep.subr.mxu0 0.0
        %7901 = vmatpush1.msra.mxu0 %v7613
        %7902 = vmatprep.subr.mxu0 0.0
        %7903 = vmatpush1.msra.mxu0 %v7614
        %7904 = vmatprep.subr.mxu0 0.0
        %7905 = vmatpush1.msra.mxu0 %v7615
        %7906 = vmatprep.subr.mxu0 0.0
        %7907 = vmatpush1.msra.mxu0 %v7616
        %7908 = vmatprep.subr.mxu0 0.0
        %7909 = vmatpush1.msra.mxu0 %v7617
        %7910 = vmatprep.subr.mxu0 0.0
        %7911 = vmatpush1.msra.mxu0 %v7618
        %7912 = vmatprep.subr.mxu0 0.0
        %7913 = vmatpush1.msra.mxu0 %v7619
        %7914 = vmatprep.subr.mxu0 0.0
        %7915 = vmatpush1.msra.mxu0 %v7620
        %7916 = vmatprep.subr.mxu0 0.0
        %7917 = vmatpush1.msra.mxu0 %v7621
        %7918 = vmatprep.subr.mxu0 0.0
        %7919 = vmatpush1.msra.mxu0 %v7622
        %7920 = vmatprep.subr.mxu0 0.0
        %7921 = vmatpush1.msra.mxu0 %v7623
        %7922 = vmatprep.subr.mxu0 0.0
        %7923 = vmatpush1.msra.mxu0 %v7624
        %7924 = vmatprep.subr.mxu0 0.0
        %7925 = vmatpush1.msra.mxu0 %v7625
        %7926 = vmatprep.subr.mxu0 0.0
        %7927 = vmatpush1.msra.mxu0 %v7626
        %7928 = vmatprep.subr.mxu0 0.0
        %7929 = vmatpush1.msra.mxu0 %v7627
        %7930 = vmatprep.subr.mxu0 0.0
        %7931 = vmatpush1.msra.mxu0 %v7628
        %7932 = vmatprep.subr.mxu0 0.0
        %7933 = vmatpush1.msra.mxu0 %v7629
        %7934 = vmatprep.subr.mxu0 0.0
        %7935 = vmatpush1.msra.mxu0 %v7630
        %7936 = vmatprep.subr.mxu0 0.0
        %7937 = vmatpush1.msra.mxu0 %v7631
        %7938 = vmatprep.subr.mxu0 0.0
        %7939 = vmatpush1.msra.mxu0 %v7632
        %7940 = vmatprep.subr.mxu0 0.0
        %7941 = vmatpush1.msra.mxu0 %v7633
        %7942 = vmatprep.subr.mxu0 0.0
        %7943 = vmatpush1.msra.mxu0 %v7634
        %7944 = vmatprep.subr.mxu0 0.0
        %7945 = vmatpush1.msra.mxu0 %v7635
        %7946 = vmatprep.subr.mxu0 0.0
        %7947 = vmatpush1.msra.mxu0 %v7636
        %7948 = vmatprep.subr.mxu0 0.0
        %7949 = vmatpush1.msra.mxu0 %v7637
        %7950 = vmatprep.mubr.f32.mxu0 %v7499
        %7951 = vmatmul.mubr.f32.gmra.mrb[0].mxu0 %v7498
        %v7952 = vpop.f32.mrb[0].mxu0
        %v7953 = vadd.f32 %v7878, %v7952
        %v7954 = vpop.f32.mrb[0].mxu0
        %7955 = vmatprep.mubr.f32.mxu0 %v7508
        %7956 = vmatmul.mubr.f32.gmra.mrb[0].mxu0 %v7507
        %v7957 = vpop.f32.mrb[0].mxu0
        %v7958 = vadd.f32 %v7883, %v7957
        %v7959 = vpop.f32.mrb[0].mxu0
        %7960 = vdwg.mxu0
        %7961 = vmatprep.subr.mxu0 0.0
        %7962 = vmatpush1.msra.mxu0 %v7638
        %7963 = vmatprep.subr.mxu0 0.0
        %7964 = vmatpush1.msra.mxu0 %v7639
        %7965 = vmatprep.subr.mxu0 0.0
        %7966 = vmatpush1.msra.mxu0 %v7640
        %7967 = vmatprep.subr.mxu0 0.0
        %7968 = vmatpush1.msra.mxu0 %v7641
        %7969 = vmatprep.subr.mxu0 0.0
        %7970 = vmatpush1.msra.mxu0 %v7642
        %7971 = vmatprep.subr.mxu0 0.0
        %7972 = vmatpush1.msra.mxu0 %v7643
        %7973 = vmatprep.subr.mxu0 0.0
        %7974 = vmatpush1.msra.mxu0 %v7644
        %7975 = vmatprep.subr.mxu0 0.0
        %7976 = vmatpush1.msra.mxu0 %v7645
        %7977 = vmatprep.subr.mxu0 0.0
        %7978 = vmatpush1.msra.mxu0 %v7646
        %7979 = vmatprep.subr.mxu0 0.0
        %7980 = vmatpush1.msra.mxu0 %v7647
        %7981 = vmatprep.subr.mxu0 0.0
        %7982 = vmatpush1.msra.mxu0 %v7648
        %7983 = vmatprep.subr.mxu0 0.0
        %7984 = vmatpush1.msra.mxu0 %v7649
        %7985 = vmatprep.subr.mxu0 0.0
        %7986 = vmatpush1.msra.mxu0 %v7650
        %7987 = vmatprep.subr.mxu0 0.0
        %7988 = vmatpush1.msra.mxu0 %v7651
        %7989 = vmatprep.subr.mxu0 0.0
        %7990 = vmatpush1.msra.mxu0 %v7652
        %7991 = vmatprep.subr.mxu0 0.0
        %7992 = vmatpush1.msra.mxu0 %v7653
        %7993 = vmatprep.subr.mxu0 0.0
        %7994 = vmatpush1.msra.mxu0 0.0
        %7995 = vmatprep.subr.mxu0 0.0
        %7996 = vmatpush1.msra.mxu0 0.0
        %7997 = vmatprep.subr.mxu0 0.0
        %7998 = vmatpush1.msra.mxu0 0.0
        %7999 = vmatprep.subr.mxu0 0.0
        %8000 = vmatpush1.msra.mxu0 0.0
        %8001 = vmatprep.subr.mxu0 0.0
        %8002 = vmatpush1.msra.mxu0 0.0
        %8003 = vmatprep.subr.mxu0 0.0
        %8004 = vmatpush1.msra.mxu0 0.0
        %8005 = vmatprep.subr.mxu0 0.0
        %8006 = vmatpush1.msra.mxu0 0.0
        %8007 = vmatprep.subr.mxu0 0.0
        %8008 = vmatpush1.msra.mxu0 0.0
        %8009 = vmatprep.subr.mxu0 0.0
        %8010 = vmatpush1.msra.mxu0 0.0
        %8011 = vmatprep.subr.mxu0 0.0
        %8012 = vmatpush1.msra.mxu0 0.0
        %8013 = vmatprep.subr.mxu0 0.0
        %8014 = vmatpush1.msra.mxu0 0.0
        %8015 = vmatprep.subr.mxu0 0.0
        %8016 = vmatpush1.msra.mxu0 0.0
        %8017 = vmatprep.subr.mxu0 0.0
        %8018 = vmatpush1.msra.mxu0 0.0
        %8019 = vmatprep.subr.mxu0 0.0
        %8020 = vmatpush1.msra.mxu0 0.0
        %8021 = vmatprep.subr.mxu0 0.0
        %8022 = vmatpush1.msra.mxu0 0.0
        %8023 = vmatprep.subr.mxu0 0.0
        %8024 = vmatpush1.msra.mxu0 0.0
        %8025 = vmatprep.mubr.f32.mxu0 0.0
        %8026 = vmatmul.mubr.f32.gmra.mrb[0].mxu0 %v7500
        %v8027 = vpop.f32.mrb[0].mxu0
        %v8028 = vadd.f32 %v7953, %v8027
        %v8029 = vpop.f32.mrb[0].mxu0
        %8030 = vmatprep.mubr.f32.mxu0 0.0
        %8031 = vmatmul.mubr.f32.gmra.mrb[0].mxu0 %v7509
        %v8032 = vpop.f32.mrb[0].mxu0
        %v8033 = vadd.f32 %v7958, %v8032
        %v8034 = vpop.f32.mrb[0].mxu0
        %8035 = vdwg.mxu0
        %v8036 = vmax.f32 %v8028, 0.0
        %v8037 = vmax.f32 %v8033, 0.0
        %v8040 = vcombine.high %v8036, %v8036
        %v8041 = vcombine.high %v8037, %v8037
        %8044 = vst [vmem:[%s505] sm:$0xf] %v8036
        %8045 = vst [vmem:[%s505 + $0x4] sm:$0xf] %v8040
        %8046 = vst [vmem:[%s505 + $0x8] sm:$0xf] %v8037
        %8047 = vst [vmem:[%s505 + $0xc] sm:$0xf] %v8041
        %s8048 = sand.u32 %s319, 1
        %s8049 = scalar_lea.sflag [#allocation9], %s8048
        %s8050 = sand.u32 %s319, 1
        %s8051 = smul.addr %s8050, 256
        %s8052 = scalar_lea.vmem [#allocation8], %s8051
        %s8053 = sand.u32 %s33, 1
        %s8054 = scalar_lea.sflag [#allocation11], %s8053
        %s8055 = sand.u32 %s345, 1
        %s8056 = smul.addr %s8055, 64
        %s8057 = scalar_lea.vmem [#allocation10], %s8056
        %s8058 = sand.u32 %s33, 1
        %s8059 = scalar_lea.sflag [#allocation11], %s8058
        %s8060 = sand.u32 %s371, 1
        %s8061 = smul.addr %s8060, 16
        %s8062 = scalar_lea.vmem [#allocation12], %s8061
        // Predicated region
        $region73: #{encoding_forward.1} parent=71 // pred_check
          %p8063 = pneg %p329
        $region74: #{encoding_forward.1} parent=71 // pred_check_branch
          %8065 = sbr.rel (%p8063) target = $region76
        $region75: #{encoding_forward.1} parent=71 // pred_region
          %s8067 = ssub.s32 4096, 4096
          %8068 = vsyncadd %s8049, %s8067
          %s8069 = smul.addr %s33, 32
          %s8070 = smul.addr %s8069, 128
          %s8071 = scalar_lea.hbm %s13, %s8070
          %s8072 = sshll.u32 %s8052, 4
          %s8073 = int_to_ptr.vmem [resolvable:$true] %s8072
          %8078 = dma.vmem_to_hbm [thread:$0]  %s8073, 4096, %s8071, %s8049, 128, 128, 8
        $region76: #{encoding_forward.1} parent=71 // pred_fallthru
          _
        // Predicated region
        $region77: #{encoding_forward.1} parent=71 // pred_check
          %p8079 = pneg %p355
        $region78: #{encoding_forward.1} parent=71 // pred_check_branch
          %8081 = sbr.rel (%p8079) target = $region80
        $region79: #{encoding_forward.1} parent=71 // pred_region
          %s8083 = ssub.s32 1024, 1024
          %8084 = vsyncadd %s8054, %s8083
          %s8085 = smul.addr %s33, 8
          %s8086 = smul.addr %s8085, 128
          %s8087 = scalar_lea.hbm %s14, %s8086
          %s8088 = sshll.u32 %s8057, 4
          %s8089 = int_to_ptr.vmem [resolvable:$true] %s8088
          %8094 = dma.vmem_to_hbm [thread:$0]  %s8089, 1024, %s8087, %s8054, 128, 128, 8
        $region80: #{encoding_forward.1} parent=71 // pred_fallthru
          _
        // Predicated region
        $region81: #{encoding_forward.1} parent=71 // pred_check
          %p8095 = pneg %p381
        $region82: #{encoding_forward.1} parent=71 // pred_check_branch
          %8097 = sbr.rel (%p8095) target = $region84
        $region83: #{encoding_forward.1} parent=71 // pred_region
          %s8099 = ssub.s32 256, 256
          %8100 = vsyncadd %s8059, %s8099
          %s8101 = smul.addr %s33, 4
          %s8102 = smul.addr %s8101, 64
          %s8103 = scalar_lea.hbm %s15, %s8102
          %s8104 = sshll.u32 %s8062, 4
          %s8105 = int_to_ptr.vmem [resolvable:$true] %s8104
          %8110 = dma.vmem_to_hbm [thread:$0]  %s8105, 256, %s8103, %s8059, 64, 64, 4
        $region84: #{encoding_forward.1} parent=71 // pred_fallthru
          _
      $region72: #{encoding_forward.1} parent=5 // pred_fallthru
        _
      %p8111 = scmp.le.s32.totalorder 2, %s28
      // Predicated region
      $region85: #{encoding_forward.1} parent=5 // pred_check
        %p8112 = pneg %p8111
      $region86: #{encoding_forward.1} parent=5 // pred_check_branch
        %8114 = sbr.rel (%p8112) target = $region88
      $region87: #{encoding_forward.1} parent=5 // pred_region
        %s8115 = ssub.s32 %s28, 2
        // Predicated region
        $region89: #{encoding_forward.1} parent=87 // pred_check
          %p8116 = pneg %p335
        $region90: #{encoding_forward.1} parent=87 // pred_check_branch
          %8118 = sbr.rel (%p8116) target = $region92
        $region91: #{encoding_forward.1} parent=87 // pred_region
          %s8119 = sand.u32 %s320, 1
          %s8120 = scalar_lea.sflag [#allocation9], %s8119
          %s8121 = sand.u32 %s320, 1
          %s8122 = smul.addr %s8121, 256
          %s8123 = scalar_lea.vmem [#allocation8], %s8122
          %8124 = dma.done %s8120, 4096
        $region92: #{encoding_forward.1} parent=87 // pred_fallthru
          _
        // Predicated region
        $region93: #{encoding_forward.1} parent=87 // pred_check
          %p8125 = pneg %p361
        $region94: #{encoding_forward.1} parent=87 // pred_check_branch
          %8127 = sbr.rel (%p8125) target = $region96
        $region95: #{encoding_forward.1} parent=87 // pred_region
          %s8128 = sand.u32 %s34, 1
          %s8129 = scalar_lea.sflag [#allocation11], %s8128
          %s8130 = sand.u32 %s346, 1
          %s8131 = smul.addr %s8130, 64
          %s8132 = scalar_lea.vmem [#allocation10], %s8131
          %8133 = dma.done %s8129, 1024
        $region96: #{encoding_forward.1} parent=87 // pred_fallthru
          _
        // Predicated region
        $region97: #{encoding_forward.1} parent=87 // pred_check
          %p8134 = pneg %p387
        $region98: #{encoding_forward.1} parent=87 // pred_check_branch
          %8136 = sbr.rel (%p8134) target = $region100
        $region99: #{encoding_forward.1} parent=87 // pred_region
          %s8137 = sand.u32 %s34, 1
          %s8138 = scalar_lea.sflag [#allocation11], %s8137
          %s8139 = sand.u32 %s372, 1
          %s8140 = smul.addr %s8139, 16
          %s8141 = scalar_lea.vmem [#allocation12], %s8140
          %8142 = dma.done %s8138, 256
        $region100: #{encoding_forward.1} parent=87 // pred_fallthru
          _
      $region88: #{encoding_forward.1} parent=5 // pred_fallthru
        _
    $region6: #{encoding_forward.1} parent=1 // loop_footer
      %s32 = sadd.s32 1, %s28
    $region7: #{encoding_forward.1} parent=1 // loop_footer_branch
      %27 = sbr.rel target = $region3
    $region8: #{encoding_forward.1} parent=1 // loop_exit
      _
    %8143 = vsyncpa [#allocation9], 1
    %s8144 = scalar_lea.sflag [#allocation9], 1
    %8145 = vsyncpa %s8144, 1
    %8146 = vsyncpa [#allocation11], 1
    %s8147 = scalar_lea.sflag [#allocation11], 1
    %8148 = vsyncpa %s8147, 1

</llo_original>
